<compile_context>
chip_gen: v7x
topology: tpu7x:2x2x1
jax: 0.10.0
libtpu: 0.0.40
codegen_flags: <defaults>
</compile_context>

<pallas_src>
import functools

import jax
import jax.numpy as jnp
import numpy as np
from jax.experimental import pallas as pl
from jax.experimental.pallas import tpu as pltpu


# ----------------------------------------------------------------------------
# Fused Pallas kernel
# ----------------------------------------------------------------------------

def _make_fused_kernel(H, W, nin, nh, g):
    HW = H * W
    cpg = nin // g

    def conv_same(act_f32, w_ref, b_ref, K, relu, col_masks):
        """'Same' KxK conv in channel-major layout: (Cin, HW) f32 -> (Cout, HW) f32.

        w_ref: (K*K, Cout, Cin) bf16, tap index t = ky*K + kx.
        b_ref: (Cout, 1) f32.
        """
        cin = act_f32.shape[0]
        cout = w_ref.shape[1]
        P = K // 2
        xb = act_f32.astype(jnp.bfloat16)
        acc = jnp.zeros((cout, HW), jnp.float32)
        for ky in range(K):
            dy = ky - P
            for kx in range(K):
                dx = kx - P
                s = dy * W + dx                    # flattened spatial shift
                if s == 0:
                    sh = xb
                elif s > 0:
                    sh = jnp.concatenate(
                        [xb[:, s:], jnp.zeros((cin, s), xb.dtype)], axis=1)
                else:
                    sh = jnp.concatenate(
                        [jnp.zeros((cin, -s), xb.dtype), xb[:, :s]], axis=1)
                if dx != 0:                        # zero columns that crossed a row edge
                    sh = jnp.where(col_masks[dx], sh, jnp.zeros_like(sh))
                acc = acc + jnp.dot(w_ref[ky * K + kx], sh,
                                    preferred_element_type=jnp.float32)
        acc = acc + b_ref[...]
        if relu:
            acc = jnp.maximum(acc, 0.0)
        return acc

    def kernel(x_ref,
               vw1, vb1, vw2, vb2, vw3, vb3,
               ldw, ldb, lw1, lb1, lw2, lb2,
               iw1, ib1, iw2, ib2,
               o_ref):
        # Column (w-coordinate) validity masks for horizontal taps; shared by all convs.
        col = jax.lax.broadcasted_iota(jnp.int32, (1, HW), 1) % W
        col_masks = {dx: (col + dx >= 0) & (col + dx < W) for dx in (-2, -1, 1, 2)}

        x = x_ref[0]                                                  # (nin+3, HW) f32

        # --- VHEEncoder on the first 3 + nh channels ---
        vhe_in = x[:3 + nh, :]
        enc_in = jnp.concatenate([vhe_in, vhe_in * vhe_in], axis=0)   # 2*(nh+3) channels
        h = conv_same(enc_in, vw1, vb1, 5, True, col_masks)
        h = conv_same(h, vw2, vb2, 5, True, col_masks)
        enc_out = conv_same(h, vw3, vb3, 5, False, col_masks)         # nh+1 channels
        # enc_out[0] is the (unused) mean estimate.
        norm_info = jnp.concatenate([vhe_in[:3, :], enc_out[1:, :]], axis=0)   # 3+nh

        # --- EESP body ---
        xin = jnp.concatenate([norm_info, x[3 + nh:, :]], axis=0)     # nin+3 channels
        ld = conv_same(xin, ldw, ldb, 1, True, col_masks)             # nin

        le = conv_same(ld, lw1, lb1, 3, True, col_masks)
        le = conv_same(le, lw2, lb2, 3, False, col_masks)

        # channel rotation: cat(out[:, -nh:], out[:, :-nh])
        rot = jnp.concatenate([le[nin - nh:, :], le[:nin - nh, :]], axis=0)

        # group-wise cumulative sum over the g channel groups
        parts = [rot[:cpg, :]]
        for gi in range(1, g):
            parts.append(parts[-1] + rot[gi * cpg:(gi + 1) * cpg, :])
        cs = jnp.concatenate(parts, axis=0)

        li = conv_same(cs, iw1, ib1, 1, True, col_masks)
        out = conv_same(li, iw2, ib2, 1, False, col_masks) + ld       # fused residual

        o_ref[0] = out.astype(o_ref.dtype)

    return kernel


def _const_spec(arr):
    """Full-array block with a constant index_map (fetched once, reused every step)."""
    zeros = (0,) * arr.ndim
    return pl.BlockSpec(arr.shape, lambda b, _z=zeros: _z)


# ----------------------------------------------------------------------------
# Forward pass wrapper (NCHW in / NCHW out, no transposes needed)
# ----------------------------------------------------------------------------

_WEIGHT_ORDER = ["vhe_w1", "vhe_b1", "vhe_w2", "vhe_b2", "vhe_w3", "vhe_b3",
                 "ld_w", "ld_b", "lane_w1", "lane_b1", "lane_w2", "lane_b2",
                 "lin_w1", "lin_b1", "lin_w2", "lin_b2"]


@functools.partial(jax.jit, static_argnums=(2, 3, 4))
def eesp_encoder_forward(x_nchw, params, num_input_channels, num_hidden_channels,
                         num_groups):
    nin, nh, g = num_input_channels, num_hidden_channels, num_groups
    B, ctot, H, W = x_nchw.shape
    assert ctot == nin + 3
    HW = H * W
    x = x_nchw.reshape(B, ctot, HW).astype(jnp.float32)

    weights = [params[k] for k in _WEIGHT_ORDER]
    in_specs = [pl.BlockSpec((1, ctot, HW), lambda b: (b, 0, 0))]
    in_specs += [_const_spec(w) for w in weights]

    out = pl.pallas_call(
        _make_fused_kernel(H, W, nin, nh, g),
        out_shape=jax.ShapeDtypeStruct((B, nin, HW), jnp.float32),
        grid=(B,),
        in_specs=in_specs,
        out_specs=pl.BlockSpec((1, nin, HW), lambda b: (b, 0, 0)),
        compiler_params=pltpu.CompilerParams(dimension_semantics=("parallel",)),
    )(x, *weights)
    return out.reshape(B, nin, H, W)


# ----------------------------------------------------------------------------
# Parameter construction (deterministic, synthetic)
# ----------------------------------------------------------------------------

def _init_conv(key, K, cin, cout, groups=1, scale=0.1):
    kw, kb = jax.random.split(key)
    w = jax.random.normal(kw, (K * K, cout, cin), jnp.float32) * scale
    if groups > 1:
        cin_g, cout_g = cin // groups, cout // groups
        mask = (jnp.arange(cout)[:, None] // cout_g) == (jnp.arange(cin)[None, :] // cin_g)
        w = w * mask[None, :, :].astype(jnp.float32)      # block-diagonal = grouped conv
    b = jax.random.normal(kb, (cout, 1), jnp.float32) * scale
    return w.astype(jnp.bfloat16), b


def make_params(key, num_input_channels, num_hidden_channels, num_groups):
    nin, nh, g = num_input_channels, num_hidden_channels, num_groups
    c_vhe = 2 * (nh + 3)
    keys = jax.random.split(key, 8)
    p = {}
    p["vhe_w1"], p["vhe_b1"] = _init_conv(keys[0], 5, c_vhe, c_vhe)
    p["vhe_w2"], p["vhe_b2"] = _init_conv(keys[1], 5, c_vhe, c_vhe)
    p["vhe_w3"], p["vhe_b3"] = _init_conv(keys[2], 5, c_vhe, nh + 1)
    p["ld_w"], p["ld_b"] = _init_conv(keys[3], 1, nin + 3, nin)
    p["lane_w1"], p["lane_b1"] = _init_conv(keys[4], 3, nin, nin, groups=g)
    p["lane_w2"], p["lane_b2"] = _init_conv(keys[5], 3, nin, nin, groups=g)
    p["lin_w1"], p["lin_b1"] = _init_conv(keys[6], 1, nin, nin, groups=g)
    p["lin_w2"], p["lin_b2"] = _init_conv(keys[7], 1, nin, nin, groups=g)
    return p


# ----------------------------------------------------------------------------
# Pure-JAX reference (same bf16-operand / f32-accumulation numerics)
# ----------------------------------------------------------------------------

def reference_forward(x_nchw, params, nin, nh, g):
    def conv(x, w, b, relu):
        kk, cout, cin = w.shape
        K = int(round(kk ** 0.5))
        wk = w.reshape(K, K, cout, cin).transpose(2, 3, 0, 1).astype(jnp.bfloat16)
        y = jax.lax.conv_general_dilated(
            x.astype(jnp.bfloat16), wk, window_strides=(1, 1), padding="SAME",
            dimension_numbers=("NCHW", "OIHW", "NCHW"),
            preferred_element_type=jnp.float32)
        y = y + b.reshape(1, cout, 1, 1)
        return jnp.maximum(y, 0.0) if relu else y

    x = x_nchw.astype(jnp.float32)
    B, _, H, W = x.shape
    vhe_in = x[:, :3 + nh]
    enc_in = jnp.concatenate([vhe_in, vhe_in * vhe_in], axis=1)
    h = conv(enc_in, params["vhe_w1"], params["vhe_b1"], True)
    h = conv(h, params["vhe_w2"], params["vhe_b2"], True)
    enc_out = conv(h, params["vhe_w3"], params["vhe_b3"], False)
    norm_info = jnp.concatenate([vhe_in[:, :3], enc_out[:, 1:]], axis=1)
    xin = jnp.concatenate([norm_info, x[:, 3 + nh:]], axis=1)
    ld = conv(xin, params["ld_w"], params["ld_b"], True)
    le = conv(ld, params["lane_w1"], params["lane_b1"], True)
    le = conv(le, params["lane_w2"], params["lane_b2"], False)
    rot = jnp.concatenate([le[:, nin - nh:], le[:, :nin - nh]], axis=1)
    cpg = nin // g
    cs = rot.reshape(B, g, cpg, H, W).cumsum(axis=1).reshape(B, nin, H, W)
    li = conv(cs, params["lin_w1"], params["lin_b1"], True)
    return conv(li, params["lin_w2"], params["lin_b2"], False) + ld


# ----------------------------------------------------------------------------
# Demo
# ----------------------------------------------------------------------------

if __name__ == "__main__":
    num_input_channels = 8
    num_hidden_channels = 4
    num_groups = 2
    B, H, W = 2, 16, 16

    key = jax.random.PRNGKey(0)
    k_param, k_x = jax.random.split(key)
    params = make_params(k_param, num_input_channels, num_hidden_channels, num_groups)

    # PyTorch-style NCHW input with num_input_channels + 3 channels.
    x = jax.random.normal(k_x, (B, num_input_channels + 3, H, W), jnp.float32)

    out = eesp_encoder_forward(x, params, num_input_channels, num_hidden_channels,
                               num_groups)
    out = jax.block_until_ready(out)
    assert out.shape == (B, num_input_channels, H, W), out.shape
    assert out.dtype == jnp.float32

    ref = reference_forward(x, params, num_input_channels, num_hidden_channels,
                            num_groups)
    ref = jax.block_until_ready(ref)
    np.testing.assert_allclose(np.asarray(out), np.asarray(ref), rtol=1e-2, atol=1e-2)
    print("KERNEL_OK")
</pallas_src>

<mosaic_0001>
module attributes {stable_mosaic.version = 11 : i64} {
  func.func @kernel(%arg0: i32, %arg1: memref<1x11x256xf32, #tpu.memory_space<vmem>>, %arg2: memref<25x14x14xbf16, #tpu.memory_space<vmem>>, %arg3: memref<14x1xf32, #tpu.memory_space<vmem>>, %arg4: memref<25x14x14xbf16, #tpu.memory_space<vmem>>, %arg5: memref<14x1xf32, #tpu.memory_space<vmem>>, %arg6: memref<25x5x14xbf16, #tpu.memory_space<vmem>>, %arg7: memref<5x1xf32, #tpu.memory_space<vmem>>, %arg8: memref<1x8x11xbf16, #tpu.memory_space<vmem>>, %arg9: memref<8x1xf32, #tpu.memory_space<vmem>>, %arg10: memref<9x8x8xbf16, #tpu.memory_space<vmem>>, %arg11: memref<8x1xf32, #tpu.memory_space<vmem>>, %arg12: memref<9x8x8xbf16, #tpu.memory_space<vmem>>, %arg13: memref<8x1xf32, #tpu.memory_space<vmem>>, %arg14: memref<1x8x8xbf16, #tpu.memory_space<vmem>>, %arg15: memref<8x1xf32, #tpu.memory_space<vmem>>, %arg16: memref<1x8x8xbf16, #tpu.memory_space<vmem>>, %arg17: memref<8x1xf32, #tpu.memory_space<vmem>>, %arg18: memref<1x8x256xf32, #tpu.memory_space<vmem>>) attributes {dimension_semantics = [#tpu.dimension_semantics<parallel>], iteration_bounds = array<i64: 2>, scalar_prefetch = 0 : i64, scratch_operands = 0 : i64, tpu.core_type = #tpu.core_type<tc>, window_params = [{transform_indices = @transform_0, window_bounds = array<i64: 1, 11, 256>}, {pipeline_mode = #tpu.pipeline_mode<synchronous>, transform_indices = @transform_1, window_bounds = array<i64: 25, 14, 14>}, {pipeline_mode = #tpu.pipeline_mode<synchronous>, transform_indices = @transform_2, window_bounds = array<i64: 14, 1>}, {pipeline_mode = #tpu.pipeline_mode<synchronous>, transform_indices = @transform_3, window_bounds = array<i64: 25, 14, 14>}, {pipeline_mode = #tpu.pipeline_mode<synchronous>, transform_indices = @transform_4, window_bounds = array<i64: 14, 1>}, {pipeline_mode = #tpu.pipeline_mode<synchronous>, transform_indices = @transform_5, window_bounds = array<i64: 25, 5, 14>}, {pipeline_mode = #tpu.pipeline_mode<synchronous>, transform_indices = @transform_6, window_bounds = array<i64: 5, 1>}, {pipeline_mode = #tpu.pipeline_mode<synchronous>, transform_indices = @transform_7, window_bounds = array<i64: 1, 8, 11>}, {pipeline_mode = #tpu.pipeline_mode<synchronous>, transform_indices = @transform_8, window_bounds = array<i64: 8, 1>}, {pipeline_mode = #tpu.pipeline_mode<synchronous>, transform_indices = @transform_9, window_bounds = array<i64: 9, 8, 8>}, {pipeline_mode = #tpu.pipeline_mode<synchronous>, transform_indices = @transform_10, window_bounds = array<i64: 8, 1>}, {pipeline_mode = #tpu.pipeline_mode<synchronous>, transform_indices = @transform_11, window_bounds = array<i64: 9, 8, 8>}, {pipeline_mode = #tpu.pipeline_mode<synchronous>, transform_indices = @transform_12, window_bounds = array<i64: 8, 1>}, {pipeline_mode = #tpu.pipeline_mode<synchronous>, transform_indices = @transform_13, window_bounds = array<i64: 1, 8, 8>}, {pipeline_mode = #tpu.pipeline_mode<synchronous>, transform_indices = @transform_14, window_bounds = array<i64: 8, 1>}, {pipeline_mode = #tpu.pipeline_mode<synchronous>, transform_indices = @transform_15, window_bounds = array<i64: 1, 8, 8>}, {pipeline_mode = #tpu.pipeline_mode<synchronous>, transform_indices = @transform_16, window_bounds = array<i64: 8, 1>}, {transform_indices = @transform_17, window_bounds = array<i64: 1, 8, 256>}]} {
    %0 = tpu.iota {dimensions = array<i32: 1>} : vector<1x256xi32>
    %c16_i32 = arith.constant 16 : i32
    %c0_i32 = arith.constant 0 : i32
    %1 = arith.cmpi eq, %c16_i32, %c0_i32 : i32
    %c1_i32 = arith.constant 1 : i32
    %2 = arith.select %1, %c1_i32, %c16_i32 : i32
    %3 = vector.broadcast %2 : i32 to vector<1x256xi32>
    %4 = arith.remsi %0, %3 : vector<1x256xi32>
    %c0_i32_0 = arith.constant 0 : i32
    %5 = vector.broadcast %c0_i32_0 : i32 to vector<1x256xi32>
    %6 = arith.cmpi ne, %4, %5 : vector<1x256xi32>
    %c0_i32_1 = arith.constant 0 : i32
    %7 = vector.broadcast %c0_i32_1 : i32 to vector<1x256xi32>
    %8 = arith.cmpi slt, %4, %7 : vector<1x256xi32>
    %c0_i32_2 = arith.constant 0 : i32
    %9 = arith.cmpi slt, %2, %c0_i32_2 : i32
    %10 = vector.broadcast %9 : i1 to vector<1x256xi1>
    %11 = vector.broadcast %10 : vector<1x256xi1> to vector<1x256xi1>
    %12 = arith.xori %8, %11 : vector<1x256xi1>
    %13 = arith.andi %12, %6 : vector<1x256xi1>
    %14 = vector.broadcast %2 : i32 to vector<1x256xi32>
    %15 = arith.addi %4, %14 : vector<1x256xi32>
    %16 = arith.select %13, %15, %4 : vector<1x256xi1>, vector<1x256xi32>
    %c-2_i32 = arith.constant -2 : i32
    %17 = vector.broadcast %c-2_i32 : i32 to vector<1x256xi32>
    %18 = arith.addi %16, %17 : vector<1x256xi32>
    %c0_i32_3 = arith.constant 0 : i32
    %19 = vector.broadcast %c0_i32_3 : i32 to vector<1x256xi32>
    %20 = arith.cmpi sge, %18, %19 : vector<1x256xi32>
    %c-2_i32_4 = arith.constant -2 : i32
    %21 = vector.broadcast %c-2_i32_4 : i32 to vector<1x256xi32>
    %22 = arith.addi %16, %21 : vector<1x256xi32>
    %c16_i32_5 = arith.constant 16 : i32
    %23 = vector.broadcast %c16_i32_5 : i32 to vector<1x256xi32>
    %24 = arith.cmpi slt, %22, %23 : vector<1x256xi32>
    %25 = arith.andi %20, %24 : vector<1x256xi1>
    %c-1_i32 = arith.constant -1 : i32
    %26 = vector.broadcast %c-1_i32 : i32 to vector<1x256xi32>
    %27 = arith.addi %16, %26 : vector<1x256xi32>
    %c0_i32_6 = arith.constant 0 : i32
    %28 = vector.broadcast %c0_i32_6 : i32 to vector<1x256xi32>
    %29 = arith.cmpi sge, %27, %28 : vector<1x256xi32>
    %c-1_i32_7 = arith.constant -1 : i32
    %30 = vector.broadcast %c-1_i32_7 : i32 to vector<1x256xi32>
    %31 = arith.addi %16, %30 : vector<1x256xi32>
    %c16_i32_8 = arith.constant 16 : i32
    %32 = vector.broadcast %c16_i32_8 : i32 to vector<1x256xi32>
    %33 = arith.cmpi slt, %31, %32 : vector<1x256xi32>
    %34 = arith.andi %29, %33 : vector<1x256xi1>
    %c1_i32_9 = arith.constant 1 : i32
    %35 = vector.broadcast %c1_i32_9 : i32 to vector<1x256xi32>
    %36 = arith.addi %16, %35 : vector<1x256xi32>
    %c0_i32_10 = arith.constant 0 : i32
    %37 = vector.broadcast %c0_i32_10 : i32 to vector<1x256xi32>
    %38 = arith.cmpi sge, %36, %37 : vector<1x256xi32>
    %c1_i32_11 = arith.constant 1 : i32
    %39 = vector.broadcast %c1_i32_11 : i32 to vector<1x256xi32>
    %40 = arith.addi %16, %39 : vector<1x256xi32>
    %c16_i32_12 = arith.constant 16 : i32
    %41 = vector.broadcast %c16_i32_12 : i32 to vector<1x256xi32>
    %42 = arith.cmpi slt, %40, %41 : vector<1x256xi32>
    %43 = arith.andi %38, %42 : vector<1x256xi1>
    %c2_i32 = arith.constant 2 : i32
    %44 = vector.broadcast %c2_i32 : i32 to vector<1x256xi32>
    %45 = arith.addi %16, %44 : vector<1x256xi32>
    %c0_i32_13 = arith.constant 0 : i32
    %46 = vector.broadcast %c0_i32_13 : i32 to vector<1x256xi32>
    %47 = arith.cmpi sge, %45, %46 : vector<1x256xi32>
    %c2_i32_14 = arith.constant 2 : i32
    %48 = vector.broadcast %c2_i32_14 : i32 to vector<1x256xi32>
    %49 = arith.addi %16, %48 : vector<1x256xi32>
    %c16_i32_15 = arith.constant 16 : i32
    %50 = vector.broadcast %c16_i32_15 : i32 to vector<1x256xi32>
    %51 = arith.cmpi slt, %49, %50 : vector<1x256xi32>
    %52 = arith.andi %47, %51 : vector<1x256xi1>
    %c0 = arith.constant 0 : index
    %c0_16 = arith.constant 0 : index
    %c0_17 = arith.constant 0 : index
    %53 = vector.load %arg1[%c0, %c0_16, %c0_17] : memref<1x11x256xf32, #tpu.memory_space<vmem>>, vector<1x11x256xf32>
    %54 = vector.shape_cast %53 : vector<1x11x256xf32> to vector<11x256xf32>
    %55 = vector.extract_strided_slice %54 {offsets = [0, 0], sizes = [7, 256], strides = [1, 1]} : vector<11x256xf32> to vector<7x256xf32>
    %56 = arith.mulf %55, %55 : vector<7x256xf32>
    %57 = tpu.concatenate %55, %56 in 0 : vector<7x256xf32>, vector<7x256xf32> -> vector<14x256xf32>
    %58 = arith.truncf %57 : vector<14x256xf32> to vector<14x256xbf16>
    %cst = arith.constant 0.000000e+00 : f32
    %59 = vector.broadcast %cst : f32 to vector<14x256xf32>
    %cst_18 = arith.constant 0.000000e+00 : bf16
    %60 = vector.broadcast %cst_18 : bf16 to vector<14x34xbf16>
    %61 = vector.extract_strided_slice %58 {offsets = [0, 0], sizes = [14, 222], strides = [1, 1]} : vector<14x256xbf16> to vector<14x222xbf16>
    %62 = tpu.concatenate %60, %61 in 1 : vector<14x34xbf16>, vector<14x222xbf16> -> vector<14x256xbf16>
    %cst_19 = arith.constant 0.000000e+00 : bf16
    %63 = vector.broadcast %cst_19 : bf16 to vector<14x256xbf16>
    %64 = vector.shape_cast %25 : vector<1x256xi1> to vector<1x256xi1>
    %65 = vector.broadcast %64 : vector<1x256xi1> to vector<14x256xi1>
    %66 = arith.select %65, %62, %63 : vector<14x256xi1>, vector<14x256xbf16>
    %c0_20 = arith.constant 0 : index
    %c0_21 = arith.constant 0 : index
    %c0_22 = arith.constant 0 : index
    %67 = vector.load %arg2[%c0_20, %c0_21, %c0_22] : memref<25x14x14xbf16, #tpu.memory_space<vmem>>, vector<1x14x14xbf16>
    %68 = vector.shape_cast %67 : vector<1x14x14xbf16> to vector<14x14xbf16>
    %cst_23 = arith.constant dense<0.000000e+00> : vector<14x256xf32>
    %69 = tpu.matmul %68, %66, %cst_23 {dimension_numbers = #tpu.dot_dimension_numbers<[1], [0], [0], [1], [0, 0, 1, 1], [], []>} : vector<14x14xbf16>, vector<14x256xbf16>, vector<14x256xf32> -> vector<14x256xf32>
    %70 = arith.addf %59, %69 : vector<14x256xf32>
    %cst_24 = arith.constant 0.000000e+00 : bf16
    %71 = vector.broadcast %cst_24 : bf16 to vector<14x33xbf16>
    %72 = vector.extract_strided_slice %58 {offsets = [0, 0], sizes = [14, 223], strides = [1, 1]} : vector<14x256xbf16> to vector<14x223xbf16>
    %73 = tpu.concatenate %71, %72 in 1 : vector<14x33xbf16>, vector<14x223xbf16> -> vector<14x256xbf16>
    %cst_25 = arith.constant 0.000000e+00 : bf16
    %74 = vector.broadcast %cst_25 : bf16 to vector<14x256xbf16>
    %75 = vector.shape_cast %34 : vector<1x256xi1> to vector<1x256xi1>
    %76 = vector.broadcast %75 : vector<1x256xi1> to vector<14x256xi1>
    %77 = arith.select %76, %73, %74 : vector<14x256xi1>, vector<14x256xbf16>
    %c1 = arith.constant 1 : index
    %c0_26 = arith.constant 0 : index
    %c0_27 = arith.constant 0 : index
    %78 = vector.load %arg2[%c1, %c0_26, %c0_27] : memref<25x14x14xbf16, #tpu.memory_space<vmem>>, vector<1x14x14xbf16>
    %79 = vector.shape_cast %78 : vector<1x14x14xbf16> to vector<14x14xbf16>
    %cst_28 = arith.constant dense<0.000000e+00> : vector<14x256xf32>
    %80 = tpu.matmul %79, %77, %cst_28 {dimension_numbers = #tpu.dot_dimension_numbers<[1], [0], [0], [1], [0, 0, 1, 1], [], []>} : vector<14x14xbf16>, vector<14x256xbf16>, vector<14x256xf32> -> vector<14x256xf32>
    %81 = arith.addf %70, %80 : vector<14x256xf32>
    %cst_29 = arith.constant 0.000000e+00 : bf16
    %82 = vector.broadcast %cst_29 : bf16 to vector<14x32xbf16>
    %83 = vector.extract_strided_slice %58 {offsets = [0, 0], sizes = [14, 224], strides = [1, 1]} : vector<14x256xbf16> to vector<14x224xbf16>
    %84 = tpu.concatenate %82, %83 in 1 : vector<14x32xbf16>, vector<14x224xbf16> -> vector<14x256xbf16>
    %c2 = arith.constant 2 : index
    %c0_30 = arith.constant 0 : index
    %c0_31 = arith.constant 0 : index
    %85 = vector.load %arg2[%c2, %c0_30, %c0_31] : memref<25x14x14xbf16, #tpu.memory_space<vmem>>, vector<1x14x14xbf16>
    %86 = vector.shape_cast %85 : vector<1x14x14xbf16> to vector<14x14xbf16>
    %cst_32 = arith.constant dense<0.000000e+00> : vector<14x256xf32>
    %87 = tpu.matmul %86, %84, %cst_32 {dimension_numbers = #tpu.dot_dimension_numbers<[1], [0], [0], [1], [0, 0, 1, 1], [], []>} : vector<14x14xbf16>, vector<14x256xbf16>, vector<14x256xf32> -> vector<14x256xf32>
    %88 = arith.addf %81, %87 : vector<14x256xf32>
    %cst_33 = arith.constant 0.000000e+00 : bf16
    %89 = vector.broadcast %cst_33 : bf16 to vector<14x31xbf16>
    %90 = vector.extract_strided_slice %58 {offsets = [0, 0], sizes = [14, 225], strides = [1, 1]} : vector<14x256xbf16> to vector<14x225xbf16>
    %91 = tpu.concatenate %89, %90 in 1 : vector<14x31xbf16>, vector<14x225xbf16> -> vector<14x256xbf16>
    %cst_34 = arith.constant 0.000000e+00 : bf16
    %92 = vector.broadcast %cst_34 : bf16 to vector<14x256xbf16>
    %93 = vector.shape_cast %43 : vector<1x256xi1> to vector<1x256xi1>
    %94 = vector.broadcast %93 : vector<1x256xi1> to vector<14x256xi1>
    %95 = arith.select %94, %91, %92 : vector<14x256xi1>, vector<14x256xbf16>
    %c3 = arith.constant 3 : index
    %c0_35 = arith.constant 0 : index
    %c0_36 = arith.constant 0 : index
    %96 = vector.load %arg2[%c3, %c0_35, %c0_36] : memref<25x14x14xbf16, #tpu.memory_space<vmem>>, vector<1x14x14xbf16>
    %97 = vector.shape_cast %96 : vector<1x14x14xbf16> to vector<14x14xbf16>
    %cst_37 = arith.constant dense<0.000000e+00> : vector<14x256xf32>
    %98 = tpu.matmul %97, %95, %cst_37 {dimension_numbers = #tpu.dot_dimension_numbers<[1], [0], [0], [1], [0, 0, 1, 1], [], []>} : vector<14x14xbf16>, vector<14x256xbf16>, vector<14x256xf32> -> vector<14x256xf32>
    %99 = arith.addf %88, %98 : vector<14x256xf32>
    %cst_38 = arith.constant 0.000000e+00 : bf16
    %100 = vector.broadcast %cst_38 : bf16 to vector<14x30xbf16>
    %101 = vector.extract_strided_slice %58 {offsets = [0, 0], sizes = [14, 226], strides = [1, 1]} : vector<14x256xbf16> to vector<14x226xbf16>
    %102 = tpu.concatenate %100, %101 in 1 : vector<14x30xbf16>, vector<14x226xbf16> -> vector<14x256xbf16>
    %cst_39 = arith.constant 0.000000e+00 : bf16
    %103 = vector.broadcast %cst_39 : bf16 to vector<14x256xbf16>
    %104 = vector.shape_cast %52 : vector<1x256xi1> to vector<1x256xi1>
    %105 = vector.broadcast %104 : vector<1x256xi1> to vector<14x256xi1>
    %106 = arith.select %105, %102, %103 : vector<14x256xi1>, vector<14x256xbf16>
    %c4 = arith.constant 4 : index
    %c0_40 = arith.constant 0 : index
    %c0_41 = arith.constant 0 : index
    %107 = vector.load %arg2[%c4, %c0_40, %c0_41] : memref<25x14x14xbf16, #tpu.memory_space<vmem>>, vector<1x14x14xbf16>
    %108 = vector.shape_cast %107 : vector<1x14x14xbf16> to vector<14x14xbf16>
    %cst_42 = arith.constant dense<0.000000e+00> : vector<14x256xf32>
    %109 = tpu.matmul %108, %106, %cst_42 {dimension_numbers = #tpu.dot_dimension_numbers<[1], [0], [0], [1], [0, 0, 1, 1], [], []>} : vector<14x14xbf16>, vector<14x256xbf16>, vector<14x256xf32> -> vector<14x256xf32>
    %110 = arith.addf %99, %109 : vector<14x256xf32>
    %cst_43 = arith.constant 0.000000e+00 : bf16
    %111 = vector.broadcast %cst_43 : bf16 to vector<14x18xbf16>
    %112 = vector.extract_strided_slice %58 {offsets = [0, 0], sizes = [14, 238], strides = [1, 1]} : vector<14x256xbf16> to vector<14x238xbf16>
    %113 = tpu.concatenate %111, %112 in 1 : vector<14x18xbf16>, vector<14x238xbf16> -> vector<14x256xbf16>
    %cst_44 = arith.constant 0.000000e+00 : bf16
    %114 = vector.broadcast %cst_44 : bf16 to vector<14x256xbf16>
    %115 = vector.shape_cast %25 : vector<1x256xi1> to vector<1x256xi1>
    %116 = vector.broadcast %115 : vector<1x256xi1> to vector<14x256xi1>
    %117 = arith.select %116, %113, %114 : vector<14x256xi1>, vector<14x256xbf16>
    %c5 = arith.constant 5 : index
    %c0_45 = arith.constant 0 : index
    %c0_46 = arith.constant 0 : index
    %118 = vector.load %arg2[%c5, %c0_45, %c0_46] : memref<25x14x14xbf16, #tpu.memory_space<vmem>>, vector<1x14x14xbf16>
    %119 = vector.shape_cast %118 : vector<1x14x14xbf16> to vector<14x14xbf16>
    %cst_47 = arith.constant dense<0.000000e+00> : vector<14x256xf32>
    %120 = tpu.matmul %119, %117, %cst_47 {dimension_numbers = #tpu.dot_dimension_numbers<[1], [0], [0], [1], [0, 0, 1, 1], [], []>} : vector<14x14xbf16>, vector<14x256xbf16>, vector<14x256xf32> -> vector<14x256xf32>
    %121 = arith.addf %110, %120 : vector<14x256xf32>
    %cst_48 = arith.constant 0.000000e+00 : bf16
    %122 = vector.broadcast %cst_48 : bf16 to vector<14x17xbf16>
    %123 = vector.extract_strided_slice %58 {offsets = [0, 0], sizes = [14, 239], strides = [1, 1]} : vector<14x256xbf16> to vector<14x239xbf16>
    %124 = tpu.concatenate %122, %123 in 1 : vector<14x17xbf16>, vector<14x239xbf16> -> vector<14x256xbf16>
    %cst_49 = arith.constant 0.000000e+00 : bf16
    %125 = vector.broadcast %cst_49 : bf16 to vector<14x256xbf16>
    %126 = vector.shape_cast %34 : vector<1x256xi1> to vector<1x256xi1>
    %127 = vector.broadcast %126 : vector<1x256xi1> to vector<14x256xi1>
    %128 = arith.select %127, %124, %125 : vector<14x256xi1>, vector<14x256xbf16>
    %c6 = arith.constant 6 : index
    %c0_50 = arith.constant 0 : index
    %c0_51 = arith.constant 0 : index
    %129 = vector.load %arg2[%c6, %c0_50, %c0_51] : memref<25x14x14xbf16, #tpu.memory_space<vmem>>, vector<1x14x14xbf16>
    %130 = vector.shape_cast %129 : vector<1x14x14xbf16> to vector<14x14xbf16>
    %cst_52 = arith.constant dense<0.000000e+00> : vector<14x256xf32>
    %131 = tpu.matmul %130, %128, %cst_52 {dimension_numbers = #tpu.dot_dimension_numbers<[1], [0], [0], [1], [0, 0, 1, 1], [], []>} : vector<14x14xbf16>, vector<14x256xbf16>, vector<14x256xf32> -> vector<14x256xf32>
    %132 = arith.addf %121, %131 : vector<14x256xf32>
    %cst_53 = arith.constant 0.000000e+00 : bf16
    %133 = vector.broadcast %cst_53 : bf16 to vector<14x16xbf16>
    %134 = vector.extract_strided_slice %58 {offsets = [0, 0], sizes = [14, 240], strides = [1, 1]} : vector<14x256xbf16> to vector<14x240xbf16>
    %135 = tpu.concatenate %133, %134 in 1 : vector<14x16xbf16>, vector<14x240xbf16> -> vector<14x256xbf16>
    %c7 = arith.constant 7 : index
    %c0_54 = arith.constant 0 : index
    %c0_55 = arith.constant 0 : index
    %136 = vector.load %arg2[%c7, %c0_54, %c0_55] : memref<25x14x14xbf16, #tpu.memory_space<vmem>>, vector<1x14x14xbf16>
    %137 = vector.shape_cast %136 : vector<1x14x14xbf16> to vector<14x14xbf16>
    %cst_56 = arith.constant dense<0.000000e+00> : vector<14x256xf32>
    %138 = tpu.matmul %137, %135, %cst_56 {dimension_numbers = #tpu.dot_dimension_numbers<[1], [0], [0], [1], [0, 0, 1, 1], [], []>} : vector<14x14xbf16>, vector<14x256xbf16>, vector<14x256xf32> -> vector<14x256xf32>
    %139 = arith.addf %132, %138 : vector<14x256xf32>
    %cst_57 = arith.constant 0.000000e+00 : bf16
    %140 = vector.broadcast %cst_57 : bf16 to vector<14x15xbf16>
    %141 = vector.extract_strided_slice %58 {offsets = [0, 0], sizes = [14, 241], strides = [1, 1]} : vector<14x256xbf16> to vector<14x241xbf16>
    %142 = tpu.concatenate %140, %141 in 1 : vector<14x15xbf16>, vector<14x241xbf16> -> vector<14x256xbf16>
    %cst_58 = arith.constant 0.000000e+00 : bf16
    %143 = vector.broadcast %cst_58 : bf16 to vector<14x256xbf16>
    %144 = vector.shape_cast %43 : vector<1x256xi1> to vector<1x256xi1>
    %145 = vector.broadcast %144 : vector<1x256xi1> to vector<14x256xi1>
    %146 = arith.select %145, %142, %143 : vector<14x256xi1>, vector<14x256xbf16>
    %c8 = arith.constant 8 : index
    %c0_59 = arith.constant 0 : index
    %c0_60 = arith.constant 0 : index
    %147 = vector.load %arg2[%c8, %c0_59, %c0_60] : memref<25x14x14xbf16, #tpu.memory_space<vmem>>, vector<1x14x14xbf16>
    %148 = vector.shape_cast %147 : vector<1x14x14xbf16> to vector<14x14xbf16>
    %cst_61 = arith.constant dense<0.000000e+00> : vector<14x256xf32>
    %149 = tpu.matmul %148, %146, %cst_61 {dimension_numbers = #tpu.dot_dimension_numbers<[1], [0], [0], [1], [0, 0, 1, 1], [], []>} : vector<14x14xbf16>, vector<14x256xbf16>, vector<14x256xf32> -> vector<14x256xf32>
    %150 = arith.addf %139, %149 : vector<14x256xf32>
    %cst_62 = arith.constant 0.000000e+00 : bf16
    %151 = vector.broadcast %cst_62 : bf16 to vector<14x14xbf16>
    %152 = vector.extract_strided_slice %58 {offsets = [0, 0], sizes = [14, 242], strides = [1, 1]} : vector<14x256xbf16> to vector<14x242xbf16>
    %153 = tpu.concatenate %151, %152 in 1 : vector<14x14xbf16>, vector<14x242xbf16> -> vector<14x256xbf16>
    %cst_63 = arith.constant 0.000000e+00 : bf16
    %154 = vector.broadcast %cst_63 : bf16 to vector<14x256xbf16>
    %155 = vector.shape_cast %52 : vector<1x256xi1> to vector<1x256xi1>
    %156 = vector.broadcast %155 : vector<1x256xi1> to vector<14x256xi1>
    %157 = arith.select %156, %153, %154 : vector<14x256xi1>, vector<14x256xbf16>
    %c9 = arith.constant 9 : index
    %c0_64 = arith.constant 0 : index
    %c0_65 = arith.constant 0 : index
    %158 = vector.load %arg2[%c9, %c0_64, %c0_65] : memref<25x14x14xbf16, #tpu.memory_space<vmem>>, vector<1x14x14xbf16>
    %159 = vector.shape_cast %158 : vector<1x14x14xbf16> to vector<14x14xbf16>
    %cst_66 = arith.constant dense<0.000000e+00> : vector<14x256xf32>
    %160 = tpu.matmul %159, %157, %cst_66 {dimension_numbers = #tpu.dot_dimension_numbers<[1], [0], [0], [1], [0, 0, 1, 1], [], []>} : vector<14x14xbf16>, vector<14x256xbf16>, vector<14x256xf32> -> vector<14x256xf32>
    %161 = arith.addf %150, %160 : vector<14x256xf32>
    %cst_67 = arith.constant 0.000000e+00 : bf16
    %162 = vector.broadcast %cst_67 : bf16 to vector<14x2xbf16>
    %163 = vector.extract_strided_slice %58 {offsets = [0, 0], sizes = [14, 254], strides = [1, 1]} : vector<14x256xbf16> to vector<14x254xbf16>
    %164 = tpu.concatenate %162, %163 in 1 : vector<14x2xbf16>, vector<14x254xbf16> -> vector<14x256xbf16>
    %cst_68 = arith.constant 0.000000e+00 : bf16
    %165 = vector.broadcast %cst_68 : bf16 to vector<14x256xbf16>
    %166 = vector.shape_cast %25 : vector<1x256xi1> to vector<1x256xi1>
    %167 = vector.broadcast %166 : vector<1x256xi1> to vector<14x256xi1>
    %168 = arith.select %167, %164, %165 : vector<14x256xi1>, vector<14x256xbf16>
    %c10 = arith.constant 10 : index
    %c0_69 = arith.constant 0 : index
    %c0_70 = arith.constant 0 : index
    %169 = vector.load %arg2[%c10, %c0_69, %c0_70] : memref<25x14x14xbf16, #tpu.memory_space<vmem>>, vector<1x14x14xbf16>
    %170 = vector.shape_cast %169 : vector<1x14x14xbf16> to vector<14x14xbf16>
    %cst_71 = arith.constant dense<0.000000e+00> : vector<14x256xf32>
    %171 = tpu.matmul %170, %168, %cst_71 {dimension_numbers = #tpu.dot_dimension_numbers<[1], [0], [0], [1], [0, 0, 1, 1], [], []>} : vector<14x14xbf16>, vector<14x256xbf16>, vector<14x256xf32> -> vector<14x256xf32>
    %172 = arith.addf %161, %171 : vector<14x256xf32>
    %cst_72 = arith.constant 0.000000e+00 : bf16
    %173 = vector.broadcast %cst_72 : bf16 to vector<14x1xbf16>
    %174 = vector.extract_strided_slice %58 {offsets = [0, 0], sizes = [14, 255], strides = [1, 1]} : vector<14x256xbf16> to vector<14x255xbf16>
    %175 = tpu.concatenate %173, %174 in 1 : vector<14x1xbf16>, vector<14x255xbf16> -> vector<14x256xbf16>
    %cst_73 = arith.constant 0.000000e+00 : bf16
    %176 = vector.broadcast %cst_73 : bf16 to vector<14x256xbf16>
    %177 = vector.shape_cast %34 : vector<1x256xi1> to vector<1x256xi1>
    %178 = vector.broadcast %177 : vector<1x256xi1> to vector<14x256xi1>
    %179 = arith.select %178, %175, %176 : vector<14x256xi1>, vector<14x256xbf16>
    %c11 = arith.constant 11 : index
    %c0_74 = arith.constant 0 : index
    %c0_75 = arith.constant 0 : index
    %180 = vector.load %arg2[%c11, %c0_74, %c0_75] : memref<25x14x14xbf16, #tpu.memory_space<vmem>>, vector<1x14x14xbf16>
    %181 = vector.shape_cast %180 : vector<1x14x14xbf16> to vector<14x14xbf16>
    %cst_76 = arith.constant dense<0.000000e+00> : vector<14x256xf32>
    %182 = tpu.matmul %181, %179, %cst_76 {dimension_numbers = #tpu.dot_dimension_numbers<[1], [0], [0], [1], [0, 0, 1, 1], [], []>} : vector<14x14xbf16>, vector<14x256xbf16>, vector<14x256xf32> -> vector<14x256xf32>
    %183 = arith.addf %172, %182 : vector<14x256xf32>
    %c12 = arith.constant 12 : index
    %c0_77 = arith.constant 0 : index
    %c0_78 = arith.constant 0 : index
    %184 = vector.load %arg2[%c12, %c0_77, %c0_78] : memref<25x14x14xbf16, #tpu.memory_space<vmem>>, vector<1x14x14xbf16>
    %185 = vector.shape_cast %184 : vector<1x14x14xbf16> to vector<14x14xbf16>
    %cst_79 = arith.constant dense<0.000000e+00> : vector<14x256xf32>
    %186 = tpu.matmul %185, %58, %cst_79 {dimension_numbers = #tpu.dot_dimension_numbers<[1], [0], [0], [1], [0, 0, 1, 1], [], []>} : vector<14x14xbf16>, vector<14x256xbf16>, vector<14x256xf32> -> vector<14x256xf32>
    %187 = arith.addf %183, %186 : vector<14x256xf32>
    %188 = vector.extract_strided_slice %58 {offsets = [0, 1], sizes = [14, 255], strides = [1, 1]} : vector<14x256xbf16> to vector<14x255xbf16>
    %cst_80 = arith.constant 0.000000e+00 : bf16
    %189 = vector.broadcast %cst_80 : bf16 to vector<14x1xbf16>
    %190 = tpu.concatenate %188, %189 in 1 : vector<14x255xbf16>, vector<14x1xbf16> -> vector<14x256xbf16>
    %cst_81 = arith.constant 0.000000e+00 : bf16
    %191 = vector.broadcast %cst_81 : bf16 to vector<14x256xbf16>
    %192 = vector.shape_cast %43 : vector<1x256xi1> to vector<1x256xi1>
    %193 = vector.broadcast %192 : vector<1x256xi1> to vector<14x256xi1>
    %194 = arith.select %193, %190, %191 : vector<14x256xi1>, vector<14x256xbf16>
    %c13 = arith.constant 13 : index
    %c0_82 = arith.constant 0 : index
    %c0_83 = arith.constant 0 : index
    %195 = vector.load %arg2[%c13, %c0_82, %c0_83] : memref<25x14x14xbf16, #tpu.memory_space<vmem>>, vector<1x14x14xbf16>
    %196 = vector.shape_cast %195 : vector<1x14x14xbf16> to vector<14x14xbf16>
    %cst_84 = arith.constant dense<0.000000e+00> : vector<14x256xf32>
    %197 = tpu.matmul %196, %194, %cst_84 {dimension_numbers = #tpu.dot_dimension_numbers<[1], [0], [0], [1], [0, 0, 1, 1], [], []>} : vector<14x14xbf16>, vector<14x256xbf16>, vector<14x256xf32> -> vector<14x256xf32>
    %198 = arith.addf %187, %197 : vector<14x256xf32>
    %199 = vector.extract_strided_slice %58 {offsets = [0, 2], sizes = [14, 254], strides = [1, 1]} : vector<14x256xbf16> to vector<14x254xbf16>
    %cst_85 = arith.constant 0.000000e+00 : bf16
    %200 = vector.broadcast %cst_85 : bf16 to vector<14x2xbf16>
    %201 = tpu.concatenate %199, %200 in 1 : vector<14x254xbf16>, vector<14x2xbf16> -> vector<14x256xbf16>
    %cst_86 = arith.constant 0.000000e+00 : bf16
    %202 = vector.broadcast %cst_86 : bf16 to vector<14x256xbf16>
    %203 = vector.shape_cast %52 : vector<1x256xi1> to vector<1x256xi1>
    %204 = vector.broadcast %203 : vector<1x256xi1> to vector<14x256xi1>
    %205 = arith.select %204, %201, %202 : vector<14x256xi1>, vector<14x256xbf16>
    %c14 = arith.constant 14 : index
    %c0_87 = arith.constant 0 : index
    %c0_88 = arith.constant 0 : index
    %206 = vector.load %arg2[%c14, %c0_87, %c0_88] : memref<25x14x14xbf16, #tpu.memory_space<vmem>>, vector<1x14x14xbf16>
    %207 = vector.shape_cast %206 : vector<1x14x14xbf16> to vector<14x14xbf16>
    %cst_89 = arith.constant dense<0.000000e+00> : vector<14x256xf32>
    %208 = tpu.matmul %207, %205, %cst_89 {dimension_numbers = #tpu.dot_dimension_numbers<[1], [0], [0], [1], [0, 0, 1, 1], [], []>} : vector<14x14xbf16>, vector<14x256xbf16>, vector<14x256xf32> -> vector<14x256xf32>
    %209 = arith.addf %198, %208 : vector<14x256xf32>
    %210 = vector.extract_strided_slice %58 {offsets = [0, 14], sizes = [14, 242], strides = [1, 1]} : vector<14x256xbf16> to vector<14x242xbf16>
    %cst_90 = arith.constant 0.000000e+00 : bf16
    %211 = vector.broadcast %cst_90 : bf16 to vector<14x14xbf16>
    %212 = tpu.concatenate %210, %211 in 1 : vector<14x242xbf16>, vector<14x14xbf16> -> vector<14x256xbf16>
    %cst_91 = arith.constant 0.000000e+00 : bf16
    %213 = vector.broadcast %cst_91 : bf16 to vector<14x256xbf16>
    %214 = vector.shape_cast %25 : vector<1x256xi1> to vector<1x256xi1>
    %215 = vector.broadcast %214 : vector<1x256xi1> to vector<14x256xi1>
    %216 = arith.select %215, %212, %213 : vector<14x256xi1>, vector<14x256xbf16>
    %c15 = arith.constant 15 : index
    %c0_92 = arith.constant 0 : index
    %c0_93 = arith.constant 0 : index
    %217 = vector.load %arg2[%c15, %c0_92, %c0_93] : memref<25x14x14xbf16, #tpu.memory_space<vmem>>, vector<1x14x14xbf16>
    %218 = vector.shape_cast %217 : vector<1x14x14xbf16> to vector<14x14xbf16>
    %cst_94 = arith.constant dense<0.000000e+00> : vector<14x256xf32>
    %219 = tpu.matmul %218, %216, %cst_94 {dimension_numbers = #tpu.dot_dimension_numbers<[1], [0], [0], [1], [0, 0, 1, 1], [], []>} : vector<14x14xbf16>, vector<14x256xbf16>, vector<14x256xf32> -> vector<14x256xf32>
    %220 = arith.addf %209, %219 : vector<14x256xf32>
    %221 = vector.extract_strided_slice %58 {offsets = [0, 15], sizes = [14, 241], strides = [1, 1]} : vector<14x256xbf16> to vector<14x241xbf16>
    %cst_95 = arith.constant 0.000000e+00 : bf16
    %222 = vector.broadcast %cst_95 : bf16 to vector<14x15xbf16>
    %223 = tpu.concatenate %221, %222 in 1 : vector<14x241xbf16>, vector<14x15xbf16> -> vector<14x256xbf16>
    %cst_96 = arith.constant 0.000000e+00 : bf16
    %224 = vector.broadcast %cst_96 : bf16 to vector<14x256xbf16>
    %225 = vector.shape_cast %34 : vector<1x256xi1> to vector<1x256xi1>
    %226 = vector.broadcast %225 : vector<1x256xi1> to vector<14x256xi1>
    %227 = arith.select %226, %223, %224 : vector<14x256xi1>, vector<14x256xbf16>
    %c16 = arith.constant 16 : index
    %c0_97 = arith.constant 0 : index
    %c0_98 = arith.constant 0 : index
    %228 = vector.load %arg2[%c16, %c0_97, %c0_98] : memref<25x14x14xbf16, #tpu.memory_space<vmem>>, vector<1x14x14xbf16>
    %229 = vector.shape_cast %228 : vector<1x14x14xbf16> to vector<14x14xbf16>
    %cst_99 = arith.constant dense<0.000000e+00> : vector<14x256xf32>
    %230 = tpu.matmul %229, %227, %cst_99 {dimension_numbers = #tpu.dot_dimension_numbers<[1], [0], [0], [1], [0, 0, 1, 1], [], []>} : vector<14x14xbf16>, vector<14x256xbf16>, vector<14x256xf32> -> vector<14x256xf32>
    %231 = arith.addf %220, %230 : vector<14x256xf32>
    %232 = vector.extract_strided_slice %58 {offsets = [0, 16], sizes = [14, 240], strides = [1, 1]} : vector<14x256xbf16> to vector<14x240xbf16>
    %cst_100 = arith.constant 0.000000e+00 : bf16
    %233 = vector.broadcast %cst_100 : bf16 to vector<14x16xbf16>
    %234 = tpu.concatenate %232, %233 in 1 : vector<14x240xbf16>, vector<14x16xbf16> -> vector<14x256xbf16>
    %c17 = arith.constant 17 : index
    %c0_101 = arith.constant 0 : index
    %c0_102 = arith.constant 0 : index
    %235 = vector.load %arg2[%c17, %c0_101, %c0_102] : memref<25x14x14xbf16, #tpu.memory_space<vmem>>, vector<1x14x14xbf16>
    %236 = vector.shape_cast %235 : vector<1x14x14xbf16> to vector<14x14xbf16>
    %cst_103 = arith.constant dense<0.000000e+00> : vector<14x256xf32>
    %237 = tpu.matmul %236, %234, %cst_103 {dimension_numbers = #tpu.dot_dimension_numbers<[1], [0], [0], [1], [0, 0, 1, 1], [], []>} : vector<14x14xbf16>, vector<14x256xbf16>, vector<14x256xf32> -> vector<14x256xf32>
    %238 = arith.addf %231, %237 : vector<14x256xf32>
    %239 = vector.extract_strided_slice %58 {offsets = [0, 17], sizes = [14, 239], strides = [1, 1]} : vector<14x256xbf16> to vector<14x239xbf16>
    %cst_104 = arith.constant 0.000000e+00 : bf16
    %240 = vector.broadcast %cst_104 : bf16 to vector<14x17xbf16>
    %241 = tpu.concatenate %239, %240 in 1 : vector<14x239xbf16>, vector<14x17xbf16> -> vector<14x256xbf16>
    %cst_105 = arith.constant 0.000000e+00 : bf16
    %242 = vector.broadcast %cst_105 : bf16 to vector<14x256xbf16>
    %243 = vector.shape_cast %43 : vector<1x256xi1> to vector<1x256xi1>
    %244 = vector.broadcast %243 : vector<1x256xi1> to vector<14x256xi1>
    %245 = arith.select %244, %241, %242 : vector<14x256xi1>, vector<14x256xbf16>
    %c18 = arith.constant 18 : index
    %c0_106 = arith.constant 0 : index
    %c0_107 = arith.constant 0 : index
    %246 = vector.load %arg2[%c18, %c0_106, %c0_107] : memref<25x14x14xbf16, #tpu.memory_space<vmem>>, vector<1x14x14xbf16>
    %247 = vector.shape_cast %246 : vector<1x14x14xbf16> to vector<14x14xbf16>
    %cst_108 = arith.constant dense<0.000000e+00> : vector<14x256xf32>
    %248 = tpu.matmul %247, %245, %cst_108 {dimension_numbers = #tpu.dot_dimension_numbers<[1], [0], [0], [1], [0, 0, 1, 1], [], []>} : vector<14x14xbf16>, vector<14x256xbf16>, vector<14x256xf32> -> vector<14x256xf32>
    %249 = arith.addf %238, %248 : vector<14x256xf32>
    %250 = vector.extract_strided_slice %58 {offsets = [0, 18], sizes = [14, 238], strides = [1, 1]} : vector<14x256xbf16> to vector<14x238xbf16>
    %cst_109 = arith.constant 0.000000e+00 : bf16
    %251 = vector.broadcast %cst_109 : bf16 to vector<14x18xbf16>
    %252 = tpu.concatenate %250, %251 in 1 : vector<14x238xbf16>, vector<14x18xbf16> -> vector<14x256xbf16>
    %cst_110 = arith.constant 0.000000e+00 : bf16
    %253 = vector.broadcast %cst_110 : bf16 to vector<14x256xbf16>
    %254 = vector.shape_cast %52 : vector<1x256xi1> to vector<1x256xi1>
    %255 = vector.broadcast %254 : vector<1x256xi1> to vector<14x256xi1>
    %256 = arith.select %255, %252, %253 : vector<14x256xi1>, vector<14x256xbf16>
    %c19 = arith.constant 19 : index
    %c0_111 = arith.constant 0 : index
    %c0_112 = arith.constant 0 : index
    %257 = vector.load %arg2[%c19, %c0_111, %c0_112] : memref<25x14x14xbf16, #tpu.memory_space<vmem>>, vector<1x14x14xbf16>
    %258 = vector.shape_cast %257 : vector<1x14x14xbf16> to vector<14x14xbf16>
    %cst_113 = arith.constant dense<0.000000e+00> : vector<14x256xf32>
    %259 = tpu.matmul %258, %256, %cst_113 {dimension_numbers = #tpu.dot_dimension_numbers<[1], [0], [0], [1], [0, 0, 1, 1], [], []>} : vector<14x14xbf16>, vector<14x256xbf16>, vector<14x256xf32> -> vector<14x256xf32>
    %260 = arith.addf %249, %259 : vector<14x256xf32>
    %261 = vector.extract_strided_slice %58 {offsets = [0, 30], sizes = [14, 226], strides = [1, 1]} : vector<14x256xbf16> to vector<14x226xbf16>
    %cst_114 = arith.constant 0.000000e+00 : bf16
    %262 = vector.broadcast %cst_114 : bf16 to vector<14x30xbf16>
    %263 = tpu.concatenate %261, %262 in 1 : vector<14x226xbf16>, vector<14x30xbf16> -> vector<14x256xbf16>
    %cst_115 = arith.constant 0.000000e+00 : bf16
    %264 = vector.broadcast %cst_115 : bf16 to vector<14x256xbf16>
    %265 = vector.shape_cast %25 : vector<1x256xi1> to vector<1x256xi1>
    %266 = vector.broadcast %265 : vector<1x256xi1> to vector<14x256xi1>
    %267 = arith.select %266, %263, %264 : vector<14x256xi1>, vector<14x256xbf16>
    %c20 = arith.constant 20 : index
    %c0_116 = arith.constant 0 : index
    %c0_117 = arith.constant 0 : index
    %268 = vector.load %arg2[%c20, %c0_116, %c0_117] : memref<25x14x14xbf16, #tpu.memory_space<vmem>>, vector<1x14x14xbf16>
    %269 = vector.shape_cast %268 : vector<1x14x14xbf16> to vector<14x14xbf16>
    %cst_118 = arith.constant dense<0.000000e+00> : vector<14x256xf32>
    %270 = tpu.matmul %269, %267, %cst_118 {dimension_numbers = #tpu.dot_dimension_numbers<[1], [0], [0], [1], [0, 0, 1, 1], [], []>} : vector<14x14xbf16>, vector<14x256xbf16>, vector<14x256xf32> -> vector<14x256xf32>
    %271 = arith.addf %260, %270 : vector<14x256xf32>
    %272 = vector.extract_strided_slice %58 {offsets = [0, 31], sizes = [14, 225], strides = [1, 1]} : vector<14x256xbf16> to vector<14x225xbf16>
    %cst_119 = arith.constant 0.000000e+00 : bf16
    %273 = vector.broadcast %cst_119 : bf16 to vector<14x31xbf16>
    %274 = tpu.concatenate %272, %273 in 1 : vector<14x225xbf16>, vector<14x31xbf16> -> vector<14x256xbf16>
    %cst_120 = arith.constant 0.000000e+00 : bf16
    %275 = vector.broadcast %cst_120 : bf16 to vector<14x256xbf16>
    %276 = vector.shape_cast %34 : vector<1x256xi1> to vector<1x256xi1>
    %277 = vector.broadcast %276 : vector<1x256xi1> to vector<14x256xi1>
    %278 = arith.select %277, %274, %275 : vector<14x256xi1>, vector<14x256xbf16>
    %c21 = arith.constant 21 : index
    %c0_121 = arith.constant 0 : index
    %c0_122 = arith.constant 0 : index
    %279 = vector.load %arg2[%c21, %c0_121, %c0_122] : memref<25x14x14xbf16, #tpu.memory_space<vmem>>, vector<1x14x14xbf16>
    %280 = vector.shape_cast %279 : vector<1x14x14xbf16> to vector<14x14xbf16>
    %cst_123 = arith.constant dense<0.000000e+00> : vector<14x256xf32>
    %281 = tpu.matmul %280, %278, %cst_123 {dimension_numbers = #tpu.dot_dimension_numbers<[1], [0], [0], [1], [0, 0, 1, 1], [], []>} : vector<14x14xbf16>, vector<14x256xbf16>, vector<14x256xf32> -> vector<14x256xf32>
    %282 = arith.addf %271, %281 : vector<14x256xf32>
    %283 = vector.extract_strided_slice %58 {offsets = [0, 32], sizes = [14, 224], strides = [1, 1]} : vector<14x256xbf16> to vector<14x224xbf16>
    %cst_124 = arith.constant 0.000000e+00 : bf16
    %284 = vector.broadcast %cst_124 : bf16 to vector<14x32xbf16>
    %285 = tpu.concatenate %283, %284 in 1 : vector<14x224xbf16>, vector<14x32xbf16> -> vector<14x256xbf16>
    %c22 = arith.constant 22 : index
    %c0_125 = arith.constant 0 : index
    %c0_126 = arith.constant 0 : index
    %286 = vector.load %arg2[%c22, %c0_125, %c0_126] : memref<25x14x14xbf16, #tpu.memory_space<vmem>>, vector<1x14x14xbf16>
    %287 = vector.shape_cast %286 : vector<1x14x14xbf16> to vector<14x14xbf16>
    %cst_127 = arith.constant dense<0.000000e+00> : vector<14x256xf32>
    %288 = tpu.matmul %287, %285, %cst_127 {dimension_numbers = #tpu.dot_dimension_numbers<[1], [0], [0], [1], [0, 0, 1, 1], [], []>} : vector<14x14xbf16>, vector<14x256xbf16>, vector<14x256xf32> -> vector<14x256xf32>
    %289 = arith.addf %282, %288 : vector<14x256xf32>
    %290 = vector.extract_strided_slice %58 {offsets = [0, 33], sizes = [14, 223], strides = [1, 1]} : vector<14x256xbf16> to vector<14x223xbf16>
    %cst_128 = arith.constant 0.000000e+00 : bf16
    %291 = vector.broadcast %cst_128 : bf16 to vector<14x33xbf16>
    %292 = tpu.concatenate %290, %291 in 1 : vector<14x223xbf16>, vector<14x33xbf16> -> vector<14x256xbf16>
    %cst_129 = arith.constant 0.000000e+00 : bf16
    %293 = vector.broadcast %cst_129 : bf16 to vector<14x256xbf16>
    %294 = vector.shape_cast %43 : vector<1x256xi1> to vector<1x256xi1>
    %295 = vector.broadcast %294 : vector<1x256xi1> to vector<14x256xi1>
    %296 = arith.select %295, %292, %293 : vector<14x256xi1>, vector<14x256xbf16>
    %c23 = arith.constant 23 : index
    %c0_130 = arith.constant 0 : index
    %c0_131 = arith.constant 0 : index
    %297 = vector.load %arg2[%c23, %c0_130, %c0_131] : memref<25x14x14xbf16, #tpu.memory_space<vmem>>, vector<1x14x14xbf16>
    %298 = vector.shape_cast %297 : vector<1x14x14xbf16> to vector<14x14xbf16>
    %cst_132 = arith.constant dense<0.000000e+00> : vector<14x256xf32>
    %299 = tpu.matmul %298, %296, %cst_132 {dimension_numbers = #tpu.dot_dimension_numbers<[1], [0], [0], [1], [0, 0, 1, 1], [], []>} : vector<14x14xbf16>, vector<14x256xbf16>, vector<14x256xf32> -> vector<14x256xf32>
    %300 = arith.addf %289, %299 : vector<14x256xf32>
    %301 = vector.extract_strided_slice %58 {offsets = [0, 34], sizes = [14, 222], strides = [1, 1]} : vector<14x256xbf16> to vector<14x222xbf16>
    %cst_133 = arith.constant 0.000000e+00 : bf16
    %302 = vector.broadcast %cst_133 : bf16 to vector<14x34xbf16>
    %303 = tpu.concatenate %301, %302 in 1 : vector<14x222xbf16>, vector<14x34xbf16> -> vector<14x256xbf16>
    %cst_134 = arith.constant 0.000000e+00 : bf16
    %304 = vector.broadcast %cst_134 : bf16 to vector<14x256xbf16>
    %305 = vector.shape_cast %52 : vector<1x256xi1> to vector<1x256xi1>
    %306 = vector.broadcast %305 : vector<1x256xi1> to vector<14x256xi1>
    %307 = arith.select %306, %303, %304 : vector<14x256xi1>, vector<14x256xbf16>
    %c24 = arith.constant 24 : index
    %c0_135 = arith.constant 0 : index
    %c0_136 = arith.constant 0 : index
    %308 = vector.load %arg2[%c24, %c0_135, %c0_136] : memref<25x14x14xbf16, #tpu.memory_space<vmem>>, vector<1x14x14xbf16>
    %309 = vector.shape_cast %308 : vector<1x14x14xbf16> to vector<14x14xbf16>
    %cst_137 = arith.constant dense<0.000000e+00> : vector<14x256xf32>
    %310 = tpu.matmul %309, %307, %cst_137 {dimension_numbers = #tpu.dot_dimension_numbers<[1], [0], [0], [1], [0, 0, 1, 1], [], []>} : vector<14x14xbf16>, vector<14x256xbf16>, vector<14x256xf32> -> vector<14x256xf32>
    %311 = arith.addf %300, %310 : vector<14x256xf32>
    %c0_138 = arith.constant 0 : index
    %c0_139 = arith.constant 0 : index
    %312 = vector.load %arg3[%c0_138, %c0_139] : memref<14x1xf32, #tpu.memory_space<vmem>>, vector<14x1xf32>
    %313 = vector.broadcast %312 : vector<14x1xf32> to vector<14x256xf32>
    %314 = arith.addf %311, %313 : vector<14x256xf32>
    %cst_140 = arith.constant 0.000000e+00 : f32
    %315 = vector.broadcast %cst_140 : f32 to vector<14x256xf32>
    %316 = arith.maximumf %314, %315 : vector<14x256xf32>
    %317 = arith.truncf %316 : vector<14x256xf32> to vector<14x256xbf16>
    %cst_141 = arith.constant 0.000000e+00 : f32
    %318 = vector.broadcast %cst_141 : f32 to vector<14x256xf32>
    %cst_142 = arith.constant 0.000000e+00 : bf16
    %319 = vector.broadcast %cst_142 : bf16 to vector<14x34xbf16>
    %320 = vector.extract_strided_slice %317 {offsets = [0, 0], sizes = [14, 222], strides = [1, 1]} : vector<14x256xbf16> to vector<14x222xbf16>
    %321 = tpu.concatenate %319, %320 in 1 : vector<14x34xbf16>, vector<14x222xbf16> -> vector<14x256xbf16>
    %cst_143 = arith.constant 0.000000e+00 : bf16
    %322 = vector.broadcast %cst_143 : bf16 to vector<14x256xbf16>
    %323 = vector.shape_cast %25 : vector<1x256xi1> to vector<1x256xi1>
    %324 = vector.broadcast %323 : vector<1x256xi1> to vector<14x256xi1>
    %325 = arith.select %324, %321, %322 : vector<14x256xi1>, vector<14x256xbf16>
    %c0_144 = arith.constant 0 : index
    %c0_145 = arith.constant 0 : index
    %c0_146 = arith.constant 0 : index
    %326 = vector.load %arg4[%c0_144, %c0_145, %c0_146] : memref<25x14x14xbf16, #tpu.memory_space<vmem>>, vector<1x14x14xbf16>
    %327 = vector.shape_cast %326 : vector<1x14x14xbf16> to vector<14x14xbf16>
    %cst_147 = arith.constant dense<0.000000e+00> : vector<14x256xf32>
    %328 = tpu.matmul %327, %325, %cst_147 {dimension_numbers = #tpu.dot_dimension_numbers<[1], [0], [0], [1], [0, 0, 1, 1], [], []>} : vector<14x14xbf16>, vector<14x256xbf16>, vector<14x256xf32> -> vector<14x256xf32>
    %329 = arith.addf %318, %328 : vector<14x256xf32>
    %cst_148 = arith.constant 0.000000e+00 : bf16
    %330 = vector.broadcast %cst_148 : bf16 to vector<14x33xbf16>
    %331 = vector.extract_strided_slice %317 {offsets = [0, 0], sizes = [14, 223], strides = [1, 1]} : vector<14x256xbf16> to vector<14x223xbf16>
    %332 = tpu.concatenate %330, %331 in 1 : vector<14x33xbf16>, vector<14x223xbf16> -> vector<14x256xbf16>
    %cst_149 = arith.constant 0.000000e+00 : bf16
    %333 = vector.broadcast %cst_149 : bf16 to vector<14x256xbf16>
    %334 = vector.shape_cast %34 : vector<1x256xi1> to vector<1x256xi1>
    %335 = vector.broadcast %334 : vector<1x256xi1> to vector<14x256xi1>
    %336 = arith.select %335, %332, %333 : vector<14x256xi1>, vector<14x256xbf16>
    %c1_150 = arith.constant 1 : index
    %c0_151 = arith.constant 0 : index
    %c0_152 = arith.constant 0 : index
    %337 = vector.load %arg4[%c1_150, %c0_151, %c0_152] : memref<25x14x14xbf16, #tpu.memory_space<vmem>>, vector<1x14x14xbf16>
    %338 = vector.shape_cast %337 : vector<1x14x14xbf16> to vector<14x14xbf16>
    %cst_153 = arith.constant dense<0.000000e+00> : vector<14x256xf32>
    %339 = tpu.matmul %338, %336, %cst_153 {dimension_numbers = #tpu.dot_dimension_numbers<[1], [0], [0], [1], [0, 0, 1, 1], [], []>} : vector<14x14xbf16>, vector<14x256xbf16>, vector<14x256xf32> -> vector<14x256xf32>
    %340 = arith.addf %329, %339 : vector<14x256xf32>
    %cst_154 = arith.constant 0.000000e+00 : bf16
    %341 = vector.broadcast %cst_154 : bf16 to vector<14x32xbf16>
    %342 = vector.extract_strided_slice %317 {offsets = [0, 0], sizes = [14, 224], strides = [1, 1]} : vector<14x256xbf16> to vector<14x224xbf16>
    %343 = tpu.concatenate %341, %342 in 1 : vector<14x32xbf16>, vector<14x224xbf16> -> vector<14x256xbf16>
    %c2_155 = arith.constant 2 : index
    %c0_156 = arith.constant 0 : index
    %c0_157 = arith.constant 0 : index
    %344 = vector.load %arg4[%c2_155, %c0_156, %c0_157] : memref<25x14x14xbf16, #tpu.memory_space<vmem>>, vector<1x14x14xbf16>
    %345 = vector.shape_cast %344 : vector<1x14x14xbf16> to vector<14x14xbf16>
    %cst_158 = arith.constant dense<0.000000e+00> : vector<14x256xf32>
    %346 = tpu.matmul %345, %343, %cst_158 {dimension_numbers = #tpu.dot_dimension_numbers<[1], [0], [0], [1], [0, 0, 1, 1], [], []>} : vector<14x14xbf16>, vector<14x256xbf16>, vector<14x256xf32> -> vector<14x256xf32>
    %347 = arith.addf %340, %346 : vector<14x256xf32>
    %cst_159 = arith.constant 0.000000e+00 : bf16
    %348 = vector.broadcast %cst_159 : bf16 to vector<14x31xbf16>
    %349 = vector.extract_strided_slice %317 {offsets = [0, 0], sizes = [14, 225], strides = [1, 1]} : vector<14x256xbf16> to vector<14x225xbf16>
    %350 = tpu.concatenate %348, %349 in 1 : vector<14x31xbf16>, vector<14x225xbf16> -> vector<14x256xbf16>
    %cst_160 = arith.constant 0.000000e+00 : bf16
    %351 = vector.broadcast %cst_160 : bf16 to vector<14x256xbf16>
    %352 = vector.shape_cast %43 : vector<1x256xi1> to vector<1x256xi1>
    %353 = vector.broadcast %352 : vector<1x256xi1> to vector<14x256xi1>
    %354 = arith.select %353, %350, %351 : vector<14x256xi1>, vector<14x256xbf16>
    %c3_161 = arith.constant 3 : index
    %c0_162 = arith.constant 0 : index
    %c0_163 = arith.constant 0 : index
    %355 = vector.load %arg4[%c3_161, %c0_162, %c0_163] : memref<25x14x14xbf16, #tpu.memory_space<vmem>>, vector<1x14x14xbf16>
    %356 = vector.shape_cast %355 : vector<1x14x14xbf16> to vector<14x14xbf16>
    %cst_164 = arith.constant dense<0.000000e+00> : vector<14x256xf32>
    %357 = tpu.matmul %356, %354, %cst_164 {dimension_numbers = #tpu.dot_dimension_numbers<[1], [0], [0], [1], [0, 0, 1, 1], [], []>} : vector<14x14xbf16>, vector<14x256xbf16>, vector<14x256xf32> -> vector<14x256xf32>
    %358 = arith.addf %347, %357 : vector<14x256xf32>
    %cst_165 = arith.constant 0.000000e+00 : bf16
    %359 = vector.broadcast %cst_165 : bf16 to vector<14x30xbf16>
    %360 = vector.extract_strided_slice %317 {offsets = [0, 0], sizes = [14, 226], strides = [1, 1]} : vector<14x256xbf16> to vector<14x226xbf16>
    %361 = tpu.concatenate %359, %360 in 1 : vector<14x30xbf16>, vector<14x226xbf16> -> vector<14x256xbf16>
    %cst_166 = arith.constant 0.000000e+00 : bf16
    %362 = vector.broadcast %cst_166 : bf16 to vector<14x256xbf16>
    %363 = vector.shape_cast %52 : vector<1x256xi1> to vector<1x256xi1>
    %364 = vector.broadcast %363 : vector<1x256xi1> to vector<14x256xi1>
    %365 = arith.select %364, %361, %362 : vector<14x256xi1>, vector<14x256xbf16>
    %c4_167 = arith.constant 4 : index
    %c0_168 = arith.constant 0 : index
    %c0_169 = arith.constant 0 : index
    %366 = vector.load %arg4[%c4_167, %c0_168, %c0_169] : memref<25x14x14xbf16, #tpu.memory_space<vmem>>, vector<1x14x14xbf16>
    %367 = vector.shape_cast %366 : vector<1x14x14xbf16> to vector<14x14xbf16>
    %cst_170 = arith.constant dense<0.000000e+00> : vector<14x256xf32>
    %368 = tpu.matmul %367, %365, %cst_170 {dimension_numbers = #tpu.dot_dimension_numbers<[1], [0], [0], [1], [0, 0, 1, 1], [], []>} : vector<14x14xbf16>, vector<14x256xbf16>, vector<14x256xf32> -> vector<14x256xf32>
    %369 = arith.addf %358, %368 : vector<14x256xf32>
    %cst_171 = arith.constant 0.000000e+00 : bf16
    %370 = vector.broadcast %cst_171 : bf16 to vector<14x18xbf16>
    %371 = vector.extract_strided_slice %317 {offsets = [0, 0], sizes = [14, 238], strides = [1, 1]} : vector<14x256xbf16> to vector<14x238xbf16>
    %372 = tpu.concatenate %370, %371 in 1 : vector<14x18xbf16>, vector<14x238xbf16> -> vector<14x256xbf16>
    %cst_172 = arith.constant 0.000000e+00 : bf16
    %373 = vector.broadcast %cst_172 : bf16 to vector<14x256xbf16>
    %374 = vector.shape_cast %25 : vector<1x256xi1> to vector<1x256xi1>
    %375 = vector.broadcast %374 : vector<1x256xi1> to vector<14x256xi1>
    %376 = arith.select %375, %372, %373 : vector<14x256xi1>, vector<14x256xbf16>
    %c5_173 = arith.constant 5 : index
    %c0_174 = arith.constant 0 : index
    %c0_175 = arith.constant 0 : index
    %377 = vector.load %arg4[%c5_173, %c0_174, %c0_175] : memref<25x14x14xbf16, #tpu.memory_space<vmem>>, vector<1x14x14xbf16>
    %378 = vector.shape_cast %377 : vector<1x14x14xbf16> to vector<14x14xbf16>
    %cst_176 = arith.constant dense<0.000000e+00> : vector<14x256xf32>
    %379 = tpu.matmul %378, %376, %cst_176 {dimension_numbers = #tpu.dot_dimension_numbers<[1], [0], [0], [1], [0, 0, 1, 1], [], []>} : vector<14x14xbf16>, vector<14x256xbf16>, vector<14x256xf32> -> vector<14x256xf32>
    %380 = arith.addf %369, %379 : vector<14x256xf32>
    %cst_177 = arith.constant 0.000000e+00 : bf16
    %381 = vector.broadcast %cst_177 : bf16 to vector<14x17xbf16>
    %382 = vector.extract_strided_slice %317 {offsets = [0, 0], sizes = [14, 239], strides = [1, 1]} : vector<14x256xbf16> to vector<14x239xbf16>
    %383 = tpu.concatenate %381, %382 in 1 : vector<14x17xbf16>, vector<14x239xbf16> -> vector<14x256xbf16>
    %cst_178 = arith.constant 0.000000e+00 : bf16
    %384 = vector.broadcast %cst_178 : bf16 to vector<14x256xbf16>
    %385 = vector.shape_cast %34 : vector<1x256xi1> to vector<1x256xi1>
    %386 = vector.broadcast %385 : vector<1x256xi1> to vector<14x256xi1>
    %387 = arith.select %386, %383, %384 : vector<14x256xi1>, vector<14x256xbf16>
    %c6_179 = arith.constant 6 : index
    %c0_180 = arith.constant 0 : index
    %c0_181 = arith.constant 0 : index
    %388 = vector.load %arg4[%c6_179, %c0_180, %c0_181] : memref<25x14x14xbf16, #tpu.memory_space<vmem>>, vector<1x14x14xbf16>
    %389 = vector.shape_cast %388 : vector<1x14x14xbf16> to vector<14x14xbf16>
    %cst_182 = arith.constant dense<0.000000e+00> : vector<14x256xf32>
    %390 = tpu.matmul %389, %387, %cst_182 {dimension_numbers = #tpu.dot_dimension_numbers<[1], [0], [0], [1], [0, 0, 1, 1], [], []>} : vector<14x14xbf16>, vector<14x256xbf16>, vector<14x256xf32> -> vector<14x256xf32>
    %391 = arith.addf %380, %390 : vector<14x256xf32>
    %cst_183 = arith.constant 0.000000e+00 : bf16
    %392 = vector.broadcast %cst_183 : bf16 to vector<14x16xbf16>
    %393 = vector.extract_strided_slice %317 {offsets = [0, 0], sizes = [14, 240], strides = [1, 1]} : vector<14x256xbf16> to vector<14x240xbf16>
    %394 = tpu.concatenate %392, %393 in 1 : vector<14x16xbf16>, vector<14x240xbf16> -> vector<14x256xbf16>
    %c7_184 = arith.constant 7 : index
    %c0_185 = arith.constant 0 : index
    %c0_186 = arith.constant 0 : index
    %395 = vector.load %arg4[%c7_184, %c0_185, %c0_186] : memref<25x14x14xbf16, #tpu.memory_space<vmem>>, vector<1x14x14xbf16>
    %396 = vector.shape_cast %395 : vector<1x14x14xbf16> to vector<14x14xbf16>
    %cst_187 = arith.constant dense<0.000000e+00> : vector<14x256xf32>
    %397 = tpu.matmul %396, %394, %cst_187 {dimension_numbers = #tpu.dot_dimension_numbers<[1], [0], [0], [1], [0, 0, 1, 1], [], []>} : vector<14x14xbf16>, vector<14x256xbf16>, vector<14x256xf32> -> vector<14x256xf32>
    %398 = arith.addf %391, %397 : vector<14x256xf32>
    %cst_188 = arith.constant 0.000000e+00 : bf16
    %399 = vector.broadcast %cst_188 : bf16 to vector<14x15xbf16>
    %400 = vector.extract_strided_slice %317 {offsets = [0, 0], sizes = [14, 241], strides = [1, 1]} : vector<14x256xbf16> to vector<14x241xbf16>
    %401 = tpu.concatenate %399, %400 in 1 : vector<14x15xbf16>, vector<14x241xbf16> -> vector<14x256xbf16>
    %cst_189 = arith.constant 0.000000e+00 : bf16
    %402 = vector.broadcast %cst_189 : bf16 to vector<14x256xbf16>
    %403 = vector.shape_cast %43 : vector<1x256xi1> to vector<1x256xi1>
    %404 = vector.broadcast %403 : vector<1x256xi1> to vector<14x256xi1>
    %405 = arith.select %404, %401, %402 : vector<14x256xi1>, vector<14x256xbf16>
    %c8_190 = arith.constant 8 : index
    %c0_191 = arith.constant 0 : index
    %c0_192 = arith.constant 0 : index
    %406 = vector.load %arg4[%c8_190, %c0_191, %c0_192] : memref<25x14x14xbf16, #tpu.memory_space<vmem>>, vector<1x14x14xbf16>
    %407 = vector.shape_cast %406 : vector<1x14x14xbf16> to vector<14x14xbf16>
    %cst_193 = arith.constant dense<0.000000e+00> : vector<14x256xf32>
    %408 = tpu.matmul %407, %405, %cst_193 {dimension_numbers = #tpu.dot_dimension_numbers<[1], [0], [0], [1], [0, 0, 1, 1], [], []>} : vector<14x14xbf16>, vector<14x256xbf16>, vector<14x256xf32> -> vector<14x256xf32>
    %409 = arith.addf %398, %408 : vector<14x256xf32>
    %cst_194 = arith.constant 0.000000e+00 : bf16
    %410 = vector.broadcast %cst_194 : bf16 to vector<14x14xbf16>
    %411 = vector.extract_strided_slice %317 {offsets = [0, 0], sizes = [14, 242], strides = [1, 1]} : vector<14x256xbf16> to vector<14x242xbf16>
    %412 = tpu.concatenate %410, %411 in 1 : vector<14x14xbf16>, vector<14x242xbf16> -> vector<14x256xbf16>
    %cst_195 = arith.constant 0.000000e+00 : bf16
    %413 = vector.broadcast %cst_195 : bf16 to vector<14x256xbf16>
    %414 = vector.shape_cast %52 : vector<1x256xi1> to vector<1x256xi1>
    %415 = vector.broadcast %414 : vector<1x256xi1> to vector<14x256xi1>
    %416 = arith.select %415, %412, %413 : vector<14x256xi1>, vector<14x256xbf16>
    %c9_196 = arith.constant 9 : index
    %c0_197 = arith.constant 0 : index
    %c0_198 = arith.constant 0 : index
    %417 = vector.load %arg4[%c9_196, %c0_197, %c0_198] : memref<25x14x14xbf16, #tpu.memory_space<vmem>>, vector<1x14x14xbf16>
    %418 = vector.shape_cast %417 : vector<1x14x14xbf16> to vector<14x14xbf16>
    %cst_199 = arith.constant dense<0.000000e+00> : vector<14x256xf32>
    %419 = tpu.matmul %418, %416, %cst_199 {dimension_numbers = #tpu.dot_dimension_numbers<[1], [0], [0], [1], [0, 0, 1, 1], [], []>} : vector<14x14xbf16>, vector<14x256xbf16>, vector<14x256xf32> -> vector<14x256xf32>
    %420 = arith.addf %409, %419 : vector<14x256xf32>
    %cst_200 = arith.constant 0.000000e+00 : bf16
    %421 = vector.broadcast %cst_200 : bf16 to vector<14x2xbf16>
    %422 = vector.extract_strided_slice %317 {offsets = [0, 0], sizes = [14, 254], strides = [1, 1]} : vector<14x256xbf16> to vector<14x254xbf16>
    %423 = tpu.concatenate %421, %422 in 1 : vector<14x2xbf16>, vector<14x254xbf16> -> vector<14x256xbf16>
    %cst_201 = arith.constant 0.000000e+00 : bf16
    %424 = vector.broadcast %cst_201 : bf16 to vector<14x256xbf16>
    %425 = vector.shape_cast %25 : vector<1x256xi1> to vector<1x256xi1>
    %426 = vector.broadcast %425 : vector<1x256xi1> to vector<14x256xi1>
    %427 = arith.select %426, %423, %424 : vector<14x256xi1>, vector<14x256xbf16>
    %c10_202 = arith.constant 10 : index
    %c0_203 = arith.constant 0 : index
    %c0_204 = arith.constant 0 : index
    %428 = vector.load %arg4[%c10_202, %c0_203, %c0_204] : memref<25x14x14xbf16, #tpu.memory_space<vmem>>, vector<1x14x14xbf16>
    %429 = vector.shape_cast %428 : vector<1x14x14xbf16> to vector<14x14xbf16>
    %cst_205 = arith.constant dense<0.000000e+00> : vector<14x256xf32>
    %430 = tpu.matmul %429, %427, %cst_205 {dimension_numbers = #tpu.dot_dimension_numbers<[1], [0], [0], [1], [0, 0, 1, 1], [], []>} : vector<14x14xbf16>, vector<14x256xbf16>, vector<14x256xf32> -> vector<14x256xf32>
    %431 = arith.addf %420, %430 : vector<14x256xf32>
    %cst_206 = arith.constant 0.000000e+00 : bf16
    %432 = vector.broadcast %cst_206 : bf16 to vector<14x1xbf16>
    %433 = vector.extract_strided_slice %317 {offsets = [0, 0], sizes = [14, 255], strides = [1, 1]} : vector<14x256xbf16> to vector<14x255xbf16>
    %434 = tpu.concatenate %432, %433 in 1 : vector<14x1xbf16>, vector<14x255xbf16> -> vector<14x256xbf16>
    %cst_207 = arith.constant 0.000000e+00 : bf16
    %435 = vector.broadcast %cst_207 : bf16 to vector<14x256xbf16>
    %436 = vector.shape_cast %34 : vector<1x256xi1> to vector<1x256xi1>
    %437 = vector.broadcast %436 : vector<1x256xi1> to vector<14x256xi1>
    %438 = arith.select %437, %434, %435 : vector<14x256xi1>, vector<14x256xbf16>
    %c11_208 = arith.constant 11 : index
    %c0_209 = arith.constant 0 : index
    %c0_210 = arith.constant 0 : index
    %439 = vector.load %arg4[%c11_208, %c0_209, %c0_210] : memref<25x14x14xbf16, #tpu.memory_space<vmem>>, vector<1x14x14xbf16>
    %440 = vector.shape_cast %439 : vector<1x14x14xbf16> to vector<14x14xbf16>
    %cst_211 = arith.constant dense<0.000000e+00> : vector<14x256xf32>
    %441 = tpu.matmul %440, %438, %cst_211 {dimension_numbers = #tpu.dot_dimension_numbers<[1], [0], [0], [1], [0, 0, 1, 1], [], []>} : vector<14x14xbf16>, vector<14x256xbf16>, vector<14x256xf32> -> vector<14x256xf32>
    %442 = arith.addf %431, %441 : vector<14x256xf32>
    %c12_212 = arith.constant 12 : index
    %c0_213 = arith.constant 0 : index
    %c0_214 = arith.constant 0 : index
    %443 = vector.load %arg4[%c12_212, %c0_213, %c0_214] : memref<25x14x14xbf16, #tpu.memory_space<vmem>>, vector<1x14x14xbf16>
    %444 = vector.shape_cast %443 : vector<1x14x14xbf16> to vector<14x14xbf16>
    %cst_215 = arith.constant dense<0.000000e+00> : vector<14x256xf32>
    %445 = tpu.matmul %444, %317, %cst_215 {dimension_numbers = #tpu.dot_dimension_numbers<[1], [0], [0], [1], [0, 0, 1, 1], [], []>} : vector<14x14xbf16>, vector<14x256xbf16>, vector<14x256xf32> -> vector<14x256xf32>
    %446 = arith.addf %442, %445 : vector<14x256xf32>
    %447 = vector.extract_strided_slice %317 {offsets = [0, 1], sizes = [14, 255], strides = [1, 1]} : vector<14x256xbf16> to vector<14x255xbf16>
    %cst_216 = arith.constant 0.000000e+00 : bf16
    %448 = vector.broadcast %cst_216 : bf16 to vector<14x1xbf16>
    %449 = tpu.concatenate %447, %448 in 1 : vector<14x255xbf16>, vector<14x1xbf16> -> vector<14x256xbf16>
    %cst_217 = arith.constant 0.000000e+00 : bf16
    %450 = vector.broadcast %cst_217 : bf16 to vector<14x256xbf16>
    %451 = vector.shape_cast %43 : vector<1x256xi1> to vector<1x256xi1>
    %452 = vector.broadcast %451 : vector<1x256xi1> to vector<14x256xi1>
    %453 = arith.select %452, %449, %450 : vector<14x256xi1>, vector<14x256xbf16>
    %c13_218 = arith.constant 13 : index
    %c0_219 = arith.constant 0 : index
    %c0_220 = arith.constant 0 : index
    %454 = vector.load %arg4[%c13_218, %c0_219, %c0_220] : memref<25x14x14xbf16, #tpu.memory_space<vmem>>, vector<1x14x14xbf16>
    %455 = vector.shape_cast %454 : vector<1x14x14xbf16> to vector<14x14xbf16>
    %cst_221 = arith.constant dense<0.000000e+00> : vector<14x256xf32>
    %456 = tpu.matmul %455, %453, %cst_221 {dimension_numbers = #tpu.dot_dimension_numbers<[1], [0], [0], [1], [0, 0, 1, 1], [], []>} : vector<14x14xbf16>, vector<14x256xbf16>, vector<14x256xf32> -> vector<14x256xf32>
    %457 = arith.addf %446, %456 : vector<14x256xf32>
    %458 = vector.extract_strided_slice %317 {offsets = [0, 2], sizes = [14, 254], strides = [1, 1]} : vector<14x256xbf16> to vector<14x254xbf16>
    %cst_222 = arith.constant 0.000000e+00 : bf16
    %459 = vector.broadcast %cst_222 : bf16 to vector<14x2xbf16>
    %460 = tpu.concatenate %458, %459 in 1 : vector<14x254xbf16>, vector<14x2xbf16> -> vector<14x256xbf16>
    %cst_223 = arith.constant 0.000000e+00 : bf16
    %461 = vector.broadcast %cst_223 : bf16 to vector<14x256xbf16>
    %462 = vector.shape_cast %52 : vector<1x256xi1> to vector<1x256xi1>
    %463 = vector.broadcast %462 : vector<1x256xi1> to vector<14x256xi1>
    %464 = arith.select %463, %460, %461 : vector<14x256xi1>, vector<14x256xbf16>
    %c14_224 = arith.constant 14 : index
    %c0_225 = arith.constant 0 : index
    %c0_226 = arith.constant 0 : index
    %465 = vector.load %arg4[%c14_224, %c0_225, %c0_226] : memref<25x14x14xbf16, #tpu.memory_space<vmem>>, vector<1x14x14xbf16>
    %466 = vector.shape_cast %465 : vector<1x14x14xbf16> to vector<14x14xbf16>
    %cst_227 = arith.constant dense<0.000000e+00> : vector<14x256xf32>
    %467 = tpu.matmul %466, %464, %cst_227 {dimension_numbers = #tpu.dot_dimension_numbers<[1], [0], [0], [1], [0, 0, 1, 1], [], []>} : vector<14x14xbf16>, vector<14x256xbf16>, vector<14x256xf32> -> vector<14x256xf32>
    %468 = arith.addf %457, %467 : vector<14x256xf32>
    %469 = vector.extract_strided_slice %317 {offsets = [0, 14], sizes = [14, 242], strides = [1, 1]} : vector<14x256xbf16> to vector<14x242xbf16>
    %cst_228 = arith.constant 0.000000e+00 : bf16
    %470 = vector.broadcast %cst_228 : bf16 to vector<14x14xbf16>
    %471 = tpu.concatenate %469, %470 in 1 : vector<14x242xbf16>, vector<14x14xbf16> -> vector<14x256xbf16>
    %cst_229 = arith.constant 0.000000e+00 : bf16
    %472 = vector.broadcast %cst_229 : bf16 to vector<14x256xbf16>
    %473 = vector.shape_cast %25 : vector<1x256xi1> to vector<1x256xi1>
    %474 = vector.broadcast %473 : vector<1x256xi1> to vector<14x256xi1>
    %475 = arith.select %474, %471, %472 : vector<14x256xi1>, vector<14x256xbf16>
    %c15_230 = arith.constant 15 : index
    %c0_231 = arith.constant 0 : index
    %c0_232 = arith.constant 0 : index
    %476 = vector.load %arg4[%c15_230, %c0_231, %c0_232] : memref<25x14x14xbf16, #tpu.memory_space<vmem>>, vector<1x14x14xbf16>
    %477 = vector.shape_cast %476 : vector<1x14x14xbf16> to vector<14x14xbf16>
    %cst_233 = arith.constant dense<0.000000e+00> : vector<14x256xf32>
    %478 = tpu.matmul %477, %475, %cst_233 {dimension_numbers = #tpu.dot_dimension_numbers<[1], [0], [0], [1], [0, 0, 1, 1], [], []>} : vector<14x14xbf16>, vector<14x256xbf16>, vector<14x256xf32> -> vector<14x256xf32>
    %479 = arith.addf %468, %478 : vector<14x256xf32>
    %480 = vector.extract_strided_slice %317 {offsets = [0, 15], sizes = [14, 241], strides = [1, 1]} : vector<14x256xbf16> to vector<14x241xbf16>
    %cst_234 = arith.constant 0.000000e+00 : bf16
    %481 = vector.broadcast %cst_234 : bf16 to vector<14x15xbf16>
    %482 = tpu.concatenate %480, %481 in 1 : vector<14x241xbf16>, vector<14x15xbf16> -> vector<14x256xbf16>
    %cst_235 = arith.constant 0.000000e+00 : bf16
    %483 = vector.broadcast %cst_235 : bf16 to vector<14x256xbf16>
    %484 = vector.shape_cast %34 : vector<1x256xi1> to vector<1x256xi1>
    %485 = vector.broadcast %484 : vector<1x256xi1> to vector<14x256xi1>
    %486 = arith.select %485, %482, %483 : vector<14x256xi1>, vector<14x256xbf16>
    %c16_236 = arith.constant 16 : index
    %c0_237 = arith.constant 0 : index
    %c0_238 = arith.constant 0 : index
    %487 = vector.load %arg4[%c16_236, %c0_237, %c0_238] : memref<25x14x14xbf16, #tpu.memory_space<vmem>>, vector<1x14x14xbf16>
    %488 = vector.shape_cast %487 : vector<1x14x14xbf16> to vector<14x14xbf16>
    %cst_239 = arith.constant dense<0.000000e+00> : vector<14x256xf32>
    %489 = tpu.matmul %488, %486, %cst_239 {dimension_numbers = #tpu.dot_dimension_numbers<[1], [0], [0], [1], [0, 0, 1, 1], [], []>} : vector<14x14xbf16>, vector<14x256xbf16>, vector<14x256xf32> -> vector<14x256xf32>
    %490 = arith.addf %479, %489 : vector<14x256xf32>
    %491 = vector.extract_strided_slice %317 {offsets = [0, 16], sizes = [14, 240], strides = [1, 1]} : vector<14x256xbf16> to vector<14x240xbf16>
    %cst_240 = arith.constant 0.000000e+00 : bf16
    %492 = vector.broadcast %cst_240 : bf16 to vector<14x16xbf16>
    %493 = tpu.concatenate %491, %492 in 1 : vector<14x240xbf16>, vector<14x16xbf16> -> vector<14x256xbf16>
    %c17_241 = arith.constant 17 : index
    %c0_242 = arith.constant 0 : index
    %c0_243 = arith.constant 0 : index
    %494 = vector.load %arg4[%c17_241, %c0_242, %c0_243] : memref<25x14x14xbf16, #tpu.memory_space<vmem>>, vector<1x14x14xbf16>
    %495 = vector.shape_cast %494 : vector<1x14x14xbf16> to vector<14x14xbf16>
    %cst_244 = arith.constant dense<0.000000e+00> : vector<14x256xf32>
    %496 = tpu.matmul %495, %493, %cst_244 {dimension_numbers = #tpu.dot_dimension_numbers<[1], [0], [0], [1], [0, 0, 1, 1], [], []>} : vector<14x14xbf16>, vector<14x256xbf16>, vector<14x256xf32> -> vector<14x256xf32>
    %497 = arith.addf %490, %496 : vector<14x256xf32>
    %498 = vector.extract_strided_slice %317 {offsets = [0, 17], sizes = [14, 239], strides = [1, 1]} : vector<14x256xbf16> to vector<14x239xbf16>
    %cst_245 = arith.constant 0.000000e+00 : bf16
    %499 = vector.broadcast %cst_245 : bf16 to vector<14x17xbf16>
    %500 = tpu.concatenate %498, %499 in 1 : vector<14x239xbf16>, vector<14x17xbf16> -> vector<14x256xbf16>
    %cst_246 = arith.constant 0.000000e+00 : bf16
    %501 = vector.broadcast %cst_246 : bf16 to vector<14x256xbf16>
    %502 = vector.shape_cast %43 : vector<1x256xi1> to vector<1x256xi1>
    %503 = vector.broadcast %502 : vector<1x256xi1> to vector<14x256xi1>
    %504 = arith.select %503, %500, %501 : vector<14x256xi1>, vector<14x256xbf16>
    %c18_247 = arith.constant 18 : index
    %c0_248 = arith.constant 0 : index
    %c0_249 = arith.constant 0 : index
    %505 = vector.load %arg4[%c18_247, %c0_248, %c0_249] : memref<25x14x14xbf16, #tpu.memory_space<vmem>>, vector<1x14x14xbf16>
    %506 = vector.shape_cast %505 : vector<1x14x14xbf16> to vector<14x14xbf16>
    %cst_250 = arith.constant dense<0.000000e+00> : vector<14x256xf32>
    %507 = tpu.matmul %506, %504, %cst_250 {dimension_numbers = #tpu.dot_dimension_numbers<[1], [0], [0], [1], [0, 0, 1, 1], [], []>} : vector<14x14xbf16>, vector<14x256xbf16>, vector<14x256xf32> -> vector<14x256xf32>
    %508 = arith.addf %497, %507 : vector<14x256xf32>
    %509 = vector.extract_strided_slice %317 {offsets = [0, 18], sizes = [14, 238], strides = [1, 1]} : vector<14x256xbf16> to vector<14x238xbf16>
    %cst_251 = arith.constant 0.000000e+00 : bf16
    %510 = vector.broadcast %cst_251 : bf16 to vector<14x18xbf16>
    %511 = tpu.concatenate %509, %510 in 1 : vector<14x238xbf16>, vector<14x18xbf16> -> vector<14x256xbf16>
    %cst_252 = arith.constant 0.000000e+00 : bf16
    %512 = vector.broadcast %cst_252 : bf16 to vector<14x256xbf16>
    %513 = vector.shape_cast %52 : vector<1x256xi1> to vector<1x256xi1>
    %514 = vector.broadcast %513 : vector<1x256xi1> to vector<14x256xi1>
    %515 = arith.select %514, %511, %512 : vector<14x256xi1>, vector<14x256xbf16>
    %c19_253 = arith.constant 19 : index
    %c0_254 = arith.constant 0 : index
    %c0_255 = arith.constant 0 : index
    %516 = vector.load %arg4[%c19_253, %c0_254, %c0_255] : memref<25x14x14xbf16, #tpu.memory_space<vmem>>, vector<1x14x14xbf16>
    %517 = vector.shape_cast %516 : vector<1x14x14xbf16> to vector<14x14xbf16>
    %cst_256 = arith.constant dense<0.000000e+00> : vector<14x256xf32>
    %518 = tpu.matmul %517, %515, %cst_256 {dimension_numbers = #tpu.dot_dimension_numbers<[1], [0], [0], [1], [0, 0, 1, 1], [], []>} : vector<14x14xbf16>, vector<14x256xbf16>, vector<14x256xf32> -> vector<14x256xf32>
    %519 = arith.addf %508, %518 : vector<14x256xf32>
    %520 = vector.extract_strided_slice %317 {offsets = [0, 30], sizes = [14, 226], strides = [1, 1]} : vector<14x256xbf16> to vector<14x226xbf16>
    %cst_257 = arith.constant 0.000000e+00 : bf16
    %521 = vector.broadcast %cst_257 : bf16 to vector<14x30xbf16>
    %522 = tpu.concatenate %520, %521 in 1 : vector<14x226xbf16>, vector<14x30xbf16> -> vector<14x256xbf16>
    %cst_258 = arith.constant 0.000000e+00 : bf16
    %523 = vector.broadcast %cst_258 : bf16 to vector<14x256xbf16>
    %524 = vector.shape_cast %25 : vector<1x256xi1> to vector<1x256xi1>
    %525 = vector.broadcast %524 : vector<1x256xi1> to vector<14x256xi1>
    %526 = arith.select %525, %522, %523 : vector<14x256xi1>, vector<14x256xbf16>
    %c20_259 = arith.constant 20 : index
    %c0_260 = arith.constant 0 : index
    %c0_261 = arith.constant 0 : index
    %527 = vector.load %arg4[%c20_259, %c0_260, %c0_261] : memref<25x14x14xbf16, #tpu.memory_space<vmem>>, vector<1x14x14xbf16>
    %528 = vector.shape_cast %527 : vector<1x14x14xbf16> to vector<14x14xbf16>
    %cst_262 = arith.constant dense<0.000000e+00> : vector<14x256xf32>
    %529 = tpu.matmul %528, %526, %cst_262 {dimension_numbers = #tpu.dot_dimension_numbers<[1], [0], [0], [1], [0, 0, 1, 1], [], []>} : vector<14x14xbf16>, vector<14x256xbf16>, vector<14x256xf32> -> vector<14x256xf32>
    %530 = arith.addf %519, %529 : vector<14x256xf32>
    %531 = vector.extract_strided_slice %317 {offsets = [0, 31], sizes = [14, 225], strides = [1, 1]} : vector<14x256xbf16> to vector<14x225xbf16>
    %cst_263 = arith.constant 0.000000e+00 : bf16
    %532 = vector.broadcast %cst_263 : bf16 to vector<14x31xbf16>
    %533 = tpu.concatenate %531, %532 in 1 : vector<14x225xbf16>, vector<14x31xbf16> -> vector<14x256xbf16>
    %cst_264 = arith.constant 0.000000e+00 : bf16
    %534 = vector.broadcast %cst_264 : bf16 to vector<14x256xbf16>
    %535 = vector.shape_cast %34 : vector<1x256xi1> to vector<1x256xi1>
    %536 = vector.broadcast %535 : vector<1x256xi1> to vector<14x256xi1>
    %537 = arith.select %536, %533, %534 : vector<14x256xi1>, vector<14x256xbf16>
    %c21_265 = arith.constant 21 : index
    %c0_266 = arith.constant 0 : index
    %c0_267 = arith.constant 0 : index
    %538 = vector.load %arg4[%c21_265, %c0_266, %c0_267] : memref<25x14x14xbf16, #tpu.memory_space<vmem>>, vector<1x14x14xbf16>
    %539 = vector.shape_cast %538 : vector<1x14x14xbf16> to vector<14x14xbf16>
    %cst_268 = arith.constant dense<0.000000e+00> : vector<14x256xf32>
    %540 = tpu.matmul %539, %537, %cst_268 {dimension_numbers = #tpu.dot_dimension_numbers<[1], [0], [0], [1], [0, 0, 1, 1], [], []>} : vector<14x14xbf16>, vector<14x256xbf16>, vector<14x256xf32> -> vector<14x256xf32>
    %541 = arith.addf %530, %540 : vector<14x256xf32>
    %542 = vector.extract_strided_slice %317 {offsets = [0, 32], sizes = [14, 224], strides = [1, 1]} : vector<14x256xbf16> to vector<14x224xbf16>
    %cst_269 = arith.constant 0.000000e+00 : bf16
    %543 = vector.broadcast %cst_269 : bf16 to vector<14x32xbf16>
    %544 = tpu.concatenate %542, %543 in 1 : vector<14x224xbf16>, vector<14x32xbf16> -> vector<14x256xbf16>
    %c22_270 = arith.constant 22 : index
    %c0_271 = arith.constant 0 : index
    %c0_272 = arith.constant 0 : index
    %545 = vector.load %arg4[%c22_270, %c0_271, %c0_272] : memref<25x14x14xbf16, #tpu.memory_space<vmem>>, vector<1x14x14xbf16>
    %546 = vector.shape_cast %545 : vector<1x14x14xbf16> to vector<14x14xbf16>
    %cst_273 = arith.constant dense<0.000000e+00> : vector<14x256xf32>
    %547 = tpu.matmul %546, %544, %cst_273 {dimension_numbers = #tpu.dot_dimension_numbers<[1], [0], [0], [1], [0, 0, 1, 1], [], []>} : vector<14x14xbf16>, vector<14x256xbf16>, vector<14x256xf32> -> vector<14x256xf32>
    %548 = arith.addf %541, %547 : vector<14x256xf32>
    %549 = vector.extract_strided_slice %317 {offsets = [0, 33], sizes = [14, 223], strides = [1, 1]} : vector<14x256xbf16> to vector<14x223xbf16>
    %cst_274 = arith.constant 0.000000e+00 : bf16
    %550 = vector.broadcast %cst_274 : bf16 to vector<14x33xbf16>
    %551 = tpu.concatenate %549, %550 in 1 : vector<14x223xbf16>, vector<14x33xbf16> -> vector<14x256xbf16>
    %cst_275 = arith.constant 0.000000e+00 : bf16
    %552 = vector.broadcast %cst_275 : bf16 to vector<14x256xbf16>
    %553 = vector.shape_cast %43 : vector<1x256xi1> to vector<1x256xi1>
    %554 = vector.broadcast %553 : vector<1x256xi1> to vector<14x256xi1>
    %555 = arith.select %554, %551, %552 : vector<14x256xi1>, vector<14x256xbf16>
    %c23_276 = arith.constant 23 : index
    %c0_277 = arith.constant 0 : index
    %c0_278 = arith.constant 0 : index
    %556 = vector.load %arg4[%c23_276, %c0_277, %c0_278] : memref<25x14x14xbf16, #tpu.memory_space<vmem>>, vector<1x14x14xbf16>
    %557 = vector.shape_cast %556 : vector<1x14x14xbf16> to vector<14x14xbf16>
    %cst_279 = arith.constant dense<0.000000e+00> : vector<14x256xf32>
    %558 = tpu.matmul %557, %555, %cst_279 {dimension_numbers = #tpu.dot_dimension_numbers<[1], [0], [0], [1], [0, 0, 1, 1], [], []>} : vector<14x14xbf16>, vector<14x256xbf16>, vector<14x256xf32> -> vector<14x256xf32>
    %559 = arith.addf %548, %558 : vector<14x256xf32>
    %560 = vector.extract_strided_slice %317 {offsets = [0, 34], sizes = [14, 222], strides = [1, 1]} : vector<14x256xbf16> to vector<14x222xbf16>
    %cst_280 = arith.constant 0.000000e+00 : bf16
    %561 = vector.broadcast %cst_280 : bf16 to vector<14x34xbf16>
    %562 = tpu.concatenate %560, %561 in 1 : vector<14x222xbf16>, vector<14x34xbf16> -> vector<14x256xbf16>
    %cst_281 = arith.constant 0.000000e+00 : bf16
    %563 = vector.broadcast %cst_281 : bf16 to vector<14x256xbf16>
    %564 = vector.shape_cast %52 : vector<1x256xi1> to vector<1x256xi1>
    %565 = vector.broadcast %564 : vector<1x256xi1> to vector<14x256xi1>
    %566 = arith.select %565, %562, %563 : vector<14x256xi1>, vector<14x256xbf16>
    %c24_282 = arith.constant 24 : index
    %c0_283 = arith.constant 0 : index
    %c0_284 = arith.constant 0 : index
    %567 = vector.load %arg4[%c24_282, %c0_283, %c0_284] : memref<25x14x14xbf16, #tpu.memory_space<vmem>>, vector<1x14x14xbf16>
    %568 = vector.shape_cast %567 : vector<1x14x14xbf16> to vector<14x14xbf16>
    %cst_285 = arith.constant dense<0.000000e+00> : vector<14x256xf32>
    %569 = tpu.matmul %568, %566, %cst_285 {dimension_numbers = #tpu.dot_dimension_numbers<[1], [0], [0], [1], [0, 0, 1, 1], [], []>} : vector<14x14xbf16>, vector<14x256xbf16>, vector<14x256xf32> -> vector<14x256xf32>
    %570 = arith.addf %559, %569 : vector<14x256xf32>
    %c0_286 = arith.constant 0 : index
    %c0_287 = arith.constant 0 : index
    %571 = vector.load %arg5[%c0_286, %c0_287] : memref<14x1xf32, #tpu.memory_space<vmem>>, vector<14x1xf32>
    %572 = vector.broadcast %571 : vector<14x1xf32> to vector<14x256xf32>
    %573 = arith.addf %570, %572 : vector<14x256xf32>
    %cst_288 = arith.constant 0.000000e+00 : f32
    %574 = vector.broadcast %cst_288 : f32 to vector<14x256xf32>
    %575 = arith.maximumf %573, %574 : vector<14x256xf32>
    %576 = arith.truncf %575 : vector<14x256xf32> to vector<14x256xbf16>
    %cst_289 = arith.constant 0.000000e+00 : f32
    %577 = vector.broadcast %cst_289 : f32 to vector<5x256xf32>
    %cst_290 = arith.constant 0.000000e+00 : bf16
    %578 = vector.broadcast %cst_290 : bf16 to vector<14x34xbf16>
    %579 = vector.extract_strided_slice %576 {offsets = [0, 0], sizes = [14, 222], strides = [1, 1]} : vector<14x256xbf16> to vector<14x222xbf16>
    %580 = tpu.concatenate %578, %579 in 1 : vector<14x34xbf16>, vector<14x222xbf16> -> vector<14x256xbf16>
    %cst_291 = arith.constant 0.000000e+00 : bf16
    %581 = vector.broadcast %cst_291 : bf16 to vector<14x256xbf16>
    %582 = vector.shape_cast %25 : vector<1x256xi1> to vector<1x256xi1>
    %583 = vector.broadcast %582 : vector<1x256xi1> to vector<14x256xi1>
    %584 = arith.select %583, %580, %581 : vector<14x256xi1>, vector<14x256xbf16>
    %c0_292 = arith.constant 0 : index
    %c0_293 = arith.constant 0 : index
    %c0_294 = arith.constant 0 : index
    %585 = vector.load %arg6[%c0_292, %c0_293, %c0_294] : memref<25x5x14xbf16, #tpu.memory_space<vmem>>, vector<1x5x14xbf16>
    %586 = vector.shape_cast %585 : vector<1x5x14xbf16> to vector<5x14xbf16>
    %cst_295 = arith.constant dense<0.000000e+00> : vector<5x256xf32>
    %587 = tpu.matmul %586, %584, %cst_295 {dimension_numbers = #tpu.dot_dimension_numbers<[1], [0], [0], [1], [0, 0, 1, 1], [], []>} : vector<5x14xbf16>, vector<14x256xbf16>, vector<5x256xf32> -> vector<5x256xf32>
    %588 = arith.addf %577, %587 : vector<5x256xf32>
    %cst_296 = arith.constant 0.000000e+00 : bf16
    %589 = vector.broadcast %cst_296 : bf16 to vector<14x33xbf16>
    %590 = vector.extract_strided_slice %576 {offsets = [0, 0], sizes = [14, 223], strides = [1, 1]} : vector<14x256xbf16> to vector<14x223xbf16>
    %591 = tpu.concatenate %589, %590 in 1 : vector<14x33xbf16>, vector<14x223xbf16> -> vector<14x256xbf16>
    %cst_297 = arith.constant 0.000000e+00 : bf16
    %592 = vector.broadcast %cst_297 : bf16 to vector<14x256xbf16>
    %593 = vector.shape_cast %34 : vector<1x256xi1> to vector<1x256xi1>
    %594 = vector.broadcast %593 : vector<1x256xi1> to vector<14x256xi1>
    %595 = arith.select %594, %591, %592 : vector<14x256xi1>, vector<14x256xbf16>
    %c1_298 = arith.constant 1 : index
    %c0_299 = arith.constant 0 : index
    %c0_300 = arith.constant 0 : index
    %596 = vector.load %arg6[%c1_298, %c0_299, %c0_300] : memref<25x5x14xbf16, #tpu.memory_space<vmem>>, vector<1x5x14xbf16>
    %597 = vector.shape_cast %596 : vector<1x5x14xbf16> to vector<5x14xbf16>
    %cst_301 = arith.constant dense<0.000000e+00> : vector<5x256xf32>
    %598 = tpu.matmul %597, %595, %cst_301 {dimension_numbers = #tpu.dot_dimension_numbers<[1], [0], [0], [1], [0, 0, 1, 1], [], []>} : vector<5x14xbf16>, vector<14x256xbf16>, vector<5x256xf32> -> vector<5x256xf32>
    %599 = arith.addf %588, %598 : vector<5x256xf32>
    %cst_302 = arith.constant 0.000000e+00 : bf16
    %600 = vector.broadcast %cst_302 : bf16 to vector<14x32xbf16>
    %601 = vector.extract_strided_slice %576 {offsets = [0, 0], sizes = [14, 224], strides = [1, 1]} : vector<14x256xbf16> to vector<14x224xbf16>
    %602 = tpu.concatenate %600, %601 in 1 : vector<14x32xbf16>, vector<14x224xbf16> -> vector<14x256xbf16>
    %c2_303 = arith.constant 2 : index
    %c0_304 = arith.constant 0 : index
    %c0_305 = arith.constant 0 : index
    %603 = vector.load %arg6[%c2_303, %c0_304, %c0_305] : memref<25x5x14xbf16, #tpu.memory_space<vmem>>, vector<1x5x14xbf16>
    %604 = vector.shape_cast %603 : vector<1x5x14xbf16> to vector<5x14xbf16>
    %cst_306 = arith.constant dense<0.000000e+00> : vector<5x256xf32>
    %605 = tpu.matmul %604, %602, %cst_306 {dimension_numbers = #tpu.dot_dimension_numbers<[1], [0], [0], [1], [0, 0, 1, 1], [], []>} : vector<5x14xbf16>, vector<14x256xbf16>, vector<5x256xf32> -> vector<5x256xf32>
    %606 = arith.addf %599, %605 : vector<5x256xf32>
    %cst_307 = arith.constant 0.000000e+00 : bf16
    %607 = vector.broadcast %cst_307 : bf16 to vector<14x31xbf16>
    %608 = vector.extract_strided_slice %576 {offsets = [0, 0], sizes = [14, 225], strides = [1, 1]} : vector<14x256xbf16> to vector<14x225xbf16>
    %609 = tpu.concatenate %607, %608 in 1 : vector<14x31xbf16>, vector<14x225xbf16> -> vector<14x256xbf16>
    %cst_308 = arith.constant 0.000000e+00 : bf16
    %610 = vector.broadcast %cst_308 : bf16 to vector<14x256xbf16>
    %611 = vector.shape_cast %43 : vector<1x256xi1> to vector<1x256xi1>
    %612 = vector.broadcast %611 : vector<1x256xi1> to vector<14x256xi1>
    %613 = arith.select %612, %609, %610 : vector<14x256xi1>, vector<14x256xbf16>
    %c3_309 = arith.constant 3 : index
    %c0_310 = arith.constant 0 : index
    %c0_311 = arith.constant 0 : index
    %614 = vector.load %arg6[%c3_309, %c0_310, %c0_311] : memref<25x5x14xbf16, #tpu.memory_space<vmem>>, vector<1x5x14xbf16>
    %615 = vector.shape_cast %614 : vector<1x5x14xbf16> to vector<5x14xbf16>
    %cst_312 = arith.constant dense<0.000000e+00> : vector<5x256xf32>
    %616 = tpu.matmul %615, %613, %cst_312 {dimension_numbers = #tpu.dot_dimension_numbers<[1], [0], [0], [1], [0, 0, 1, 1], [], []>} : vector<5x14xbf16>, vector<14x256xbf16>, vector<5x256xf32> -> vector<5x256xf32>
    %617 = arith.addf %606, %616 : vector<5x256xf32>
    %cst_313 = arith.constant 0.000000e+00 : bf16
    %618 = vector.broadcast %cst_313 : bf16 to vector<14x30xbf16>
    %619 = vector.extract_strided_slice %576 {offsets = [0, 0], sizes = [14, 226], strides = [1, 1]} : vector<14x256xbf16> to vector<14x226xbf16>
    %620 = tpu.concatenate %618, %619 in 1 : vector<14x30xbf16>, vector<14x226xbf16> -> vector<14x256xbf16>
    %cst_314 = arith.constant 0.000000e+00 : bf16
    %621 = vector.broadcast %cst_314 : bf16 to vector<14x256xbf16>
    %622 = vector.shape_cast %52 : vector<1x256xi1> to vector<1x256xi1>
    %623 = vector.broadcast %622 : vector<1x256xi1> to vector<14x256xi1>
    %624 = arith.select %623, %620, %621 : vector<14x256xi1>, vector<14x256xbf16>
    %c4_315 = arith.constant 4 : index
    %c0_316 = arith.constant 0 : index
    %c0_317 = arith.constant 0 : index
    %625 = vector.load %arg6[%c4_315, %c0_316, %c0_317] : memref<25x5x14xbf16, #tpu.memory_space<vmem>>, vector<1x5x14xbf16>
    %626 = vector.shape_cast %625 : vector<1x5x14xbf16> to vector<5x14xbf16>
    %cst_318 = arith.constant dense<0.000000e+00> : vector<5x256xf32>
    %627 = tpu.matmul %626, %624, %cst_318 {dimension_numbers = #tpu.dot_dimension_numbers<[1], [0], [0], [1], [0, 0, 1, 1], [], []>} : vector<5x14xbf16>, vector<14x256xbf16>, vector<5x256xf32> -> vector<5x256xf32>
    %628 = arith.addf %617, %627 : vector<5x256xf32>
    %cst_319 = arith.constant 0.000000e+00 : bf16
    %629 = vector.broadcast %cst_319 : bf16 to vector<14x18xbf16>
    %630 = vector.extract_strided_slice %576 {offsets = [0, 0], sizes = [14, 238], strides = [1, 1]} : vector<14x256xbf16> to vector<14x238xbf16>
    %631 = tpu.concatenate %629, %630 in 1 : vector<14x18xbf16>, vector<14x238xbf16> -> vector<14x256xbf16>
    %cst_320 = arith.constant 0.000000e+00 : bf16
    %632 = vector.broadcast %cst_320 : bf16 to vector<14x256xbf16>
    %633 = vector.shape_cast %25 : vector<1x256xi1> to vector<1x256xi1>
    %634 = vector.broadcast %633 : vector<1x256xi1> to vector<14x256xi1>
    %635 = arith.select %634, %631, %632 : vector<14x256xi1>, vector<14x256xbf16>
    %c5_321 = arith.constant 5 : index
    %c0_322 = arith.constant 0 : index
    %c0_323 = arith.constant 0 : index
    %636 = vector.load %arg6[%c5_321, %c0_322, %c0_323] : memref<25x5x14xbf16, #tpu.memory_space<vmem>>, vector<1x5x14xbf16>
    %637 = vector.shape_cast %636 : vector<1x5x14xbf16> to vector<5x14xbf16>
    %cst_324 = arith.constant dense<0.000000e+00> : vector<5x256xf32>
    %638 = tpu.matmul %637, %635, %cst_324 {dimension_numbers = #tpu.dot_dimension_numbers<[1], [0], [0], [1], [0, 0, 1, 1], [], []>} : vector<5x14xbf16>, vector<14x256xbf16>, vector<5x256xf32> -> vector<5x256xf32>
    %639 = arith.addf %628, %638 : vector<5x256xf32>
    %cst_325 = arith.constant 0.000000e+00 : bf16
    %640 = vector.broadcast %cst_325 : bf16 to vector<14x17xbf16>
    %641 = vector.extract_strided_slice %576 {offsets = [0, 0], sizes = [14, 239], strides = [1, 1]} : vector<14x256xbf16> to vector<14x239xbf16>
    %642 = tpu.concatenate %640, %641 in 1 : vector<14x17xbf16>, vector<14x239xbf16> -> vector<14x256xbf16>
    %cst_326 = arith.constant 0.000000e+00 : bf16
    %643 = vector.broadcast %cst_326 : bf16 to vector<14x256xbf16>
    %644 = vector.shape_cast %34 : vector<1x256xi1> to vector<1x256xi1>
    %645 = vector.broadcast %644 : vector<1x256xi1> to vector<14x256xi1>
    %646 = arith.select %645, %642, %643 : vector<14x256xi1>, vector<14x256xbf16>
    %c6_327 = arith.constant 6 : index
    %c0_328 = arith.constant 0 : index
    %c0_329 = arith.constant 0 : index
    %647 = vector.load %arg6[%c6_327, %c0_328, %c0_329] : memref<25x5x14xbf16, #tpu.memory_space<vmem>>, vector<1x5x14xbf16>
    %648 = vector.shape_cast %647 : vector<1x5x14xbf16> to vector<5x14xbf16>
    %cst_330 = arith.constant dense<0.000000e+00> : vector<5x256xf32>
    %649 = tpu.matmul %648, %646, %cst_330 {dimension_numbers = #tpu.dot_dimension_numbers<[1], [0], [0], [1], [0, 0, 1, 1], [], []>} : vector<5x14xbf16>, vector<14x256xbf16>, vector<5x256xf32> -> vector<5x256xf32>
    %650 = arith.addf %639, %649 : vector<5x256xf32>
    %cst_331 = arith.constant 0.000000e+00 : bf16
    %651 = vector.broadcast %cst_331 : bf16 to vector<14x16xbf16>
    %652 = vector.extract_strided_slice %576 {offsets = [0, 0], sizes = [14, 240], strides = [1, 1]} : vector<14x256xbf16> to vector<14x240xbf16>
    %653 = tpu.concatenate %651, %652 in 1 : vector<14x16xbf16>, vector<14x240xbf16> -> vector<14x256xbf16>
    %c7_332 = arith.constant 7 : index
    %c0_333 = arith.constant 0 : index
    %c0_334 = arith.constant 0 : index
    %654 = vector.load %arg6[%c7_332, %c0_333, %c0_334] : memref<25x5x14xbf16, #tpu.memory_space<vmem>>, vector<1x5x14xbf16>
    %655 = vector.shape_cast %654 : vector<1x5x14xbf16> to vector<5x14xbf16>
    %cst_335 = arith.constant dense<0.000000e+00> : vector<5x256xf32>
    %656 = tpu.matmul %655, %653, %cst_335 {dimension_numbers = #tpu.dot_dimension_numbers<[1], [0], [0], [1], [0, 0, 1, 1], [], []>} : vector<5x14xbf16>, vector<14x256xbf16>, vector<5x256xf32> -> vector<5x256xf32>
    %657 = arith.addf %650, %656 : vector<5x256xf32>
    %cst_336 = arith.constant 0.000000e+00 : bf16
    %658 = vector.broadcast %cst_336 : bf16 to vector<14x15xbf16>
    %659 = vector.extract_strided_slice %576 {offsets = [0, 0], sizes = [14, 241], strides = [1, 1]} : vector<14x256xbf16> to vector<14x241xbf16>
    %660 = tpu.concatenate %658, %659 in 1 : vector<14x15xbf16>, vector<14x241xbf16> -> vector<14x256xbf16>
    %cst_337 = arith.constant 0.000000e+00 : bf16
    %661 = vector.broadcast %cst_337 : bf16 to vector<14x256xbf16>
    %662 = vector.shape_cast %43 : vector<1x256xi1> to vector<1x256xi1>
    %663 = vector.broadcast %662 : vector<1x256xi1> to vector<14x256xi1>
    %664 = arith.select %663, %660, %661 : vector<14x256xi1>, vector<14x256xbf16>
    %c8_338 = arith.constant 8 : index
    %c0_339 = arith.constant 0 : index
    %c0_340 = arith.constant 0 : index
    %665 = vector.load %arg6[%c8_338, %c0_339, %c0_340] : memref<25x5x14xbf16, #tpu.memory_space<vmem>>, vector<1x5x14xbf16>
    %666 = vector.shape_cast %665 : vector<1x5x14xbf16> to vector<5x14xbf16>
    %cst_341 = arith.constant dense<0.000000e+00> : vector<5x256xf32>
    %667 = tpu.matmul %666, %664, %cst_341 {dimension_numbers = #tpu.dot_dimension_numbers<[1], [0], [0], [1], [0, 0, 1, 1], [], []>} : vector<5x14xbf16>, vector<14x256xbf16>, vector<5x256xf32> -> vector<5x256xf32>
    %668 = arith.addf %657, %667 : vector<5x256xf32>
    %cst_342 = arith.constant 0.000000e+00 : bf16
    %669 = vector.broadcast %cst_342 : bf16 to vector<14x14xbf16>
    %670 = vector.extract_strided_slice %576 {offsets = [0, 0], sizes = [14, 242], strides = [1, 1]} : vector<14x256xbf16> to vector<14x242xbf16>
    %671 = tpu.concatenate %669, %670 in 1 : vector<14x14xbf16>, vector<14x242xbf16> -> vector<14x256xbf16>
    %cst_343 = arith.constant 0.000000e+00 : bf16
    %672 = vector.broadcast %cst_343 : bf16 to vector<14x256xbf16>
    %673 = vector.shape_cast %52 : vector<1x256xi1> to vector<1x256xi1>
    %674 = vector.broadcast %673 : vector<1x256xi1> to vector<14x256xi1>
    %675 = arith.select %674, %671, %672 : vector<14x256xi1>, vector<14x256xbf16>
    %c9_344 = arith.constant 9 : index
    %c0_345 = arith.constant 0 : index
    %c0_346 = arith.constant 0 : index
    %676 = vector.load %arg6[%c9_344, %c0_345, %c0_346] : memref<25x5x14xbf16, #tpu.memory_space<vmem>>, vector<1x5x14xbf16>
    %677 = vector.shape_cast %676 : vector<1x5x14xbf16> to vector<5x14xbf16>
    %cst_347 = arith.constant dense<0.000000e+00> : vector<5x256xf32>
    %678 = tpu.matmul %677, %675, %cst_347 {dimension_numbers = #tpu.dot_dimension_numbers<[1], [0], [0], [1], [0, 0, 1, 1], [], []>} : vector<5x14xbf16>, vector<14x256xbf16>, vector<5x256xf32> -> vector<5x256xf32>
    %679 = arith.addf %668, %678 : vector<5x256xf32>
    %cst_348 = arith.constant 0.000000e+00 : bf16
    %680 = vector.broadcast %cst_348 : bf16 to vector<14x2xbf16>
    %681 = vector.extract_strided_slice %576 {offsets = [0, 0], sizes = [14, 254], strides = [1, 1]} : vector<14x256xbf16> to vector<14x254xbf16>
    %682 = tpu.concatenate %680, %681 in 1 : vector<14x2xbf16>, vector<14x254xbf16> -> vector<14x256xbf16>
    %cst_349 = arith.constant 0.000000e+00 : bf16
    %683 = vector.broadcast %cst_349 : bf16 to vector<14x256xbf16>
    %684 = vector.shape_cast %25 : vector<1x256xi1> to vector<1x256xi1>
    %685 = vector.broadcast %684 : vector<1x256xi1> to vector<14x256xi1>
    %686 = arith.select %685, %682, %683 : vector<14x256xi1>, vector<14x256xbf16>
    %c10_350 = arith.constant 10 : index
    %c0_351 = arith.constant 0 : index
    %c0_352 = arith.constant 0 : index
    %687 = vector.load %arg6[%c10_350, %c0_351, %c0_352] : memref<25x5x14xbf16, #tpu.memory_space<vmem>>, vector<1x5x14xbf16>
    %688 = vector.shape_cast %687 : vector<1x5x14xbf16> to vector<5x14xbf16>
    %cst_353 = arith.constant dense<0.000000e+00> : vector<5x256xf32>
    %689 = tpu.matmul %688, %686, %cst_353 {dimension_numbers = #tpu.dot_dimension_numbers<[1], [0], [0], [1], [0, 0, 1, 1], [], []>} : vector<5x14xbf16>, vector<14x256xbf16>, vector<5x256xf32> -> vector<5x256xf32>
    %690 = arith.addf %679, %689 : vector<5x256xf32>
    %cst_354 = arith.constant 0.000000e+00 : bf16
    %691 = vector.broadcast %cst_354 : bf16 to vector<14x1xbf16>
    %692 = vector.extract_strided_slice %576 {offsets = [0, 0], sizes = [14, 255], strides = [1, 1]} : vector<14x256xbf16> to vector<14x255xbf16>
    %693 = tpu.concatenate %691, %692 in 1 : vector<14x1xbf16>, vector<14x255xbf16> -> vector<14x256xbf16>
    %cst_355 = arith.constant 0.000000e+00 : bf16
    %694 = vector.broadcast %cst_355 : bf16 to vector<14x256xbf16>
    %695 = vector.shape_cast %34 : vector<1x256xi1> to vector<1x256xi1>
    %696 = vector.broadcast %695 : vector<1x256xi1> to vector<14x256xi1>
    %697 = arith.select %696, %693, %694 : vector<14x256xi1>, vector<14x256xbf16>
    %c11_356 = arith.constant 11 : index
    %c0_357 = arith.constant 0 : index
    %c0_358 = arith.constant 0 : index
    %698 = vector.load %arg6[%c11_356, %c0_357, %c0_358] : memref<25x5x14xbf16, #tpu.memory_space<vmem>>, vector<1x5x14xbf16>
    %699 = vector.shape_cast %698 : vector<1x5x14xbf16> to vector<5x14xbf16>
    %cst_359 = arith.constant dense<0.000000e+00> : vector<5x256xf32>
    %700 = tpu.matmul %699, %697, %cst_359 {dimension_numbers = #tpu.dot_dimension_numbers<[1], [0], [0], [1], [0, 0, 1, 1], [], []>} : vector<5x14xbf16>, vector<14x256xbf16>, vector<5x256xf32> -> vector<5x256xf32>
    %701 = arith.addf %690, %700 : vector<5x256xf32>
    %c12_360 = arith.constant 12 : index
    %c0_361 = arith.constant 0 : index
    %c0_362 = arith.constant 0 : index
    %702 = vector.load %arg6[%c12_360, %c0_361, %c0_362] : memref<25x5x14xbf16, #tpu.memory_space<vmem>>, vector<1x5x14xbf16>
    %703 = vector.shape_cast %702 : vector<1x5x14xbf16> to vector<5x14xbf16>
    %cst_363 = arith.constant dense<0.000000e+00> : vector<5x256xf32>
    %704 = tpu.matmul %703, %576, %cst_363 {dimension_numbers = #tpu.dot_dimension_numbers<[1], [0], [0], [1], [0, 0, 1, 1], [], []>} : vector<5x14xbf16>, vector<14x256xbf16>, vector<5x256xf32> -> vector<5x256xf32>
    %705 = arith.addf %701, %704 : vector<5x256xf32>
    %706 = vector.extract_strided_slice %576 {offsets = [0, 1], sizes = [14, 255], strides = [1, 1]} : vector<14x256xbf16> to vector<14x255xbf16>
    %cst_364 = arith.constant 0.000000e+00 : bf16
    %707 = vector.broadcast %cst_364 : bf16 to vector<14x1xbf16>
    %708 = tpu.concatenate %706, %707 in 1 : vector<14x255xbf16>, vector<14x1xbf16> -> vector<14x256xbf16>
    %cst_365 = arith.constant 0.000000e+00 : bf16
    %709 = vector.broadcast %cst_365 : bf16 to vector<14x256xbf16>
    %710 = vector.shape_cast %43 : vector<1x256xi1> to vector<1x256xi1>
    %711 = vector.broadcast %710 : vector<1x256xi1> to vector<14x256xi1>
    %712 = arith.select %711, %708, %709 : vector<14x256xi1>, vector<14x256xbf16>
    %c13_366 = arith.constant 13 : index
    %c0_367 = arith.constant 0 : index
    %c0_368 = arith.constant 0 : index
    %713 = vector.load %arg6[%c13_366, %c0_367, %c0_368] : memref<25x5x14xbf16, #tpu.memory_space<vmem>>, vector<1x5x14xbf16>
    %714 = vector.shape_cast %713 : vector<1x5x14xbf16> to vector<5x14xbf16>
    %cst_369 = arith.constant dense<0.000000e+00> : vector<5x256xf32>
    %715 = tpu.matmul %714, %712, %cst_369 {dimension_numbers = #tpu.dot_dimension_numbers<[1], [0], [0], [1], [0, 0, 1, 1], [], []>} : vector<5x14xbf16>, vector<14x256xbf16>, vector<5x256xf32> -> vector<5x256xf32>
    %716 = arith.addf %705, %715 : vector<5x256xf32>
    %717 = vector.extract_strided_slice %576 {offsets = [0, 2], sizes = [14, 254], strides = [1, 1]} : vector<14x256xbf16> to vector<14x254xbf16>
    %cst_370 = arith.constant 0.000000e+00 : bf16
    %718 = vector.broadcast %cst_370 : bf16 to vector<14x2xbf16>
    %719 = tpu.concatenate %717, %718 in 1 : vector<14x254xbf16>, vector<14x2xbf16> -> vector<14x256xbf16>
    %cst_371 = arith.constant 0.000000e+00 : bf16
    %720 = vector.broadcast %cst_371 : bf16 to vector<14x256xbf16>
    %721 = vector.shape_cast %52 : vector<1x256xi1> to vector<1x256xi1>
    %722 = vector.broadcast %721 : vector<1x256xi1> to vector<14x256xi1>
    %723 = arith.select %722, %719, %720 : vector<14x256xi1>, vector<14x256xbf16>
    %c14_372 = arith.constant 14 : index
    %c0_373 = arith.constant 0 : index
    %c0_374 = arith.constant 0 : index
    %724 = vector.load %arg6[%c14_372, %c0_373, %c0_374] : memref<25x5x14xbf16, #tpu.memory_space<vmem>>, vector<1x5x14xbf16>
    %725 = vector.shape_cast %724 : vector<1x5x14xbf16> to vector<5x14xbf16>
    %cst_375 = arith.constant dense<0.000000e+00> : vector<5x256xf32>
    %726 = tpu.matmul %725, %723, %cst_375 {dimension_numbers = #tpu.dot_dimension_numbers<[1], [0], [0], [1], [0, 0, 1, 1], [], []>} : vector<5x14xbf16>, vector<14x256xbf16>, vector<5x256xf32> -> vector<5x256xf32>
    %727 = arith.addf %716, %726 : vector<5x256xf32>
    %728 = vector.extract_strided_slice %576 {offsets = [0, 14], sizes = [14, 242], strides = [1, 1]} : vector<14x256xbf16> to vector<14x242xbf16>
    %cst_376 = arith.constant 0.000000e+00 : bf16
    %729 = vector.broadcast %cst_376 : bf16 to vector<14x14xbf16>
    %730 = tpu.concatenate %728, %729 in 1 : vector<14x242xbf16>, vector<14x14xbf16> -> vector<14x256xbf16>
    %cst_377 = arith.constant 0.000000e+00 : bf16
    %731 = vector.broadcast %cst_377 : bf16 to vector<14x256xbf16>
    %732 = vector.shape_cast %25 : vector<1x256xi1> to vector<1x256xi1>
    %733 = vector.broadcast %732 : vector<1x256xi1> to vector<14x256xi1>
    %734 = arith.select %733, %730, %731 : vector<14x256xi1>, vector<14x256xbf16>
    %c15_378 = arith.constant 15 : index
    %c0_379 = arith.constant 0 : index
    %c0_380 = arith.constant 0 : index
    %735 = vector.load %arg6[%c15_378, %c0_379, %c0_380] : memref<25x5x14xbf16, #tpu.memory_space<vmem>>, vector<1x5x14xbf16>
    %736 = vector.shape_cast %735 : vector<1x5x14xbf16> to vector<5x14xbf16>
    %cst_381 = arith.constant dense<0.000000e+00> : vector<5x256xf32>
    %737 = tpu.matmul %736, %734, %cst_381 {dimension_numbers = #tpu.dot_dimension_numbers<[1], [0], [0], [1], [0, 0, 1, 1], [], []>} : vector<5x14xbf16>, vector<14x256xbf16>, vector<5x256xf32> -> vector<5x256xf32>
    %738 = arith.addf %727, %737 : vector<5x256xf32>
    %739 = vector.extract_strided_slice %576 {offsets = [0, 15], sizes = [14, 241], strides = [1, 1]} : vector<14x256xbf16> to vector<14x241xbf16>
    %cst_382 = arith.constant 0.000000e+00 : bf16
    %740 = vector.broadcast %cst_382 : bf16 to vector<14x15xbf16>
    %741 = tpu.concatenate %739, %740 in 1 : vector<14x241xbf16>, vector<14x15xbf16> -> vector<14x256xbf16>
    %cst_383 = arith.constant 0.000000e+00 : bf16
    %742 = vector.broadcast %cst_383 : bf16 to vector<14x256xbf16>
    %743 = vector.shape_cast %34 : vector<1x256xi1> to vector<1x256xi1>
    %744 = vector.broadcast %743 : vector<1x256xi1> to vector<14x256xi1>
    %745 = arith.select %744, %741, %742 : vector<14x256xi1>, vector<14x256xbf16>
    %c16_384 = arith.constant 16 : index
    %c0_385 = arith.constant 0 : index
    %c0_386 = arith.constant 0 : index
    %746 = vector.load %arg6[%c16_384, %c0_385, %c0_386] : memref<25x5x14xbf16, #tpu.memory_space<vmem>>, vector<1x5x14xbf16>
    %747 = vector.shape_cast %746 : vector<1x5x14xbf16> to vector<5x14xbf16>
    %cst_387 = arith.constant dense<0.000000e+00> : vector<5x256xf32>
    %748 = tpu.matmul %747, %745, %cst_387 {dimension_numbers = #tpu.dot_dimension_numbers<[1], [0], [0], [1], [0, 0, 1, 1], [], []>} : vector<5x14xbf16>, vector<14x256xbf16>, vector<5x256xf32> -> vector<5x256xf32>
    %749 = arith.addf %738, %748 : vector<5x256xf32>
    %750 = vector.extract_strided_slice %576 {offsets = [0, 16], sizes = [14, 240], strides = [1, 1]} : vector<14x256xbf16> to vector<14x240xbf16>
    %cst_388 = arith.constant 0.000000e+00 : bf16
    %751 = vector.broadcast %cst_388 : bf16 to vector<14x16xbf16>
    %752 = tpu.concatenate %750, %751 in 1 : vector<14x240xbf16>, vector<14x16xbf16> -> vector<14x256xbf16>
    %c17_389 = arith.constant 17 : index
    %c0_390 = arith.constant 0 : index
    %c0_391 = arith.constant 0 : index
    %753 = vector.load %arg6[%c17_389, %c0_390, %c0_391] : memref<25x5x14xbf16, #tpu.memory_space<vmem>>, vector<1x5x14xbf16>
    %754 = vector.shape_cast %753 : vector<1x5x14xbf16> to vector<5x14xbf16>
    %cst_392 = arith.constant dense<0.000000e+00> : vector<5x256xf32>
    %755 = tpu.matmul %754, %752, %cst_392 {dimension_numbers = #tpu.dot_dimension_numbers<[1], [0], [0], [1], [0, 0, 1, 1], [], []>} : vector<5x14xbf16>, vector<14x256xbf16>, vector<5x256xf32> -> vector<5x256xf32>
    %756 = arith.addf %749, %755 : vector<5x256xf32>
    %757 = vector.extract_strided_slice %576 {offsets = [0, 17], sizes = [14, 239], strides = [1, 1]} : vector<14x256xbf16> to vector<14x239xbf16>
    %cst_393 = arith.constant 0.000000e+00 : bf16
    %758 = vector.broadcast %cst_393 : bf16 to vector<14x17xbf16>
    %759 = tpu.concatenate %757, %758 in 1 : vector<14x239xbf16>, vector<14x17xbf16> -> vector<14x256xbf16>
    %cst_394 = arith.constant 0.000000e+00 : bf16
    %760 = vector.broadcast %cst_394 : bf16 to vector<14x256xbf16>
    %761 = vector.shape_cast %43 : vector<1x256xi1> to vector<1x256xi1>
    %762 = vector.broadcast %761 : vector<1x256xi1> to vector<14x256xi1>
    %763 = arith.select %762, %759, %760 : vector<14x256xi1>, vector<14x256xbf16>
    %c18_395 = arith.constant 18 : index
    %c0_396 = arith.constant 0 : index
    %c0_397 = arith.constant 0 : index
    %764 = vector.load %arg6[%c18_395, %c0_396, %c0_397] : memref<25x5x14xbf16, #tpu.memory_space<vmem>>, vector<1x5x14xbf16>
    %765 = vector.shape_cast %764 : vector<1x5x14xbf16> to vector<5x14xbf16>
    %cst_398 = arith.constant dense<0.000000e+00> : vector<5x256xf32>
    %766 = tpu.matmul %765, %763, %cst_398 {dimension_numbers = #tpu.dot_dimension_numbers<[1], [0], [0], [1], [0, 0, 1, 1], [], []>} : vector<5x14xbf16>, vector<14x256xbf16>, vector<5x256xf32> -> vector<5x256xf32>
    %767 = arith.addf %756, %766 : vector<5x256xf32>
    %768 = vector.extract_strided_slice %576 {offsets = [0, 18], sizes = [14, 238], strides = [1, 1]} : vector<14x256xbf16> to vector<14x238xbf16>
    %cst_399 = arith.constant 0.000000e+00 : bf16
    %769 = vector.broadcast %cst_399 : bf16 to vector<14x18xbf16>
    %770 = tpu.concatenate %768, %769 in 1 : vector<14x238xbf16>, vector<14x18xbf16> -> vector<14x256xbf16>
    %cst_400 = arith.constant 0.000000e+00 : bf16
    %771 = vector.broadcast %cst_400 : bf16 to vector<14x256xbf16>
    %772 = vector.shape_cast %52 : vector<1x256xi1> to vector<1x256xi1>
    %773 = vector.broadcast %772 : vector<1x256xi1> to vector<14x256xi1>
    %774 = arith.select %773, %770, %771 : vector<14x256xi1>, vector<14x256xbf16>
    %c19_401 = arith.constant 19 : index
    %c0_402 = arith.constant 0 : index
    %c0_403 = arith.constant 0 : index
    %775 = vector.load %arg6[%c19_401, %c0_402, %c0_403] : memref<25x5x14xbf16, #tpu.memory_space<vmem>>, vector<1x5x14xbf16>
    %776 = vector.shape_cast %775 : vector<1x5x14xbf16> to vector<5x14xbf16>
    %cst_404 = arith.constant dense<0.000000e+00> : vector<5x256xf32>
    %777 = tpu.matmul %776, %774, %cst_404 {dimension_numbers = #tpu.dot_dimension_numbers<[1], [0], [0], [1], [0, 0, 1, 1], [], []>} : vector<5x14xbf16>, vector<14x256xbf16>, vector<5x256xf32> -> vector<5x256xf32>
    %778 = arith.addf %767, %777 : vector<5x256xf32>
    %779 = vector.extract_strided_slice %576 {offsets = [0, 30], sizes = [14, 226], strides = [1, 1]} : vector<14x256xbf16> to vector<14x226xbf16>
    %cst_405 = arith.constant 0.000000e+00 : bf16
    %780 = vector.broadcast %cst_405 : bf16 to vector<14x30xbf16>
    %781 = tpu.concatenate %779, %780 in 1 : vector<14x226xbf16>, vector<14x30xbf16> -> vector<14x256xbf16>
    %cst_406 = arith.constant 0.000000e+00 : bf16
    %782 = vector.broadcast %cst_406 : bf16 to vector<14x256xbf16>
    %783 = vector.shape_cast %25 : vector<1x256xi1> to vector<1x256xi1>
    %784 = vector.broadcast %783 : vector<1x256xi1> to vector<14x256xi1>
    %785 = arith.select %784, %781, %782 : vector<14x256xi1>, vector<14x256xbf16>
    %c20_407 = arith.constant 20 : index
    %c0_408 = arith.constant 0 : index
    %c0_409 = arith.constant 0 : index
    %786 = vector.load %arg6[%c20_407, %c0_408, %c0_409] : memref<25x5x14xbf16, #tpu.memory_space<vmem>>, vector<1x5x14xbf16>
    %787 = vector.shape_cast %786 : vector<1x5x14xbf16> to vector<5x14xbf16>
    %cst_410 = arith.constant dense<0.000000e+00> : vector<5x256xf32>
    %788 = tpu.matmul %787, %785, %cst_410 {dimension_numbers = #tpu.dot_dimension_numbers<[1], [0], [0], [1], [0, 0, 1, 1], [], []>} : vector<5x14xbf16>, vector<14x256xbf16>, vector<5x256xf32> -> vector<5x256xf32>
    %789 = arith.addf %778, %788 : vector<5x256xf32>
    %790 = vector.extract_strided_slice %576 {offsets = [0, 31], sizes = [14, 225], strides = [1, 1]} : vector<14x256xbf16> to vector<14x225xbf16>
    %cst_411 = arith.constant 0.000000e+00 : bf16
    %791 = vector.broadcast %cst_411 : bf16 to vector<14x31xbf16>
    %792 = tpu.concatenate %790, %791 in 1 : vector<14x225xbf16>, vector<14x31xbf16> -> vector<14x256xbf16>
    %cst_412 = arith.constant 0.000000e+00 : bf16
    %793 = vector.broadcast %cst_412 : bf16 to vector<14x256xbf16>
    %794 = vector.shape_cast %34 : vector<1x256xi1> to vector<1x256xi1>
    %795 = vector.broadcast %794 : vector<1x256xi1> to vector<14x256xi1>
    %796 = arith.select %795, %792, %793 : vector<14x256xi1>, vector<14x256xbf16>
    %c21_413 = arith.constant 21 : index
    %c0_414 = arith.constant 0 : index
    %c0_415 = arith.constant 0 : index
    %797 = vector.load %arg6[%c21_413, %c0_414, %c0_415] : memref<25x5x14xbf16, #tpu.memory_space<vmem>>, vector<1x5x14xbf16>
    %798 = vector.shape_cast %797 : vector<1x5x14xbf16> to vector<5x14xbf16>
    %cst_416 = arith.constant dense<0.000000e+00> : vector<5x256xf32>
    %799 = tpu.matmul %798, %796, %cst_416 {dimension_numbers = #tpu.dot_dimension_numbers<[1], [0], [0], [1], [0, 0, 1, 1], [], []>} : vector<5x14xbf16>, vector<14x256xbf16>, vector<5x256xf32> -> vector<5x256xf32>
    %800 = arith.addf %789, %799 : vector<5x256xf32>
    %801 = vector.extract_strided_slice %576 {offsets = [0, 32], sizes = [14, 224], strides = [1, 1]} : vector<14x256xbf16> to vector<14x224xbf16>
    %cst_417 = arith.constant 0.000000e+00 : bf16
    %802 = vector.broadcast %cst_417 : bf16 to vector<14x32xbf16>
    %803 = tpu.concatenate %801, %802 in 1 : vector<14x224xbf16>, vector<14x32xbf16> -> vector<14x256xbf16>
    %c22_418 = arith.constant 22 : index
    %c0_419 = arith.constant 0 : index
    %c0_420 = arith.constant 0 : index
    %804 = vector.load %arg6[%c22_418, %c0_419, %c0_420] : memref<25x5x14xbf16, #tpu.memory_space<vmem>>, vector<1x5x14xbf16>
    %805 = vector.shape_cast %804 : vector<1x5x14xbf16> to vector<5x14xbf16>
    %cst_421 = arith.constant dense<0.000000e+00> : vector<5x256xf32>
    %806 = tpu.matmul %805, %803, %cst_421 {dimension_numbers = #tpu.dot_dimension_numbers<[1], [0], [0], [1], [0, 0, 1, 1], [], []>} : vector<5x14xbf16>, vector<14x256xbf16>, vector<5x256xf32> -> vector<5x256xf32>
    %807 = arith.addf %800, %806 : vector<5x256xf32>
    %808 = vector.extract_strided_slice %576 {offsets = [0, 33], sizes = [14, 223], strides = [1, 1]} : vector<14x256xbf16> to vector<14x223xbf16>
    %cst_422 = arith.constant 0.000000e+00 : bf16
    %809 = vector.broadcast %cst_422 : bf16 to vector<14x33xbf16>
    %810 = tpu.concatenate %808, %809 in 1 : vector<14x223xbf16>, vector<14x33xbf16> -> vector<14x256xbf16>
    %cst_423 = arith.constant 0.000000e+00 : bf16
    %811 = vector.broadcast %cst_423 : bf16 to vector<14x256xbf16>
    %812 = vector.shape_cast %43 : vector<1x256xi1> to vector<1x256xi1>
    %813 = vector.broadcast %812 : vector<1x256xi1> to vector<14x256xi1>
    %814 = arith.select %813, %810, %811 : vector<14x256xi1>, vector<14x256xbf16>
    %c23_424 = arith.constant 23 : index
    %c0_425 = arith.constant 0 : index
    %c0_426 = arith.constant 0 : index
    %815 = vector.load %arg6[%c23_424, %c0_425, %c0_426] : memref<25x5x14xbf16, #tpu.memory_space<vmem>>, vector<1x5x14xbf16>
    %816 = vector.shape_cast %815 : vector<1x5x14xbf16> to vector<5x14xbf16>
    %cst_427 = arith.constant dense<0.000000e+00> : vector<5x256xf32>
    %817 = tpu.matmul %816, %814, %cst_427 {dimension_numbers = #tpu.dot_dimension_numbers<[1], [0], [0], [1], [0, 0, 1, 1], [], []>} : vector<5x14xbf16>, vector<14x256xbf16>, vector<5x256xf32> -> vector<5x256xf32>
    %818 = arith.addf %807, %817 : vector<5x256xf32>
    %819 = vector.extract_strided_slice %576 {offsets = [0, 34], sizes = [14, 222], strides = [1, 1]} : vector<14x256xbf16> to vector<14x222xbf16>
    %cst_428 = arith.constant 0.000000e+00 : bf16
    %820 = vector.broadcast %cst_428 : bf16 to vector<14x34xbf16>
    %821 = tpu.concatenate %819, %820 in 1 : vector<14x222xbf16>, vector<14x34xbf16> -> vector<14x256xbf16>
    %cst_429 = arith.constant 0.000000e+00 : bf16
    %822 = vector.broadcast %cst_429 : bf16 to vector<14x256xbf16>
    %823 = vector.shape_cast %52 : vector<1x256xi1> to vector<1x256xi1>
    %824 = vector.broadcast %823 : vector<1x256xi1> to vector<14x256xi1>
    %825 = arith.select %824, %821, %822 : vector<14x256xi1>, vector<14x256xbf16>
    %c24_430 = arith.constant 24 : index
    %c0_431 = arith.constant 0 : index
    %c0_432 = arith.constant 0 : index
    %826 = vector.load %arg6[%c24_430, %c0_431, %c0_432] : memref<25x5x14xbf16, #tpu.memory_space<vmem>>, vector<1x5x14xbf16>
    %827 = vector.shape_cast %826 : vector<1x5x14xbf16> to vector<5x14xbf16>
    %cst_433 = arith.constant dense<0.000000e+00> : vector<5x256xf32>
    %828 = tpu.matmul %827, %825, %cst_433 {dimension_numbers = #tpu.dot_dimension_numbers<[1], [0], [0], [1], [0, 0, 1, 1], [], []>} : vector<5x14xbf16>, vector<14x256xbf16>, vector<5x256xf32> -> vector<5x256xf32>
    %829 = arith.addf %818, %828 : vector<5x256xf32>
    %c0_434 = arith.constant 0 : index
    %c0_435 = arith.constant 0 : index
    %830 = vector.load %arg7[%c0_434, %c0_435] : memref<5x1xf32, #tpu.memory_space<vmem>>, vector<5x1xf32>
    %831 = vector.broadcast %830 : vector<5x1xf32> to vector<5x256xf32>
    %832 = arith.addf %829, %831 : vector<5x256xf32>
    %833 = vector.extract_strided_slice %55 {offsets = [0, 0], sizes = [3, 256], strides = [1, 1]} : vector<7x256xf32> to vector<3x256xf32>
    %834 = vector.extract_strided_slice %832 {offsets = [1, 0], sizes = [4, 256], strides = [1, 1]} : vector<5x256xf32> to vector<4x256xf32>
    %835 = tpu.concatenate %833, %834 in 0 : vector<3x256xf32>, vector<4x256xf32> -> vector<7x256xf32>
    %836 = vector.extract_strided_slice %54 {offsets = [7, 0], sizes = [4, 256], strides = [1, 1]} : vector<11x256xf32> to vector<4x256xf32>
    %837 = tpu.concatenate %835, %836 in 0 : vector<7x256xf32>, vector<4x256xf32> -> vector<11x256xf32>
    %838 = arith.truncf %837 : vector<11x256xf32> to vector<11x256xbf16>
    %cst_436 = arith.constant 0.000000e+00 : f32
    %839 = vector.broadcast %cst_436 : f32 to vector<8x256xf32>
    %c0_437 = arith.constant 0 : index
    %c0_438 = arith.constant 0 : index
    %c0_439 = arith.constant 0 : index
    %840 = vector.load %arg8[%c0_437, %c0_438, %c0_439] : memref<1x8x11xbf16, #tpu.memory_space<vmem>>, vector<1x8x11xbf16>
    %841 = vector.shape_cast %840 : vector<1x8x11xbf16> to vector<8x11xbf16>
    %cst_440 = arith.constant dense<0.000000e+00> : vector<8x256xf32>
    %842 = tpu.matmul %841, %838, %cst_440 {dimension_numbers = #tpu.dot_dimension_numbers<[1], [0], [0], [1], [0, 0, 1, 1], [], []>} : vector<8x11xbf16>, vector<11x256xbf16>, vector<8x256xf32> -> vector<8x256xf32>
    %843 = arith.addf %839, %842 : vector<8x256xf32>
    %c0_441 = arith.constant 0 : index
    %c0_442 = arith.constant 0 : index
    %844 = vector.load %arg9[%c0_441, %c0_442] : memref<8x1xf32, #tpu.memory_space<vmem>>, vector<8x1xf32>
    %845 = vector.broadcast %844 : vector<8x1xf32> to vector<8x256xf32>
    %846 = arith.addf %843, %845 : vector<8x256xf32>
    %cst_443 = arith.constant 0.000000e+00 : f32
    %847 = vector.broadcast %cst_443 : f32 to vector<8x256xf32>
    %848 = arith.maximumf %846, %847 : vector<8x256xf32>
    %849 = arith.truncf %848 : vector<8x256xf32> to vector<8x256xbf16>
    %cst_444 = arith.constant 0.000000e+00 : f32
    %850 = vector.broadcast %cst_444 : f32 to vector<8x256xf32>
    %cst_445 = arith.constant 0.000000e+00 : bf16
    %851 = vector.broadcast %cst_445 : bf16 to vector<8x17xbf16>
    %852 = vector.extract_strided_slice %849 {offsets = [0, 0], sizes = [8, 239], strides = [1, 1]} : vector<8x256xbf16> to vector<8x239xbf16>
    %853 = tpu.concatenate %851, %852 in 1 : vector<8x17xbf16>, vector<8x239xbf16> -> vector<8x256xbf16>
    %cst_446 = arith.constant 0.000000e+00 : bf16
    %854 = vector.broadcast %cst_446 : bf16 to vector<8x256xbf16>
    %855 = vector.shape_cast %34 : vector<1x256xi1> to vector<1x256xi1>
    %856 = vector.broadcast %855 : vector<1x256xi1> to vector<8x256xi1>
    %857 = arith.select %856, %853, %854 : vector<8x256xi1>, vector<8x256xbf16>
    %c0_447 = arith.constant 0 : index
    %c0_448 = arith.constant 0 : index
    %c0_449 = arith.constant 0 : index
    %858 = vector.load %arg10[%c0_447, %c0_448, %c0_449] : memref<9x8x8xbf16, #tpu.memory_space<vmem>>, vector<1x8x8xbf16>
    %859 = vector.shape_cast %858 : vector<1x8x8xbf16> to vector<8x8xbf16>
    %cst_450 = arith.constant dense<0.000000e+00> : vector<8x256xf32>
    %860 = tpu.matmul %859, %857, %cst_450 {dimension_numbers = #tpu.dot_dimension_numbers<[1], [0], [0], [1], [0, 0, 1, 1], [], []>} : vector<8x8xbf16>, vector<8x256xbf16>, vector<8x256xf32> -> vector<8x256xf32>
    %861 = arith.addf %850, %860 : vector<8x256xf32>
    %cst_451 = arith.constant 0.000000e+00 : bf16
    %862 = vector.broadcast %cst_451 : bf16 to vector<8x16xbf16>
    %863 = vector.extract_strided_slice %849 {offsets = [0, 0], sizes = [8, 240], strides = [1, 1]} : vector<8x256xbf16> to vector<8x240xbf16>
    %864 = tpu.concatenate %862, %863 in 1 : vector<8x16xbf16>, vector<8x240xbf16> -> vector<8x256xbf16>
    %c1_452 = arith.constant 1 : index
    %c0_453 = arith.constant 0 : index
    %c0_454 = arith.constant 0 : index
    %865 = vector.load %arg10[%c1_452, %c0_453, %c0_454] : memref<9x8x8xbf16, #tpu.memory_space<vmem>>, vector<1x8x8xbf16>
    %866 = vector.shape_cast %865 : vector<1x8x8xbf16> to vector<8x8xbf16>
    %cst_455 = arith.constant dense<0.000000e+00> : vector<8x256xf32>
    %867 = tpu.matmul %866, %864, %cst_455 {dimension_numbers = #tpu.dot_dimension_numbers<[1], [0], [0], [1], [0, 0, 1, 1], [], []>} : vector<8x8xbf16>, vector<8x256xbf16>, vector<8x256xf32> -> vector<8x256xf32>
    %868 = arith.addf %861, %867 : vector<8x256xf32>
    %cst_456 = arith.constant 0.000000e+00 : bf16
    %869 = vector.broadcast %cst_456 : bf16 to vector<8x15xbf16>
    %870 = vector.extract_strided_slice %849 {offsets = [0, 0], sizes = [8, 241], strides = [1, 1]} : vector<8x256xbf16> to vector<8x241xbf16>
    %871 = tpu.concatenate %869, %870 in 1 : vector<8x15xbf16>, vector<8x241xbf16> -> vector<8x256xbf16>
    %cst_457 = arith.constant 0.000000e+00 : bf16
    %872 = vector.broadcast %cst_457 : bf16 to vector<8x256xbf16>
    %873 = vector.shape_cast %43 : vector<1x256xi1> to vector<1x256xi1>
    %874 = vector.broadcast %873 : vector<1x256xi1> to vector<8x256xi1>
    %875 = arith.select %874, %871, %872 : vector<8x256xi1>, vector<8x256xbf16>
    %c2_458 = arith.constant 2 : index
    %c0_459 = arith.constant 0 : index
    %c0_460 = arith.constant 0 : index
    %876 = vector.load %arg10[%c2_458, %c0_459, %c0_460] : memref<9x8x8xbf16, #tpu.memory_space<vmem>>, vector<1x8x8xbf16>
    %877 = vector.shape_cast %876 : vector<1x8x8xbf16> to vector<8x8xbf16>
    %cst_461 = arith.constant dense<0.000000e+00> : vector<8x256xf32>
    %878 = tpu.matmul %877, %875, %cst_461 {dimension_numbers = #tpu.dot_dimension_numbers<[1], [0], [0], [1], [0, 0, 1, 1], [], []>} : vector<8x8xbf16>, vector<8x256xbf16>, vector<8x256xf32> -> vector<8x256xf32>
    %879 = arith.addf %868, %878 : vector<8x256xf32>
    %cst_462 = arith.constant 0.000000e+00 : bf16
    %880 = vector.broadcast %cst_462 : bf16 to vector<8x1xbf16>
    %881 = vector.extract_strided_slice %849 {offsets = [0, 0], sizes = [8, 255], strides = [1, 1]} : vector<8x256xbf16> to vector<8x255xbf16>
    %882 = tpu.concatenate %880, %881 in 1 : vector<8x1xbf16>, vector<8x255xbf16> -> vector<8x256xbf16>
    %cst_463 = arith.constant 0.000000e+00 : bf16
    %883 = vector.broadcast %cst_463 : bf16 to vector<8x256xbf16>
    %884 = vector.shape_cast %34 : vector<1x256xi1> to vector<1x256xi1>
    %885 = vector.broadcast %884 : vector<1x256xi1> to vector<8x256xi1>
    %886 = arith.select %885, %882, %883 : vector<8x256xi1>, vector<8x256xbf16>
    %c3_464 = arith.constant 3 : index
    %c0_465 = arith.constant 0 : index
    %c0_466 = arith.constant 0 : index
    %887 = vector.load %arg10[%c3_464, %c0_465, %c0_466] : memref<9x8x8xbf16, #tpu.memory_space<vmem>>, vector<1x8x8xbf16>
    %888 = vector.shape_cast %887 : vector<1x8x8xbf16> to vector<8x8xbf16>
    %cst_467 = arith.constant dense<0.000000e+00> : vector<8x256xf32>
    %889 = tpu.matmul %888, %886, %cst_467 {dimension_numbers = #tpu.dot_dimension_numbers<[1], [0], [0], [1], [0, 0, 1, 1], [], []>} : vector<8x8xbf16>, vector<8x256xbf16>, vector<8x256xf32> -> vector<8x256xf32>
    %890 = arith.addf %879, %889 : vector<8x256xf32>
    %c4_468 = arith.constant 4 : index
    %c0_469 = arith.constant 0 : index
    %c0_470 = arith.constant 0 : index
    %891 = vector.load %arg10[%c4_468, %c0_469, %c0_470] : memref<9x8x8xbf16, #tpu.memory_space<vmem>>, vector<1x8x8xbf16>
    %892 = vector.shape_cast %891 : vector<1x8x8xbf16> to vector<8x8xbf16>
    %cst_471 = arith.constant dense<0.000000e+00> : vector<8x256xf32>
    %893 = tpu.matmul %892, %849, %cst_471 {dimension_numbers = #tpu.dot_dimension_numbers<[1], [0], [0], [1], [0, 0, 1, 1], [], []>} : vector<8x8xbf16>, vector<8x256xbf16>, vector<8x256xf32> -> vector<8x256xf32>
    %894 = arith.addf %890, %893 : vector<8x256xf32>
    %895 = vector.extract_strided_slice %849 {offsets = [0, 1], sizes = [8, 255], strides = [1, 1]} : vector<8x256xbf16> to vector<8x255xbf16>
    %cst_472 = arith.constant 0.000000e+00 : bf16
    %896 = vector.broadcast %cst_472 : bf16 to vector<8x1xbf16>
    %897 = tpu.concatenate %895, %896 in 1 : vector<8x255xbf16>, vector<8x1xbf16> -> vector<8x256xbf16>
    %cst_473 = arith.constant 0.000000e+00 : bf16
    %898 = vector.broadcast %cst_473 : bf16 to vector<8x256xbf16>
    %899 = vector.shape_cast %43 : vector<1x256xi1> to vector<1x256xi1>
    %900 = vector.broadcast %899 : vector<1x256xi1> to vector<8x256xi1>
    %901 = arith.select %900, %897, %898 : vector<8x256xi1>, vector<8x256xbf16>
    %c5_474 = arith.constant 5 : index
    %c0_475 = arith.constant 0 : index
    %c0_476 = arith.constant 0 : index
    %902 = vector.load %arg10[%c5_474, %c0_475, %c0_476] : memref<9x8x8xbf16, #tpu.memory_space<vmem>>, vector<1x8x8xbf16>
    %903 = vector.shape_cast %902 : vector<1x8x8xbf16> to vector<8x8xbf16>
    %cst_477 = arith.constant dense<0.000000e+00> : vector<8x256xf32>
    %904 = tpu.matmul %903, %901, %cst_477 {dimension_numbers = #tpu.dot_dimension_numbers<[1], [0], [0], [1], [0, 0, 1, 1], [], []>} : vector<8x8xbf16>, vector<8x256xbf16>, vector<8x256xf32> -> vector<8x256xf32>
    %905 = arith.addf %894, %904 : vector<8x256xf32>
    %906 = vector.extract_strided_slice %849 {offsets = [0, 15], sizes = [8, 241], strides = [1, 1]} : vector<8x256xbf16> to vector<8x241xbf16>
    %cst_478 = arith.constant 0.000000e+00 : bf16
    %907 = vector.broadcast %cst_478 : bf16 to vector<8x15xbf16>
    %908 = tpu.concatenate %906, %907 in 1 : vector<8x241xbf16>, vector<8x15xbf16> -> vector<8x256xbf16>
    %cst_479 = arith.constant 0.000000e+00 : bf16
    %909 = vector.broadcast %cst_479 : bf16 to vector<8x256xbf16>
    %910 = vector.shape_cast %34 : vector<1x256xi1> to vector<1x256xi1>
    %911 = vector.broadcast %910 : vector<1x256xi1> to vector<8x256xi1>
    %912 = arith.select %911, %908, %909 : vector<8x256xi1>, vector<8x256xbf16>
    %c6_480 = arith.constant 6 : index
    %c0_481 = arith.constant 0 : index
    %c0_482 = arith.constant 0 : index
    %913 = vector.load %arg10[%c6_480, %c0_481, %c0_482] : memref<9x8x8xbf16, #tpu.memory_space<vmem>>, vector<1x8x8xbf16>
    %914 = vector.shape_cast %913 : vector<1x8x8xbf16> to vector<8x8xbf16>
    %cst_483 = arith.constant dense<0.000000e+00> : vector<8x256xf32>
    %915 = tpu.matmul %914, %912, %cst_483 {dimension_numbers = #tpu.dot_dimension_numbers<[1], [0], [0], [1], [0, 0, 1, 1], [], []>} : vector<8x8xbf16>, vector<8x256xbf16>, vector<8x256xf32> -> vector<8x256xf32>
    %916 = arith.addf %905, %915 : vector<8x256xf32>
    %917 = vector.extract_strided_slice %849 {offsets = [0, 16], sizes = [8, 240], strides = [1, 1]} : vector<8x256xbf16> to vector<8x240xbf16>
    %cst_484 = arith.constant 0.000000e+00 : bf16
    %918 = vector.broadcast %cst_484 : bf16 to vector<8x16xbf16>
    %919 = tpu.concatenate %917, %918 in 1 : vector<8x240xbf16>, vector<8x16xbf16> -> vector<8x256xbf16>
    %c7_485 = arith.constant 7 : index
    %c0_486 = arith.constant 0 : index
    %c0_487 = arith.constant 0 : index
    %920 = vector.load %arg10[%c7_485, %c0_486, %c0_487] : memref<9x8x8xbf16, #tpu.memory_space<vmem>>, vector<1x8x8xbf16>
    %921 = vector.shape_cast %920 : vector<1x8x8xbf16> to vector<8x8xbf16>
    %cst_488 = arith.constant dense<0.000000e+00> : vector<8x256xf32>
    %922 = tpu.matmul %921, %919, %cst_488 {dimension_numbers = #tpu.dot_dimension_numbers<[1], [0], [0], [1], [0, 0, 1, 1], [], []>} : vector<8x8xbf16>, vector<8x256xbf16>, vector<8x256xf32> -> vector<8x256xf32>
    %923 = arith.addf %916, %922 : vector<8x256xf32>
    %924 = vector.extract_strided_slice %849 {offsets = [0, 17], sizes = [8, 239], strides = [1, 1]} : vector<8x256xbf16> to vector<8x239xbf16>
    %cst_489 = arith.constant 0.000000e+00 : bf16
    %925 = vector.broadcast %cst_489 : bf16 to vector<8x17xbf16>
    %926 = tpu.concatenate %924, %925 in 1 : vector<8x239xbf16>, vector<8x17xbf16> -> vector<8x256xbf16>
    %cst_490 = arith.constant 0.000000e+00 : bf16
    %927 = vector.broadcast %cst_490 : bf16 to vector<8x256xbf16>
    %928 = vector.shape_cast %43 : vector<1x256xi1> to vector<1x256xi1>
    %929 = vector.broadcast %928 : vector<1x256xi1> to vector<8x256xi1>
    %930 = arith.select %929, %926, %927 : vector<8x256xi1>, vector<8x256xbf16>
    %c8_491 = arith.constant 8 : index
    %c0_492 = arith.constant 0 : index
    %c0_493 = arith.constant 0 : index
    %931 = vector.load %arg10[%c8_491, %c0_492, %c0_493] : memref<9x8x8xbf16, #tpu.memory_space<vmem>>, vector<1x8x8xbf16>
    %932 = vector.shape_cast %931 : vector<1x8x8xbf16> to vector<8x8xbf16>
    %cst_494 = arith.constant dense<0.000000e+00> : vector<8x256xf32>
    %933 = tpu.matmul %932, %930, %cst_494 {dimension_numbers = #tpu.dot_dimension_numbers<[1], [0], [0], [1], [0, 0, 1, 1], [], []>} : vector<8x8xbf16>, vector<8x256xbf16>, vector<8x256xf32> -> vector<8x256xf32>
    %934 = arith.addf %923, %933 : vector<8x256xf32>
    %c0_495 = arith.constant 0 : index
    %c0_496 = arith.constant 0 : index
    %935 = vector.load %arg11[%c0_495, %c0_496] : memref<8x1xf32, #tpu.memory_space<vmem>>, vector<8x1xf32>
    %936 = vector.broadcast %935 : vector<8x1xf32> to vector<8x256xf32>
    %937 = arith.addf %934, %936 : vector<8x256xf32>
    %cst_497 = arith.constant 0.000000e+00 : f32
    %938 = vector.broadcast %cst_497 : f32 to vector<8x256xf32>
    %939 = arith.maximumf %937, %938 : vector<8x256xf32>
    %940 = arith.truncf %939 : vector<8x256xf32> to vector<8x256xbf16>
    %cst_498 = arith.constant 0.000000e+00 : f32
    %941 = vector.broadcast %cst_498 : f32 to vector<8x256xf32>
    %cst_499 = arith.constant 0.000000e+00 : bf16
    %942 = vector.broadcast %cst_499 : bf16 to vector<8x17xbf16>
    %943 = vector.extract_strided_slice %940 {offsets = [0, 0], sizes = [8, 239], strides = [1, 1]} : vector<8x256xbf16> to vector<8x239xbf16>
    %944 = tpu.concatenate %942, %943 in 1 : vector<8x17xbf16>, vector<8x239xbf16> -> vector<8x256xbf16>
    %cst_500 = arith.constant 0.000000e+00 : bf16
    %945 = vector.broadcast %cst_500 : bf16 to vector<8x256xbf16>
    %946 = vector.shape_cast %34 : vector<1x256xi1> to vector<1x256xi1>
    %947 = vector.broadcast %946 : vector<1x256xi1> to vector<8x256xi1>
    %948 = arith.select %947, %944, %945 : vector<8x256xi1>, vector<8x256xbf16>
    %c0_501 = arith.constant 0 : index
    %c0_502 = arith.constant 0 : index
    %c0_503 = arith.constant 0 : index
    %949 = vector.load %arg12[%c0_501, %c0_502, %c0_503] : memref<9x8x8xbf16, #tpu.memory_space<vmem>>, vector<1x8x8xbf16>
    %950 = vector.shape_cast %949 : vector<1x8x8xbf16> to vector<8x8xbf16>
    %cst_504 = arith.constant dense<0.000000e+00> : vector<8x256xf32>
    %951 = tpu.matmul %950, %948, %cst_504 {dimension_numbers = #tpu.dot_dimension_numbers<[1], [0], [0], [1], [0, 0, 1, 1], [], []>} : vector<8x8xbf16>, vector<8x256xbf16>, vector<8x256xf32> -> vector<8x256xf32>
    %952 = arith.addf %941, %951 : vector<8x256xf32>
    %cst_505 = arith.constant 0.000000e+00 : bf16
    %953 = vector.broadcast %cst_505 : bf16 to vector<8x16xbf16>
    %954 = vector.extract_strided_slice %940 {offsets = [0, 0], sizes = [8, 240], strides = [1, 1]} : vector<8x256xbf16> to vector<8x240xbf16>
    %955 = tpu.concatenate %953, %954 in 1 : vector<8x16xbf16>, vector<8x240xbf16> -> vector<8x256xbf16>
    %c1_506 = arith.constant 1 : index
    %c0_507 = arith.constant 0 : index
    %c0_508 = arith.constant 0 : index
    %956 = vector.load %arg12[%c1_506, %c0_507, %c0_508] : memref<9x8x8xbf16, #tpu.memory_space<vmem>>, vector<1x8x8xbf16>
    %957 = vector.shape_cast %956 : vector<1x8x8xbf16> to vector<8x8xbf16>
    %cst_509 = arith.constant dense<0.000000e+00> : vector<8x256xf32>
    %958 = tpu.matmul %957, %955, %cst_509 {dimension_numbers = #tpu.dot_dimension_numbers<[1], [0], [0], [1], [0, 0, 1, 1], [], []>} : vector<8x8xbf16>, vector<8x256xbf16>, vector<8x256xf32> -> vector<8x256xf32>
    %959 = arith.addf %952, %958 : vector<8x256xf32>
    %cst_510 = arith.constant 0.000000e+00 : bf16
    %960 = vector.broadcast %cst_510 : bf16 to vector<8x15xbf16>
    %961 = vector.extract_strided_slice %940 {offsets = [0, 0], sizes = [8, 241], strides = [1, 1]} : vector<8x256xbf16> to vector<8x241xbf16>
    %962 = tpu.concatenate %960, %961 in 1 : vector<8x15xbf16>, vector<8x241xbf16> -> vector<8x256xbf16>
    %cst_511 = arith.constant 0.000000e+00 : bf16
    %963 = vector.broadcast %cst_511 : bf16 to vector<8x256xbf16>
    %964 = vector.shape_cast %43 : vector<1x256xi1> to vector<1x256xi1>
    %965 = vector.broadcast %964 : vector<1x256xi1> to vector<8x256xi1>
    %966 = arith.select %965, %962, %963 : vector<8x256xi1>, vector<8x256xbf16>
    %c2_512 = arith.constant 2 : index
    %c0_513 = arith.constant 0 : index
    %c0_514 = arith.constant 0 : index
    %967 = vector.load %arg12[%c2_512, %c0_513, %c0_514] : memref<9x8x8xbf16, #tpu.memory_space<vmem>>, vector<1x8x8xbf16>
    %968 = vector.shape_cast %967 : vector<1x8x8xbf16> to vector<8x8xbf16>
    %cst_515 = arith.constant dense<0.000000e+00> : vector<8x256xf32>
    %969 = tpu.matmul %968, %966, %cst_515 {dimension_numbers = #tpu.dot_dimension_numbers<[1], [0], [0], [1], [0, 0, 1, 1], [], []>} : vector<8x8xbf16>, vector<8x256xbf16>, vector<8x256xf32> -> vector<8x256xf32>
    %970 = arith.addf %959, %969 : vector<8x256xf32>
    %cst_516 = arith.constant 0.000000e+00 : bf16
    %971 = vector.broadcast %cst_516 : bf16 to vector<8x1xbf16>
    %972 = vector.extract_strided_slice %940 {offsets = [0, 0], sizes = [8, 255], strides = [1, 1]} : vector<8x256xbf16> to vector<8x255xbf16>
    %973 = tpu.concatenate %971, %972 in 1 : vector<8x1xbf16>, vector<8x255xbf16> -> vector<8x256xbf16>
    %cst_517 = arith.constant 0.000000e+00 : bf16
    %974 = vector.broadcast %cst_517 : bf16 to vector<8x256xbf16>
    %975 = vector.shape_cast %34 : vector<1x256xi1> to vector<1x256xi1>
    %976 = vector.broadcast %975 : vector<1x256xi1> to vector<8x256xi1>
    %977 = arith.select %976, %973, %974 : vector<8x256xi1>, vector<8x256xbf16>
    %c3_518 = arith.constant 3 : index
    %c0_519 = arith.constant 0 : index
    %c0_520 = arith.constant 0 : index
    %978 = vector.load %arg12[%c3_518, %c0_519, %c0_520] : memref<9x8x8xbf16, #tpu.memory_space<vmem>>, vector<1x8x8xbf16>
    %979 = vector.shape_cast %978 : vector<1x8x8xbf16> to vector<8x8xbf16>
    %cst_521 = arith.constant dense<0.000000e+00> : vector<8x256xf32>
    %980 = tpu.matmul %979, %977, %cst_521 {dimension_numbers = #tpu.dot_dimension_numbers<[1], [0], [0], [1], [0, 0, 1, 1], [], []>} : vector<8x8xbf16>, vector<8x256xbf16>, vector<8x256xf32> -> vector<8x256xf32>
    %981 = arith.addf %970, %980 : vector<8x256xf32>
    %c4_522 = arith.constant 4 : index
    %c0_523 = arith.constant 0 : index
    %c0_524 = arith.constant 0 : index
    %982 = vector.load %arg12[%c4_522, %c0_523, %c0_524] : memref<9x8x8xbf16, #tpu.memory_space<vmem>>, vector<1x8x8xbf16>
    %983 = vector.shape_cast %982 : vector<1x8x8xbf16> to vector<8x8xbf16>
    %cst_525 = arith.constant dense<0.000000e+00> : vector<8x256xf32>
    %984 = tpu.matmul %983, %940, %cst_525 {dimension_numbers = #tpu.dot_dimension_numbers<[1], [0], [0], [1], [0, 0, 1, 1], [], []>} : vector<8x8xbf16>, vector<8x256xbf16>, vector<8x256xf32> -> vector<8x256xf32>
    %985 = arith.addf %981, %984 : vector<8x256xf32>
    %986 = vector.extract_strided_slice %940 {offsets = [0, 1], sizes = [8, 255], strides = [1, 1]} : vector<8x256xbf16> to vector<8x255xbf16>
    %cst_526 = arith.constant 0.000000e+00 : bf16
    %987 = vector.broadcast %cst_526 : bf16 to vector<8x1xbf16>
    %988 = tpu.concatenate %986, %987 in 1 : vector<8x255xbf16>, vector<8x1xbf16> -> vector<8x256xbf16>
    %cst_527 = arith.constant 0.000000e+00 : bf16
    %989 = vector.broadcast %cst_527 : bf16 to vector<8x256xbf16>
    %990 = vector.shape_cast %43 : vector<1x256xi1> to vector<1x256xi1>
    %991 = vector.broadcast %990 : vector<1x256xi1> to vector<8x256xi1>
    %992 = arith.select %991, %988, %989 : vector<8x256xi1>, vector<8x256xbf16>
    %c5_528 = arith.constant 5 : index
    %c0_529 = arith.constant 0 : index
    %c0_530 = arith.constant 0 : index
    %993 = vector.load %arg12[%c5_528, %c0_529, %c0_530] : memref<9x8x8xbf16, #tpu.memory_space<vmem>>, vector<1x8x8xbf16>
    %994 = vector.shape_cast %993 : vector<1x8x8xbf16> to vector<8x8xbf16>
    %cst_531 = arith.constant dense<0.000000e+00> : vector<8x256xf32>
    %995 = tpu.matmul %994, %992, %cst_531 {dimension_numbers = #tpu.dot_dimension_numbers<[1], [0], [0], [1], [0, 0, 1, 1], [], []>} : vector<8x8xbf16>, vector<8x256xbf16>, vector<8x256xf32> -> vector<8x256xf32>
    %996 = arith.addf %985, %995 : vector<8x256xf32>
    %997 = vector.extract_strided_slice %940 {offsets = [0, 15], sizes = [8, 241], strides = [1, 1]} : vector<8x256xbf16> to vector<8x241xbf16>
    %cst_532 = arith.constant 0.000000e+00 : bf16
    %998 = vector.broadcast %cst_532 : bf16 to vector<8x15xbf16>
    %999 = tpu.concatenate %997, %998 in 1 : vector<8x241xbf16>, vector<8x15xbf16> -> vector<8x256xbf16>
    %cst_533 = arith.constant 0.000000e+00 : bf16
    %1000 = vector.broadcast %cst_533 : bf16 to vector<8x256xbf16>
    %1001 = vector.shape_cast %34 : vector<1x256xi1> to vector<1x256xi1>
    %1002 = vector.broadcast %1001 : vector<1x256xi1> to vector<8x256xi1>
    %1003 = arith.select %1002, %999, %1000 : vector<8x256xi1>, vector<8x256xbf16>
    %c6_534 = arith.constant 6 : index
    %c0_535 = arith.constant 0 : index
    %c0_536 = arith.constant 0 : index
    %1004 = vector.load %arg12[%c6_534, %c0_535, %c0_536] : memref<9x8x8xbf16, #tpu.memory_space<vmem>>, vector<1x8x8xbf16>
    %1005 = vector.shape_cast %1004 : vector<1x8x8xbf16> to vector<8x8xbf16>
    %cst_537 = arith.constant dense<0.000000e+00> : vector<8x256xf32>
    %1006 = tpu.matmul %1005, %1003, %cst_537 {dimension_numbers = #tpu.dot_dimension_numbers<[1], [0], [0], [1], [0, 0, 1, 1], [], []>} : vector<8x8xbf16>, vector<8x256xbf16>, vector<8x256xf32> -> vector<8x256xf32>
    %1007 = arith.addf %996, %1006 : vector<8x256xf32>
    %1008 = vector.extract_strided_slice %940 {offsets = [0, 16], sizes = [8, 240], strides = [1, 1]} : vector<8x256xbf16> to vector<8x240xbf16>
    %cst_538 = arith.constant 0.000000e+00 : bf16
    %1009 = vector.broadcast %cst_538 : bf16 to vector<8x16xbf16>
    %1010 = tpu.concatenate %1008, %1009 in 1 : vector<8x240xbf16>, vector<8x16xbf16> -> vector<8x256xbf16>
    %c7_539 = arith.constant 7 : index
    %c0_540 = arith.constant 0 : index
    %c0_541 = arith.constant 0 : index
    %1011 = vector.load %arg12[%c7_539, %c0_540, %c0_541] : memref<9x8x8xbf16, #tpu.memory_space<vmem>>, vector<1x8x8xbf16>
    %1012 = vector.shape_cast %1011 : vector<1x8x8xbf16> to vector<8x8xbf16>
    %cst_542 = arith.constant dense<0.000000e+00> : vector<8x256xf32>
    %1013 = tpu.matmul %1012, %1010, %cst_542 {dimension_numbers = #tpu.dot_dimension_numbers<[1], [0], [0], [1], [0, 0, 1, 1], [], []>} : vector<8x8xbf16>, vector<8x256xbf16>, vector<8x256xf32> -> vector<8x256xf32>
    %1014 = arith.addf %1007, %1013 : vector<8x256xf32>
    %1015 = vector.extract_strided_slice %940 {offsets = [0, 17], sizes = [8, 239], strides = [1, 1]} : vector<8x256xbf16> to vector<8x239xbf16>
    %cst_543 = arith.constant 0.000000e+00 : bf16
    %1016 = vector.broadcast %cst_543 : bf16 to vector<8x17xbf16>
    %1017 = tpu.concatenate %1015, %1016 in 1 : vector<8x239xbf16>, vector<8x17xbf16> -> vector<8x256xbf16>
    %cst_544 = arith.constant 0.000000e+00 : bf16
    %1018 = vector.broadcast %cst_544 : bf16 to vector<8x256xbf16>
    %1019 = vector.shape_cast %43 : vector<1x256xi1> to vector<1x256xi1>
    %1020 = vector.broadcast %1019 : vector<1x256xi1> to vector<8x256xi1>
    %1021 = arith.select %1020, %1017, %1018 : vector<8x256xi1>, vector<8x256xbf16>
    %c8_545 = arith.constant 8 : index
    %c0_546 = arith.constant 0 : index
    %c0_547 = arith.constant 0 : index
    %1022 = vector.load %arg12[%c8_545, %c0_546, %c0_547] : memref<9x8x8xbf16, #tpu.memory_space<vmem>>, vector<1x8x8xbf16>
    %1023 = vector.shape_cast %1022 : vector<1x8x8xbf16> to vector<8x8xbf16>
    %cst_548 = arith.constant dense<0.000000e+00> : vector<8x256xf32>
    %1024 = tpu.matmul %1023, %1021, %cst_548 {dimension_numbers = #tpu.dot_dimension_numbers<[1], [0], [0], [1], [0, 0, 1, 1], [], []>} : vector<8x8xbf16>, vector<8x256xbf16>, vector<8x256xf32> -> vector<8x256xf32>
    %1025 = arith.addf %1014, %1024 : vector<8x256xf32>
    %c0_549 = arith.constant 0 : index
    %c0_550 = arith.constant 0 : index
    %1026 = vector.load %arg13[%c0_549, %c0_550] : memref<8x1xf32, #tpu.memory_space<vmem>>, vector<8x1xf32>
    %1027 = vector.broadcast %1026 : vector<8x1xf32> to vector<8x256xf32>
    %1028 = arith.addf %1025, %1027 : vector<8x256xf32>
    %1029 = vector.extract_strided_slice %1028 {offsets = [4, 0], sizes = [4, 256], strides = [1, 1]} : vector<8x256xf32> to vector<4x256xf32>
    %1030 = vector.extract_strided_slice %1028 {offsets = [0, 0], sizes = [4, 256], strides = [1, 1]} : vector<8x256xf32> to vector<4x256xf32>
    %1031 = tpu.concatenate %1029, %1030 in 0 : vector<4x256xf32>, vector<4x256xf32> -> vector<8x256xf32>
    %1032 = vector.extract_strided_slice %1031 {offsets = [0, 0], sizes = [4, 256], strides = [1, 1]} : vector<8x256xf32> to vector<4x256xf32>
    %1033 = vector.extract_strided_slice %1031 {offsets = [4, 0], sizes = [4, 256], strides = [1, 1]} : vector<8x256xf32> to vector<4x256xf32>
    %1034 = arith.addf %1032, %1033 : vector<4x256xf32>
    %1035 = tpu.concatenate %1032, %1034 in 0 : vector<4x256xf32>, vector<4x256xf32> -> vector<8x256xf32>
    %1036 = arith.truncf %1035 : vector<8x256xf32> to vector<8x256xbf16>
    %cst_551 = arith.constant 0.000000e+00 : f32
    %1037 = vector.broadcast %cst_551 : f32 to vector<8x256xf32>
    %c0_552 = arith.constant 0 : index
    %c0_553 = arith.constant 0 : index
    %c0_554 = arith.constant 0 : index
    %1038 = vector.load %arg14[%c0_552, %c0_553, %c0_554] : memref<1x8x8xbf16, #tpu.memory_space<vmem>>, vector<1x8x8xbf16>
    %1039 = vector.shape_cast %1038 : vector<1x8x8xbf16> to vector<8x8xbf16>
    %cst_555 = arith.constant dense<0.000000e+00> : vector<8x256xf32>
    %1040 = tpu.matmul %1039, %1036, %cst_555 {dimension_numbers = #tpu.dot_dimension_numbers<[1], [0], [0], [1], [0, 0, 1, 1], [], []>} : vector<8x8xbf16>, vector<8x256xbf16>, vector<8x256xf32> -> vector<8x256xf32>
    %1041 = arith.addf %1037, %1040 : vector<8x256xf32>
    %c0_556 = arith.constant 0 : index
    %c0_557 = arith.constant 0 : index
    %1042 = vector.load %arg15[%c0_556, %c0_557] : memref<8x1xf32, #tpu.memory_space<vmem>>, vector<8x1xf32>
    %1043 = vector.broadcast %1042 : vector<8x1xf32> to vector<8x256xf32>
    %1044 = arith.addf %1041, %1043 : vector<8x256xf32>
    %cst_558 = arith.constant 0.000000e+00 : f32
    %1045 = vector.broadcast %cst_558 : f32 to vector<8x256xf32>
    %1046 = arith.maximumf %1044, %1045 : vector<8x256xf32>
    %1047 = arith.truncf %1046 : vector<8x256xf32> to vector<8x256xbf16>
    %cst_559 = arith.constant 0.000000e+00 : f32
    %1048 = vector.broadcast %cst_559 : f32 to vector<8x256xf32>
    %c0_560 = arith.constant 0 : index
    %c0_561 = arith.constant 0 : index
    %c0_562 = arith.constant 0 : index
    %1049 = vector.load %arg16[%c0_560, %c0_561, %c0_562] : memref<1x8x8xbf16, #tpu.memory_space<vmem>>, vector<1x8x8xbf16>
    %1050 = vector.shape_cast %1049 : vector<1x8x8xbf16> to vector<8x8xbf16>
    %cst_563 = arith.constant dense<0.000000e+00> : vector<8x256xf32>
    %1051 = tpu.matmul %1050, %1047, %cst_563 {dimension_numbers = #tpu.dot_dimension_numbers<[1], [0], [0], [1], [0, 0, 1, 1], [], []>} : vector<8x8xbf16>, vector<8x256xbf16>, vector<8x256xf32> -> vector<8x256xf32>
    %1052 = arith.addf %1048, %1051 : vector<8x256xf32>
    %c0_564 = arith.constant 0 : index
    %c0_565 = arith.constant 0 : index
    %1053 = vector.load %arg17[%c0_564, %c0_565] : memref<8x1xf32, #tpu.memory_space<vmem>>, vector<8x1xf32>
    %1054 = vector.broadcast %1053 : vector<8x1xf32> to vector<8x256xf32>
    %1055 = arith.addf %1052, %1054 : vector<8x256xf32>
    %1056 = arith.addf %1055, %848 : vector<8x256xf32>
    %c0_566 = arith.constant 0 : index
    %c0_567 = arith.constant 0 : index
    %c0_568 = arith.constant 0 : index
    %1057 = vector.load %arg18[%c0_566, %c0_567, %c0_568] : memref<1x8x256xf32, #tpu.memory_space<vmem>>, vector<1x8x256xf32>
    %1058 = vector.shape_cast %1057 : vector<1x8x256xf32> to vector<8x256xf32>
    %1059 = vector.shape_cast %1056 : vector<8x256xf32> to vector<1x8x256xf32>
    tpu.vector_store %arg18[%c0_566, %c0_567, %c0_568], %1059 {strides = array<i32>} : memref<1x8x256xf32, #tpu.memory_space<vmem>>, vector<1x8x256xf32>,
    return
  }
  func.func @transform_0(%arg0: i32) -> (i32, i32, i32) {
    %c0_i32 = arith.constant 0 : i32
    %c0_i32_0 = arith.constant 0 : i32
    %c0_i32_1 = arith.constant 0 : i32
    return %arg0, %c0_i32, %c0_i32_0 : i32, i32, i32
  }
  func.func @transform_1(%arg0: i32) -> (i32, i32, i32) {
    %c0_i32 = arith.constant 0 : i32
    %c0_i32_0 = arith.constant 0 : i32
    %c0_i32_1 = arith.constant 0 : i32
    %c0_i32_2 = arith.constant 0 : i32
    return %c0_i32, %c0_i32_0, %c0_i32_1 : i32, i32, i32
  }
  func.func @transform_2(%arg0: i32) -> (i32, i32) {
    %c0_i32 = arith.constant 0 : i32
    %c0_i32_0 = arith.constant 0 : i32
    %c0_i32_1 = arith.constant 0 : i32
    return %c0_i32, %c0_i32_0 : i32, i32
  }
  func.func @transform_3(%arg0: i32) -> (i32, i32, i32) {
    %c0_i32 = arith.constant 0 : i32
    %c0_i32_0 = arith.constant 0 : i32
    %c0_i32_1 = arith.constant 0 : i32
    %c0_i32_2 = arith.constant 0 : i32
    return %c0_i32, %c0_i32_0, %c0_i32_1 : i32, i32, i32
  }
  func.func @transform_4(%arg0: i32) -> (i32, i32) {
    %c0_i32 = arith.constant 0 : i32
    %c0_i32_0 = arith.constant 0 : i32
    %c0_i32_1 = arith.constant 0 : i32
    return %c0_i32, %c0_i32_0 : i32, i32
  }
  func.func @transform_5(%arg0: i32) -> (i32, i32, i32) {
    %c0_i32 = arith.constant 0 : i32
    %c0_i32_0 = arith.constant 0 : i32
    %c0_i32_1 = arith.constant 0 : i32
    %c0_i32_2 = arith.constant 0 : i32
    return %c0_i32, %c0_i32_0, %c0_i32_1 : i32, i32, i32
  }
  func.func @transform_6(%arg0: i32) -> (i32, i32) {
    %c0_i32 = arith.constant 0 : i32
    %c0_i32_0 = arith.constant 0 : i32
    %c0_i32_1 = arith.constant 0 : i32
    return %c0_i32, %c0_i32_0 : i32, i32
  }
  func.func @transform_7(%arg0: i32) -> (i32, i32, i32) {
    %c0_i32 = arith.constant 0 : i32
    %c0_i32_0 = arith.constant 0 : i32
    %c0_i32_1 = arith.constant 0 : i32
    %c0_i32_2 = arith.constant 0 : i32
    return %c0_i32, %c0_i32_0, %c0_i32_1 : i32, i32, i32
  }
  func.func @transform_8(%arg0: i32) -> (i32, i32) {
    %c0_i32 = arith.constant 0 : i32
    %c0_i32_0 = arith.constant 0 : i32
    %c0_i32_1 = arith.constant 0 : i32
    return %c0_i32, %c0_i32_0 : i32, i32
  }
  func.func @transform_9(%arg0: i32) -> (i32, i32, i32) {
    %c0_i32 = arith.constant 0 : i32
    %c0_i32_0 = arith.constant 0 : i32
    %c0_i32_1 = arith.constant 0 : i32
    %c0_i32_2 = arith.constant 0 : i32
    return %c0_i32, %c0_i32_0, %c0_i32_1 : i32, i32, i32
  }
  func.func @transform_10(%arg0: i32) -> (i32, i32) {
    %c0_i32 = arith.constant 0 : i32
    %c0_i32_0 = arith.constant 0 : i32
    %c0_i32_1 = arith.constant 0 : i32
    return %c0_i32, %c0_i32_0 : i32, i32
  }
  func.func @transform_11(%arg0: i32) -> (i32, i32, i32) {
    %c0_i32 = arith.constant 0 : i32
    %c0_i32_0 = arith.constant 0 : i32
    %c0_i32_1 = arith.constant 0 : i32
    %c0_i32_2 = arith.constant 0 : i32
    return %c0_i32, %c0_i32_0, %c0_i32_1 : i32, i32, i32
  }
  func.func @transform_12(%arg0: i32) -> (i32, i32) {
    %c0_i32 = arith.constant 0 : i32
    %c0_i32_0 = arith.constant 0 : i32
    %c0_i32_1 = arith.constant 0 : i32
    return %c0_i32, %c0_i32_0 : i32, i32
  }
  func.func @transform_13(%arg0: i32) -> (i32, i32, i32) {
    %c0_i32 = arith.constant 0 : i32
    %c0_i32_0 = arith.constant 0 : i32
    %c0_i32_1 = arith.constant 0 : i32
    %c0_i32_2 = arith.constant 0 : i32
    return %c0_i32, %c0_i32_0, %c0_i32_1 : i32, i32, i32
  }
  func.func @transform_14(%arg0: i32) -> (i32, i32) {
    %c0_i32 = arith.constant 0 : i32
    %c0_i32_0 = arith.constant 0 : i32
    %c0_i32_1 = arith.constant 0 : i32
    return %c0_i32, %c0_i32_0 : i32, i32
  }
  func.func @transform_15(%arg0: i32) -> (i32, i32, i32) {
    %c0_i32 = arith.constant 0 : i32
    %c0_i32_0 = arith.constant 0 : i32
    %c0_i32_1 = arith.constant 0 : i32
    %c0_i32_2 = arith.constant 0 : i32
    return %c0_i32, %c0_i32_0, %c0_i32_1 : i32, i32, i32
  }
  func.func @transform_16(%arg0: i32) -> (i32, i32) {
    %c0_i32 = arith.constant 0 : i32
    %c0_i32_0 = arith.constant 0 : i32
    %c0_i32_1 = arith.constant 0 : i32
    return %c0_i32, %c0_i32_0 : i32, i32
  }
  func.func @transform_17(%arg0: i32) -> (i32, i32, i32) {
    %c0_i32 = arith.constant 0 : i32
    %c0_i32_0 = arith.constant 0 : i32
    %c0_i32_1 = arith.constant 0 : i32
    return %arg0, %c0_i32, %c0_i32_0 : i32, i32, i32
  }
}

</mosaic_0001>

<llo_original>
// kernel: eesp_encoder_forward.1
$region0: #{eesp_encoder_forward.1}
  #allocation0 [shape = 'u32[]', space=smem, size = 0x4, offset = 0x4, fixed_abs, tag = 'smem constant byte address 0x4 - core index']
  #allocation1 [shape = 'u32[144,128]{1,0:T(1,128)}', space=vmem, size = 0x12000, scoped, tag = 'internal scratch']
  %s0 = inlined_call_operand.vmem [shape: f32[2,11,256], index: 0, kind: input, shape index: {}]
  %s1 = inlined_call_operand.vmem [shape: bf16[25,14,14], index: 1, kind: input, shape index: {}]
  %s2 = inlined_call_operand.vmem [shape: f32[14,1], index: 2, kind: input, shape index: {}]
  %s3 = inlined_call_operand.vmem [shape: bf16[25,14,14], index: 3, kind: input, shape index: {}]
  %s4 = inlined_call_operand.vmem [shape: f32[14,1], index: 4, kind: input, shape index: {}]
  %s5 = inlined_call_operand.vmem [shape: bf16[25,5,14], index: 5, kind: input, shape index: {}]
  %s6 = inlined_call_operand.vmem [shape: f32[5,1], index: 6, kind: input, shape index: {}]
  %s7 = inlined_call_operand.vmem [shape: bf16[1,8,11], index: 7, kind: input, shape index: {}]
  %s8 = inlined_call_operand.vmem [shape: f32[8,1], index: 8, kind: input, shape index: {}]
  %s9 = inlined_call_operand.vmem [shape: bf16[9,8,8], index: 9, kind: input, shape index: {}]
  %s10 = inlined_call_operand.vmem [shape: f32[8,1], index: 10, kind: input, shape index: {}]
  %s11 = inlined_call_operand.vmem [shape: bf16[9,8,8], index: 11, kind: input, shape index: {}]
  %s12 = inlined_call_operand.vmem [shape: f32[8,1], index: 12, kind: input, shape index: {}]
  %s13 = inlined_call_operand.vmem [shape: bf16[1,8,8], index: 13, kind: input, shape index: {}]
  %s14 = inlined_call_operand.vmem [shape: f32[8,1], index: 14, kind: input, shape index: {}]
  %s15 = inlined_call_operand.vmem [shape: bf16[1,8,8], index: 15, kind: input, shape index: {}]
  %s16 = inlined_call_operand.vmem [shape: f32[8,1], index: 16, kind: input, shape index: {}]
  %s17 = inlined_call_operand.vmem [shape: f32[2,8,256], index: 17, kind: output, shape index: {}]
  %s18 = sld [smem:[#allocation0]]
  $region101: #{eesp_encoder_forward.1} parent=0
    _
  %s20 = ssub.s32 1, %s18
  %s21 = scalar_select 0, %s20, %s18
  loop: start=0, step=1, limit=4
  $region2: #{eesp_encoder_forward.1} parent=0 // loop_pre_header
    _
  $region3: #{eesp_encoder_forward.1} parent=0 // loop_header
    %s23 = sphi 0, %s27
    %p24 = scmp.ge.s32.totalorder %s23, 4
    %s33 = sphi 0, %s35
    %s36 = sphi 0, %s33
    %s37 = sphi 0, %s36
    %s53 = sphi 0, %s37
    %s57 = sphi 0, %s57
    %s59 = sphi 0, %s57
    %s60 = sphi 0, %s59
    %s74 = sphi 0, %s60
    %s78 = sphi 0, %s78
    %s80 = sphi 0, %s78
    %s81 = sphi 0, %s80
    %s95 = sphi 0, %s81
    %s99 = sphi 0, %s99
    %s101 = sphi 0, %s99
    %s102 = sphi 0, %s101
    %s116 = sphi 0, %s102
    %s120 = sphi 0, %s120
    %s122 = sphi 0, %s120
    %s123 = sphi 0, %s122
    %s137 = sphi 0, %s123
    %s141 = sphi 0, %s141
    %s143 = sphi 0, %s141
    %s144 = sphi 0, %s143
    %s158 = sphi 0, %s144
    %s162 = sphi 0, %s162
    %s164 = sphi 0, %s162
    %s165 = sphi 0, %s164
    %s179 = sphi 0, %s165
    %s183 = sphi 0, %s183
    %s185 = sphi 0, %s183
    %s186 = sphi 0, %s185
    %s200 = sphi 0, %s186
    %s204 = sphi 0, %s204
    %s206 = sphi 0, %s204
    %s207 = sphi 0, %s206
    %s221 = sphi 0, %s207
    %s225 = sphi 0, %s225
    %s227 = sphi 0, %s225
    %s228 = sphi 0, %s227
    %s242 = sphi 0, %s228
    %s246 = sphi 0, %s246
    %s248 = sphi 0, %s246
    %s249 = sphi 0, %s248
    %s263 = sphi 0, %s249
    %s267 = sphi 0, %s267
    %s269 = sphi 0, %s267
    %s270 = sphi 0, %s269
    %s284 = sphi 0, %s270
    %s288 = sphi 0, %s288
    %s290 = sphi 0, %s288
    %s291 = sphi 0, %s290
    %s305 = sphi 0, %s291
    %s309 = sphi 0, %s309
    %s311 = sphi 0, %s309
    %s312 = sphi 0, %s311
    %s326 = sphi 0, %s312
    %s330 = sphi 0, %s330
    %s332 = sphi 0, %s330
    %s333 = sphi 0, %s332
    %s347 = sphi 0, %s333
    %s351 = sphi 0, %s351
    %s353 = sphi 0, %s351
    %s354 = sphi 0, %s353
    %s368 = sphi 0, %s354
    %s372 = sphi 0, %s372
    %s374 = sphi 0, %s372
    %s375 = sphi 0, %s374
    %s389 = sphi 0, %s375
    %s395 = sphi 0, %s397
    %s398 = sphi 0, %s395
    %s399 = sphi 0, %s398
    %s415 = sphi 0, %s399
  $region4: #{eesp_encoder_forward.1} parent=0 // loop_header_branch
    %26 = sbr.rel (%p24) target = $region8
  $region5: #{eesp_encoder_forward.1} parent=0 // loop_body
    %s28 = ssub.s32 %s23, 1
    %s29 = ssub.s32 %s23, 2
    %s30 = sadd.s32 %s23, 1
    %s31 = ssub.s32 %s23, %s30
    %p32 = scmp.eq.s32.totalorder %s31, 0
    %s34 = sadd.s32 %s33, 1
    %s35 = scalar_select %p32, %s33, %s34
    %p38 = pneg %p32
    %p39 = scmp.eq.s32.totalorder %s23, 1
    %p40 = por %p38, %p39
    %p41 = scmp.ne.s32.totalorder %s33, %s36
    %p42 = scmp.eq.s32.totalorder %s23, 0
    %p43 = por %p41, %p42
    %p44 = scmp.ne.s32.totalorder %s33, %s36
    %p45 = scmp.eq.s32.totalorder %s28, 1
    %p46 = por %p44, %p45
    %p47 = scmp.ne.s32.totalorder %s36, %s37
    %p48 = scmp.eq.s32.totalorder %s28, 0
    %p49 = por %p47, %p48
    %p50 = scmp.ne.s32.totalorder %s36, %s37
    %p51 = scmp.eq.s32.totalorder %s29, 1
    %p52 = por %p50, %p51
    %p54 = scmp.ne.s32.totalorder %s37, %s53
    %p55 = scmp.eq.s32.totalorder %s29, 0
    %p56 = por %p54, %p55
    %s58 = sadd.s32 %s57, 1
    %p61 = scmp.eq.s32.totalorder %s23, 1
    %p62 = scmp.ne.s32.totalorder %s57, %s59
    %p63 = scmp.eq.s32.totalorder %s23, 0
    %p64 = por %p62, %p63
    %p65 = scmp.ne.s32.totalorder %s57, %s59
    %p66 = scmp.eq.s32.totalorder %s28, 1
    %p67 = por %p65, %p66
    %p68 = scmp.ne.s32.totalorder %s59, %s60
    %p69 = scmp.eq.s32.totalorder %s28, 0
    %p70 = por %p68, %p69
    %p71 = scmp.ne.s32.totalorder %s59, %s60
    %p72 = scmp.eq.s32.totalorder %s29, 1
    %p73 = por %p71, %p72
    %p75 = scmp.ne.s32.totalorder %s60, %s74
    %p76 = scmp.eq.s32.totalorder %s29, 0
    %p77 = por %p75, %p76
    %s79 = sadd.s32 %s78, 1
    %p82 = scmp.eq.s32.totalorder %s23, 1
    %p83 = scmp.ne.s32.totalorder %s78, %s80
    %p84 = scmp.eq.s32.totalorder %s23, 0
    %p85 = por %p83, %p84
    %p86 = scmp.ne.s32.totalorder %s78, %s80
    %p87 = scmp.eq.s32.totalorder %s28, 1
    %p88 = por %p86, %p87
    %p89 = scmp.ne.s32.totalorder %s80, %s81
    %p90 = scmp.eq.s32.totalorder %s28, 0
    %p91 = por %p89, %p90
    %p92 = scmp.ne.s32.totalorder %s80, %s81
    %p93 = scmp.eq.s32.totalorder %s29, 1
    %p94 = por %p92, %p93
    %p96 = scmp.ne.s32.totalorder %s81, %s95
    %p97 = scmp.eq.s32.totalorder %s29, 0
    %p98 = por %p96, %p97
    %s100 = sadd.s32 %s99, 1
    %p103 = scmp.eq.s32.totalorder %s23, 1
    %p104 = scmp.ne.s32.totalorder %s99, %s101
    %p105 = scmp.eq.s32.totalorder %s23, 0
    %p106 = por %p104, %p105
    %p107 = scmp.ne.s32.totalorder %s99, %s101
    %p108 = scmp.eq.s32.totalorder %s28, 1
    %p109 = por %p107, %p108
    %p110 = scmp.ne.s32.totalorder %s101, %s102
    %p111 = scmp.eq.s32.totalorder %s28, 0
    %p112 = por %p110, %p111
    %p113 = scmp.ne.s32.totalorder %s101, %s102
    %p114 = scmp.eq.s32.totalorder %s29, 1
    %p115 = por %p113, %p114
    %p117 = scmp.ne.s32.totalorder %s102, %s116
    %p118 = scmp.eq.s32.totalorder %s29, 0
    %p119 = por %p117, %p118
    %s121 = sadd.s32 %s120, 1
    %p124 = scmp.eq.s32.totalorder %s23, 1
    %p125 = scmp.ne.s32.totalorder %s120, %s122
    %p126 = scmp.eq.s32.totalorder %s23, 0
    %p127 = por %p125, %p126
    %p128 = scmp.ne.s32.totalorder %s120, %s122
    %p129 = scmp.eq.s32.totalorder %s28, 1
    %p130 = por %p128, %p129
    %p131 = scmp.ne.s32.totalorder %s122, %s123
    %p132 = scmp.eq.s32.totalorder %s28, 0
    %p133 = por %p131, %p132
    %p134 = scmp.ne.s32.totalorder %s122, %s123
    %p135 = scmp.eq.s32.totalorder %s29, 1
    %p136 = por %p134, %p135
    %p138 = scmp.ne.s32.totalorder %s123, %s137
    %p139 = scmp.eq.s32.totalorder %s29, 0
    %p140 = por %p138, %p139
    %s142 = sadd.s32 %s141, 1
    %p145 = scmp.eq.s32.totalorder %s23, 1
    %p146 = scmp.ne.s32.totalorder %s141, %s143
    %p147 = scmp.eq.s32.totalorder %s23, 0
    %p148 = por %p146, %p147
    %p149 = scmp.ne.s32.totalorder %s141, %s143
    %p150 = scmp.eq.s32.totalorder %s28, 1
    %p151 = por %p149, %p150
    %p152 = scmp.ne.s32.totalorder %s143, %s144
    %p153 = scmp.eq.s32.totalorder %s28, 0
    %p154 = por %p152, %p153
    %p155 = scmp.ne.s32.totalorder %s143, %s144
    %p156 = scmp.eq.s32.totalorder %s29, 1
    %p157 = por %p155, %p156
    %p159 = scmp.ne.s32.totalorder %s144, %s158
    %p160 = scmp.eq.s32.totalorder %s29, 0
    %p161 = por %p159, %p160
    %s163 = sadd.s32 %s162, 1
    %p166 = scmp.eq.s32.totalorder %s23, 1
    %p167 = scmp.ne.s32.totalorder %s162, %s164
    %p168 = scmp.eq.s32.totalorder %s23, 0
    %p169 = por %p167, %p168
    %p170 = scmp.ne.s32.totalorder %s162, %s164
    %p171 = scmp.eq.s32.totalorder %s28, 1
    %p172 = por %p170, %p171
    %p173 = scmp.ne.s32.totalorder %s164, %s165
    %p174 = scmp.eq.s32.totalorder %s28, 0
    %p175 = por %p173, %p174
    %p176 = scmp.ne.s32.totalorder %s164, %s165
    %p177 = scmp.eq.s32.totalorder %s29, 1
    %p178 = por %p176, %p177
    %p180 = scmp.ne.s32.totalorder %s165, %s179
    %p181 = scmp.eq.s32.totalorder %s29, 0
    %p182 = por %p180, %p181
    %s184 = sadd.s32 %s183, 1
    %p187 = scmp.eq.s32.totalorder %s23, 1
    %p188 = scmp.ne.s32.totalorder %s183, %s185
    %p189 = scmp.eq.s32.totalorder %s23, 0
    %p190 = por %p188, %p189
    %p191 = scmp.ne.s32.totalorder %s183, %s185
    %p192 = scmp.eq.s32.totalorder %s28, 1
    %p193 = por %p191, %p192
    %p194 = scmp.ne.s32.totalorder %s185, %s186
    %p195 = scmp.eq.s32.totalorder %s28, 0
    %p196 = por %p194, %p195
    %p197 = scmp.ne.s32.totalorder %s185, %s186
    %p198 = scmp.eq.s32.totalorder %s29, 1
    %p199 = por %p197, %p198
    %p201 = scmp.ne.s32.totalorder %s186, %s200
    %p202 = scmp.eq.s32.totalorder %s29, 0
    %p203 = por %p201, %p202
    %s205 = sadd.s32 %s204, 1
    %p208 = scmp.eq.s32.totalorder %s23, 1
    %p209 = scmp.ne.s32.totalorder %s204, %s206
    %p210 = scmp.eq.s32.totalorder %s23, 0
    %p211 = por %p209, %p210
    %p212 = scmp.ne.s32.totalorder %s204, %s206
    %p213 = scmp.eq.s32.totalorder %s28, 1
    %p214 = por %p212, %p213
    %p215 = scmp.ne.s32.totalorder %s206, %s207
    %p216 = scmp.eq.s32.totalorder %s28, 0
    %p217 = por %p215, %p216
    %p218 = scmp.ne.s32.totalorder %s206, %s207
    %p219 = scmp.eq.s32.totalorder %s29, 1
    %p220 = por %p218, %p219
    %p222 = scmp.ne.s32.totalorder %s207, %s221
    %p223 = scmp.eq.s32.totalorder %s29, 0
    %p224 = por %p222, %p223
    %s226 = sadd.s32 %s225, 1
    %p229 = scmp.eq.s32.totalorder %s23, 1
    %p230 = scmp.ne.s32.totalorder %s225, %s227
    %p231 = scmp.eq.s32.totalorder %s23, 0
    %p232 = por %p230, %p231
    %p233 = scmp.ne.s32.totalorder %s225, %s227
    %p234 = scmp.eq.s32.totalorder %s28, 1
    %p235 = por %p233, %p234
    %p236 = scmp.ne.s32.totalorder %s227, %s228
    %p237 = scmp.eq.s32.totalorder %s28, 0
    %p238 = por %p236, %p237
    %p239 = scmp.ne.s32.totalorder %s227, %s228
    %p240 = scmp.eq.s32.totalorder %s29, 1
    %p241 = por %p239, %p240
    %p243 = scmp.ne.s32.totalorder %s228, %s242
    %p244 = scmp.eq.s32.totalorder %s29, 0
    %p245 = por %p243, %p244
    %s247 = sadd.s32 %s246, 1
    %p250 = scmp.eq.s32.totalorder %s23, 1
    %p251 = scmp.ne.s32.totalorder %s246, %s248
    %p252 = scmp.eq.s32.totalorder %s23, 0
    %p253 = por %p251, %p252
    %p254 = scmp.ne.s32.totalorder %s246, %s248
    %p255 = scmp.eq.s32.totalorder %s28, 1
    %p256 = por %p254, %p255
    %p257 = scmp.ne.s32.totalorder %s248, %s249
    %p258 = scmp.eq.s32.totalorder %s28, 0
    %p259 = por %p257, %p258
    %p260 = scmp.ne.s32.totalorder %s248, %s249
    %p261 = scmp.eq.s32.totalorder %s29, 1
    %p262 = por %p260, %p261
    %p264 = scmp.ne.s32.totalorder %s249, %s263
    %p265 = scmp.eq.s32.totalorder %s29, 0
    %p266 = por %p264, %p265
    %s268 = sadd.s32 %s267, 1
    %p271 = scmp.eq.s32.totalorder %s23, 1
    %p272 = scmp.ne.s32.totalorder %s267, %s269
    %p273 = scmp.eq.s32.totalorder %s23, 0
    %p274 = por %p272, %p273
    %p275 = scmp.ne.s32.totalorder %s267, %s269
    %p276 = scmp.eq.s32.totalorder %s28, 1
    %p277 = por %p275, %p276
    %p278 = scmp.ne.s32.totalorder %s269, %s270
    %p279 = scmp.eq.s32.totalorder %s28, 0
    %p280 = por %p278, %p279
    %p281 = scmp.ne.s32.totalorder %s269, %s270
    %p282 = scmp.eq.s32.totalorder %s29, 1
    %p283 = por %p281, %p282
    %p285 = scmp.ne.s32.totalorder %s270, %s284
    %p286 = scmp.eq.s32.totalorder %s29, 0
    %p287 = por %p285, %p286
    %s289 = sadd.s32 %s288, 1
    %p292 = scmp.eq.s32.totalorder %s23, 1
    %p293 = scmp.ne.s32.totalorder %s288, %s290
    %p294 = scmp.eq.s32.totalorder %s23, 0
    %p295 = por %p293, %p294
    %p296 = scmp.ne.s32.totalorder %s288, %s290
    %p297 = scmp.eq.s32.totalorder %s28, 1
    %p298 = por %p296, %p297
    %p299 = scmp.ne.s32.totalorder %s290, %s291
    %p300 = scmp.eq.s32.totalorder %s28, 0
    %p301 = por %p299, %p300
    %p302 = scmp.ne.s32.totalorder %s290, %s291
    %p303 = scmp.eq.s32.totalorder %s29, 1
    %p304 = por %p302, %p303
    %p306 = scmp.ne.s32.totalorder %s291, %s305
    %p307 = scmp.eq.s32.totalorder %s29, 0
    %p308 = por %p306, %p307
    %s310 = sadd.s32 %s309, 1
    %p313 = scmp.eq.s32.totalorder %s23, 1
    %p314 = scmp.ne.s32.totalorder %s309, %s311
    %p315 = scmp.eq.s32.totalorder %s23, 0
    %p316 = por %p314, %p315
    %p317 = scmp.ne.s32.totalorder %s309, %s311
    %p318 = scmp.eq.s32.totalorder %s28, 1
    %p319 = por %p317, %p318
    %p320 = scmp.ne.s32.totalorder %s311, %s312
    %p321 = scmp.eq.s32.totalorder %s28, 0
    %p322 = por %p320, %p321
    %p323 = scmp.ne.s32.totalorder %s311, %s312
    %p324 = scmp.eq.s32.totalorder %s29, 1
    %p325 = por %p323, %p324
    %p327 = scmp.ne.s32.totalorder %s312, %s326
    %p328 = scmp.eq.s32.totalorder %s29, 0
    %p329 = por %p327, %p328
    %s331 = sadd.s32 %s330, 1
    %p334 = scmp.eq.s32.totalorder %s23, 1
    %p335 = scmp.ne.s32.totalorder %s330, %s332
    %p336 = scmp.eq.s32.totalorder %s23, 0
    %p337 = por %p335, %p336
    %p338 = scmp.ne.s32.totalorder %s330, %s332
    %p339 = scmp.eq.s32.totalorder %s28, 1
    %p340 = por %p338, %p339
    %p341 = scmp.ne.s32.totalorder %s332, %s333
    %p342 = scmp.eq.s32.totalorder %s28, 0
    %p343 = por %p341, %p342
    %p344 = scmp.ne.s32.totalorder %s332, %s333
    %p345 = scmp.eq.s32.totalorder %s29, 1
    %p346 = por %p344, %p345
    %p348 = scmp.ne.s32.totalorder %s333, %s347
    %p349 = scmp.eq.s32.totalorder %s29, 0
    %p350 = por %p348, %p349
    %s352 = sadd.s32 %s351, 1
    %p355 = scmp.eq.s32.totalorder %s23, 1
    %p356 = scmp.ne.s32.totalorder %s351, %s353
    %p357 = scmp.eq.s32.totalorder %s23, 0
    %p358 = por %p356, %p357
    %p359 = scmp.ne.s32.totalorder %s351, %s353
    %p360 = scmp.eq.s32.totalorder %s28, 1
    %p361 = por %p359, %p360
    %p362 = scmp.ne.s32.totalorder %s353, %s354
    %p363 = scmp.eq.s32.totalorder %s28, 0
    %p364 = por %p362, %p363
    %p365 = scmp.ne.s32.totalorder %s353, %s354
    %p366 = scmp.eq.s32.totalorder %s29, 1
    %p367 = por %p365, %p366
    %p369 = scmp.ne.s32.totalorder %s354, %s368
    %p370 = scmp.eq.s32.totalorder %s29, 0
    %p371 = por %p369, %p370
    %s373 = sadd.s32 %s372, 1
    %p376 = scmp.eq.s32.totalorder %s23, 1
    %p377 = scmp.ne.s32.totalorder %s372, %s374
    %p378 = scmp.eq.s32.totalorder %s23, 0
    %p379 = por %p377, %p378
    %p380 = scmp.ne.s32.totalorder %s372, %s374
    %p381 = scmp.eq.s32.totalorder %s28, 1
    %p382 = por %p380, %p381
    %p383 = scmp.ne.s32.totalorder %s374, %s375
    %p384 = scmp.eq.s32.totalorder %s28, 0
    %p385 = por %p383, %p384
    %p386 = scmp.ne.s32.totalorder %s374, %s375
    %p387 = scmp.eq.s32.totalorder %s29, 1
    %p388 = por %p386, %p387
    %p390 = scmp.ne.s32.totalorder %s375, %s389
    %p391 = scmp.eq.s32.totalorder %s29, 0
    %p392 = por %p390, %p391
    %s393 = ssub.s32 %s23, %s30
    %p394 = scmp.eq.s32.totalorder %s393, 0
    %s396 = sadd.s32 %s395, 1
    %s397 = scalar_select %p394, %s395, %s396
    %p400 = pneg %p394
    %p401 = scmp.eq.s32.totalorder %s23, 1
    %p402 = por %p400, %p401
    %p403 = scmp.ne.s32.totalorder %s395, %s398
    %p404 = scmp.eq.s32.totalorder %s23, 0
    %p405 = por %p403, %p404
    %p406 = scmp.ne.s32.totalorder %s395, %s398
    %p407 = scmp.eq.s32.totalorder %s28, 1
    %p408 = por %p406, %p407
    %p409 = scmp.ne.s32.totalorder %s398, %s399
    %p410 = scmp.eq.s32.totalorder %s28, 0
    %p411 = por %p409, %p410
    %p412 = scmp.ne.s32.totalorder %s398, %s399
    %p413 = scmp.eq.s32.totalorder %s29, 1
    %p414 = por %p412, %p413
    %p416 = scmp.ne.s32.totalorder %s399, %s415
    %p417 = scmp.eq.s32.totalorder %s29, 0
    %p418 = por %p416, %p417
    %p419 = scmp.le.s32.totalorder 1, %s23
    %p420 = scmp.lt.s32.totalorder %s23, 3
    %p421 = pnand %p419, %p420
    %p422 = pneg %p421
    // Predicated region
    $region9: #{eesp_encoder_forward.1} parent=5 // pred_check
      _
    $region10: #{eesp_encoder_forward.1} parent=5 // pred_check_branch
      %424 = sbr.rel (%p421) target = $region12
    $region11: #{eesp_encoder_forward.1} parent=5 // pred_region
      %s425 = ssub.s32 %s23, 1
      // Predicated region
      $region13: #{eesp_encoder_forward.1} parent=11 // pred_check
        %p426 = pneg %p70
      $region14: #{eesp_encoder_forward.1} parent=11 // pred_check_branch
        %428 = sbr.rel (%p426) target = $region16
      $region15: #{eesp_encoder_forward.1} parent=11 // pred_region
        _
      $region16: #{eesp_encoder_forward.1} parent=11 // pred_fallthru
        _
      // Predicated region
      $region17: #{eesp_encoder_forward.1} parent=11 // pred_check
        %p429 = pneg %p91
      $region18: #{eesp_encoder_forward.1} parent=11 // pred_check_branch
        %431 = sbr.rel (%p429) target = $region20
      $region19: #{eesp_encoder_forward.1} parent=11 // pred_region
        _
      $region20: #{eesp_encoder_forward.1} parent=11 // pred_fallthru
        _
      // Predicated region
      $region21: #{eesp_encoder_forward.1} parent=11 // pred_check
        %p432 = pneg %p112
      $region22: #{eesp_encoder_forward.1} parent=11 // pred_check_branch
        %434 = sbr.rel (%p432) target = $region24
      $region23: #{eesp_encoder_forward.1} parent=11 // pred_region
        _
      $region24: #{eesp_encoder_forward.1} parent=11 // pred_fallthru
        _
      // Predicated region
      $region25: #{eesp_encoder_forward.1} parent=11 // pred_check
        %p435 = pneg %p133
      $region26: #{eesp_encoder_forward.1} parent=11 // pred_check_branch
        %437 = sbr.rel (%p435) target = $region28
      $region27: #{eesp_encoder_forward.1} parent=11 // pred_region
        _
      $region28: #{eesp_encoder_forward.1} parent=11 // pred_fallthru
        _
      // Predicated region
      $region29: #{eesp_encoder_forward.1} parent=11 // pred_check
        %p438 = pneg %p154
      $region30: #{eesp_encoder_forward.1} parent=11 // pred_check_branch
        %440 = sbr.rel (%p438) target = $region32
      $region31: #{eesp_encoder_forward.1} parent=11 // pred_region
        _
      $region32: #{eesp_encoder_forward.1} parent=11 // pred_fallthru
        _
      // Predicated region
      $region33: #{eesp_encoder_forward.1} parent=11 // pred_check
        %p441 = pneg %p175
      $region34: #{eesp_encoder_forward.1} parent=11 // pred_check_branch
        %443 = sbr.rel (%p441) target = $region36
      $region35: #{eesp_encoder_forward.1} parent=11 // pred_region
        _
      $region36: #{eesp_encoder_forward.1} parent=11 // pred_fallthru
        _
      // Predicated region
      $region37: #{eesp_encoder_forward.1} parent=11 // pred_check
        %p444 = pneg %p196
      $region38: #{eesp_encoder_forward.1} parent=11 // pred_check_branch
        %446 = sbr.rel (%p444) target = $region40
      $region39: #{eesp_encoder_forward.1} parent=11 // pred_region
        _
      $region40: #{eesp_encoder_forward.1} parent=11 // pred_fallthru
        _
      // Predicated region
      $region41: #{eesp_encoder_forward.1} parent=11 // pred_check
        %p447 = pneg %p217
      $region42: #{eesp_encoder_forward.1} parent=11 // pred_check_branch
        %449 = sbr.rel (%p447) target = $region44
      $region43: #{eesp_encoder_forward.1} parent=11 // pred_region
        _
      $region44: #{eesp_encoder_forward.1} parent=11 // pred_fallthru
        _
      // Predicated region
      $region45: #{eesp_encoder_forward.1} parent=11 // pred_check
        %p450 = pneg %p238
      $region46: #{eesp_encoder_forward.1} parent=11 // pred_check_branch
        %452 = sbr.rel (%p450) target = $region48
      $region47: #{eesp_encoder_forward.1} parent=11 // pred_region
        _
      $region48: #{eesp_encoder_forward.1} parent=11 // pred_fallthru
        _
      // Predicated region
      $region49: #{eesp_encoder_forward.1} parent=11 // pred_check
        %p453 = pneg %p259
      $region50: #{eesp_encoder_forward.1} parent=11 // pred_check_branch
        %455 = sbr.rel (%p453) target = $region52
      $region51: #{eesp_encoder_forward.1} parent=11 // pred_region
        _
      $region52: #{eesp_encoder_forward.1} parent=11 // pred_fallthru
        _
      // Predicated region
      $region53: #{eesp_encoder_forward.1} parent=11 // pred_check
        %p456 = pneg %p280
      $region54: #{eesp_encoder_forward.1} parent=11 // pred_check_branch
        %458 = sbr.rel (%p456) target = $region56
      $region55: #{eesp_encoder_forward.1} parent=11 // pred_region
        _
      $region56: #{eesp_encoder_forward.1} parent=11 // pred_fallthru
        _
      // Predicated region
      $region57: #{eesp_encoder_forward.1} parent=11 // pred_check
        %p459 = pneg %p301
      $region58: #{eesp_encoder_forward.1} parent=11 // pred_check_branch
        %461 = sbr.rel (%p459) target = $region60
      $region59: #{eesp_encoder_forward.1} parent=11 // pred_region
        _
      $region60: #{eesp_encoder_forward.1} parent=11 // pred_fallthru
        _
      // Predicated region
      $region61: #{eesp_encoder_forward.1} parent=11 // pred_check
        %p462 = pneg %p322
      $region62: #{eesp_encoder_forward.1} parent=11 // pred_check_branch
        %464 = sbr.rel (%p462) target = $region64
      $region63: #{eesp_encoder_forward.1} parent=11 // pred_region
        _
      $region64: #{eesp_encoder_forward.1} parent=11 // pred_fallthru
        _
      // Predicated region
      $region65: #{eesp_encoder_forward.1} parent=11 // pred_check
        %p465 = pneg %p343
      $region66: #{eesp_encoder_forward.1} parent=11 // pred_check_branch
        %467 = sbr.rel (%p465) target = $region68
      $region67: #{eesp_encoder_forward.1} parent=11 // pred_region
        _
      $region68: #{eesp_encoder_forward.1} parent=11 // pred_fallthru
        _
      // Predicated region
      $region69: #{eesp_encoder_forward.1} parent=11 // pred_check
        %p468 = pneg %p364
      $region70: #{eesp_encoder_forward.1} parent=11 // pred_check_branch
        %470 = sbr.rel (%p468) target = $region72
      $region71: #{eesp_encoder_forward.1} parent=11 // pred_region
        _
      $region72: #{eesp_encoder_forward.1} parent=11 // pred_fallthru
        _
      // Predicated region
      $region73: #{eesp_encoder_forward.1} parent=11 // pred_check
        %p471 = pneg %p385
      $region74: #{eesp_encoder_forward.1} parent=11 // pred_check_branch
        %473 = sbr.rel (%p471) target = $region76
      $region75: #{eesp_encoder_forward.1} parent=11 // pred_region
        _
      $region76: #{eesp_encoder_forward.1} parent=11 // pred_fallthru
        _
    $region12: #{eesp_encoder_forward.1} parent=5 // pred_fallthru
      _
    %p474 = scmp.lt.s32.totalorder %s23, 2
    // Predicated region
    $region77: #{eesp_encoder_forward.1} parent=5 // pred_check
      %p475 = pneg %p474
    $region78: #{eesp_encoder_forward.1} parent=5 // pred_check_branch
      %477 = sbr.rel (%p475) target = $region80
    $region79: #{eesp_encoder_forward.1} parent=5 // pred_region
      // Predicated region
      $region81: #{eesp_encoder_forward.1} parent=79 // pred_check
        %p478 = pneg %p43
      $region82: #{eesp_encoder_forward.1} parent=79 // pred_check_branch
        %480 = sbr.rel (%p478) target = $region84
      $region83: #{eesp_encoder_forward.1} parent=79 // pred_region
        %p481 = scmp.lt.s32.totalorder %s23, 1
        %s482 = scalar_select %p481, %s23, 1
        %s483 = smul.addr %s482, 4
        %s484 = smul.addr %s483, 8
        %s485 = scalar_lea.vmem %s0, %s484
      $region84: #{eesp_encoder_forward.1} parent=79 // pred_fallthru
        _
    $region80: #{eesp_encoder_forward.1} parent=5 // pred_fallthru
      _
    %p486 = scmp.le.s32.totalorder 1, %s23
    %p487 = scmp.lt.s32.totalorder %s23, 3
    %p488 = pnand %p486, %p487
    %p489 = pneg %p488
    // Predicated region
    $region85: #{eesp_encoder_forward.1} parent=5 // pred_check
      _
    $region86: #{eesp_encoder_forward.1} parent=5 // pred_check_branch
      %491 = sbr.rel (%p488) target = $region88
    $region87: #{eesp_encoder_forward.1} parent=5 // pred_region
      %s492 = ssub.s32 %s23, 1
      %p493 = scmp.lt.s32.totalorder %s28, 1
      %s494 = scalar_select %p493, %s28, 1
      %s495 = smul.addr %s494, 4
      %s496 = smul.addr %s495, 8
      %s497 = scalar_lea.vmem %s0, %s496
      %p498 = pneg %p49
      %p499 = pneg %p46
      %p500 = pneg %p70
      %p501 = pneg %p67
      %p502 = pneg %p91
      %p503 = pneg %p88
      %p504 = pneg %p112
      %p505 = pneg %p109
      %p506 = pneg %p133
      %p507 = pneg %p130
      %p508 = pneg %p154
      %p509 = pneg %p151
      %p510 = pneg %p175
      %p511 = pneg %p172
      %p512 = pneg %p196
      %p513 = pneg %p193
      %p514 = pneg %p217
      %p515 = pneg %p214
      %p516 = pneg %p238
      %p517 = pneg %p235
      %p518 = pneg %p259
      %p519 = pneg %p256
      %p520 = pneg %p280
      %p521 = pneg %p277
      %p522 = pneg %p301
      %p523 = pneg %p298
      %p524 = pneg %p322
      %p525 = pneg %p319
      %p526 = pneg %p343
      %p527 = pneg %p340
      %p528 = pneg %p364
      %p529 = pneg %p361
      %p530 = pneg %p385
      %p531 = pneg %p382
      %p532 = pneg %p411
      %p533 = pneg %p408
      %p534 = scmp.lt.s32.totalorder %s28, 1
      %s535 = scalar_select %p534, %s28, 1
      %s536 = smul.addr %s535, 2
      %s537 = smul.addr %s536, 8
      %s538 = scalar_lea.vmem %s17, %s537
      %p539 = scmp.lt.s32.totalorder %s28, 1
      %s540 = scalar_select %p539, %s28, 1
      %s541 = smul.addr %s540, 4
      %s542 = smul.addr %s541, 8
      %s543 = scalar_lea.vmem %s0, %s542
      %p544 = scmp.lt.s32.totalorder %s28, 1
      %s545 = scalar_select %p544, %s28, 1
      %s546 = smul.addr %s545, 2
      %s547 = smul.addr %s546, 8
      %s548 = scalar_lea.vmem %s17, %s547
      %v552 = vlaneseq
      %v553 = vand.u32 %v552, 127
      %v554 = vadd.s32 %v553, 128
      %vm555 = vcmp.lt.s32.totalorder %v553, 0
      %v556 = vsub.s32 0, %v553
      %v557 = vsel %vm555, %v556, %v553
      %v558 = vshrl.u32 %v557, 4
      %v559 = vand.u32 %v557, 15
      %v560 = vsub.s32 0, %v559
      %v561 = vsel %vm555, %v560, %v559
      %vm562 = vcmp.lt.s32.totalorder %v554, 0
      %v563 = vsub.s32 0, %v554
      %v564 = vsel %vm562, %v563, %v554
      %v565 = vshrl.u32 %v564, 4
      %v566 = vand.u32 %v564, 15
      %v567 = vsub.s32 0, %v566
      %v568 = vsel %vm562, %v567, %v566
      %vm569 = vcmp.ne.s32.totalorder %v561, 0
      %vm570 = vcmp.ne.s32.totalorder %v568, 0
      %vm571 = vcmp.lt.s32.totalorder %v561, 0
      %vm572 = vcmp.lt.s32.totalorder %v568, 0
      %vm573 = vmand %vm571, %vm569
      %vm574 = vmand %vm572, %vm570
      %v575 = vadd.s32 %v561, 16
      %v576 = vadd.s32 %v568, 16
      %v577 = vsel %vm573, %v575, %v561
      %v578 = vsel %vm574, %v576, %v568
      %v579 = vadd.s32 %v577, 4294967294
      %v580 = vadd.s32 %v578, 4294967294
      %vm581 = vcmp.ge.s32.totalorder %v579, 0
      %vm582 = vcmp.ge.s32.totalorder %v580, 0
      %vm583 = vcmp.lt.s32.totalorder %v579, 16
      %vm584 = vcmp.lt.s32.totalorder %v580, 16
      %vm585 = vmand %vm581, %vm583
      %vm586 = vmand %vm582, %vm584
      %v587 = vadd.s32 %v577, 4294967295
      %v588 = vadd.s32 %v578, 4294967295
      %vm589 = vcmp.ge.s32.totalorder %v587, 0
      %vm590 = vcmp.ge.s32.totalorder %v588, 0
      %vm591 = vcmp.lt.s32.totalorder %v587, 16
      %vm592 = vcmp.lt.s32.totalorder %v588, 16
      %vm593 = vmand %vm589, %vm591
      %vm594 = vmand %vm590, %vm592
      %v595 = vadd.s32 %v577, 1
      %v596 = vadd.s32 %v578, 1
      %vm597 = vcmp.ge.s32.totalorder %v595, 0
      %vm598 = vcmp.ge.s32.totalorder %v596, 0
      %vm599 = vcmp.lt.s32.totalorder %v595, 16
      %vm600 = vcmp.lt.s32.totalorder %v596, 16
      %vm601 = vmand %vm597, %vm599
      %vm602 = vmand %vm598, %vm600
      %v603 = vadd.s32 %v577, 2
      %v604 = vadd.s32 %v578, 2
      %vm605 = vcmp.ge.s32.totalorder %v603, 0
      %vm606 = vcmp.ge.s32.totalorder %v604, 0
      %vm607 = vcmp.lt.s32.totalorder %v603, 16
      %vm608 = vcmp.lt.s32.totalorder %v604, 16
      %vm609 = vmand %vm605, %vm607
      %vm610 = vmand %vm606, %vm608
      %v611 = vld [vmem:[%s543] sm:$0xff]
      %v612 = vld [vmem:[%s543 + $0x8] sm:$0xff]
      %v613 = vld [vmem:[%s543 + $0x10] sm:$0x7]
      %v614 = vld [vmem:[%s543 + $0x18] sm:$0x7]
      %v615 = vmul.f32 %v611, %v611
      %v616 = vmul.f32 %v612, %v612
      %v619 = vrot.slane %v615, 1
      %v620 = vrot.slane %v616, 1
      %vm623 = vcmask 1046528
      %v624 = vsel %vm623, %v611, %v619
      %v625 = vsel %vm623, %v612, %v620
      %v626 = vpack.c.bf16 %v619, %v624
      %v627 = vpack.c.bf16 %v620, %v625
      %630 = vrot.lane.b32.xlu0 %v626, 34
      %v631 = vpop.permute.xlu0 %630
      %632 = vrot.lane.b32.xlu0 %v627, 34
      %v633 = vpop.permute.xlu0 %632
      %vm634 = vcmask 277504
      %v635 = vsel %vm634, %v631, %v633
      %vm637 = vcmask 277504
      %v640 = vsel %vm637, 0, %v631
      %v642 = vsel %vm585, 1, 0
      %v643 = vsel %vm586, 1, 0
      %vm644 = vcmp.eq.s32.totalorder %v642, 1
      %vm645 = vcmp.eq.s32.totalorder %v643, 1
      %vm646 = vmpackc.low %vm645, %vm644
      %v647 = vsel %vm646, 65537, 0
      %v648 = vlaneseq
      %v649 = vshrl.u32 %v648, 7
      %v650 = vsub.s32 0, %v649
      %v651 = vrot.slane %v647, %v650
      %v652 = vlaneseq
      %v653 = vshrl.u32 %v652, 7
      %v654 = vsub.s32 4, %v653
      %v655 = vrot.slane %v647, %v654
      %vm656 = vcmp.ne.s16.totalorder %v651, 0
      %vm657 = vcmp.ne.s16.totalorder %v655, 0
      %v658 = vsel %vm656, %v640, 0
      %v659 = vsel %vm657, %v635, 0
      %v660 = vld [vmem:[%s1] sm:$0xf]
      %v661 = vld [vmem:[%s1 + $0x4] sm:$0x7]
      %662 = vrot.lane.b32.xlu0 %v626, 33
      %v663 = vpop.permute.xlu0 %662
      %664 = vrot.lane.b32.xlu0 %v627, 33
      %v665 = vpop.permute.xlu0 %664
      %vm666 = vcmask 269312
      %v667 = vsel %vm666, %v663, %v665
      %vm669 = vcmask 269312
      %v671 = vsel %vm669, 0, %v663
      %v673 = vsel %vm593, 1, 0
      %v674 = vsel %vm594, 1, 0
      %vm675 = vcmp.eq.s32.totalorder %v673, 1
      %vm676 = vcmp.eq.s32.totalorder %v674, 1
      %vm677 = vmpackc.low %vm676, %vm675
      %v678 = vsel %vm677, 65537, 0
      %v679 = vlaneseq
      %v680 = vshrl.u32 %v679, 7
      %v681 = vsub.s32 0, %v680
      %v682 = vrot.slane %v678, %v681
      %v683 = vlaneseq
      %v684 = vshrl.u32 %v683, 7
      %v685 = vsub.s32 4, %v684
      %v686 = vrot.slane %v678, %v685
      %vm687 = vcmp.ne.s16.totalorder %v682, 0
      %vm688 = vcmp.ne.s16.totalorder %v686, 0
      %v689 = vsel %vm687, %v671, 0
      %v690 = vsel %vm688, %v667, 0
      %s691 = scalar_lea.vmem %s1, 8
      %v692 = vld [vmem:[%s691] sm:$0xf]
      %v693 = vld [vmem:[%s691 + $0x4] sm:$0x7]
      %v696 = vunpack.c.l.b16 %v692
      %v697 = vunpack.c.l.b16 %v693
      %v698 = vpack.c.b16 %v697, %v696
      %vm699 = vcmask 113664
      %v701 = vsel %vm699, %v698, 0
      %v704 = vsel %vm623, %v689, 0
      %v707 = vsel %vm623, %v690, 0
      %709 = vmatprep.subr.bf16.mxu0 %v707
      %710 = vmatpush1.bf16.msra.mxu0 %v704
      %711 = vmatprep.subr.bf16.mxu0 0
      %712 = vmatpush1.bf16.msra.mxu0 0
      %713 = vmatprep.subr.bf16.mxu0 0
      %714 = vmatpush1.bf16.msra.mxu0 0
      %715 = vmatprep.subr.bf16.mxu0 0
      %716 = vmatpush1.bf16.msra.mxu0 0
      %717 = vmatprep.subr.bf16.mxu0 0
      %718 = vmatpush1.bf16.msra.mxu0 0
      %719 = vmatprep.subr.bf16.mxu0 0
      %720 = vmatpush1.bf16.msra.mxu0 0
      %721 = vmatprep.subr.bf16.mxu0 0
      %722 = vmatpush1.bf16.msra.mxu0 0
      %723 = vmatprep.subr.bf16.mxu0 0
      %724 = vmatpush1.bf16.msra.mxu0 0
      %725 = vmatprep.subr.bf16.mxu0 0
      %726 = vmatpush1.bf16.msra.mxu0 0
      %727 = vmatprep.subr.bf16.mxu0 0
      %728 = vmatpush1.bf16.msra.mxu0 0
      %729 = vmatprep.subr.bf16.mxu0 0
      %730 = vmatpush1.bf16.msra.mxu0 0
      %731 = vmatprep.subr.bf16.mxu0 0
      %732 = vmatpush1.bf16.msra.mxu0 0
      %733 = vmatprep.subr.bf16.mxu0 0
      %734 = vmatpush1.bf16.msra.mxu0 0
      %735 = vmatprep.subr.bf16.mxu0 0
      %736 = vmatpush1.bf16.msra.mxu0 0
      %737 = vmatprep.subr.bf16.mxu0 0
      %738 = vmatpush1.bf16.msra.mxu0 0
      %739 = vmatprep.subr.bf16.mxu0 0
      %740 = vmatpush1.bf16.msra.mxu0 0
      %741 = vmatprep.mubr.bf16.mxu0 0
      %742 = vmatmul.mubr.bf16.gmra.mrb[0].mxu0 %v701
      %v743 = vpop.f32.mrb[0].mxu0
      %v744 = vadd.f32 0.0, %v743
      %v745 = vpop.f32.mrb[0].mxu0
      %v746 = vadd.f32 0.0, %v745
      %v747 = vpop.f32.mrb[0].mxu0
      %v748 = vadd.f32 0.0, %v747
      %v749 = vpop.f32.mrb[0].mxu0
      %v750 = vadd.f32 0.0, %v749
      %751 = vdwg.mxu0
      %v754 = vunpack.c.l.b16 %v660
      %v755 = vunpack.c.l.b16 %v661
      %v756 = vpack.c.b16 %v755, %v754
      %v758 = vsel %vm699, %v756, 0
      %v761 = vsel %vm623, %v658, 0
      %v764 = vsel %vm623, %v659, 0
      %766 = vmatprep.subr.bf16.mxu0 %v764
      %767 = vmatpush1.bf16.msra.mxu0 %v761
      %768 = vmatprep.subr.bf16.mxu0 0
      %769 = vmatpush1.bf16.msra.mxu0 0
      %770 = vmatprep.subr.bf16.mxu0 0
      %771 = vmatpush1.bf16.msra.mxu0 0
      %772 = vmatprep.subr.bf16.mxu0 0
      %773 = vmatpush1.bf16.msra.mxu0 0
      %774 = vmatprep.subr.bf16.mxu0 0
      %775 = vmatpush1.bf16.msra.mxu0 0
      %776 = vmatprep.subr.bf16.mxu0 0
      %777 = vmatpush1.bf16.msra.mxu0 0
      %778 = vmatprep.subr.bf16.mxu0 0
      %779 = vmatpush1.bf16.msra.mxu0 0
      %780 = vmatprep.subr.bf16.mxu0 0
      %781 = vmatpush1.bf16.msra.mxu0 0
      %782 = vmatprep.subr.bf16.mxu0 0
      %783 = vmatpush1.bf16.msra.mxu0 0
      %784 = vmatprep.subr.bf16.mxu0 0
      %785 = vmatpush1.bf16.msra.mxu0 0
      %786 = vmatprep.subr.bf16.mxu0 0
      %787 = vmatpush1.bf16.msra.mxu0 0
      %788 = vmatprep.subr.bf16.mxu0 0
      %789 = vmatpush1.bf16.msra.mxu0 0
      %790 = vmatprep.subr.bf16.mxu0 0
      %791 = vmatpush1.bf16.msra.mxu0 0
      %792 = vmatprep.subr.bf16.mxu0 0
      %793 = vmatpush1.bf16.msra.mxu0 0
      %794 = vmatprep.subr.bf16.mxu0 0
      %795 = vmatpush1.bf16.msra.mxu0 0
      %796 = vmatprep.subr.bf16.mxu0 0
      %797 = vmatpush1.bf16.msra.mxu0 0
      %798 = vmatprep.mubr.bf16.mxu0 0
      %799 = vmatmul.mubr.bf16.gmra.mrb[0].mxu0 %v758
      %v800 = vpop.f32.mrb[0].mxu0
      %v801 = vadd.f32 %v744, %v800
      %v802 = vpop.f32.mrb[0].mxu0
      %v803 = vadd.f32 %v746, %v802
      %v804 = vpop.f32.mrb[0].mxu0
      %v805 = vadd.f32 %v748, %v804
      %v806 = vpop.f32.mrb[0].mxu0
      %v807 = vadd.f32 %v750, %v806
      %808 = vdwg.mxu0
      %809 = vrot.lane.b32.xlu0 %v626, 32
      %v810 = vpop.permute.xlu0 %809
      %811 = vrot.lane.b32.xlu0 %v627, 32
      %v812 = vpop.permute.xlu0 %811
      %vm813 = vcmask 261120
      %v814 = vsel %vm813, %v810, %v812
      %vm815 = vcmask 261120
      %v817 = vsel %vm815, 0, %v810
      %s818 = scalar_lea.vmem %s1, 16
      %v819 = vld [vmem:[%s818] sm:$0xf]
      %v820 = vld [vmem:[%s818 + $0x4] sm:$0x7]
      %v823 = vunpack.c.l.b16 %v819
      %v824 = vunpack.c.l.b16 %v820
      %v825 = vpack.c.b16 %v824, %v823
      %v827 = vsel %vm699, %v825, 0
      %v829 = vsel %vm623, %v817, 0
      %v832 = vsel %vm623, %v814, 0
      %834 = vmatprep.subr.bf16.mxu0 %v832
      %835 = vmatpush1.bf16.msra.mxu0 %v829
      %836 = vmatprep.subr.bf16.mxu0 0
      %837 = vmatpush1.bf16.msra.mxu0 0
      %838 = vmatprep.subr.bf16.mxu0 0
      %839 = vmatpush1.bf16.msra.mxu0 0
      %840 = vmatprep.subr.bf16.mxu0 0
      %841 = vmatpush1.bf16.msra.mxu0 0
      %842 = vmatprep.subr.bf16.mxu0 0
      %843 = vmatpush1.bf16.msra.mxu0 0
      %844 = vmatprep.subr.bf16.mxu0 0
      %845 = vmatpush1.bf16.msra.mxu0 0
      %846 = vmatprep.subr.bf16.mxu0 0
      %847 = vmatpush1.bf16.msra.mxu0 0
      %848 = vmatprep.subr.bf16.mxu0 0
      %849 = vmatpush1.bf16.msra.mxu0 0
      %850 = vmatprep.subr.bf16.mxu0 0
      %851 = vmatpush1.bf16.msra.mxu0 0
      %852 = vmatprep.subr.bf16.mxu0 0
      %853 = vmatpush1.bf16.msra.mxu0 0
      %854 = vmatprep.subr.bf16.mxu0 0
      %855 = vmatpush1.bf16.msra.mxu0 0
      %856 = vmatprep.subr.bf16.mxu0 0
      %857 = vmatpush1.bf16.msra.mxu0 0
      %858 = vmatprep.subr.bf16.mxu0 0
      %859 = vmatpush1.bf16.msra.mxu0 0
      %860 = vmatprep.subr.bf16.mxu0 0
      %861 = vmatpush1.bf16.msra.mxu0 0
      %862 = vmatprep.subr.bf16.mxu0 0
      %863 = vmatpush1.bf16.msra.mxu0 0
      %864 = vmatprep.subr.bf16.mxu0 0
      %865 = vmatpush1.bf16.msra.mxu0 0
      %866 = vmatprep.mubr.bf16.mxu0 0
      %867 = vmatmul.mubr.bf16.gmra.mrb[0].mxu0 %v827
      %v868 = vpop.f32.mrb[0].mxu0
      %v869 = vadd.f32 0.0, %v868
      %v870 = vpop.f32.mrb[0].mxu0
      %v871 = vadd.f32 0.0, %v870
      %v872 = vpop.f32.mrb[0].mxu0
      %v873 = vadd.f32 0.0, %v872
      %v874 = vpop.f32.mrb[0].mxu0
      %v875 = vadd.f32 0.0, %v874
      %876 = vdwg.mxu0
      %v877 = vadd.f32 %v801, %v869
      %v878 = vadd.f32 %v803, %v871
      %v879 = vadd.f32 %v805, %v873
      %v880 = vadd.f32 %v807, %v875
      %881 = vrot.lane.b32.xlu0 %v626, 31
      %v882 = vpop.permute.xlu0 %881
      %883 = vrot.lane.b32.xlu0 %v627, 31
      %v884 = vpop.permute.xlu0 %883
      %vm885 = vcmask 252928
      %v886 = vsel %vm885, %v882, %v884
      %vm888 = vcmask 252928
      %v890 = vsel %vm888, 0, %v882
      %v892 = vsel %vm601, 1, 0
      %v893 = vsel %vm602, 1, 0
      %vm894 = vcmp.eq.s32.totalorder %v892, 1
      %vm895 = vcmp.eq.s32.totalorder %v893, 1
      %vm896 = vmpackc.low %vm895, %vm894
      %v897 = vsel %vm896, 65537, 0
      %v898 = vlaneseq
      %v899 = vshrl.u32 %v898, 7
      %v900 = vsub.s32 0, %v899
      %v901 = vrot.slane %v897, %v900
      %v902 = vlaneseq
      %v903 = vshrl.u32 %v902, 7
      %v904 = vsub.s32 4, %v903
      %v905 = vrot.slane %v897, %v904
      %vm906 = vcmp.ne.s16.totalorder %v901, 0
      %vm907 = vcmp.ne.s16.totalorder %v905, 0
      %v908 = vsel %vm906, %v890, 0
      %v909 = vsel %vm907, %v886, 0
      %s910 = scalar_lea.vmem %s1, 24
      %v911 = vld [vmem:[%s910] sm:$0xf]
      %v912 = vld [vmem:[%s910 + $0x4] sm:$0x7]
      %v915 = vunpack.c.l.b16 %v911
      %v916 = vunpack.c.l.b16 %v912
      %v917 = vpack.c.b16 %v916, %v915
      %v919 = vsel %vm699, %v917, 0
      %v922 = vsel %vm623, %v908, 0
      %v925 = vsel %vm623, %v909, 0
      %927 = vmatprep.subr.bf16.mxu0 %v925
      %928 = vmatpush1.bf16.msra.mxu0 %v922
      %929 = vmatprep.subr.bf16.mxu0 0
      %930 = vmatpush1.bf16.msra.mxu0 0
      %931 = vmatprep.subr.bf16.mxu0 0
      %932 = vmatpush1.bf16.msra.mxu0 0
      %933 = vmatprep.subr.bf16.mxu0 0
      %934 = vmatpush1.bf16.msra.mxu0 0
      %935 = vmatprep.subr.bf16.mxu0 0
      %936 = vmatpush1.bf16.msra.mxu0 0
      %937 = vmatprep.subr.bf16.mxu0 0
      %938 = vmatpush1.bf16.msra.mxu0 0
      %939 = vmatprep.subr.bf16.mxu0 0
      %940 = vmatpush1.bf16.msra.mxu0 0
      %941 = vmatprep.subr.bf16.mxu0 0
      %942 = vmatpush1.bf16.msra.mxu0 0
      %943 = vmatprep.subr.bf16.mxu0 0
      %944 = vmatpush1.bf16.msra.mxu0 0
      %945 = vmatprep.subr.bf16.mxu0 0
      %946 = vmatpush1.bf16.msra.mxu0 0
      %947 = vmatprep.subr.bf16.mxu0 0
      %948 = vmatpush1.bf16.msra.mxu0 0
      %949 = vmatprep.subr.bf16.mxu0 0
      %950 = vmatpush1.bf16.msra.mxu0 0
      %951 = vmatprep.subr.bf16.mxu0 0
      %952 = vmatpush1.bf16.msra.mxu0 0
      %953 = vmatprep.subr.bf16.mxu0 0
      %954 = vmatpush1.bf16.msra.mxu0 0
      %955 = vmatprep.subr.bf16.mxu0 0
      %956 = vmatpush1.bf16.msra.mxu0 0
      %957 = vmatprep.subr.bf16.mxu0 0
      %958 = vmatpush1.bf16.msra.mxu0 0
      %959 = vmatprep.mubr.bf16.mxu0 0
      %960 = vmatmul.mubr.bf16.gmra.mrb[0].mxu0 %v919
      %v961 = vpop.f32.mrb[0].mxu0
      %v962 = vadd.f32 0.0, %v961
      %v963 = vpop.f32.mrb[0].mxu0
      %v964 = vadd.f32 0.0, %v963
      %v965 = vpop.f32.mrb[0].mxu0
      %v966 = vadd.f32 0.0, %v965
      %v967 = vpop.f32.mrb[0].mxu0
      %v968 = vadd.f32 0.0, %v967
      %969 = vdwg.mxu0
      %v970 = vadd.f32 %v877, %v962
      %v971 = vadd.f32 %v878, %v964
      %v972 = vadd.f32 %v879, %v966
      %v973 = vadd.f32 %v880, %v968
      %974 = vrot.lane.b32.xlu0 %v626, 30
      %v975 = vpop.permute.xlu0 %974
      %976 = vrot.lane.b32.xlu0 %v627, 30
      %v977 = vpop.permute.xlu0 %976
      %vm978 = vcmask 244736
      %v979 = vsel %vm978, %v975, %v977
      %vm981 = vcmask 244736
      %v983 = vsel %vm981, 0, %v975
      %v985 = vsel %vm609, 1, 0
      %v986 = vsel %vm610, 1, 0
      %vm987 = vcmp.eq.s32.totalorder %v985, 1
      %vm988 = vcmp.eq.s32.totalorder %v986, 1
      %vm989 = vmpackc.low %vm988, %vm987
      %v990 = vsel %vm989, 65537, 0
      %v991 = vlaneseq
      %v992 = vshrl.u32 %v991, 7
      %v993 = vsub.s32 0, %v992
      %v994 = vrot.slane %v990, %v993
      %v995 = vlaneseq
      %v996 = vshrl.u32 %v995, 7
      %v997 = vsub.s32 4, %v996
      %v998 = vrot.slane %v990, %v997
      %vm999 = vcmp.ne.s16.totalorder %v994, 0
      %vm1000 = vcmp.ne.s16.totalorder %v998, 0
      %v1001 = vsel %vm999, %v983, 0
      %v1002 = vsel %vm1000, %v979, 0
      %s1003 = scalar_lea.vmem %s1, 32
      %v1004 = vld [vmem:[%s1003] sm:$0xf]
      %v1005 = vld [vmem:[%s1003 + $0x4] sm:$0x7]
      %v1008 = vunpack.c.l.b16 %v1004
      %v1009 = vunpack.c.l.b16 %v1005
      %v1010 = vpack.c.b16 %v1009, %v1008
      %v1012 = vsel %vm699, %v1010, 0
      %v1015 = vsel %vm623, %v1001, 0
      %v1018 = vsel %vm623, %v1002, 0
      %1020 = vmatprep.subr.bf16.mxu0 %v1018
      %1021 = vmatpush1.bf16.msra.mxu0 %v1015
      %1022 = vmatprep.subr.bf16.mxu0 0
      %1023 = vmatpush1.bf16.msra.mxu0 0
      %1024 = vmatprep.subr.bf16.mxu0 0
      %1025 = vmatpush1.bf16.msra.mxu0 0
      %1026 = vmatprep.subr.bf16.mxu0 0
      %1027 = vmatpush1.bf16.msra.mxu0 0
      %1028 = vmatprep.subr.bf16.mxu0 0
      %1029 = vmatpush1.bf16.msra.mxu0 0
      %1030 = vmatprep.subr.bf16.mxu0 0
      %1031 = vmatpush1.bf16.msra.mxu0 0
      %1032 = vmatprep.subr.bf16.mxu0 0
      %1033 = vmatpush1.bf16.msra.mxu0 0
      %1034 = vmatprep.subr.bf16.mxu0 0
      %1035 = vmatpush1.bf16.msra.mxu0 0
      %1036 = vmatprep.subr.bf16.mxu0 0
      %1037 = vmatpush1.bf16.msra.mxu0 0
      %1038 = vmatprep.subr.bf16.mxu0 0
      %1039 = vmatpush1.bf16.msra.mxu0 0
      %1040 = vmatprep.subr.bf16.mxu0 0
      %1041 = vmatpush1.bf16.msra.mxu0 0
      %1042 = vmatprep.subr.bf16.mxu0 0
      %1043 = vmatpush1.bf16.msra.mxu0 0
      %1044 = vmatprep.subr.bf16.mxu0 0
      %1045 = vmatpush1.bf16.msra.mxu0 0
      %1046 = vmatprep.subr.bf16.mxu0 0
      %1047 = vmatpush1.bf16.msra.mxu0 0
      %1048 = vmatprep.subr.bf16.mxu0 0
      %1049 = vmatpush1.bf16.msra.mxu0 0
      %1050 = vmatprep.subr.bf16.mxu0 0
      %1051 = vmatpush1.bf16.msra.mxu0 0
      %1052 = vmatprep.mubr.bf16.mxu0 0
      %1053 = vmatmul.mubr.bf16.gmra.mrb[0].mxu0 %v1012
      %v1054 = vpop.f32.mrb[0].mxu0
      %v1055 = vadd.f32 0.0, %v1054
      %v1056 = vpop.f32.mrb[0].mxu0
      %v1057 = vadd.f32 0.0, %v1056
      %v1058 = vpop.f32.mrb[0].mxu0
      %v1059 = vadd.f32 0.0, %v1058
      %v1060 = vpop.f32.mrb[0].mxu0
      %v1061 = vadd.f32 0.0, %v1060
      %1062 = vdwg.mxu0
      %v1063 = vadd.f32 %v970, %v1055
      %v1064 = vadd.f32 %v971, %v1057
      %v1065 = vadd.f32 %v972, %v1059
      %v1066 = vadd.f32 %v973, %v1061
      %1067 = vrot.lane.b32.xlu0 %v626, 18
      %v1068 = vpop.permute.xlu0 %1067
      %1069 = vrot.lane.b32.xlu0 %v627, 18
      %v1070 = vpop.permute.xlu0 %1069
      %vm1071 = vcmask 146432
      %v1072 = vsel %vm1071, %v1068, %v1070
      %vm1074 = vcmask 146432
      %v1076 = vsel %vm1074, 0, %v1068
      %v1078 = vsel %vm656, %v1076, 0
      %v1079 = vsel %vm657, %v1072, 0
      %s1080 = scalar_lea.vmem %s1, 40
      %v1081 = vld [vmem:[%s1080] sm:$0xf]
      %v1082 = vld [vmem:[%s1080 + $0x4] sm:$0x7]
      %v1085 = vunpack.c.l.b16 %v1081
      %v1086 = vunpack.c.l.b16 %v1082
      %v1087 = vpack.c.b16 %v1086, %v1085
      %v1089 = vsel %vm699, %v1087, 0
      %v1092 = vsel %vm623, %v1078, 0
      %v1095 = vsel %vm623, %v1079, 0
      %1097 = vmatprep.subr.bf16.mxu0 %v1095
      %1098 = vmatpush1.bf16.msra.mxu0 %v1092
      %1099 = vmatprep.subr.bf16.mxu0 0
      %1100 = vmatpush1.bf16.msra.mxu0 0
      %1101 = vmatprep.subr.bf16.mxu0 0
      %1102 = vmatpush1.bf16.msra.mxu0 0
      %1103 = vmatprep.subr.bf16.mxu0 0
      %1104 = vmatpush1.bf16.msra.mxu0 0
      %1105 = vmatprep.subr.bf16.mxu0 0
      %1106 = vmatpush1.bf16.msra.mxu0 0
      %1107 = vmatprep.subr.bf16.mxu0 0
      %1108 = vmatpush1.bf16.msra.mxu0 0
      %1109 = vmatprep.subr.bf16.mxu0 0
      %1110 = vmatpush1.bf16.msra.mxu0 0
      %1111 = vmatprep.subr.bf16.mxu0 0
      %1112 = vmatpush1.bf16.msra.mxu0 0
      %1113 = vmatprep.subr.bf16.mxu0 0
      %1114 = vmatpush1.bf16.msra.mxu0 0
      %1115 = vmatprep.subr.bf16.mxu0 0
      %1116 = vmatpush1.bf16.msra.mxu0 0
      %1117 = vmatprep.subr.bf16.mxu0 0
      %1118 = vmatpush1.bf16.msra.mxu0 0
      %1119 = vmatprep.subr.bf16.mxu0 0
      %1120 = vmatpush1.bf16.msra.mxu0 0
      %1121 = vmatprep.subr.bf16.mxu0 0
      %1122 = vmatpush1.bf16.msra.mxu0 0
      %1123 = vmatprep.subr.bf16.mxu0 0
      %1124 = vmatpush1.bf16.msra.mxu0 0
      %1125 = vmatprep.subr.bf16.mxu0 0
      %1126 = vmatpush1.bf16.msra.mxu0 0
      %1127 = vmatprep.subr.bf16.mxu0 0
      %1128 = vmatpush1.bf16.msra.mxu0 0
      %1129 = vmatprep.mubr.bf16.mxu0 0
      %1130 = vmatmul.mubr.bf16.gmra.mrb[0].mxu0 %v1089
      %v1131 = vpop.f32.mrb[0].mxu0
      %v1132 = vadd.f32 0.0, %v1131
      %v1133 = vpop.f32.mrb[0].mxu0
      %v1134 = vadd.f32 0.0, %v1133
      %v1135 = vpop.f32.mrb[0].mxu0
      %v1136 = vadd.f32 0.0, %v1135
      %v1137 = vpop.f32.mrb[0].mxu0
      %v1138 = vadd.f32 0.0, %v1137
      %1139 = vdwg.mxu0
      %v1140 = vadd.f32 %v1063, %v1132
      %v1141 = vadd.f32 %v1064, %v1134
      %v1142 = vadd.f32 %v1065, %v1136
      %v1143 = vadd.f32 %v1066, %v1138
      %1144 = vrot.lane.b32.xlu0 %v626, 17
      %v1145 = vpop.permute.xlu0 %1144
      %1146 = vrot.lane.b32.xlu0 %v627, 17
      %v1147 = vpop.permute.xlu0 %1146
      %vm1148 = vcmask 138240
      %v1149 = vsel %vm1148, %v1145, %v1147
      %vm1151 = vcmask 138240
      %v1153 = vsel %vm1151, 0, %v1145
      %v1155 = vsel %vm687, %v1153, 0
      %v1156 = vsel %vm688, %v1149, 0
      %s1157 = scalar_lea.vmem %s1, 48
      %v1158 = vld [vmem:[%s1157] sm:$0xf]
      %v1159 = vld [vmem:[%s1157 + $0x4] sm:$0x7]
      %v1162 = vunpack.c.l.b16 %v1158
      %v1163 = vunpack.c.l.b16 %v1159
      %v1164 = vpack.c.b16 %v1163, %v1162
      %v1166 = vsel %vm699, %v1164, 0
      %v1169 = vsel %vm623, %v1155, 0
      %v1172 = vsel %vm623, %v1156, 0
      %1174 = vmatprep.subr.bf16.mxu0 %v1172
      %1175 = vmatpush1.bf16.msra.mxu0 %v1169
      %1176 = vmatprep.subr.bf16.mxu0 0
      %1177 = vmatpush1.bf16.msra.mxu0 0
      %1178 = vmatprep.subr.bf16.mxu0 0
      %1179 = vmatpush1.bf16.msra.mxu0 0
      %1180 = vmatprep.subr.bf16.mxu0 0
      %1181 = vmatpush1.bf16.msra.mxu0 0
      %1182 = vmatprep.subr.bf16.mxu0 0
      %1183 = vmatpush1.bf16.msra.mxu0 0
      %1184 = vmatprep.subr.bf16.mxu0 0
      %1185 = vmatpush1.bf16.msra.mxu0 0
      %1186 = vmatprep.subr.bf16.mxu0 0
      %1187 = vmatpush1.bf16.msra.mxu0 0
      %1188 = vmatprep.subr.bf16.mxu0 0
      %1189 = vmatpush1.bf16.msra.mxu0 0
      %1190 = vmatprep.subr.bf16.mxu0 0
      %1191 = vmatpush1.bf16.msra.mxu0 0
      %1192 = vmatprep.subr.bf16.mxu0 0
      %1193 = vmatpush1.bf16.msra.mxu0 0
      %1194 = vmatprep.subr.bf16.mxu0 0
      %1195 = vmatpush1.bf16.msra.mxu0 0
      %1196 = vmatprep.subr.bf16.mxu0 0
      %1197 = vmatpush1.bf16.msra.mxu0 0
      %1198 = vmatprep.subr.bf16.mxu0 0
      %1199 = vmatpush1.bf16.msra.mxu0 0
      %1200 = vmatprep.subr.bf16.mxu0 0
      %1201 = vmatpush1.bf16.msra.mxu0 0
      %1202 = vmatprep.subr.bf16.mxu0 0
      %1203 = vmatpush1.bf16.msra.mxu0 0
      %1204 = vmatprep.subr.bf16.mxu0 0
      %1205 = vmatpush1.bf16.msra.mxu0 0
      %1206 = vmatprep.mubr.bf16.mxu0 0
      %1207 = vmatmul.mubr.bf16.gmra.mrb[0].mxu0 %v1166
      %v1208 = vpop.f32.mrb[0].mxu0
      %v1209 = vadd.f32 0.0, %v1208
      %v1210 = vpop.f32.mrb[0].mxu0
      %v1211 = vadd.f32 0.0, %v1210
      %v1212 = vpop.f32.mrb[0].mxu0
      %v1213 = vadd.f32 0.0, %v1212
      %v1214 = vpop.f32.mrb[0].mxu0
      %v1215 = vadd.f32 0.0, %v1214
      %1216 = vdwg.mxu0
      %v1217 = vadd.f32 %v1140, %v1209
      %v1218 = vadd.f32 %v1141, %v1211
      %v1219 = vadd.f32 %v1142, %v1213
      %v1220 = vadd.f32 %v1143, %v1215
      %1221 = vrot.lane.b32.xlu0 %v626, 16
      %v1222 = vpop.permute.xlu0 %1221
      %1223 = vrot.lane.b32.xlu0 %v627, 16
      %v1224 = vpop.permute.xlu0 %1223
      %vm1225 = vcmask 130048
      %v1226 = vsel %vm1225, %v1222, %v1224
      %vm1227 = vcmask 130048
      %v1229 = vsel %vm1227, 0, %v1222
      %s1230 = scalar_lea.vmem %s1, 56
      %v1231 = vld [vmem:[%s1230] sm:$0xf]
      %v1232 = vld [vmem:[%s1230 + $0x4] sm:$0x7]
      %v1235 = vunpack.c.l.b16 %v1231
      %v1236 = vunpack.c.l.b16 %v1232
      %v1237 = vpack.c.b16 %v1236, %v1235
      %v1239 = vsel %vm699, %v1237, 0
      %v1241 = vsel %vm623, %v1229, 0
      %v1244 = vsel %vm623, %v1226, 0
      %1246 = vmatprep.subr.bf16.mxu0 %v1244
      %1247 = vmatpush1.bf16.msra.mxu0 %v1241
      %1248 = vmatprep.subr.bf16.mxu0 0
      %1249 = vmatpush1.bf16.msra.mxu0 0
      %1250 = vmatprep.subr.bf16.mxu0 0
      %1251 = vmatpush1.bf16.msra.mxu0 0
      %1252 = vmatprep.subr.bf16.mxu0 0
      %1253 = vmatpush1.bf16.msra.mxu0 0
      %1254 = vmatprep.subr.bf16.mxu0 0
      %1255 = vmatpush1.bf16.msra.mxu0 0
      %1256 = vmatprep.subr.bf16.mxu0 0
      %1257 = vmatpush1.bf16.msra.mxu0 0
      %1258 = vmatprep.subr.bf16.mxu0 0
      %1259 = vmatpush1.bf16.msra.mxu0 0
      %1260 = vmatprep.subr.bf16.mxu0 0
      %1261 = vmatpush1.bf16.msra.mxu0 0
      %1262 = vmatprep.subr.bf16.mxu0 0
      %1263 = vmatpush1.bf16.msra.mxu0 0
      %1264 = vmatprep.subr.bf16.mxu0 0
      %1265 = vmatpush1.bf16.msra.mxu0 0
      %1266 = vmatprep.subr.bf16.mxu0 0
      %1267 = vmatpush1.bf16.msra.mxu0 0
      %1268 = vmatprep.subr.bf16.mxu0 0
      %1269 = vmatpush1.bf16.msra.mxu0 0
      %1270 = vmatprep.subr.bf16.mxu0 0
      %1271 = vmatpush1.bf16.msra.mxu0 0
      %1272 = vmatprep.subr.bf16.mxu0 0
      %1273 = vmatpush1.bf16.msra.mxu0 0
      %1274 = vmatprep.subr.bf16.mxu0 0
      %1275 = vmatpush1.bf16.msra.mxu0 0
      %1276 = vmatprep.subr.bf16.mxu0 0
      %1277 = vmatpush1.bf16.msra.mxu0 0
      %1278 = vmatprep.mubr.bf16.mxu0 0
      %1279 = vmatmul.mubr.bf16.gmra.mrb[0].mxu0 %v1239
      %v1280 = vpop.f32.mrb[0].mxu0
      %v1281 = vadd.f32 0.0, %v1280
      %v1282 = vpop.f32.mrb[0].mxu0
      %v1283 = vadd.f32 0.0, %v1282
      %v1284 = vpop.f32.mrb[0].mxu0
      %v1285 = vadd.f32 0.0, %v1284
      %v1286 = vpop.f32.mrb[0].mxu0
      %v1287 = vadd.f32 0.0, %v1286
      %1288 = vdwg.mxu0
      %v1289 = vadd.f32 %v1217, %v1281
      %v1290 = vadd.f32 %v1218, %v1283
      %v1291 = vadd.f32 %v1219, %v1285
      %v1292 = vadd.f32 %v1220, %v1287
      %1293 = vrot.lane.b32.xlu0 %v626, 15
      %v1294 = vpop.permute.xlu0 %1293
      %1295 = vrot.lane.b32.xlu0 %v627, 15
      %v1296 = vpop.permute.xlu0 %1295
      %vm1297 = vcmask 121856
      %v1298 = vsel %vm1297, %v1294, %v1296
      %vm1300 = vcmask 121856
      %v1302 = vsel %vm1300, 0, %v1294
      %v1304 = vsel %vm906, %v1302, 0
      %v1305 = vsel %vm907, %v1298, 0
      %s1306 = scalar_lea.vmem %s1, 64
      %v1307 = vld [vmem:[%s1306] sm:$0xf]
      %v1308 = vld [vmem:[%s1306 + $0x4] sm:$0x7]
      %v1311 = vunpack.c.l.b16 %v1307
      %v1312 = vunpack.c.l.b16 %v1308
      %v1313 = vpack.c.b16 %v1312, %v1311
      %v1315 = vsel %vm699, %v1313, 0
      %v1318 = vsel %vm623, %v1304, 0
      %v1321 = vsel %vm623, %v1305, 0
      %1323 = vmatprep.subr.bf16.mxu0 %v1321
      %1324 = vmatpush1.bf16.msra.mxu0 %v1318
      %1325 = vmatprep.subr.bf16.mxu0 0
      %1326 = vmatpush1.bf16.msra.mxu0 0
      %1327 = vmatprep.subr.bf16.mxu0 0
      %1328 = vmatpush1.bf16.msra.mxu0 0
      %1329 = vmatprep.subr.bf16.mxu0 0
      %1330 = vmatpush1.bf16.msra.mxu0 0
      %1331 = vmatprep.subr.bf16.mxu0 0
      %1332 = vmatpush1.bf16.msra.mxu0 0
      %1333 = vmatprep.subr.bf16.mxu0 0
      %1334 = vmatpush1.bf16.msra.mxu0 0
      %1335 = vmatprep.subr.bf16.mxu0 0
      %1336 = vmatpush1.bf16.msra.mxu0 0
      %1337 = vmatprep.subr.bf16.mxu0 0
      %1338 = vmatpush1.bf16.msra.mxu0 0
      %1339 = vmatprep.subr.bf16.mxu0 0
      %1340 = vmatpush1.bf16.msra.mxu0 0
      %1341 = vmatprep.subr.bf16.mxu0 0
      %1342 = vmatpush1.bf16.msra.mxu0 0
      %1343 = vmatprep.subr.bf16.mxu0 0
      %1344 = vmatpush1.bf16.msra.mxu0 0
      %1345 = vmatprep.subr.bf16.mxu0 0
      %1346 = vmatpush1.bf16.msra.mxu0 0
      %1347 = vmatprep.subr.bf16.mxu0 0
      %1348 = vmatpush1.bf16.msra.mxu0 0
      %1349 = vmatprep.subr.bf16.mxu0 0
      %1350 = vmatpush1.bf16.msra.mxu0 0
      %1351 = vmatprep.subr.bf16.mxu0 0
      %1352 = vmatpush1.bf16.msra.mxu0 0
      %1353 = vmatprep.subr.bf16.mxu0 0
      %1354 = vmatpush1.bf16.msra.mxu0 0
      %1355 = vmatprep.mubr.bf16.mxu0 0
      %1356 = vmatmul.mubr.bf16.gmra.mrb[0].mxu0 %v1315
      %v1357 = vpop.f32.mrb[0].mxu0
      %v1358 = vadd.f32 0.0, %v1357
      %v1359 = vpop.f32.mrb[0].mxu0
      %v1360 = vadd.f32 0.0, %v1359
      %v1361 = vpop.f32.mrb[0].mxu0
      %v1362 = vadd.f32 0.0, %v1361
      %v1363 = vpop.f32.mrb[0].mxu0
      %v1364 = vadd.f32 0.0, %v1363
      %1365 = vdwg.mxu0
      %v1366 = vadd.f32 %v1289, %v1358
      %v1367 = vadd.f32 %v1290, %v1360
      %v1368 = vadd.f32 %v1291, %v1362
      %v1369 = vadd.f32 %v1292, %v1364
      %1370 = vrot.lane.b32.xlu0 %v626, 14
      %v1371 = vpop.permute.xlu0 %1370
      %1372 = vrot.lane.b32.xlu0 %v627, 14
      %v1373 = vpop.permute.xlu0 %1372
      %vm1374 = vcmask 113664
      %v1375 = vsel %vm1374, %v1371, %v1373
      %v1378 = vsel %vm699, 0, %v1371
      %v1380 = vsel %vm999, %v1378, 0
      %v1381 = vsel %vm1000, %v1375, 0
      %s1382 = scalar_lea.vmem %s1, 72
      %v1383 = vld [vmem:[%s1382] sm:$0xf]
      %v1384 = vld [vmem:[%s1382 + $0x4] sm:$0x7]
      %v1387 = vunpack.c.l.b16 %v1383
      %v1388 = vunpack.c.l.b16 %v1384
      %v1389 = vpack.c.b16 %v1388, %v1387
      %v1391 = vsel %vm699, %v1389, 0
      %v1394 = vsel %vm623, %v1380, 0
      %v1397 = vsel %vm623, %v1381, 0
      %1399 = vmatprep.subr.bf16.mxu0 %v1397
      %1400 = vmatpush1.bf16.msra.mxu0 %v1394
      %1401 = vmatprep.subr.bf16.mxu0 0
      %1402 = vmatpush1.bf16.msra.mxu0 0
      %1403 = vmatprep.subr.bf16.mxu0 0
      %1404 = vmatpush1.bf16.msra.mxu0 0
      %1405 = vmatprep.subr.bf16.mxu0 0
      %1406 = vmatpush1.bf16.msra.mxu0 0
      %1407 = vmatprep.subr.bf16.mxu0 0
      %1408 = vmatpush1.bf16.msra.mxu0 0
      %1409 = vmatprep.subr.bf16.mxu0 0
      %1410 = vmatpush1.bf16.msra.mxu0 0
      %1411 = vmatprep.subr.bf16.mxu0 0
      %1412 = vmatpush1.bf16.msra.mxu0 0
      %1413 = vmatprep.subr.bf16.mxu0 0
      %1414 = vmatpush1.bf16.msra.mxu0 0
      %1415 = vmatprep.subr.bf16.mxu0 0
      %1416 = vmatpush1.bf16.msra.mxu0 0
      %1417 = vmatprep.subr.bf16.mxu0 0
      %1418 = vmatpush1.bf16.msra.mxu0 0
      %1419 = vmatprep.subr.bf16.mxu0 0
      %1420 = vmatpush1.bf16.msra.mxu0 0
      %1421 = vmatprep.subr.bf16.mxu0 0
      %1422 = vmatpush1.bf16.msra.mxu0 0
      %1423 = vmatprep.subr.bf16.mxu0 0
      %1424 = vmatpush1.bf16.msra.mxu0 0
      %1425 = vmatprep.subr.bf16.mxu0 0
      %1426 = vmatpush1.bf16.msra.mxu0 0
      %1427 = vmatprep.subr.bf16.mxu0 0
      %1428 = vmatpush1.bf16.msra.mxu0 0
      %1429 = vmatprep.subr.bf16.mxu0 0
      %1430 = vmatpush1.bf16.msra.mxu0 0
      %1431 = vmatprep.mubr.bf16.mxu0 0
      %1432 = vmatmul.mubr.bf16.gmra.mrb[0].mxu0 %v1391
      %v1433 = vpop.f32.mrb[0].mxu0
      %v1434 = vadd.f32 0.0, %v1433
      %v1435 = vpop.f32.mrb[0].mxu0
      %v1436 = vadd.f32 0.0, %v1435
      %v1437 = vpop.f32.mrb[0].mxu0
      %v1438 = vadd.f32 0.0, %v1437
      %v1439 = vpop.f32.mrb[0].mxu0
      %v1440 = vadd.f32 0.0, %v1439
      %1441 = vdwg.mxu0
      %v1442 = vadd.f32 %v1366, %v1434
      %v1443 = vadd.f32 %v1367, %v1436
      %v1444 = vadd.f32 %v1368, %v1438
      %v1445 = vadd.f32 %v1369, %v1440
      %1446 = vrot.lane.b32.xlu0 %v626, 2
      %v1447 = vpop.permute.xlu0 %1446
      %1448 = vrot.lane.b32.xlu0 %v627, 2
      %v1449 = vpop.permute.xlu0 %1448
      %vm1450 = vcmask 15360
      %v1451 = vsel %vm1450, %v1447, %v1449
      %vm1453 = vcmask 15360
      %v1455 = vsel %vm1453, 0, %v1447
      %v1457 = vsel %vm656, %v1455, 0
      %v1458 = vsel %vm657, %v1451, 0
      %s1459 = scalar_lea.vmem %s1, 80
      %v1460 = vld [vmem:[%s1459] sm:$0xf]
      %v1461 = vld [vmem:[%s1459 + $0x4] sm:$0x7]
      %v1464 = vunpack.c.l.b16 %v1460
      %v1465 = vunpack.c.l.b16 %v1461
      %v1466 = vpack.c.b16 %v1465, %v1464
      %v1468 = vsel %vm699, %v1466, 0
      %v1471 = vsel %vm623, %v1457, 0
      %v1474 = vsel %vm623, %v1458, 0
      %1476 = vmatprep.subr.bf16.mxu0 %v1474
      %1477 = vmatpush1.bf16.msra.mxu0 %v1471
      %1478 = vmatprep.subr.bf16.mxu0 0
      %1479 = vmatpush1.bf16.msra.mxu0 0
      %1480 = vmatprep.subr.bf16.mxu0 0
      %1481 = vmatpush1.bf16.msra.mxu0 0
      %1482 = vmatprep.subr.bf16.mxu0 0
      %1483 = vmatpush1.bf16.msra.mxu0 0
      %1484 = vmatprep.subr.bf16.mxu0 0
      %1485 = vmatpush1.bf16.msra.mxu0 0
      %1486 = vmatprep.subr.bf16.mxu0 0
      %1487 = vmatpush1.bf16.msra.mxu0 0
      %1488 = vmatprep.subr.bf16.mxu0 0
      %1489 = vmatpush1.bf16.msra.mxu0 0
      %1490 = vmatprep.subr.bf16.mxu0 0
      %1491 = vmatpush1.bf16.msra.mxu0 0
      %1492 = vmatprep.subr.bf16.mxu0 0
      %1493 = vmatpush1.bf16.msra.mxu0 0
      %1494 = vmatprep.subr.bf16.mxu0 0
      %1495 = vmatpush1.bf16.msra.mxu0 0
      %1496 = vmatprep.subr.bf16.mxu0 0
      %1497 = vmatpush1.bf16.msra.mxu0 0
      %1498 = vmatprep.subr.bf16.mxu0 0
      %1499 = vmatpush1.bf16.msra.mxu0 0
      %1500 = vmatprep.subr.bf16.mxu0 0
      %1501 = vmatpush1.bf16.msra.mxu0 0
      %1502 = vmatprep.subr.bf16.mxu0 0
      %1503 = vmatpush1.bf16.msra.mxu0 0
      %1504 = vmatprep.subr.bf16.mxu0 0
      %1505 = vmatpush1.bf16.msra.mxu0 0
      %1506 = vmatprep.subr.bf16.mxu0 0
      %1507 = vmatpush1.bf16.msra.mxu0 0
      %1508 = vmatprep.mubr.bf16.mxu0 0
      %1509 = vmatmul.mubr.bf16.gmra.mrb[0].mxu0 %v1468
      %v1510 = vpop.f32.mrb[0].mxu0
      %v1511 = vadd.f32 0.0, %v1510
      %v1512 = vpop.f32.mrb[0].mxu0
      %v1513 = vadd.f32 0.0, %v1512
      %v1514 = vpop.f32.mrb[0].mxu0
      %v1515 = vadd.f32 0.0, %v1514
      %v1516 = vpop.f32.mrb[0].mxu0
      %v1517 = vadd.f32 0.0, %v1516
      %1518 = vdwg.mxu0
      %v1519 = vadd.f32 %v1442, %v1511
      %v1520 = vadd.f32 %v1443, %v1513
      %v1521 = vadd.f32 %v1444, %v1515
      %v1522 = vadd.f32 %v1445, %v1517
      %1523 = vrot.lane.b32.xlu0 %v626, 1
      %v1524 = vpop.permute.xlu0 %1523
      %1525 = vrot.lane.b32.xlu0 %v627, 1
      %v1526 = vpop.permute.xlu0 %1525
      %vm1527 = vcmask 7168
      %v1528 = vsel %vm1527, %v1524, %v1526
      %vm1530 = vcmask 7168
      %v1532 = vsel %vm1530, 0, %v1524
      %v1534 = vsel %vm687, %v1532, 0
      %v1535 = vsel %vm688, %v1528, 0
      %s1536 = scalar_lea.vmem %s1, 88
      %v1537 = vld [vmem:[%s1536] sm:$0xf]
      %v1538 = vld [vmem:[%s1536 + $0x4] sm:$0x7]
      %v1541 = vunpack.c.l.b16 %v1537
      %v1542 = vunpack.c.l.b16 %v1538
      %v1543 = vpack.c.b16 %v1542, %v1541
      %v1545 = vsel %vm699, %v1543, 0
      %v1548 = vsel %vm623, %v1534, 0
      %v1551 = vsel %vm623, %v1535, 0
      %1553 = vmatprep.subr.bf16.mxu0 %v1551
      %1554 = vmatpush1.bf16.msra.mxu0 %v1548
      %1555 = vmatprep.subr.bf16.mxu0 0
      %1556 = vmatpush1.bf16.msra.mxu0 0
      %1557 = vmatprep.subr.bf16.mxu0 0
      %1558 = vmatpush1.bf16.msra.mxu0 0
      %1559 = vmatprep.subr.bf16.mxu0 0
      %1560 = vmatpush1.bf16.msra.mxu0 0
      %1561 = vmatprep.subr.bf16.mxu0 0
      %1562 = vmatpush1.bf16.msra.mxu0 0
      %1563 = vmatprep.subr.bf16.mxu0 0
      %1564 = vmatpush1.bf16.msra.mxu0 0
      %1565 = vmatprep.subr.bf16.mxu0 0
      %1566 = vmatpush1.bf16.msra.mxu0 0
      %1567 = vmatprep.subr.bf16.mxu0 0
      %1568 = vmatpush1.bf16.msra.mxu0 0
      %1569 = vmatprep.subr.bf16.mxu0 0
      %1570 = vmatpush1.bf16.msra.mxu0 0
      %1571 = vmatprep.subr.bf16.mxu0 0
      %1572 = vmatpush1.bf16.msra.mxu0 0
      %1573 = vmatprep.subr.bf16.mxu0 0
      %1574 = vmatpush1.bf16.msra.mxu0 0
      %1575 = vmatprep.subr.bf16.mxu0 0
      %1576 = vmatpush1.bf16.msra.mxu0 0
      %1577 = vmatprep.subr.bf16.mxu0 0
      %1578 = vmatpush1.bf16.msra.mxu0 0
      %1579 = vmatprep.subr.bf16.mxu0 0
      %1580 = vmatpush1.bf16.msra.mxu0 0
      %1581 = vmatprep.subr.bf16.mxu0 0
      %1582 = vmatpush1.bf16.msra.mxu0 0
      %1583 = vmatprep.subr.bf16.mxu0 0
      %1584 = vmatpush1.bf16.msra.mxu0 0
      %1585 = vmatprep.mubr.bf16.mxu0 0
      %1586 = vmatmul.mubr.bf16.gmra.mrb[0].mxu0 %v1545
      %v1587 = vpop.f32.mrb[0].mxu0
      %v1588 = vadd.f32 0.0, %v1587
      %v1589 = vpop.f32.mrb[0].mxu0
      %v1590 = vadd.f32 0.0, %v1589
      %v1591 = vpop.f32.mrb[0].mxu0
      %v1592 = vadd.f32 0.0, %v1591
      %v1593 = vpop.f32.mrb[0].mxu0
      %v1594 = vadd.f32 0.0, %v1593
      %1595 = vdwg.mxu0
      %v1596 = vadd.f32 %v1519, %v1588
      %v1597 = vadd.f32 %v1520, %v1590
      %v1598 = vadd.f32 %v1521, %v1592
      %v1599 = vadd.f32 %v1522, %v1594
      %s1600 = scalar_lea.vmem %s1, 96
      %v1601 = vld [vmem:[%s1600] sm:$0xf]
      %v1602 = vld [vmem:[%s1600 + $0x4] sm:$0x7]
      %v1605 = vunpack.c.l.b16 %v1601
      %v1606 = vunpack.c.l.b16 %v1602
      %v1607 = vpack.c.b16 %v1606, %v1605
      %v1609 = vsel %vm699, %v1607, 0
      %v1612 = vsel %vm623, %v626, 0
      %v1615 = vsel %vm623, %v627, 0
      %1617 = vmatprep.subr.bf16.mxu0 %v1615
      %1618 = vmatpush1.bf16.msra.mxu0 %v1612
      %1619 = vmatprep.subr.bf16.mxu0 0
      %1620 = vmatpush1.bf16.msra.mxu0 0
      %1621 = vmatprep.subr.bf16.mxu0 0
      %1622 = vmatpush1.bf16.msra.mxu0 0
      %1623 = vmatprep.subr.bf16.mxu0 0
      %1624 = vmatpush1.bf16.msra.mxu0 0
      %1625 = vmatprep.subr.bf16.mxu0 0
      %1626 = vmatpush1.bf16.msra.mxu0 0
      %1627 = vmatprep.subr.bf16.mxu0 0
      %1628 = vmatpush1.bf16.msra.mxu0 0
      %1629 = vmatprep.subr.bf16.mxu0 0
      %1630 = vmatpush1.bf16.msra.mxu0 0
      %1631 = vmatprep.subr.bf16.mxu0 0
      %1632 = vmatpush1.bf16.msra.mxu0 0
      %1633 = vmatprep.subr.bf16.mxu0 0
      %1634 = vmatpush1.bf16.msra.mxu0 0
      %1635 = vmatprep.subr.bf16.mxu0 0
      %1636 = vmatpush1.bf16.msra.mxu0 0
      %1637 = vmatprep.subr.bf16.mxu0 0
      %1638 = vmatpush1.bf16.msra.mxu0 0
      %1639 = vmatprep.subr.bf16.mxu0 0
      %1640 = vmatpush1.bf16.msra.mxu0 0
      %1641 = vmatprep.subr.bf16.mxu0 0
      %1642 = vmatpush1.bf16.msra.mxu0 0
      %1643 = vmatprep.subr.bf16.mxu0 0
      %1644 = vmatpush1.bf16.msra.mxu0 0
      %1645 = vmatprep.subr.bf16.mxu0 0
      %1646 = vmatpush1.bf16.msra.mxu0 0
      %1647 = vmatprep.subr.bf16.mxu0 0
      %1648 = vmatpush1.bf16.msra.mxu0 0
      %1649 = vmatprep.mubr.bf16.mxu0 0
      %1650 = vmatmul.mubr.bf16.gmra.mrb[0].mxu0 %v1609
      %v1651 = vpop.f32.mrb[0].mxu0
      %v1652 = vadd.f32 0.0, %v1651
      %v1653 = vpop.f32.mrb[0].mxu0
      %v1654 = vadd.f32 0.0, %v1653
      %v1655 = vpop.f32.mrb[0].mxu0
      %v1656 = vadd.f32 0.0, %v1655
      %v1657 = vpop.f32.mrb[0].mxu0
      %v1658 = vadd.f32 0.0, %v1657
      %1659 = vdwg.mxu0
      %v1660 = vadd.f32 %v1596, %v1652
      %v1661 = vadd.f32 %v1597, %v1654
      %v1662 = vadd.f32 %v1598, %v1656
      %v1663 = vadd.f32 %v1599, %v1658
      %1664 = vrot.lane.b32.xlu0 %v626, 127
      %v1665 = vpop.permute.xlu0 %1664
      %1666 = vrot.lane.b32.xlu0 %v627, 127
      %v1667 = vpop.permute.xlu0 %1666
      %vm1668 = vcmask 1039360
      %v1669 = vsel %vm1668, %v1665, %v1667
      %vm1671 = vcmask 1039360
      %v1673 = vsel %vm1671, %v1667, 0
      %v1675 = vsel %vm906, %v1669, 0
      %v1676 = vsel %vm907, %v1673, 0
      %s1677 = scalar_lea.vmem %s1, 104
      %v1678 = vld [vmem:[%s1677] sm:$0xf]
      %v1679 = vld [vmem:[%s1677 + $0x4] sm:$0x7]
      %v1682 = vunpack.c.l.b16 %v1678
      %v1683 = vunpack.c.l.b16 %v1679
      %v1684 = vpack.c.b16 %v1683, %v1682
      %v1686 = vsel %vm699, %v1684, 0
      %v1689 = vsel %vm623, %v1675, 0
      %v1692 = vsel %vm623, %v1676, 0
      %1694 = vmatprep.subr.bf16.mxu0 %v1692
      %1695 = vmatpush1.bf16.msra.mxu0 %v1689
      %1696 = vmatprep.subr.bf16.mxu0 0
      %1697 = vmatpush1.bf16.msra.mxu0 0
      %1698 = vmatprep.subr.bf16.mxu0 0
      %1699 = vmatpush1.bf16.msra.mxu0 0
      %1700 = vmatprep.subr.bf16.mxu0 0
      %1701 = vmatpush1.bf16.msra.mxu0 0
      %1702 = vmatprep.subr.bf16.mxu0 0
      %1703 = vmatpush1.bf16.msra.mxu0 0
      %1704 = vmatprep.subr.bf16.mxu0 0
      %1705 = vmatpush1.bf16.msra.mxu0 0
      %1706 = vmatprep.subr.bf16.mxu0 0
      %1707 = vmatpush1.bf16.msra.mxu0 0
      %1708 = vmatprep.subr.bf16.mxu0 0
      %1709 = vmatpush1.bf16.msra.mxu0 0
      %1710 = vmatprep.subr.bf16.mxu0 0
      %1711 = vmatpush1.bf16.msra.mxu0 0
      %1712 = vmatprep.subr.bf16.mxu0 0
      %1713 = vmatpush1.bf16.msra.mxu0 0
      %1714 = vmatprep.subr.bf16.mxu0 0
      %1715 = vmatpush1.bf16.msra.mxu0 0
      %1716 = vmatprep.subr.bf16.mxu0 0
      %1717 = vmatpush1.bf16.msra.mxu0 0
      %1718 = vmatprep.subr.bf16.mxu0 0
      %1719 = vmatpush1.bf16.msra.mxu0 0
      %1720 = vmatprep.subr.bf16.mxu0 0
      %1721 = vmatpush1.bf16.msra.mxu0 0
      %1722 = vmatprep.subr.bf16.mxu0 0
      %1723 = vmatpush1.bf16.msra.mxu0 0
      %1724 = vmatprep.subr.bf16.mxu0 0
      %1725 = vmatpush1.bf16.msra.mxu0 0
      %1726 = vmatprep.mubr.bf16.mxu0 0
      %1727 = vmatmul.mubr.bf16.gmra.mrb[0].mxu0 %v1686
      %v1728 = vpop.f32.mrb[0].mxu0
      %v1729 = vadd.f32 0.0, %v1728
      %v1730 = vpop.f32.mrb[0].mxu0
      %v1731 = vadd.f32 0.0, %v1730
      %v1732 = vpop.f32.mrb[0].mxu0
      %v1733 = vadd.f32 0.0, %v1732
      %v1734 = vpop.f32.mrb[0].mxu0
      %v1735 = vadd.f32 0.0, %v1734
      %1736 = vdwg.mxu0
      %v1737 = vadd.f32 %v1660, %v1729
      %v1738 = vadd.f32 %v1661, %v1731
      %v1739 = vadd.f32 %v1662, %v1733
      %v1740 = vadd.f32 %v1663, %v1735
      %1741 = vrot.lane.b32.xlu0 %v626, 126
      %v1742 = vpop.permute.xlu0 %1741
      %1743 = vrot.lane.b32.xlu0 %v627, 126
      %v1744 = vpop.permute.xlu0 %1743
      %vm1745 = vcmask 1031168
      %v1746 = vsel %vm1745, %v1742, %v1744
      %vm1748 = vcmask 1031168
      %v1750 = vsel %vm1748, %v1744, 0
      %v1752 = vsel %vm999, %v1746, 0
      %v1753 = vsel %vm1000, %v1750, 0
      %s1754 = scalar_lea.vmem %s1, 112
      %v1755 = vld [vmem:[%s1754] sm:$0xf]
      %v1756 = vld [vmem:[%s1754 + $0x4] sm:$0x7]
      %v1759 = vunpack.c.l.b16 %v1755
      %v1760 = vunpack.c.l.b16 %v1756
      %v1761 = vpack.c.b16 %v1760, %v1759
      %v1763 = vsel %vm699, %v1761, 0
      %v1766 = vsel %vm623, %v1752, 0
      %v1769 = vsel %vm623, %v1753, 0
      %1771 = vmatprep.subr.bf16.mxu0 %v1769
      %1772 = vmatpush1.bf16.msra.mxu0 %v1766
      %1773 = vmatprep.subr.bf16.mxu0 0
      %1774 = vmatpush1.bf16.msra.mxu0 0
      %1775 = vmatprep.subr.bf16.mxu0 0
      %1776 = vmatpush1.bf16.msra.mxu0 0
      %1777 = vmatprep.subr.bf16.mxu0 0
      %1778 = vmatpush1.bf16.msra.mxu0 0
      %1779 = vmatprep.subr.bf16.mxu0 0
      %1780 = vmatpush1.bf16.msra.mxu0 0
      %1781 = vmatprep.subr.bf16.mxu0 0
      %1782 = vmatpush1.bf16.msra.mxu0 0
      %1783 = vmatprep.subr.bf16.mxu0 0
      %1784 = vmatpush1.bf16.msra.mxu0 0
      %1785 = vmatprep.subr.bf16.mxu0 0
      %1786 = vmatpush1.bf16.msra.mxu0 0
      %1787 = vmatprep.subr.bf16.mxu0 0
      %1788 = vmatpush1.bf16.msra.mxu0 0
      %1789 = vmatprep.subr.bf16.mxu0 0
      %1790 = vmatpush1.bf16.msra.mxu0 0
      %1791 = vmatprep.subr.bf16.mxu0 0
      %1792 = vmatpush1.bf16.msra.mxu0 0
      %1793 = vmatprep.subr.bf16.mxu0 0
      %1794 = vmatpush1.bf16.msra.mxu0 0
      %1795 = vmatprep.subr.bf16.mxu0 0
      %1796 = vmatpush1.bf16.msra.mxu0 0
      %1797 = vmatprep.subr.bf16.mxu0 0
      %1798 = vmatpush1.bf16.msra.mxu0 0
      %1799 = vmatprep.subr.bf16.mxu0 0
      %1800 = vmatpush1.bf16.msra.mxu0 0
      %1801 = vmatprep.subr.bf16.mxu0 0
      %1802 = vmatpush1.bf16.msra.mxu0 0
      %1803 = vmatprep.mubr.bf16.mxu0 0
      %1804 = vmatmul.mubr.bf16.gmra.mrb[0].mxu0 %v1763
      %v1805 = vpop.f32.mrb[0].mxu0
      %v1806 = vadd.f32 0.0, %v1805
      %v1807 = vpop.f32.mrb[0].mxu0
      %v1808 = vadd.f32 0.0, %v1807
      %v1809 = vpop.f32.mrb[0].mxu0
      %v1810 = vadd.f32 0.0, %v1809
      %v1811 = vpop.f32.mrb[0].mxu0
      %v1812 = vadd.f32 0.0, %v1811
      %1813 = vdwg.mxu0
      %v1814 = vadd.f32 %v1737, %v1806
      %v1815 = vadd.f32 %v1738, %v1808
      %v1816 = vadd.f32 %v1739, %v1810
      %v1817 = vadd.f32 %v1740, %v1812
      %1818 = vrot.lane.b32.xlu0 %v626, 114
      %v1819 = vpop.permute.xlu0 %1818
      %1820 = vrot.lane.b32.xlu0 %v627, 114
      %v1821 = vpop.permute.xlu0 %1820
      %vm1822 = vcmask 932864
      %v1823 = vsel %vm1822, %v1819, %v1821
      %vm1825 = vcmask 932864
      %v1827 = vsel %vm1825, %v1821, 0
      %v1829 = vsel %vm656, %v1823, 0
      %v1830 = vsel %vm657, %v1827, 0
      %s1831 = scalar_lea.vmem %s1, 120
      %v1832 = vld [vmem:[%s1831] sm:$0xf]
      %v1833 = vld [vmem:[%s1831 + $0x4] sm:$0x7]
      %v1836 = vunpack.c.l.b16 %v1832
      %v1837 = vunpack.c.l.b16 %v1833
      %v1838 = vpack.c.b16 %v1837, %v1836
      %v1840 = vsel %vm699, %v1838, 0
      %v1843 = vsel %vm623, %v1829, 0
      %v1846 = vsel %vm623, %v1830, 0
      %1848 = vmatprep.subr.bf16.mxu0 %v1846
      %1849 = vmatpush1.bf16.msra.mxu0 %v1843
      %1850 = vmatprep.subr.bf16.mxu0 0
      %1851 = vmatpush1.bf16.msra.mxu0 0
      %1852 = vmatprep.subr.bf16.mxu0 0
      %1853 = vmatpush1.bf16.msra.mxu0 0
      %1854 = vmatprep.subr.bf16.mxu0 0
      %1855 = vmatpush1.bf16.msra.mxu0 0
      %1856 = vmatprep.subr.bf16.mxu0 0
      %1857 = vmatpush1.bf16.msra.mxu0 0
      %1858 = vmatprep.subr.bf16.mxu0 0
      %1859 = vmatpush1.bf16.msra.mxu0 0
      %1860 = vmatprep.subr.bf16.mxu0 0
      %1861 = vmatpush1.bf16.msra.mxu0 0
      %1862 = vmatprep.subr.bf16.mxu0 0
      %1863 = vmatpush1.bf16.msra.mxu0 0
      %1864 = vmatprep.subr.bf16.mxu0 0
      %1865 = vmatpush1.bf16.msra.mxu0 0
      %1866 = vmatprep.subr.bf16.mxu0 0
      %1867 = vmatpush1.bf16.msra.mxu0 0
      %1868 = vmatprep.subr.bf16.mxu0 0
      %1869 = vmatpush1.bf16.msra.mxu0 0
      %1870 = vmatprep.subr.bf16.mxu0 0
      %1871 = vmatpush1.bf16.msra.mxu0 0
      %1872 = vmatprep.subr.bf16.mxu0 0
      %1873 = vmatpush1.bf16.msra.mxu0 0
      %1874 = vmatprep.subr.bf16.mxu0 0
      %1875 = vmatpush1.bf16.msra.mxu0 0
      %1876 = vmatprep.subr.bf16.mxu0 0
      %1877 = vmatpush1.bf16.msra.mxu0 0
      %1878 = vmatprep.subr.bf16.mxu0 0
      %1879 = vmatpush1.bf16.msra.mxu0 0
      %1880 = vmatprep.mubr.bf16.mxu0 0
      %1881 = vmatmul.mubr.bf16.gmra.mrb[0].mxu0 %v1840
      %v1882 = vpop.f32.mrb[0].mxu0
      %v1883 = vadd.f32 0.0, %v1882
      %v1884 = vpop.f32.mrb[0].mxu0
      %v1885 = vadd.f32 0.0, %v1884
      %v1886 = vpop.f32.mrb[0].mxu0
      %v1887 = vadd.f32 0.0, %v1886
      %v1888 = vpop.f32.mrb[0].mxu0
      %v1889 = vadd.f32 0.0, %v1888
      %1890 = vdwg.mxu0
      %v1891 = vadd.f32 %v1814, %v1883
      %v1892 = vadd.f32 %v1815, %v1885
      %v1893 = vadd.f32 %v1816, %v1887
      %v1894 = vadd.f32 %v1817, %v1889
      %1895 = vrot.lane.b32.xlu0 %v626, 113
      %v1896 = vpop.permute.xlu0 %1895
      %1897 = vrot.lane.b32.xlu0 %v627, 113
      %v1898 = vpop.permute.xlu0 %1897
      %vm1899 = vcmask 924672
      %v1900 = vsel %vm1899, %v1896, %v1898
      %vm1902 = vcmask 924672
      %v1904 = vsel %vm1902, %v1898, 0
      %v1906 = vsel %vm687, %v1900, 0
      %v1907 = vsel %vm688, %v1904, 0
      %s1908 = scalar_lea.vmem %s1, 128
      %v1909 = vld [vmem:[%s1908] sm:$0xf]
      %v1910 = vld [vmem:[%s1908 + $0x4] sm:$0x7]
      %v1913 = vunpack.c.l.b16 %v1909
      %v1914 = vunpack.c.l.b16 %v1910
      %v1915 = vpack.c.b16 %v1914, %v1913
      %v1917 = vsel %vm699, %v1915, 0
      %v1920 = vsel %vm623, %v1906, 0
      %v1923 = vsel %vm623, %v1907, 0
      %1925 = vmatprep.subr.bf16.mxu0 %v1923
      %1926 = vmatpush1.bf16.msra.mxu0 %v1920
      %1927 = vmatprep.subr.bf16.mxu0 0
      %1928 = vmatpush1.bf16.msra.mxu0 0
      %1929 = vmatprep.subr.bf16.mxu0 0
      %1930 = vmatpush1.bf16.msra.mxu0 0
      %1931 = vmatprep.subr.bf16.mxu0 0
      %1932 = vmatpush1.bf16.msra.mxu0 0
      %1933 = vmatprep.subr.bf16.mxu0 0
      %1934 = vmatpush1.bf16.msra.mxu0 0
      %1935 = vmatprep.subr.bf16.mxu0 0
      %1936 = vmatpush1.bf16.msra.mxu0 0
      %1937 = vmatprep.subr.bf16.mxu0 0
      %1938 = vmatpush1.bf16.msra.mxu0 0
      %1939 = vmatprep.subr.bf16.mxu0 0
      %1940 = vmatpush1.bf16.msra.mxu0 0
      %1941 = vmatprep.subr.bf16.mxu0 0
      %1942 = vmatpush1.bf16.msra.mxu0 0
      %1943 = vmatprep.subr.bf16.mxu0 0
      %1944 = vmatpush1.bf16.msra.mxu0 0
      %1945 = vmatprep.subr.bf16.mxu0 0
      %1946 = vmatpush1.bf16.msra.mxu0 0
      %1947 = vmatprep.subr.bf16.mxu0 0
      %1948 = vmatpush1.bf16.msra.mxu0 0
      %1949 = vmatprep.subr.bf16.mxu0 0
      %1950 = vmatpush1.bf16.msra.mxu0 0
      %1951 = vmatprep.subr.bf16.mxu0 0
      %1952 = vmatpush1.bf16.msra.mxu0 0
      %1953 = vmatprep.subr.bf16.mxu0 0
      %1954 = vmatpush1.bf16.msra.mxu0 0
      %1955 = vmatprep.subr.bf16.mxu0 0
      %1956 = vmatpush1.bf16.msra.mxu0 0
      %1957 = vmatprep.mubr.bf16.mxu0 0
      %1958 = vmatmul.mubr.bf16.gmra.mrb[0].mxu0 %v1917
      %v1959 = vpop.f32.mrb[0].mxu0
      %v1960 = vadd.f32 0.0, %v1959
      %v1961 = vpop.f32.mrb[0].mxu0
      %v1962 = vadd.f32 0.0, %v1961
      %v1963 = vpop.f32.mrb[0].mxu0
      %v1964 = vadd.f32 0.0, %v1963
      %v1965 = vpop.f32.mrb[0].mxu0
      %v1966 = vadd.f32 0.0, %v1965
      %1967 = vdwg.mxu0
      %v1968 = vadd.f32 %v1891, %v1960
      %v1969 = vadd.f32 %v1892, %v1962
      %v1970 = vadd.f32 %v1893, %v1964
      %v1971 = vadd.f32 %v1894, %v1966
      %1972 = vrot.lane.b32.xlu0 %v626, 112
      %v1973 = vpop.permute.xlu0 %1972
      %1974 = vrot.lane.b32.xlu0 %v627, 112
      %v1975 = vpop.permute.xlu0 %1974
      %vm1976 = vcmask 916480
      %v1977 = vsel %vm1976, %v1973, %v1975
      %vm1978 = vcmask 916480
      %v1980 = vsel %vm1978, %v1975, 0
      %s1981 = scalar_lea.vmem %s1, 136
      %v1982 = vld [vmem:[%s1981] sm:$0xf]
      %v1983 = vld [vmem:[%s1981 + $0x4] sm:$0x7]
      %v1986 = vunpack.c.l.b16 %v1982
      %v1987 = vunpack.c.l.b16 %v1983
      %v1988 = vpack.c.b16 %v1987, %v1986
      %v1990 = vsel %vm699, %v1988, 0
      %v1993 = vsel %vm623, %v1977, 0
      %v1995 = vsel %vm623, %v1980, 0
      %1997 = vmatprep.subr.bf16.mxu0 %v1995
      %1998 = vmatpush1.bf16.msra.mxu0 %v1993
      %1999 = vmatprep.subr.bf16.mxu0 0
      %2000 = vmatpush1.bf16.msra.mxu0 0
      %2001 = vmatprep.subr.bf16.mxu0 0
      %2002 = vmatpush1.bf16.msra.mxu0 0
      %2003 = vmatprep.subr.bf16.mxu0 0
      %2004 = vmatpush1.bf16.msra.mxu0 0
      %2005 = vmatprep.subr.bf16.mxu0 0
      %2006 = vmatpush1.bf16.msra.mxu0 0
      %2007 = vmatprep.subr.bf16.mxu0 0
      %2008 = vmatpush1.bf16.msra.mxu0 0
      %2009 = vmatprep.subr.bf16.mxu0 0
      %2010 = vmatpush1.bf16.msra.mxu0 0
      %2011 = vmatprep.subr.bf16.mxu0 0
      %2012 = vmatpush1.bf16.msra.mxu0 0
      %2013 = vmatprep.subr.bf16.mxu0 0
      %2014 = vmatpush1.bf16.msra.mxu0 0
      %2015 = vmatprep.subr.bf16.mxu0 0
      %2016 = vmatpush1.bf16.msra.mxu0 0
      %2017 = vmatprep.subr.bf16.mxu0 0
      %2018 = vmatpush1.bf16.msra.mxu0 0
      %2019 = vmatprep.subr.bf16.mxu0 0
      %2020 = vmatpush1.bf16.msra.mxu0 0
      %2021 = vmatprep.subr.bf16.mxu0 0
      %2022 = vmatpush1.bf16.msra.mxu0 0
      %2023 = vmatprep.subr.bf16.mxu0 0
      %2024 = vmatpush1.bf16.msra.mxu0 0
      %2025 = vmatprep.subr.bf16.mxu0 0
      %2026 = vmatpush1.bf16.msra.mxu0 0
      %2027 = vmatprep.subr.bf16.mxu0 0
      %2028 = vmatpush1.bf16.msra.mxu0 0
      %2029 = vmatprep.mubr.bf16.mxu0 0
      %2030 = vmatmul.mubr.bf16.gmra.mrb[0].mxu0 %v1990
      %v2031 = vpop.f32.mrb[0].mxu0
      %v2032 = vadd.f32 0.0, %v2031
      %v2033 = vpop.f32.mrb[0].mxu0
      %v2034 = vadd.f32 0.0, %v2033
      %v2035 = vpop.f32.mrb[0].mxu0
      %v2036 = vadd.f32 0.0, %v2035
      %v2037 = vpop.f32.mrb[0].mxu0
      %v2038 = vadd.f32 0.0, %v2037
      %2039 = vdwg.mxu0
      %v2040 = vadd.f32 %v1968, %v2032
      %v2041 = vadd.f32 %v1969, %v2034
      %v2042 = vadd.f32 %v1970, %v2036
      %v2043 = vadd.f32 %v1971, %v2038
      %2044 = vrot.lane.b32.xlu0 %v626, 111
      %v2045 = vpop.permute.xlu0 %2044
      %2046 = vrot.lane.b32.xlu0 %v627, 111
      %v2047 = vpop.permute.xlu0 %2046
      %vm2048 = vcmask 908288
      %v2049 = vsel %vm2048, %v2045, %v2047
      %vm2051 = vcmask 908288
      %v2053 = vsel %vm2051, %v2047, 0
      %v2055 = vsel %vm906, %v2049, 0
      %v2056 = vsel %vm907, %v2053, 0
      %s2057 = scalar_lea.vmem %s1, 144
      %v2058 = vld [vmem:[%s2057] sm:$0xf]
      %v2059 = vld [vmem:[%s2057 + $0x4] sm:$0x7]
      %v2062 = vunpack.c.l.b16 %v2058
      %v2063 = vunpack.c.l.b16 %v2059
      %v2064 = vpack.c.b16 %v2063, %v2062
      %v2066 = vsel %vm699, %v2064, 0
      %v2069 = vsel %vm623, %v2055, 0
      %v2072 = vsel %vm623, %v2056, 0
      %2074 = vmatprep.subr.bf16.mxu0 %v2072
      %2075 = vmatpush1.bf16.msra.mxu0 %v2069
      %2076 = vmatprep.subr.bf16.mxu0 0
      %2077 = vmatpush1.bf16.msra.mxu0 0
      %2078 = vmatprep.subr.bf16.mxu0 0
      %2079 = vmatpush1.bf16.msra.mxu0 0
      %2080 = vmatprep.subr.bf16.mxu0 0
      %2081 = vmatpush1.bf16.msra.mxu0 0
      %2082 = vmatprep.subr.bf16.mxu0 0
      %2083 = vmatpush1.bf16.msra.mxu0 0
      %2084 = vmatprep.subr.bf16.mxu0 0
      %2085 = vmatpush1.bf16.msra.mxu0 0
      %2086 = vmatprep.subr.bf16.mxu0 0
      %2087 = vmatpush1.bf16.msra.mxu0 0
      %2088 = vmatprep.subr.bf16.mxu0 0
      %2089 = vmatpush1.bf16.msra.mxu0 0
      %2090 = vmatprep.subr.bf16.mxu0 0
      %2091 = vmatpush1.bf16.msra.mxu0 0
      %2092 = vmatprep.subr.bf16.mxu0 0
      %2093 = vmatpush1.bf16.msra.mxu0 0
      %2094 = vmatprep.subr.bf16.mxu0 0
      %2095 = vmatpush1.bf16.msra.mxu0 0
      %2096 = vmatprep.subr.bf16.mxu0 0
      %2097 = vmatpush1.bf16.msra.mxu0 0
      %2098 = vmatprep.subr.bf16.mxu0 0
      %2099 = vmatpush1.bf16.msra.mxu0 0
      %2100 = vmatprep.subr.bf16.mxu0 0
      %2101 = vmatpush1.bf16.msra.mxu0 0
      %2102 = vmatprep.subr.bf16.mxu0 0
      %2103 = vmatpush1.bf16.msra.mxu0 0
      %2104 = vmatprep.subr.bf16.mxu0 0
      %2105 = vmatpush1.bf16.msra.mxu0 0
      %2106 = vmatprep.mubr.bf16.mxu0 0
      %2107 = vmatmul.mubr.bf16.gmra.mrb[0].mxu0 %v2066
      %v2108 = vpop.f32.mrb[0].mxu0
      %v2109 = vadd.f32 0.0, %v2108
      %v2110 = vpop.f32.mrb[0].mxu0
      %v2111 = vadd.f32 0.0, %v2110
      %v2112 = vpop.f32.mrb[0].mxu0
      %v2113 = vadd.f32 0.0, %v2112
      %v2114 = vpop.f32.mrb[0].mxu0
      %v2115 = vadd.f32 0.0, %v2114
      %2116 = vdwg.mxu0
      %v2117 = vadd.f32 %v2040, %v2109
      %v2118 = vadd.f32 %v2041, %v2111
      %v2119 = vadd.f32 %v2042, %v2113
      %v2120 = vadd.f32 %v2043, %v2115
      %2121 = vrot.lane.b32.xlu0 %v626, 110
      %v2122 = vpop.permute.xlu0 %2121
      %2123 = vrot.lane.b32.xlu0 %v627, 110
      %v2124 = vpop.permute.xlu0 %2123
      %vm2125 = vcmask 900096
      %v2126 = vsel %vm2125, %v2122, %v2124
      %vm2128 = vcmask 900096
      %v2130 = vsel %vm2128, %v2124, 0
      %v2132 = vsel %vm999, %v2126, 0
      %v2133 = vsel %vm1000, %v2130, 0
      %s2134 = scalar_lea.vmem %s1, 152
      %v2135 = vld [vmem:[%s2134] sm:$0xf]
      %v2136 = vld [vmem:[%s2134 + $0x4] sm:$0x7]
      %v2139 = vunpack.c.l.b16 %v2135
      %v2140 = vunpack.c.l.b16 %v2136
      %v2141 = vpack.c.b16 %v2140, %v2139
      %v2143 = vsel %vm699, %v2141, 0
      %v2146 = vsel %vm623, %v2132, 0
      %v2149 = vsel %vm623, %v2133, 0
      %2151 = vmatprep.subr.bf16.mxu0 %v2149
      %2152 = vmatpush1.bf16.msra.mxu0 %v2146
      %2153 = vmatprep.subr.bf16.mxu0 0
      %2154 = vmatpush1.bf16.msra.mxu0 0
      %2155 = vmatprep.subr.bf16.mxu0 0
      %2156 = vmatpush1.bf16.msra.mxu0 0
      %2157 = vmatprep.subr.bf16.mxu0 0
      %2158 = vmatpush1.bf16.msra.mxu0 0
      %2159 = vmatprep.subr.bf16.mxu0 0
      %2160 = vmatpush1.bf16.msra.mxu0 0
      %2161 = vmatprep.subr.bf16.mxu0 0
      %2162 = vmatpush1.bf16.msra.mxu0 0
      %2163 = vmatprep.subr.bf16.mxu0 0
      %2164 = vmatpush1.bf16.msra.mxu0 0
      %2165 = vmatprep.subr.bf16.mxu0 0
      %2166 = vmatpush1.bf16.msra.mxu0 0
      %2167 = vmatprep.subr.bf16.mxu0 0
      %2168 = vmatpush1.bf16.msra.mxu0 0
      %2169 = vmatprep.subr.bf16.mxu0 0
      %2170 = vmatpush1.bf16.msra.mxu0 0
      %2171 = vmatprep.subr.bf16.mxu0 0
      %2172 = vmatpush1.bf16.msra.mxu0 0
      %2173 = vmatprep.subr.bf16.mxu0 0
      %2174 = vmatpush1.bf16.msra.mxu0 0
      %2175 = vmatprep.subr.bf16.mxu0 0
      %2176 = vmatpush1.bf16.msra.mxu0 0
      %2177 = vmatprep.subr.bf16.mxu0 0
      %2178 = vmatpush1.bf16.msra.mxu0 0
      %2179 = vmatprep.subr.bf16.mxu0 0
      %2180 = vmatpush1.bf16.msra.mxu0 0
      %2181 = vmatprep.subr.bf16.mxu0 0
      %2182 = vmatpush1.bf16.msra.mxu0 0
      %2183 = vmatprep.mubr.bf16.mxu0 0
      %2184 = vmatmul.mubr.bf16.gmra.mrb[0].mxu0 %v2143
      %v2185 = vpop.f32.mrb[0].mxu0
      %v2186 = vadd.f32 0.0, %v2185
      %v2187 = vpop.f32.mrb[0].mxu0
      %v2188 = vadd.f32 0.0, %v2187
      %v2189 = vpop.f32.mrb[0].mxu0
      %v2190 = vadd.f32 0.0, %v2189
      %v2191 = vpop.f32.mrb[0].mxu0
      %v2192 = vadd.f32 0.0, %v2191
      %2193 = vdwg.mxu0
      %v2194 = vadd.f32 %v2117, %v2186
      %v2195 = vadd.f32 %v2118, %v2188
      %v2196 = vadd.f32 %v2119, %v2190
      %v2197 = vadd.f32 %v2120, %v2192
      %2198 = vrot.lane.b32.xlu0 %v626, 98
      %v2199 = vpop.permute.xlu0 %2198
      %2200 = vrot.lane.b32.xlu0 %v627, 98
      %v2201 = vpop.permute.xlu0 %2200
      %vm2202 = vcmask 801792
      %v2203 = vsel %vm2202, %v2199, %v2201
      %vm2205 = vcmask 801792
      %v2207 = vsel %vm2205, %v2201, 0
      %v2209 = vsel %vm656, %v2203, 0
      %v2210 = vsel %vm657, %v2207, 0
      %s2211 = scalar_lea.vmem %s1, 160
      %v2212 = vld [vmem:[%s2211] sm:$0xf]
      %v2213 = vld [vmem:[%s2211 + $0x4] sm:$0x7]
      %v2216 = vunpack.c.l.b16 %v2212
      %v2217 = vunpack.c.l.b16 %v2213
      %v2218 = vpack.c.b16 %v2217, %v2216
      %v2220 = vsel %vm699, %v2218, 0
      %v2223 = vsel %vm623, %v2209, 0
      %v2226 = vsel %vm623, %v2210, 0
      %2228 = vmatprep.subr.bf16.mxu0 %v2226
      %2229 = vmatpush1.bf16.msra.mxu0 %v2223
      %2230 = vmatprep.subr.bf16.mxu0 0
      %2231 = vmatpush1.bf16.msra.mxu0 0
      %2232 = vmatprep.subr.bf16.mxu0 0
      %2233 = vmatpush1.bf16.msra.mxu0 0
      %2234 = vmatprep.subr.bf16.mxu0 0
      %2235 = vmatpush1.bf16.msra.mxu0 0
      %2236 = vmatprep.subr.bf16.mxu0 0
      %2237 = vmatpush1.bf16.msra.mxu0 0
      %2238 = vmatprep.subr.bf16.mxu0 0
      %2239 = vmatpush1.bf16.msra.mxu0 0
      %2240 = vmatprep.subr.bf16.mxu0 0
      %2241 = vmatpush1.bf16.msra.mxu0 0
      %2242 = vmatprep.subr.bf16.mxu0 0
      %2243 = vmatpush1.bf16.msra.mxu0 0
      %2244 = vmatprep.subr.bf16.mxu0 0
      %2245 = vmatpush1.bf16.msra.mxu0 0
      %2246 = vmatprep.subr.bf16.mxu0 0
      %2247 = vmatpush1.bf16.msra.mxu0 0
      %2248 = vmatprep.subr.bf16.mxu0 0
      %2249 = vmatpush1.bf16.msra.mxu0 0
      %2250 = vmatprep.subr.bf16.mxu0 0
      %2251 = vmatpush1.bf16.msra.mxu0 0
      %2252 = vmatprep.subr.bf16.mxu0 0
      %2253 = vmatpush1.bf16.msra.mxu0 0
      %2254 = vmatprep.subr.bf16.mxu0 0
      %2255 = vmatpush1.bf16.msra.mxu0 0
      %2256 = vmatprep.subr.bf16.mxu0 0
      %2257 = vmatpush1.bf16.msra.mxu0 0
      %2258 = vmatprep.subr.bf16.mxu0 0
      %2259 = vmatpush1.bf16.msra.mxu0 0
      %2260 = vmatprep.mubr.bf16.mxu0 0
      %2261 = vmatmul.mubr.bf16.gmra.mrb[0].mxu0 %v2220
      %v2262 = vpop.f32.mrb[0].mxu0
      %v2263 = vadd.f32 0.0, %v2262
      %v2264 = vpop.f32.mrb[0].mxu0
      %v2265 = vadd.f32 0.0, %v2264
      %v2266 = vpop.f32.mrb[0].mxu0
      %v2267 = vadd.f32 0.0, %v2266
      %v2268 = vpop.f32.mrb[0].mxu0
      %v2269 = vadd.f32 0.0, %v2268
      %2270 = vdwg.mxu0
      %v2271 = vadd.f32 %v2194, %v2263
      %v2272 = vadd.f32 %v2195, %v2265
      %v2273 = vadd.f32 %v2196, %v2267
      %v2274 = vadd.f32 %v2197, %v2269
      %2275 = vrot.lane.b32.xlu0 %v626, 97
      %v2276 = vpop.permute.xlu0 %2275
      %2277 = vrot.lane.b32.xlu0 %v627, 97
      %v2278 = vpop.permute.xlu0 %2277
      %vm2279 = vcmask 793600
      %v2280 = vsel %vm2279, %v2276, %v2278
      %vm2282 = vcmask 793600
      %v2284 = vsel %vm2282, %v2278, 0
      %v2286 = vsel %vm687, %v2280, 0
      %v2287 = vsel %vm688, %v2284, 0
      %s2288 = scalar_lea.vmem %s1, 168
      %v2289 = vld [vmem:[%s2288] sm:$0xf]
      %v2290 = vld [vmem:[%s2288 + $0x4] sm:$0x7]
      %v2293 = vunpack.c.l.b16 %v2289
      %v2294 = vunpack.c.l.b16 %v2290
      %v2295 = vpack.c.b16 %v2294, %v2293
      %v2297 = vsel %vm699, %v2295, 0
      %v2300 = vsel %vm623, %v2286, 0
      %v2303 = vsel %vm623, %v2287, 0
      %2305 = vmatprep.subr.bf16.mxu0 %v2303
      %2306 = vmatpush1.bf16.msra.mxu0 %v2300
      %2307 = vmatprep.subr.bf16.mxu0 0
      %2308 = vmatpush1.bf16.msra.mxu0 0
      %2309 = vmatprep.subr.bf16.mxu0 0
      %2310 = vmatpush1.bf16.msra.mxu0 0
      %2311 = vmatprep.subr.bf16.mxu0 0
      %2312 = vmatpush1.bf16.msra.mxu0 0
      %2313 = vmatprep.subr.bf16.mxu0 0
      %2314 = vmatpush1.bf16.msra.mxu0 0
      %2315 = vmatprep.subr.bf16.mxu0 0
      %2316 = vmatpush1.bf16.msra.mxu0 0
      %2317 = vmatprep.subr.bf16.mxu0 0
      %2318 = vmatpush1.bf16.msra.mxu0 0
      %2319 = vmatprep.subr.bf16.mxu0 0
      %2320 = vmatpush1.bf16.msra.mxu0 0
      %2321 = vmatprep.subr.bf16.mxu0 0
      %2322 = vmatpush1.bf16.msra.mxu0 0
      %2323 = vmatprep.subr.bf16.mxu0 0
      %2324 = vmatpush1.bf16.msra.mxu0 0
      %2325 = vmatprep.subr.bf16.mxu0 0
      %2326 = vmatpush1.bf16.msra.mxu0 0
      %2327 = vmatprep.subr.bf16.mxu0 0
      %2328 = vmatpush1.bf16.msra.mxu0 0
      %2329 = vmatprep.subr.bf16.mxu0 0
      %2330 = vmatpush1.bf16.msra.mxu0 0
      %2331 = vmatprep.subr.bf16.mxu0 0
      %2332 = vmatpush1.bf16.msra.mxu0 0
      %2333 = vmatprep.subr.bf16.mxu0 0
      %2334 = vmatpush1.bf16.msra.mxu0 0
      %2335 = vmatprep.subr.bf16.mxu0 0
      %2336 = vmatpush1.bf16.msra.mxu0 0
      %2337 = vmatprep.mubr.bf16.mxu0 0
      %2338 = vmatmul.mubr.bf16.gmra.mrb[0].mxu0 %v2297
      %v2339 = vpop.f32.mrb[0].mxu0
      %v2340 = vadd.f32 0.0, %v2339
      %v2341 = vpop.f32.mrb[0].mxu0
      %v2342 = vadd.f32 0.0, %v2341
      %v2343 = vpop.f32.mrb[0].mxu0
      %v2344 = vadd.f32 0.0, %v2343
      %v2345 = vpop.f32.mrb[0].mxu0
      %v2346 = vadd.f32 0.0, %v2345
      %2347 = vdwg.mxu0
      %v2348 = vadd.f32 %v2271, %v2340
      %v2349 = vadd.f32 %v2272, %v2342
      %v2350 = vadd.f32 %v2273, %v2344
      %v2351 = vadd.f32 %v2274, %v2346
      %2352 = vrot.lane.b32.xlu0 %v626, 96
      %v2353 = vpop.permute.xlu0 %2352
      %2354 = vrot.lane.b32.xlu0 %v627, 96
      %v2355 = vpop.permute.xlu0 %2354
      %vm2356 = vcmask 785408
      %v2357 = vsel %vm2356, %v2353, %v2355
      %vm2358 = vcmask 785408
      %v2360 = vsel %vm2358, %v2355, 0
      %s2361 = scalar_lea.vmem %s1, 176
      %v2362 = vld [vmem:[%s2361] sm:$0xf]
      %v2363 = vld [vmem:[%s2361 + $0x4] sm:$0x7]
      %v2366 = vunpack.c.l.b16 %v2362
      %v2367 = vunpack.c.l.b16 %v2363
      %v2368 = vpack.c.b16 %v2367, %v2366
      %v2370 = vsel %vm699, %v2368, 0
      %v2373 = vsel %vm623, %v2357, 0
      %v2375 = vsel %vm623, %v2360, 0
      %2377 = vmatprep.subr.bf16.mxu0 %v2375
      %2378 = vmatpush1.bf16.msra.mxu0 %v2373
      %2379 = vmatprep.subr.bf16.mxu0 0
      %2380 = vmatpush1.bf16.msra.mxu0 0
      %2381 = vmatprep.subr.bf16.mxu0 0
      %2382 = vmatpush1.bf16.msra.mxu0 0
      %2383 = vmatprep.subr.bf16.mxu0 0
      %2384 = vmatpush1.bf16.msra.mxu0 0
      %2385 = vmatprep.subr.bf16.mxu0 0
      %2386 = vmatpush1.bf16.msra.mxu0 0
      %2387 = vmatprep.subr.bf16.mxu0 0
      %2388 = vmatpush1.bf16.msra.mxu0 0
      %2389 = vmatprep.subr.bf16.mxu0 0
      %2390 = vmatpush1.bf16.msra.mxu0 0
      %2391 = vmatprep.subr.bf16.mxu0 0
      %2392 = vmatpush1.bf16.msra.mxu0 0
      %2393 = vmatprep.subr.bf16.mxu0 0
      %2394 = vmatpush1.bf16.msra.mxu0 0
      %2395 = vmatprep.subr.bf16.mxu0 0
      %2396 = vmatpush1.bf16.msra.mxu0 0
      %2397 = vmatprep.subr.bf16.mxu0 0
      %2398 = vmatpush1.bf16.msra.mxu0 0
      %2399 = vmatprep.subr.bf16.mxu0 0
      %2400 = vmatpush1.bf16.msra.mxu0 0
      %2401 = vmatprep.subr.bf16.mxu0 0
      %2402 = vmatpush1.bf16.msra.mxu0 0
      %2403 = vmatprep.subr.bf16.mxu0 0
      %2404 = vmatpush1.bf16.msra.mxu0 0
      %2405 = vmatprep.subr.bf16.mxu0 0
      %2406 = vmatpush1.bf16.msra.mxu0 0
      %2407 = vmatprep.subr.bf16.mxu0 0
      %2408 = vmatpush1.bf16.msra.mxu0 0
      %2409 = vmatprep.mubr.bf16.mxu0 0
      %2410 = vmatmul.mubr.bf16.gmra.mrb[0].mxu0 %v2370
      %v2411 = vpop.f32.mrb[0].mxu0
      %v2412 = vadd.f32 0.0, %v2411
      %v2413 = vpop.f32.mrb[0].mxu0
      %v2414 = vadd.f32 0.0, %v2413
      %v2415 = vpop.f32.mrb[0].mxu0
      %v2416 = vadd.f32 0.0, %v2415
      %v2417 = vpop.f32.mrb[0].mxu0
      %v2418 = vadd.f32 0.0, %v2417
      %2419 = vdwg.mxu0
      %v2420 = vadd.f32 %v2348, %v2412
      %v2421 = vadd.f32 %v2349, %v2414
      %v2422 = vadd.f32 %v2350, %v2416
      %v2423 = vadd.f32 %v2351, %v2418
      %2424 = vrot.lane.b32.xlu0 %v626, 95
      %v2425 = vpop.permute.xlu0 %2424
      %2426 = vrot.lane.b32.xlu0 %v627, 95
      %v2427 = vpop.permute.xlu0 %2426
      %vm2428 = vcmask 777216
      %v2429 = vsel %vm2428, %v2425, %v2427
      %vm2431 = vcmask 777216
      %v2433 = vsel %vm2431, %v2427, 0
      %v2435 = vsel %vm906, %v2429, 0
      %v2436 = vsel %vm907, %v2433, 0
      %s2437 = scalar_lea.vmem %s1, 184
      %v2438 = vld [vmem:[%s2437] sm:$0xf]
      %v2439 = vld [vmem:[%s2437 + $0x4] sm:$0x7]
      %v2442 = vunpack.c.l.b16 %v2438
      %v2443 = vunpack.c.l.b16 %v2439
      %v2444 = vpack.c.b16 %v2443, %v2442
      %v2446 = vsel %vm699, %v2444, 0
      %v2449 = vsel %vm623, %v2435, 0
      %v2452 = vsel %vm623, %v2436, 0
      %2454 = vmatprep.subr.bf16.mxu0 %v2452
      %2455 = vmatpush1.bf16.msra.mxu0 %v2449
      %2456 = vmatprep.subr.bf16.mxu0 0
      %2457 = vmatpush1.bf16.msra.mxu0 0
      %2458 = vmatprep.subr.bf16.mxu0 0
      %2459 = vmatpush1.bf16.msra.mxu0 0
      %2460 = vmatprep.subr.bf16.mxu0 0
      %2461 = vmatpush1.bf16.msra.mxu0 0
      %2462 = vmatprep.subr.bf16.mxu0 0
      %2463 = vmatpush1.bf16.msra.mxu0 0
      %2464 = vmatprep.subr.bf16.mxu0 0
      %2465 = vmatpush1.bf16.msra.mxu0 0
      %2466 = vmatprep.subr.bf16.mxu0 0
      %2467 = vmatpush1.bf16.msra.mxu0 0
      %2468 = vmatprep.subr.bf16.mxu0 0
      %2469 = vmatpush1.bf16.msra.mxu0 0
      %2470 = vmatprep.subr.bf16.mxu0 0
      %2471 = vmatpush1.bf16.msra.mxu0 0
      %2472 = vmatprep.subr.bf16.mxu0 0
      %2473 = vmatpush1.bf16.msra.mxu0 0
      %2474 = vmatprep.subr.bf16.mxu0 0
      %2475 = vmatpush1.bf16.msra.mxu0 0
      %2476 = vmatprep.subr.bf16.mxu0 0
      %2477 = vmatpush1.bf16.msra.mxu0 0
      %2478 = vmatprep.subr.bf16.mxu0 0
      %2479 = vmatpush1.bf16.msra.mxu0 0
      %2480 = vmatprep.subr.bf16.mxu0 0
      %2481 = vmatpush1.bf16.msra.mxu0 0
      %2482 = vmatprep.subr.bf16.mxu0 0
      %2483 = vmatpush1.bf16.msra.mxu0 0
      %2484 = vmatprep.subr.bf16.mxu0 0
      %2485 = vmatpush1.bf16.msra.mxu0 0
      %2486 = vmatprep.mubr.bf16.mxu0 0
      %2487 = vmatmul.mubr.bf16.gmra.mrb[0].mxu0 %v2446
      %v2488 = vpop.f32.mrb[0].mxu0
      %v2489 = vadd.f32 0.0, %v2488
      %v2490 = vpop.f32.mrb[0].mxu0
      %v2491 = vadd.f32 0.0, %v2490
      %v2492 = vpop.f32.mrb[0].mxu0
      %v2493 = vadd.f32 0.0, %v2492
      %v2494 = vpop.f32.mrb[0].mxu0
      %v2495 = vadd.f32 0.0, %v2494
      %2496 = vdwg.mxu0
      %v2497 = vadd.f32 %v2420, %v2489
      %v2498 = vadd.f32 %v2421, %v2491
      %v2499 = vadd.f32 %v2422, %v2493
      %v2500 = vadd.f32 %v2423, %v2495
      %2501 = vrot.lane.b32.xlu0 %v626, 94
      %v2502 = vpop.permute.xlu0 %2501
      %2503 = vrot.lane.b32.xlu0 %v627, 94
      %v2504 = vpop.permute.xlu0 %2503
      %vm2505 = vcmask 769024
      %v2506 = vsel %vm2505, %v2502, %v2504
      %vm2508 = vcmask 769024
      %v2510 = vsel %vm2508, %v2504, 0
      %v2512 = vsel %vm999, %v2506, 0
      %v2513 = vsel %vm1000, %v2510, 0
      %s2514 = scalar_lea.vmem %s1, 192
      %v2515 = vld [vmem:[%s2514] sm:$0xf]
      %v2516 = vld [vmem:[%s2514 + $0x4] sm:$0x7]
      %v2519 = vunpack.c.l.b16 %v2515
      %v2520 = vunpack.c.l.b16 %v2516
      %v2521 = vpack.c.b16 %v2520, %v2519
      %v2523 = vsel %vm699, %v2521, 0
      %v2526 = vsel %vm623, %v2512, 0
      %v2529 = vsel %vm623, %v2513, 0
      %2531 = vmatprep.subr.bf16.mxu0 %v2529
      %2532 = vmatpush1.bf16.msra.mxu0 %v2526
      %2533 = vmatprep.subr.bf16.mxu0 0
      %2534 = vmatpush1.bf16.msra.mxu0 0
      %2535 = vmatprep.subr.bf16.mxu0 0
      %2536 = vmatpush1.bf16.msra.mxu0 0
      %2537 = vmatprep.subr.bf16.mxu0 0
      %2538 = vmatpush1.bf16.msra.mxu0 0
      %2539 = vmatprep.subr.bf16.mxu0 0
      %2540 = vmatpush1.bf16.msra.mxu0 0
      %2541 = vmatprep.subr.bf16.mxu0 0
      %2542 = vmatpush1.bf16.msra.mxu0 0
      %2543 = vmatprep.subr.bf16.mxu0 0
      %2544 = vmatpush1.bf16.msra.mxu0 0
      %2545 = vmatprep.subr.bf16.mxu0 0
      %2546 = vmatpush1.bf16.msra.mxu0 0
      %2547 = vmatprep.subr.bf16.mxu0 0
      %2548 = vmatpush1.bf16.msra.mxu0 0
      %2549 = vmatprep.subr.bf16.mxu0 0
      %2550 = vmatpush1.bf16.msra.mxu0 0
      %2551 = vmatprep.subr.bf16.mxu0 0
      %2552 = vmatpush1.bf16.msra.mxu0 0
      %2553 = vmatprep.subr.bf16.mxu0 0
      %2554 = vmatpush1.bf16.msra.mxu0 0
      %2555 = vmatprep.subr.bf16.mxu0 0
      %2556 = vmatpush1.bf16.msra.mxu0 0
      %2557 = vmatprep.subr.bf16.mxu0 0
      %2558 = vmatpush1.bf16.msra.mxu0 0
      %2559 = vmatprep.subr.bf16.mxu0 0
      %2560 = vmatpush1.bf16.msra.mxu0 0
      %2561 = vmatprep.subr.bf16.mxu0 0
      %2562 = vmatpush1.bf16.msra.mxu0 0
      %2563 = vmatprep.mubr.bf16.mxu0 0
      %2564 = vmatmul.mubr.bf16.gmra.mrb[0].mxu0 %v2523
      %v2565 = vpop.f32.mrb[0].mxu0
      %v2566 = vadd.f32 0.0, %v2565
      %v2567 = vpop.f32.mrb[0].mxu0
      %v2568 = vadd.f32 0.0, %v2567
      %v2569 = vpop.f32.mrb[0].mxu0
      %v2570 = vadd.f32 0.0, %v2569
      %v2571 = vpop.f32.mrb[0].mxu0
      %v2572 = vadd.f32 0.0, %v2571
      %2573 = vdwg.mxu0
      %v2574 = vadd.f32 %v2497, %v2566
      %v2575 = vadd.f32 %v2498, %v2568
      %v2576 = vadd.f32 %v2499, %v2570
      %v2577 = vadd.f32 %v2500, %v2572
      %v2578 = vld [vmem:[%s2] sm:$0xff]
      %v2579 = vld [vmem:[%s2 + $0x8] sm:$0x3f]
      %2581 = vset.pattern.permute.xlu0 0
      %2582 = vperm.xlu0 %2581, %v2578
      %v2583 = vpop.permute.xlu0 %2582
      %2586 = vset.pattern.permute.xlu0 0
      %2587 = vperm.xlu0 %2586, %v2579
      %v2588 = vpop.permute.xlu0 %2587
      %v2590 = vadd.f32 %v2574, %v2583
      %v2591 = vadd.f32 %v2575, %v2583
      %v2592 = vadd.f32 %v2576, %v2588
      %v2593 = vadd.f32 %v2577, %v2588
      %v2594 = vmax.f32 %v2590, 0.0
      %v2595 = vmax.f32 %v2591, 0.0
      %v2596 = vmax.f32 %v2592, 0.0
      %v2597 = vmax.f32 %v2593, 0.0
      %v2598 = vpack.c.bf16 %v2596, %v2594
      %v2599 = vpack.c.bf16 %v2597, %v2595
      %2602 = vrot.lane.b32.xlu0 %v2598, 34
      %v2603 = vpop.permute.xlu0 %2602
      %2604 = vrot.lane.b32.xlu0 %v2599, 34
      %v2605 = vpop.permute.xlu0 %2604
      %v2606 = vsel %vm634, %v2603, %v2605
      %v2609 = vsel %vm637, 0, %v2603
      %v2611 = vsel %vm656, %v2609, 0
      %v2612 = vsel %vm657, %v2606, 0
      %v2613 = vld [vmem:[%s3] sm:$0xf]
      %v2614 = vld [vmem:[%s3 + $0x4] sm:$0x7]
      %2615 = vrot.lane.b32.xlu0 %v2598, 33
      %v2616 = vpop.permute.xlu0 %2615
      %2617 = vrot.lane.b32.xlu0 %v2599, 33
      %v2618 = vpop.permute.xlu0 %2617
      %v2619 = vsel %vm666, %v2616, %v2618
      %v2622 = vsel %vm669, 0, %v2616
      %v2624 = vsel %vm687, %v2622, 0
      %v2625 = vsel %vm688, %v2619, 0
      %s2626 = scalar_lea.vmem %s3, 8
      %v2627 = vld [vmem:[%s2626] sm:$0xf]
      %v2628 = vld [vmem:[%s2626 + $0x4] sm:$0x7]
      %v2631 = vunpack.c.l.b16 %v2627
      %v2632 = vunpack.c.l.b16 %v2628
      %v2633 = vpack.c.b16 %v2632, %v2631
      %v2635 = vsel %vm699, %v2633, 0
      %v2638 = vsel %vm623, %v2624, 0
      %v2641 = vsel %vm623, %v2625, 0
      %2643 = vmatprep.subr.bf16.mxu0 %v2641
      %2644 = vmatpush1.bf16.msra.mxu0 %v2638
      %2645 = vmatprep.subr.bf16.mxu0 0
      %2646 = vmatpush1.bf16.msra.mxu0 0
      %2647 = vmatprep.subr.bf16.mxu0 0
      %2648 = vmatpush1.bf16.msra.mxu0 0
      %2649 = vmatprep.subr.bf16.mxu0 0
      %2650 = vmatpush1.bf16.msra.mxu0 0
      %2651 = vmatprep.subr.bf16.mxu0 0
      %2652 = vmatpush1.bf16.msra.mxu0 0
      %2653 = vmatprep.subr.bf16.mxu0 0
      %2654 = vmatpush1.bf16.msra.mxu0 0
      %2655 = vmatprep.subr.bf16.mxu0 0
      %2656 = vmatpush1.bf16.msra.mxu0 0
      %2657 = vmatprep.subr.bf16.mxu0 0
      %2658 = vmatpush1.bf16.msra.mxu0 0
      %2659 = vmatprep.subr.bf16.mxu0 0
      %2660 = vmatpush1.bf16.msra.mxu0 0
      %2661 = vmatprep.subr.bf16.mxu0 0
      %2662 = vmatpush1.bf16.msra.mxu0 0
      %2663 = vmatprep.subr.bf16.mxu0 0
      %2664 = vmatpush1.bf16.msra.mxu0 0
      %2665 = vmatprep.subr.bf16.mxu0 0
      %2666 = vmatpush1.bf16.msra.mxu0 0
      %2667 = vmatprep.subr.bf16.mxu0 0
      %2668 = vmatpush1.bf16.msra.mxu0 0
      %2669 = vmatprep.subr.bf16.mxu0 0
      %2670 = vmatpush1.bf16.msra.mxu0 0
      %2671 = vmatprep.subr.bf16.mxu0 0
      %2672 = vmatpush1.bf16.msra.mxu0 0
      %2673 = vmatprep.subr.bf16.mxu0 0
      %2674 = vmatpush1.bf16.msra.mxu0 0
      %2675 = vmatprep.mubr.bf16.mxu0 0
      %2676 = vmatmul.mubr.bf16.gmra.mrb[0].mxu0 %v2635
      %v2677 = vpop.f32.mrb[0].mxu0
      %v2678 = vadd.f32 0.0, %v2677
      %v2679 = vpop.f32.mrb[0].mxu0
      %v2680 = vadd.f32 0.0, %v2679
      %v2681 = vpop.f32.mrb[0].mxu0
      %v2682 = vadd.f32 0.0, %v2681
      %v2683 = vpop.f32.mrb[0].mxu0
      %v2684 = vadd.f32 0.0, %v2683
      %2685 = vdwg.mxu0
      %v2688 = vunpack.c.l.b16 %v2613
      %v2689 = vunpack.c.l.b16 %v2614
      %v2690 = vpack.c.b16 %v2689, %v2688
      %v2692 = vsel %vm699, %v2690, 0
      %v2695 = vsel %vm623, %v2611, 0
      %v2698 = vsel %vm623, %v2612, 0
      %2700 = vmatprep.subr.bf16.mxu0 %v2698
      %2701 = vmatpush1.bf16.msra.mxu0 %v2695
      %2702 = vmatprep.subr.bf16.mxu0 0
      %2703 = vmatpush1.bf16.msra.mxu0 0
      %2704 = vmatprep.subr.bf16.mxu0 0
      %2705 = vmatpush1.bf16.msra.mxu0 0
      %2706 = vmatprep.subr.bf16.mxu0 0
      %2707 = vmatpush1.bf16.msra.mxu0 0
      %2708 = vmatprep.subr.bf16.mxu0 0
      %2709 = vmatpush1.bf16.msra.mxu0 0
      %2710 = vmatprep.subr.bf16.mxu0 0
      %2711 = vmatpush1.bf16.msra.mxu0 0
      %2712 = vmatprep.subr.bf16.mxu0 0
      %2713 = vmatpush1.bf16.msra.mxu0 0
      %2714 = vmatprep.subr.bf16.mxu0 0
      %2715 = vmatpush1.bf16.msra.mxu0 0
      %2716 = vmatprep.subr.bf16.mxu0 0
      %2717 = vmatpush1.bf16.msra.mxu0 0
      %2718 = vmatprep.subr.bf16.mxu0 0
      %2719 = vmatpush1.bf16.msra.mxu0 0
      %2720 = vmatprep.subr.bf16.mxu0 0
      %2721 = vmatpush1.bf16.msra.mxu0 0
      %2722 = vmatprep.subr.bf16.mxu0 0
      %2723 = vmatpush1.bf16.msra.mxu0 0
      %2724 = vmatprep.subr.bf16.mxu0 0
      %2725 = vmatpush1.bf16.msra.mxu0 0
      %2726 = vmatprep.subr.bf16.mxu0 0
      %2727 = vmatpush1.bf16.msra.mxu0 0
      %2728 = vmatprep.subr.bf16.mxu0 0
      %2729 = vmatpush1.bf16.msra.mxu0 0
      %2730 = vmatprep.subr.bf16.mxu0 0
      %2731 = vmatpush1.bf16.msra.mxu0 0
      %2732 = vmatprep.mubr.bf16.mxu0 0
      %2733 = vmatmul.mubr.bf16.gmra.mrb[0].mxu0 %v2692
      %v2734 = vpop.f32.mrb[0].mxu0
      %v2735 = vadd.f32 %v2678, %v2734
      %v2736 = vpop.f32.mrb[0].mxu0
      %v2737 = vadd.f32 %v2680, %v2736
      %v2738 = vpop.f32.mrb[0].mxu0
      %v2739 = vadd.f32 %v2682, %v2738
      %v2740 = vpop.f32.mrb[0].mxu0
      %v2741 = vadd.f32 %v2684, %v2740
      %2742 = vdwg.mxu0
      %2743 = vrot.lane.b32.xlu0 %v2598, 32
      %v2744 = vpop.permute.xlu0 %2743
      %2745 = vrot.lane.b32.xlu0 %v2599, 32
      %v2746 = vpop.permute.xlu0 %2745
      %v2747 = vsel %vm813, %v2744, %v2746
      %v2749 = vsel %vm815, 0, %v2744
      %s2750 = scalar_lea.vmem %s3, 16
      %v2751 = vld [vmem:[%s2750] sm:$0xf]
      %v2752 = vld [vmem:[%s2750 + $0x4] sm:$0x7]
      %v2755 = vunpack.c.l.b16 %v2751
      %v2756 = vunpack.c.l.b16 %v2752
      %v2757 = vpack.c.b16 %v2756, %v2755
      %v2759 = vsel %vm699, %v2757, 0
      %v2761 = vsel %vm623, %v2749, 0
      %v2764 = vsel %vm623, %v2747, 0
      %2766 = vmatprep.subr.bf16.mxu0 %v2764
      %2767 = vmatpush1.bf16.msra.mxu0 %v2761
      %2768 = vmatprep.subr.bf16.mxu0 0
      %2769 = vmatpush1.bf16.msra.mxu0 0
      %2770 = vmatprep.subr.bf16.mxu0 0
      %2771 = vmatpush1.bf16.msra.mxu0 0
      %2772 = vmatprep.subr.bf16.mxu0 0
      %2773 = vmatpush1.bf16.msra.mxu0 0
      %2774 = vmatprep.subr.bf16.mxu0 0
      %2775 = vmatpush1.bf16.msra.mxu0 0
      %2776 = vmatprep.subr.bf16.mxu0 0
      %2777 = vmatpush1.bf16.msra.mxu0 0
      %2778 = vmatprep.subr.bf16.mxu0 0
      %2779 = vmatpush1.bf16.msra.mxu0 0
      %2780 = vmatprep.subr.bf16.mxu0 0
      %2781 = vmatpush1.bf16.msra.mxu0 0
      %2782 = vmatprep.subr.bf16.mxu0 0
      %2783 = vmatpush1.bf16.msra.mxu0 0
      %2784 = vmatprep.subr.bf16.mxu0 0
      %2785 = vmatpush1.bf16.msra.mxu0 0
      %2786 = vmatprep.subr.bf16.mxu0 0
      %2787 = vmatpush1.bf16.msra.mxu0 0
      %2788 = vmatprep.subr.bf16.mxu0 0
      %2789 = vmatpush1.bf16.msra.mxu0 0
      %2790 = vmatprep.subr.bf16.mxu0 0
      %2791 = vmatpush1.bf16.msra.mxu0 0
      %2792 = vmatprep.subr.bf16.mxu0 0
      %2793 = vmatpush1.bf16.msra.mxu0 0
      %2794 = vmatprep.subr.bf16.mxu0 0
      %2795 = vmatpush1.bf16.msra.mxu0 0
      %2796 = vmatprep.subr.bf16.mxu0 0
      %2797 = vmatpush1.bf16.msra.mxu0 0
      %2798 = vmatprep.mubr.bf16.mxu0 0
      %2799 = vmatmul.mubr.bf16.gmra.mrb[0].mxu0 %v2759
      %v2800 = vpop.f32.mrb[0].mxu0
      %v2801 = vadd.f32 0.0, %v2800
      %v2802 = vpop.f32.mrb[0].mxu0
      %v2803 = vadd.f32 0.0, %v2802
      %v2804 = vpop.f32.mrb[0].mxu0
      %v2805 = vadd.f32 0.0, %v2804
      %v2806 = vpop.f32.mrb[0].mxu0
      %v2807 = vadd.f32 0.0, %v2806
      %2808 = vdwg.mxu0
      %v2809 = vadd.f32 %v2735, %v2801
      %v2810 = vadd.f32 %v2737, %v2803
      %v2811 = vadd.f32 %v2739, %v2805
      %v2812 = vadd.f32 %v2741, %v2807
      %2813 = vrot.lane.b32.xlu0 %v2598, 31
      %v2814 = vpop.permute.xlu0 %2813
      %2815 = vrot.lane.b32.xlu0 %v2599, 31
      %v2816 = vpop.permute.xlu0 %2815
      %v2817 = vsel %vm885, %v2814, %v2816
      %v2820 = vsel %vm888, 0, %v2814
      %v2822 = vsel %vm906, %v2820, 0
      %v2823 = vsel %vm907, %v2817, 0
      %s2824 = scalar_lea.vmem %s3, 24
      %v2825 = vld [vmem:[%s2824] sm:$0xf]
      %v2826 = vld [vmem:[%s2824 + $0x4] sm:$0x7]
      %v2829 = vunpack.c.l.b16 %v2825
      %v2830 = vunpack.c.l.b16 %v2826
      %v2831 = vpack.c.b16 %v2830, %v2829
      %v2833 = vsel %vm699, %v2831, 0
      %v2836 = vsel %vm623, %v2822, 0
      %v2839 = vsel %vm623, %v2823, 0
      %2841 = vmatprep.subr.bf16.mxu0 %v2839
      %2842 = vmatpush1.bf16.msra.mxu0 %v2836
      %2843 = vmatprep.subr.bf16.mxu0 0
      %2844 = vmatpush1.bf16.msra.mxu0 0
      %2845 = vmatprep.subr.bf16.mxu0 0
      %2846 = vmatpush1.bf16.msra.mxu0 0
      %2847 = vmatprep.subr.bf16.mxu0 0
      %2848 = vmatpush1.bf16.msra.mxu0 0
      %2849 = vmatprep.subr.bf16.mxu0 0
      %2850 = vmatpush1.bf16.msra.mxu0 0
      %2851 = vmatprep.subr.bf16.mxu0 0
      %2852 = vmatpush1.bf16.msra.mxu0 0
      %2853 = vmatprep.subr.bf16.mxu0 0
      %2854 = vmatpush1.bf16.msra.mxu0 0
      %2855 = vmatprep.subr.bf16.mxu0 0
      %2856 = vmatpush1.bf16.msra.mxu0 0
      %2857 = vmatprep.subr.bf16.mxu0 0
      %2858 = vmatpush1.bf16.msra.mxu0 0
      %2859 = vmatprep.subr.bf16.mxu0 0
      %2860 = vmatpush1.bf16.msra.mxu0 0
      %2861 = vmatprep.subr.bf16.mxu0 0
      %2862 = vmatpush1.bf16.msra.mxu0 0
      %2863 = vmatprep.subr.bf16.mxu0 0
      %2864 = vmatpush1.bf16.msra.mxu0 0
      %2865 = vmatprep.subr.bf16.mxu0 0
      %2866 = vmatpush1.bf16.msra.mxu0 0
      %2867 = vmatprep.subr.bf16.mxu0 0
      %2868 = vmatpush1.bf16.msra.mxu0 0
      %2869 = vmatprep.subr.bf16.mxu0 0
      %2870 = vmatpush1.bf16.msra.mxu0 0
      %2871 = vmatprep.subr.bf16.mxu0 0
      %2872 = vmatpush1.bf16.msra.mxu0 0
      %2873 = vmatprep.mubr.bf16.mxu0 0
      %2874 = vmatmul.mubr.bf16.gmra.mrb[0].mxu0 %v2833
      %v2875 = vpop.f32.mrb[0].mxu0
      %v2876 = vadd.f32 0.0, %v2875
      %v2877 = vpop.f32.mrb[0].mxu0
      %v2878 = vadd.f32 0.0, %v2877
      %v2879 = vpop.f32.mrb[0].mxu0
      %v2880 = vadd.f32 0.0, %v2879
      %v2881 = vpop.f32.mrb[0].mxu0
      %v2882 = vadd.f32 0.0, %v2881
      %2883 = vdwg.mxu0
      %v2884 = vadd.f32 %v2809, %v2876
      %v2885 = vadd.f32 %v2810, %v2878
      %v2886 = vadd.f32 %v2811, %v2880
      %v2887 = vadd.f32 %v2812, %v2882
      %2888 = vrot.lane.b32.xlu0 %v2598, 30
      %v2889 = vpop.permute.xlu0 %2888
      %2890 = vrot.lane.b32.xlu0 %v2599, 30
      %v2891 = vpop.permute.xlu0 %2890
      %v2892 = vsel %vm978, %v2889, %v2891
      %v2895 = vsel %vm981, 0, %v2889
      %v2897 = vsel %vm999, %v2895, 0
      %v2898 = vsel %vm1000, %v2892, 0
      %s2899 = scalar_lea.vmem %s3, 32
      %v2900 = vld [vmem:[%s2899] sm:$0xf]
      %v2901 = vld [vmem:[%s2899 + $0x4] sm:$0x7]
      %v2904 = vunpack.c.l.b16 %v2900
      %v2905 = vunpack.c.l.b16 %v2901
      %v2906 = vpack.c.b16 %v2905, %v2904
      %v2908 = vsel %vm699, %v2906, 0
      %v2911 = vsel %vm623, %v2897, 0
      %v2914 = vsel %vm623, %v2898, 0
      %2916 = vmatprep.subr.bf16.mxu0 %v2914
      %2917 = vmatpush1.bf16.msra.mxu0 %v2911
      %2918 = vmatprep.subr.bf16.mxu0 0
      %2919 = vmatpush1.bf16.msra.mxu0 0
      %2920 = vmatprep.subr.bf16.mxu0 0
      %2921 = vmatpush1.bf16.msra.mxu0 0
      %2922 = vmatprep.subr.bf16.mxu0 0
      %2923 = vmatpush1.bf16.msra.mxu0 0
      %2924 = vmatprep.subr.bf16.mxu0 0
      %2925 = vmatpush1.bf16.msra.mxu0 0
      %2926 = vmatprep.subr.bf16.mxu0 0
      %2927 = vmatpush1.bf16.msra.mxu0 0
      %2928 = vmatprep.subr.bf16.mxu0 0
      %2929 = vmatpush1.bf16.msra.mxu0 0
      %2930 = vmatprep.subr.bf16.mxu0 0
      %2931 = vmatpush1.bf16.msra.mxu0 0
      %2932 = vmatprep.subr.bf16.mxu0 0
      %2933 = vmatpush1.bf16.msra.mxu0 0
      %2934 = vmatprep.subr.bf16.mxu0 0
      %2935 = vmatpush1.bf16.msra.mxu0 0
      %2936 = vmatprep.subr.bf16.mxu0 0
      %2937 = vmatpush1.bf16.msra.mxu0 0
      %2938 = vmatprep.subr.bf16.mxu0 0
      %2939 = vmatpush1.bf16.msra.mxu0 0
      %2940 = vmatprep.subr.bf16.mxu0 0
      %2941 = vmatpush1.bf16.msra.mxu0 0
      %2942 = vmatprep.subr.bf16.mxu0 0
      %2943 = vmatpush1.bf16.msra.mxu0 0
      %2944 = vmatprep.subr.bf16.mxu0 0
      %2945 = vmatpush1.bf16.msra.mxu0 0
      %2946 = vmatprep.subr.bf16.mxu0 0
      %2947 = vmatpush1.bf16.msra.mxu0 0
      %2948 = vmatprep.mubr.bf16.mxu0 0
      %2949 = vmatmul.mubr.bf16.gmra.mrb[0].mxu0 %v2908
      %v2950 = vpop.f32.mrb[0].mxu0
      %v2951 = vadd.f32 0.0, %v2950
      %v2952 = vpop.f32.mrb[0].mxu0
      %v2953 = vadd.f32 0.0, %v2952
      %v2954 = vpop.f32.mrb[0].mxu0
      %v2955 = vadd.f32 0.0, %v2954
      %v2956 = vpop.f32.mrb[0].mxu0
      %v2957 = vadd.f32 0.0, %v2956
      %2958 = vdwg.mxu0
      %v2959 = vadd.f32 %v2884, %v2951
      %v2960 = vadd.f32 %v2885, %v2953
      %v2961 = vadd.f32 %v2886, %v2955
      %v2962 = vadd.f32 %v2887, %v2957
      %2963 = vrot.lane.b32.xlu0 %v2598, 18
      %v2964 = vpop.permute.xlu0 %2963
      %2965 = vrot.lane.b32.xlu0 %v2599, 18
      %v2966 = vpop.permute.xlu0 %2965
      %v2967 = vsel %vm1071, %v2964, %v2966
      %v2970 = vsel %vm1074, 0, %v2964
      %v2972 = vsel %vm656, %v2970, 0
      %v2973 = vsel %vm657, %v2967, 0
      %s2974 = scalar_lea.vmem %s3, 40
      %v2975 = vld [vmem:[%s2974] sm:$0xf]
      %v2976 = vld [vmem:[%s2974 + $0x4] sm:$0x7]
      %v2979 = vunpack.c.l.b16 %v2975
      %v2980 = vunpack.c.l.b16 %v2976
      %v2981 = vpack.c.b16 %v2980, %v2979
      %v2983 = vsel %vm699, %v2981, 0
      %v2986 = vsel %vm623, %v2972, 0
      %v2989 = vsel %vm623, %v2973, 0
      %2991 = vmatprep.subr.bf16.mxu0 %v2989
      %2992 = vmatpush1.bf16.msra.mxu0 %v2986
      %2993 = vmatprep.subr.bf16.mxu0 0
      %2994 = vmatpush1.bf16.msra.mxu0 0
      %2995 = vmatprep.subr.bf16.mxu0 0
      %2996 = vmatpush1.bf16.msra.mxu0 0
      %2997 = vmatprep.subr.bf16.mxu0 0
      %2998 = vmatpush1.bf16.msra.mxu0 0
      %2999 = vmatprep.subr.bf16.mxu0 0
      %3000 = vmatpush1.bf16.msra.mxu0 0
      %3001 = vmatprep.subr.bf16.mxu0 0
      %3002 = vmatpush1.bf16.msra.mxu0 0
      %3003 = vmatprep.subr.bf16.mxu0 0
      %3004 = vmatpush1.bf16.msra.mxu0 0
      %3005 = vmatprep.subr.bf16.mxu0 0
      %3006 = vmatpush1.bf16.msra.mxu0 0
      %3007 = vmatprep.subr.bf16.mxu0 0
      %3008 = vmatpush1.bf16.msra.mxu0 0
      %3009 = vmatprep.subr.bf16.mxu0 0
      %3010 = vmatpush1.bf16.msra.mxu0 0
      %3011 = vmatprep.subr.bf16.mxu0 0
      %3012 = vmatpush1.bf16.msra.mxu0 0
      %3013 = vmatprep.subr.bf16.mxu0 0
      %3014 = vmatpush1.bf16.msra.mxu0 0
      %3015 = vmatprep.subr.bf16.mxu0 0
      %3016 = vmatpush1.bf16.msra.mxu0 0
      %3017 = vmatprep.subr.bf16.mxu0 0
      %3018 = vmatpush1.bf16.msra.mxu0 0
      %3019 = vmatprep.subr.bf16.mxu0 0
      %3020 = vmatpush1.bf16.msra.mxu0 0
      %3021 = vmatprep.subr.bf16.mxu0 0
      %3022 = vmatpush1.bf16.msra.mxu0 0
      %3023 = vmatprep.mubr.bf16.mxu0 0
      %3024 = vmatmul.mubr.bf16.gmra.mrb[0].mxu0 %v2983
      %v3025 = vpop.f32.mrb[0].mxu0
      %v3026 = vadd.f32 0.0, %v3025
      %v3027 = vpop.f32.mrb[0].mxu0
      %v3028 = vadd.f32 0.0, %v3027
      %v3029 = vpop.f32.mrb[0].mxu0
      %v3030 = vadd.f32 0.0, %v3029
      %v3031 = vpop.f32.mrb[0].mxu0
      %v3032 = vadd.f32 0.0, %v3031
      %3033 = vdwg.mxu0
      %v3034 = vadd.f32 %v2959, %v3026
      %v3035 = vadd.f32 %v2960, %v3028
      %v3036 = vadd.f32 %v2961, %v3030
      %v3037 = vadd.f32 %v2962, %v3032
      %3038 = vrot.lane.b32.xlu0 %v2598, 17
      %v3039 = vpop.permute.xlu0 %3038
      %3040 = vrot.lane.b32.xlu0 %v2599, 17
      %v3041 = vpop.permute.xlu0 %3040
      %v3042 = vsel %vm1148, %v3039, %v3041
      %v3045 = vsel %vm1151, 0, %v3039
      %v3047 = vsel %vm687, %v3045, 0
      %v3048 = vsel %vm688, %v3042, 0
      %s3049 = scalar_lea.vmem %s3, 48
      %v3050 = vld [vmem:[%s3049] sm:$0xf]
      %v3051 = vld [vmem:[%s3049 + $0x4] sm:$0x7]
      %v3054 = vunpack.c.l.b16 %v3050
      %v3055 = vunpack.c.l.b16 %v3051
      %v3056 = vpack.c.b16 %v3055, %v3054
      %v3058 = vsel %vm699, %v3056, 0
      %v3061 = vsel %vm623, %v3047, 0
      %v3064 = vsel %vm623, %v3048, 0
      %3066 = vmatprep.subr.bf16.mxu0 %v3064
      %3067 = vmatpush1.bf16.msra.mxu0 %v3061
      %3068 = vmatprep.subr.bf16.mxu0 0
      %3069 = vmatpush1.bf16.msra.mxu0 0
      %3070 = vmatprep.subr.bf16.mxu0 0
      %3071 = vmatpush1.bf16.msra.mxu0 0
      %3072 = vmatprep.subr.bf16.mxu0 0
      %3073 = vmatpush1.bf16.msra.mxu0 0
      %3074 = vmatprep.subr.bf16.mxu0 0
      %3075 = vmatpush1.bf16.msra.mxu0 0
      %3076 = vmatprep.subr.bf16.mxu0 0
      %3077 = vmatpush1.bf16.msra.mxu0 0
      %3078 = vmatprep.subr.bf16.mxu0 0
      %3079 = vmatpush1.bf16.msra.mxu0 0
      %3080 = vmatprep.subr.bf16.mxu0 0
      %3081 = vmatpush1.bf16.msra.mxu0 0
      %3082 = vmatprep.subr.bf16.mxu0 0
      %3083 = vmatpush1.bf16.msra.mxu0 0
      %3084 = vmatprep.subr.bf16.mxu0 0
      %3085 = vmatpush1.bf16.msra.mxu0 0
      %3086 = vmatprep.subr.bf16.mxu0 0
      %3087 = vmatpush1.bf16.msra.mxu0 0
      %3088 = vmatprep.subr.bf16.mxu0 0
      %3089 = vmatpush1.bf16.msra.mxu0 0
      %3090 = vmatprep.subr.bf16.mxu0 0
      %3091 = vmatpush1.bf16.msra.mxu0 0
      %3092 = vmatprep.subr.bf16.mxu0 0
      %3093 = vmatpush1.bf16.msra.mxu0 0
      %3094 = vmatprep.subr.bf16.mxu0 0
      %3095 = vmatpush1.bf16.msra.mxu0 0
      %3096 = vmatprep.subr.bf16.mxu0 0
      %3097 = vmatpush1.bf16.msra.mxu0 0
      %3098 = vmatprep.mubr.bf16.mxu0 0
      %3099 = vmatmul.mubr.bf16.gmra.mrb[0].mxu0 %v3058
      %v3100 = vpop.f32.mrb[0].mxu0
      %v3101 = vadd.f32 0.0, %v3100
      %v3102 = vpop.f32.mrb[0].mxu0
      %v3103 = vadd.f32 0.0, %v3102
      %v3104 = vpop.f32.mrb[0].mxu0
      %v3105 = vadd.f32 0.0, %v3104
      %v3106 = vpop.f32.mrb[0].mxu0
      %v3107 = vadd.f32 0.0, %v3106
      %3108 = vdwg.mxu0
      %v3109 = vadd.f32 %v3034, %v3101
      %v3110 = vadd.f32 %v3035, %v3103
      %v3111 = vadd.f32 %v3036, %v3105
      %v3112 = vadd.f32 %v3037, %v3107
      %3113 = vrot.lane.b32.xlu0 %v2598, 16
      %v3114 = vpop.permute.xlu0 %3113
      %3115 = vrot.lane.b32.xlu0 %v2599, 16
      %v3116 = vpop.permute.xlu0 %3115
      %v3117 = vsel %vm1225, %v3114, %v3116
      %v3119 = vsel %vm1227, 0, %v3114
      %s3120 = scalar_lea.vmem %s3, 56
      %v3121 = vld [vmem:[%s3120] sm:$0xf]
      %v3122 = vld [vmem:[%s3120 + $0x4] sm:$0x7]
      %v3125 = vunpack.c.l.b16 %v3121
      %v3126 = vunpack.c.l.b16 %v3122
      %v3127 = vpack.c.b16 %v3126, %v3125
      %v3129 = vsel %vm699, %v3127, 0
      %v3131 = vsel %vm623, %v3119, 0
      %v3134 = vsel %vm623, %v3117, 0
      %3136 = vmatprep.subr.bf16.mxu0 %v3134
      %3137 = vmatpush1.bf16.msra.mxu0 %v3131
      %3138 = vmatprep.subr.bf16.mxu0 0
      %3139 = vmatpush1.bf16.msra.mxu0 0
      %3140 = vmatprep.subr.bf16.mxu0 0
      %3141 = vmatpush1.bf16.msra.mxu0 0
      %3142 = vmatprep.subr.bf16.mxu0 0
      %3143 = vmatpush1.bf16.msra.mxu0 0
      %3144 = vmatprep.subr.bf16.mxu0 0
      %3145 = vmatpush1.bf16.msra.mxu0 0
      %3146 = vmatprep.subr.bf16.mxu0 0
      %3147 = vmatpush1.bf16.msra.mxu0 0
      %3148 = vmatprep.subr.bf16.mxu0 0
      %3149 = vmatpush1.bf16.msra.mxu0 0
      %3150 = vmatprep.subr.bf16.mxu0 0
      %3151 = vmatpush1.bf16.msra.mxu0 0
      %3152 = vmatprep.subr.bf16.mxu0 0
      %3153 = vmatpush1.bf16.msra.mxu0 0
      %3154 = vmatprep.subr.bf16.mxu0 0
      %3155 = vmatpush1.bf16.msra.mxu0 0
      %3156 = vmatprep.subr.bf16.mxu0 0
      %3157 = vmatpush1.bf16.msra.mxu0 0
      %3158 = vmatprep.subr.bf16.mxu0 0
      %3159 = vmatpush1.bf16.msra.mxu0 0
      %3160 = vmatprep.subr.bf16.mxu0 0
      %3161 = vmatpush1.bf16.msra.mxu0 0
      %3162 = vmatprep.subr.bf16.mxu0 0
      %3163 = vmatpush1.bf16.msra.mxu0 0
      %3164 = vmatprep.subr.bf16.mxu0 0
      %3165 = vmatpush1.bf16.msra.mxu0 0
      %3166 = vmatprep.subr.bf16.mxu0 0
      %3167 = vmatpush1.bf16.msra.mxu0 0
      %3168 = vmatprep.mubr.bf16.mxu0 0
      %3169 = vmatmul.mubr.bf16.gmra.mrb[0].mxu0 %v3129
      %v3170 = vpop.f32.mrb[0].mxu0
      %v3171 = vadd.f32 0.0, %v3170
      %v3172 = vpop.f32.mrb[0].mxu0
      %v3173 = vadd.f32 0.0, %v3172
      %v3174 = vpop.f32.mrb[0].mxu0
      %v3175 = vadd.f32 0.0, %v3174
      %v3176 = vpop.f32.mrb[0].mxu0
      %v3177 = vadd.f32 0.0, %v3176
      %3178 = vdwg.mxu0
      %v3179 = vadd.f32 %v3109, %v3171
      %v3180 = vadd.f32 %v3110, %v3173
      %v3181 = vadd.f32 %v3111, %v3175
      %v3182 = vadd.f32 %v3112, %v3177
      %3183 = vrot.lane.b32.xlu0 %v2598, 15
      %v3184 = vpop.permute.xlu0 %3183
      %3185 = vrot.lane.b32.xlu0 %v2599, 15
      %v3186 = vpop.permute.xlu0 %3185
      %v3187 = vsel %vm1297, %v3184, %v3186
      %v3190 = vsel %vm1300, 0, %v3184
      %v3192 = vsel %vm906, %v3190, 0
      %v3193 = vsel %vm907, %v3187, 0
      %s3194 = scalar_lea.vmem %s3, 64
      %v3195 = vld [vmem:[%s3194] sm:$0xf]
      %v3196 = vld [vmem:[%s3194 + $0x4] sm:$0x7]
      %v3199 = vunpack.c.l.b16 %v3195
      %v3200 = vunpack.c.l.b16 %v3196
      %v3201 = vpack.c.b16 %v3200, %v3199
      %v3203 = vsel %vm699, %v3201, 0
      %v3206 = vsel %vm623, %v3192, 0
      %v3209 = vsel %vm623, %v3193, 0
      %3211 = vmatprep.subr.bf16.mxu0 %v3209
      %3212 = vmatpush1.bf16.msra.mxu0 %v3206
      %3213 = vmatprep.subr.bf16.mxu0 0
      %3214 = vmatpush1.bf16.msra.mxu0 0
      %3215 = vmatprep.subr.bf16.mxu0 0
      %3216 = vmatpush1.bf16.msra.mxu0 0
      %3217 = vmatprep.subr.bf16.mxu0 0
      %3218 = vmatpush1.bf16.msra.mxu0 0
      %3219 = vmatprep.subr.bf16.mxu0 0
      %3220 = vmatpush1.bf16.msra.mxu0 0
      %3221 = vmatprep.subr.bf16.mxu0 0
      %3222 = vmatpush1.bf16.msra.mxu0 0
      %3223 = vmatprep.subr.bf16.mxu0 0
      %3224 = vmatpush1.bf16.msra.mxu0 0
      %3225 = vmatprep.subr.bf16.mxu0 0
      %3226 = vmatpush1.bf16.msra.mxu0 0
      %3227 = vmatprep.subr.bf16.mxu0 0
      %3228 = vmatpush1.bf16.msra.mxu0 0
      %3229 = vmatprep.subr.bf16.mxu0 0
      %3230 = vmatpush1.bf16.msra.mxu0 0
      %3231 = vmatprep.subr.bf16.mxu0 0
      %3232 = vmatpush1.bf16.msra.mxu0 0
      %3233 = vmatprep.subr.bf16.mxu0 0
      %3234 = vmatpush1.bf16.msra.mxu0 0
      %3235 = vmatprep.subr.bf16.mxu0 0
      %3236 = vmatpush1.bf16.msra.mxu0 0
      %3237 = vmatprep.subr.bf16.mxu0 0
      %3238 = vmatpush1.bf16.msra.mxu0 0
      %3239 = vmatprep.subr.bf16.mxu0 0
      %3240 = vmatpush1.bf16.msra.mxu0 0
      %3241 = vmatprep.subr.bf16.mxu0 0
      %3242 = vmatpush1.bf16.msra.mxu0 0
      %3243 = vmatprep.mubr.bf16.mxu0 0
      %3244 = vmatmul.mubr.bf16.gmra.mrb[0].mxu0 %v3203
      %v3245 = vpop.f32.mrb[0].mxu0
      %v3246 = vadd.f32 0.0, %v3245
      %v3247 = vpop.f32.mrb[0].mxu0
      %v3248 = vadd.f32 0.0, %v3247
      %v3249 = vpop.f32.mrb[0].mxu0
      %v3250 = vadd.f32 0.0, %v3249
      %v3251 = vpop.f32.mrb[0].mxu0
      %v3252 = vadd.f32 0.0, %v3251
      %3253 = vdwg.mxu0
      %v3254 = vadd.f32 %v3179, %v3246
      %v3255 = vadd.f32 %v3180, %v3248
      %v3256 = vadd.f32 %v3181, %v3250
      %v3257 = vadd.f32 %v3182, %v3252
      %3258 = vrot.lane.b32.xlu0 %v2598, 14
      %v3259 = vpop.permute.xlu0 %3258
      %3260 = vrot.lane.b32.xlu0 %v2599, 14
      %v3261 = vpop.permute.xlu0 %3260
      %v3262 = vsel %vm1374, %v3259, %v3261
      %v3265 = vsel %vm699, 0, %v3259
      %v3267 = vsel %vm999, %v3265, 0
      %v3268 = vsel %vm1000, %v3262, 0
      %s3269 = scalar_lea.vmem %s3, 72
      %v3270 = vld [vmem:[%s3269] sm:$0xf]
      %v3271 = vld [vmem:[%s3269 + $0x4] sm:$0x7]
      %v3274 = vunpack.c.l.b16 %v3270
      %v3275 = vunpack.c.l.b16 %v3271
      %v3276 = vpack.c.b16 %v3275, %v3274
      %v3278 = vsel %vm699, %v3276, 0
      %v3281 = vsel %vm623, %v3267, 0
      %v3284 = vsel %vm623, %v3268, 0
      %3286 = vmatprep.subr.bf16.mxu0 %v3284
      %3287 = vmatpush1.bf16.msra.mxu0 %v3281
      %3288 = vmatprep.subr.bf16.mxu0 0
      %3289 = vmatpush1.bf16.msra.mxu0 0
      %3290 = vmatprep.subr.bf16.mxu0 0
      %3291 = vmatpush1.bf16.msra.mxu0 0
      %3292 = vmatprep.subr.bf16.mxu0 0
      %3293 = vmatpush1.bf16.msra.mxu0 0
      %3294 = vmatprep.subr.bf16.mxu0 0
      %3295 = vmatpush1.bf16.msra.mxu0 0
      %3296 = vmatprep.subr.bf16.mxu0 0
      %3297 = vmatpush1.bf16.msra.mxu0 0
      %3298 = vmatprep.subr.bf16.mxu0 0
      %3299 = vmatpush1.bf16.msra.mxu0 0
      %3300 = vmatprep.subr.bf16.mxu0 0
      %3301 = vmatpush1.bf16.msra.mxu0 0
      %3302 = vmatprep.subr.bf16.mxu0 0
      %3303 = vmatpush1.bf16.msra.mxu0 0
      %3304 = vmatprep.subr.bf16.mxu0 0
      %3305 = vmatpush1.bf16.msra.mxu0 0
      %3306 = vmatprep.subr.bf16.mxu0 0
      %3307 = vmatpush1.bf16.msra.mxu0 0
      %3308 = vmatprep.subr.bf16.mxu0 0
      %3309 = vmatpush1.bf16.msra.mxu0 0
      %3310 = vmatprep.subr.bf16.mxu0 0
      %3311 = vmatpush1.bf16.msra.mxu0 0
      %3312 = vmatprep.subr.bf16.mxu0 0
      %3313 = vmatpush1.bf16.msra.mxu0 0
      %3314 = vmatprep.subr.bf16.mxu0 0
      %3315 = vmatpush1.bf16.msra.mxu0 0
      %3316 = vmatprep.subr.bf16.mxu0 0
      %3317 = vmatpush1.bf16.msra.mxu0 0
      %3318 = vmatprep.mubr.bf16.mxu0 0
      %3319 = vmatmul.mubr.bf16.gmra.mrb[0].mxu0 %v3278
      %v3320 = vpop.f32.mrb[0].mxu0
      %v3321 = vadd.f32 0.0, %v3320
      %v3322 = vpop.f32.mrb[0].mxu0
      %v3323 = vadd.f32 0.0, %v3322
      %v3324 = vpop.f32.mrb[0].mxu0
      %v3325 = vadd.f32 0.0, %v3324
      %v3326 = vpop.f32.mrb[0].mxu0
      %v3327 = vadd.f32 0.0, %v3326
      %3328 = vdwg.mxu0
      %v3329 = vadd.f32 %v3254, %v3321
      %v3330 = vadd.f32 %v3255, %v3323
      %v3331 = vadd.f32 %v3256, %v3325
      %v3332 = vadd.f32 %v3257, %v3327
      %3333 = vrot.lane.b32.xlu0 %v2598, 2
      %v3334 = vpop.permute.xlu0 %3333
      %3335 = vrot.lane.b32.xlu0 %v2599, 2
      %v3336 = vpop.permute.xlu0 %3335
      %v3337 = vsel %vm1450, %v3334, %v3336
      %v3340 = vsel %vm1453, 0, %v3334
      %v3342 = vsel %vm656, %v3340, 0
      %v3343 = vsel %vm657, %v3337, 0
      %s3344 = scalar_lea.vmem %s3, 80
      %v3345 = vld [vmem:[%s3344] sm:$0xf]
      %v3346 = vld [vmem:[%s3344 + $0x4] sm:$0x7]
      %v3349 = vunpack.c.l.b16 %v3345
      %v3350 = vunpack.c.l.b16 %v3346
      %v3351 = vpack.c.b16 %v3350, %v3349
      %v3353 = vsel %vm699, %v3351, 0
      %v3356 = vsel %vm623, %v3342, 0
      %v3359 = vsel %vm623, %v3343, 0
      %3361 = vmatprep.subr.bf16.mxu0 %v3359
      %3362 = vmatpush1.bf16.msra.mxu0 %v3356
      %3363 = vmatprep.subr.bf16.mxu0 0
      %3364 = vmatpush1.bf16.msra.mxu0 0
      %3365 = vmatprep.subr.bf16.mxu0 0
      %3366 = vmatpush1.bf16.msra.mxu0 0
      %3367 = vmatprep.subr.bf16.mxu0 0
      %3368 = vmatpush1.bf16.msra.mxu0 0
      %3369 = vmatprep.subr.bf16.mxu0 0
      %3370 = vmatpush1.bf16.msra.mxu0 0
      %3371 = vmatprep.subr.bf16.mxu0 0
      %3372 = vmatpush1.bf16.msra.mxu0 0
      %3373 = vmatprep.subr.bf16.mxu0 0
      %3374 = vmatpush1.bf16.msra.mxu0 0
      %3375 = vmatprep.subr.bf16.mxu0 0
      %3376 = vmatpush1.bf16.msra.mxu0 0
      %3377 = vmatprep.subr.bf16.mxu0 0
      %3378 = vmatpush1.bf16.msra.mxu0 0
      %3379 = vmatprep.subr.bf16.mxu0 0
      %3380 = vmatpush1.bf16.msra.mxu0 0
      %3381 = vmatprep.subr.bf16.mxu0 0
      %3382 = vmatpush1.bf16.msra.mxu0 0
      %3383 = vmatprep.subr.bf16.mxu0 0
      %3384 = vmatpush1.bf16.msra.mxu0 0
      %3385 = vmatprep.subr.bf16.mxu0 0
      %3386 = vmatpush1.bf16.msra.mxu0 0
      %3387 = vmatprep.subr.bf16.mxu0 0
      %3388 = vmatpush1.bf16.msra.mxu0 0
      %3389 = vmatprep.subr.bf16.mxu0 0
      %3390 = vmatpush1.bf16.msra.mxu0 0
      %3391 = vmatprep.subr.bf16.mxu0 0
      %3392 = vmatpush1.bf16.msra.mxu0 0
      %3393 = vmatprep.mubr.bf16.mxu0 0
      %3394 = vmatmul.mubr.bf16.gmra.mrb[0].mxu0 %v3353
      %v3395 = vpop.f32.mrb[0].mxu0
      %v3396 = vadd.f32 0.0, %v3395
      %v3397 = vpop.f32.mrb[0].mxu0
      %v3398 = vadd.f32 0.0, %v3397
      %v3399 = vpop.f32.mrb[0].mxu0
      %v3400 = vadd.f32 0.0, %v3399
      %v3401 = vpop.f32.mrb[0].mxu0
      %v3402 = vadd.f32 0.0, %v3401
      %3403 = vdwg.mxu0
      %v3404 = vadd.f32 %v3329, %v3396
      %v3405 = vadd.f32 %v3330, %v3398
      %v3406 = vadd.f32 %v3331, %v3400
      %v3407 = vadd.f32 %v3332, %v3402
      %3408 = vrot.lane.b32.xlu0 %v2598, 1
      %v3409 = vpop.permute.xlu0 %3408
      %3410 = vrot.lane.b32.xlu0 %v2599, 1
      %v3411 = vpop.permute.xlu0 %3410
      %v3412 = vsel %vm1527, %v3409, %v3411
      %v3415 = vsel %vm1530, 0, %v3409
      %v3417 = vsel %vm687, %v3415, 0
      %v3418 = vsel %vm688, %v3412, 0
      %s3419 = scalar_lea.vmem %s3, 88
      %v3420 = vld [vmem:[%s3419] sm:$0xf]
      %v3421 = vld [vmem:[%s3419 + $0x4] sm:$0x7]
      %v3424 = vunpack.c.l.b16 %v3420
      %v3425 = vunpack.c.l.b16 %v3421
      %v3426 = vpack.c.b16 %v3425, %v3424
      %v3428 = vsel %vm699, %v3426, 0
      %v3431 = vsel %vm623, %v3417, 0
      %v3434 = vsel %vm623, %v3418, 0
      %3436 = vmatprep.subr.bf16.mxu0 %v3434
      %3437 = vmatpush1.bf16.msra.mxu0 %v3431
      %3438 = vmatprep.subr.bf16.mxu0 0
      %3439 = vmatpush1.bf16.msra.mxu0 0
      %3440 = vmatprep.subr.bf16.mxu0 0
      %3441 = vmatpush1.bf16.msra.mxu0 0
      %3442 = vmatprep.subr.bf16.mxu0 0
      %3443 = vmatpush1.bf16.msra.mxu0 0
      %3444 = vmatprep.subr.bf16.mxu0 0
      %3445 = vmatpush1.bf16.msra.mxu0 0
      %3446 = vmatprep.subr.bf16.mxu0 0
      %3447 = vmatpush1.bf16.msra.mxu0 0
      %3448 = vmatprep.subr.bf16.mxu0 0
      %3449 = vmatpush1.bf16.msra.mxu0 0
      %3450 = vmatprep.subr.bf16.mxu0 0
      %3451 = vmatpush1.bf16.msra.mxu0 0
      %3452 = vmatprep.subr.bf16.mxu0 0
      %3453 = vmatpush1.bf16.msra.mxu0 0
      %3454 = vmatprep.subr.bf16.mxu0 0
      %3455 = vmatpush1.bf16.msra.mxu0 0
      %3456 = vmatprep.subr.bf16.mxu0 0
      %3457 = vmatpush1.bf16.msra.mxu0 0
      %3458 = vmatprep.subr.bf16.mxu0 0
      %3459 = vmatpush1.bf16.msra.mxu0 0
      %3460 = vmatprep.subr.bf16.mxu0 0
      %3461 = vmatpush1.bf16.msra.mxu0 0
      %3462 = vmatprep.subr.bf16.mxu0 0
      %3463 = vmatpush1.bf16.msra.mxu0 0
      %3464 = vmatprep.subr.bf16.mxu0 0
      %3465 = vmatpush1.bf16.msra.mxu0 0
      %3466 = vmatprep.subr.bf16.mxu0 0
      %3467 = vmatpush1.bf16.msra.mxu0 0
      %3468 = vmatprep.mubr.bf16.mxu0 0
      %3469 = vmatmul.mubr.bf16.gmra.mrb[0].mxu0 %v3428
      %v3470 = vpop.f32.mrb[0].mxu0
      %v3471 = vadd.f32 0.0, %v3470
      %v3472 = vpop.f32.mrb[0].mxu0
      %v3473 = vadd.f32 0.0, %v3472
      %v3474 = vpop.f32.mrb[0].mxu0
      %v3475 = vadd.f32 0.0, %v3474
      %v3476 = vpop.f32.mrb[0].mxu0
      %v3477 = vadd.f32 0.0, %v3476
      %3478 = vdwg.mxu0
      %v3479 = vadd.f32 %v3404, %v3471
      %v3480 = vadd.f32 %v3405, %v3473
      %v3481 = vadd.f32 %v3406, %v3475
      %v3482 = vadd.f32 %v3407, %v3477
      %s3483 = scalar_lea.vmem %s3, 96
      %v3484 = vld [vmem:[%s3483] sm:$0xf]
      %v3485 = vld [vmem:[%s3483 + $0x4] sm:$0x7]
      %v3488 = vunpack.c.l.b16 %v3484
      %v3489 = vunpack.c.l.b16 %v3485
      %v3490 = vpack.c.b16 %v3489, %v3488
      %v3492 = vsel %vm699, %v3490, 0
      %v3495 = vsel %vm623, %v2598, 0
      %v3498 = vsel %vm623, %v2599, 0
      %3500 = vmatprep.subr.bf16.mxu0 %v3498
      %3501 = vmatpush1.bf16.msra.mxu0 %v3495
      %3502 = vmatprep.subr.bf16.mxu0 0
      %3503 = vmatpush1.bf16.msra.mxu0 0
      %3504 = vmatprep.subr.bf16.mxu0 0
      %3505 = vmatpush1.bf16.msra.mxu0 0
      %3506 = vmatprep.subr.bf16.mxu0 0
      %3507 = vmatpush1.bf16.msra.mxu0 0
      %3508 = vmatprep.subr.bf16.mxu0 0
      %3509 = vmatpush1.bf16.msra.mxu0 0
      %3510 = vmatprep.subr.bf16.mxu0 0
      %3511 = vmatpush1.bf16.msra.mxu0 0
      %3512 = vmatprep.subr.bf16.mxu0 0
      %3513 = vmatpush1.bf16.msra.mxu0 0
      %3514 = vmatprep.subr.bf16.mxu0 0
      %3515 = vmatpush1.bf16.msra.mxu0 0
      %3516 = vmatprep.subr.bf16.mxu0 0
      %3517 = vmatpush1.bf16.msra.mxu0 0
      %3518 = vmatprep.subr.bf16.mxu0 0
      %3519 = vmatpush1.bf16.msra.mxu0 0
      %3520 = vmatprep.subr.bf16.mxu0 0
      %3521 = vmatpush1.bf16.msra.mxu0 0
      %3522 = vmatprep.subr.bf16.mxu0 0
      %3523 = vmatpush1.bf16.msra.mxu0 0
      %3524 = vmatprep.subr.bf16.mxu0 0
      %3525 = vmatpush1.bf16.msra.mxu0 0
      %3526 = vmatprep.subr.bf16.mxu0 0
      %3527 = vmatpush1.bf16.msra.mxu0 0
      %3528 = vmatprep.subr.bf16.mxu0 0
      %3529 = vmatpush1.bf16.msra.mxu0 0
      %3530 = vmatprep.subr.bf16.mxu0 0
      %3531 = vmatpush1.bf16.msra.mxu0 0
      %3532 = vmatprep.mubr.bf16.mxu0 0
      %3533 = vmatmul.mubr.bf16.gmra.mrb[0].mxu0 %v3492
      %v3534 = vpop.f32.mrb[0].mxu0
      %v3535 = vadd.f32 0.0, %v3534
      %v3536 = vpop.f32.mrb[0].mxu0
      %v3537 = vadd.f32 0.0, %v3536
      %v3538 = vpop.f32.mrb[0].mxu0
      %v3539 = vadd.f32 0.0, %v3538
      %v3540 = vpop.f32.mrb[0].mxu0
      %v3541 = vadd.f32 0.0, %v3540
      %3542 = vdwg.mxu0
      %v3543 = vadd.f32 %v3479, %v3535
      %v3544 = vadd.f32 %v3480, %v3537
      %v3545 = vadd.f32 %v3481, %v3539
      %v3546 = vadd.f32 %v3482, %v3541
      %3547 = vrot.lane.b32.xlu0 %v2598, 127
      %v3548 = vpop.permute.xlu0 %3547
      %3549 = vrot.lane.b32.xlu0 %v2599, 127
      %v3550 = vpop.permute.xlu0 %3549
      %v3551 = vsel %vm1668, %v3548, %v3550
      %v3554 = vsel %vm1671, %v3550, 0
      %v3556 = vsel %vm906, %v3551, 0
      %v3557 = vsel %vm907, %v3554, 0
      %s3558 = scalar_lea.vmem %s3, 104
      %v3559 = vld [vmem:[%s3558] sm:$0xf]
      %v3560 = vld [vmem:[%s3558 + $0x4] sm:$0x7]
      %v3563 = vunpack.c.l.b16 %v3559
      %v3564 = vunpack.c.l.b16 %v3560
      %v3565 = vpack.c.b16 %v3564, %v3563
      %v3567 = vsel %vm699, %v3565, 0
      %v3570 = vsel %vm623, %v3556, 0
      %v3573 = vsel %vm623, %v3557, 0
      %3575 = vmatprep.subr.bf16.mxu0 %v3573
      %3576 = vmatpush1.bf16.msra.mxu0 %v3570
      %3577 = vmatprep.subr.bf16.mxu0 0
      %3578 = vmatpush1.bf16.msra.mxu0 0
      %3579 = vmatprep.subr.bf16.mxu0 0
      %3580 = vmatpush1.bf16.msra.mxu0 0
      %3581 = vmatprep.subr.bf16.mxu0 0
      %3582 = vmatpush1.bf16.msra.mxu0 0
      %3583 = vmatprep.subr.bf16.mxu0 0
      %3584 = vmatpush1.bf16.msra.mxu0 0
      %3585 = vmatprep.subr.bf16.mxu0 0
      %3586 = vmatpush1.bf16.msra.mxu0 0
      %3587 = vmatprep.subr.bf16.mxu0 0
      %3588 = vmatpush1.bf16.msra.mxu0 0
      %3589 = vmatprep.subr.bf16.mxu0 0
      %3590 = vmatpush1.bf16.msra.mxu0 0
      %3591 = vmatprep.subr.bf16.mxu0 0
      %3592 = vmatpush1.bf16.msra.mxu0 0
      %3593 = vmatprep.subr.bf16.mxu0 0
      %3594 = vmatpush1.bf16.msra.mxu0 0
      %3595 = vmatprep.subr.bf16.mxu0 0
      %3596 = vmatpush1.bf16.msra.mxu0 0
      %3597 = vmatprep.subr.bf16.mxu0 0
      %3598 = vmatpush1.bf16.msra.mxu0 0
      %3599 = vmatprep.subr.bf16.mxu0 0
      %3600 = vmatpush1.bf16.msra.mxu0 0
      %3601 = vmatprep.subr.bf16.mxu0 0
      %3602 = vmatpush1.bf16.msra.mxu0 0
      %3603 = vmatprep.subr.bf16.mxu0 0
      %3604 = vmatpush1.bf16.msra.mxu0 0
      %3605 = vmatprep.subr.bf16.mxu0 0
      %3606 = vmatpush1.bf16.msra.mxu0 0
      %3607 = vmatprep.mubr.bf16.mxu0 0
      %3608 = vmatmul.mubr.bf16.gmra.mrb[0].mxu0 %v3567
      %v3609 = vpop.f32.mrb[0].mxu0
      %v3610 = vadd.f32 0.0, %v3609
      %v3611 = vpop.f32.mrb[0].mxu0
      %v3612 = vadd.f32 0.0, %v3611
      %v3613 = vpop.f32.mrb[0].mxu0
      %v3614 = vadd.f32 0.0, %v3613
      %v3615 = vpop.f32.mrb[0].mxu0
      %v3616 = vadd.f32 0.0, %v3615
      %3617 = vdwg.mxu0
      %v3618 = vadd.f32 %v3543, %v3610
      %v3619 = vadd.f32 %v3544, %v3612
      %v3620 = vadd.f32 %v3545, %v3614
      %v3621 = vadd.f32 %v3546, %v3616
      %3622 = vrot.lane.b32.xlu0 %v2598, 126
      %v3623 = vpop.permute.xlu0 %3622
      %3624 = vrot.lane.b32.xlu0 %v2599, 126
      %v3625 = vpop.permute.xlu0 %3624
      %v3626 = vsel %vm1745, %v3623, %v3625
      %v3629 = vsel %vm1748, %v3625, 0
      %v3631 = vsel %vm999, %v3626, 0
      %v3632 = vsel %vm1000, %v3629, 0
      %s3633 = scalar_lea.vmem %s3, 112
      %v3634 = vld [vmem:[%s3633] sm:$0xf]
      %v3635 = vld [vmem:[%s3633 + $0x4] sm:$0x7]
      %v3638 = vunpack.c.l.b16 %v3634
      %v3639 = vunpack.c.l.b16 %v3635
      %v3640 = vpack.c.b16 %v3639, %v3638
      %v3642 = vsel %vm699, %v3640, 0
      %v3645 = vsel %vm623, %v3631, 0
      %v3648 = vsel %vm623, %v3632, 0
      %3650 = vmatprep.subr.bf16.mxu0 %v3648
      %3651 = vmatpush1.bf16.msra.mxu0 %v3645
      %3652 = vmatprep.subr.bf16.mxu0 0
      %3653 = vmatpush1.bf16.msra.mxu0 0
      %3654 = vmatprep.subr.bf16.mxu0 0
      %3655 = vmatpush1.bf16.msra.mxu0 0
      %3656 = vmatprep.subr.bf16.mxu0 0
      %3657 = vmatpush1.bf16.msra.mxu0 0
      %3658 = vmatprep.subr.bf16.mxu0 0
      %3659 = vmatpush1.bf16.msra.mxu0 0
      %3660 = vmatprep.subr.bf16.mxu0 0
      %3661 = vmatpush1.bf16.msra.mxu0 0
      %3662 = vmatprep.subr.bf16.mxu0 0
      %3663 = vmatpush1.bf16.msra.mxu0 0
      %3664 = vmatprep.subr.bf16.mxu0 0
      %3665 = vmatpush1.bf16.msra.mxu0 0
      %3666 = vmatprep.subr.bf16.mxu0 0
      %3667 = vmatpush1.bf16.msra.mxu0 0
      %3668 = vmatprep.subr.bf16.mxu0 0
      %3669 = vmatpush1.bf16.msra.mxu0 0
      %3670 = vmatprep.subr.bf16.mxu0 0
      %3671 = vmatpush1.bf16.msra.mxu0 0
      %3672 = vmatprep.subr.bf16.mxu0 0
      %3673 = vmatpush1.bf16.msra.mxu0 0
      %3674 = vmatprep.subr.bf16.mxu0 0
      %3675 = vmatpush1.bf16.msra.mxu0 0
      %3676 = vmatprep.subr.bf16.mxu0 0
      %3677 = vmatpush1.bf16.msra.mxu0 0
      %3678 = vmatprep.subr.bf16.mxu0 0
      %3679 = vmatpush1.bf16.msra.mxu0 0
      %3680 = vmatprep.subr.bf16.mxu0 0
      %3681 = vmatpush1.bf16.msra.mxu0 0
      %3682 = vmatprep.mubr.bf16.mxu0 0
      %3683 = vmatmul.mubr.bf16.gmra.mrb[0].mxu0 %v3642
      %v3684 = vpop.f32.mrb[0].mxu0
      %v3685 = vadd.f32 0.0, %v3684
      %v3686 = vpop.f32.mrb[0].mxu0
      %v3687 = vadd.f32 0.0, %v3686
      %v3688 = vpop.f32.mrb[0].mxu0
      %v3689 = vadd.f32 0.0, %v3688
      %v3690 = vpop.f32.mrb[0].mxu0
      %v3691 = vadd.f32 0.0, %v3690
      %3692 = vdwg.mxu0
      %v3693 = vadd.f32 %v3618, %v3685
      %v3694 = vadd.f32 %v3619, %v3687
      %v3695 = vadd.f32 %v3620, %v3689
      %v3696 = vadd.f32 %v3621, %v3691
      %3697 = vrot.lane.b32.xlu0 %v2598, 114
      %v3698 = vpop.permute.xlu0 %3697
      %3699 = vrot.lane.b32.xlu0 %v2599, 114
      %v3700 = vpop.permute.xlu0 %3699
      %v3701 = vsel %vm1822, %v3698, %v3700
      %v3704 = vsel %vm1825, %v3700, 0
      %v3706 = vsel %vm656, %v3701, 0
      %v3707 = vsel %vm657, %v3704, 0
      %s3708 = scalar_lea.vmem %s3, 120
      %v3709 = vld [vmem:[%s3708] sm:$0xf]
      %v3710 = vld [vmem:[%s3708 + $0x4] sm:$0x7]
      %v3713 = vunpack.c.l.b16 %v3709
      %v3714 = vunpack.c.l.b16 %v3710
      %v3715 = vpack.c.b16 %v3714, %v3713
      %v3717 = vsel %vm699, %v3715, 0
      %v3720 = vsel %vm623, %v3706, 0
      %v3723 = vsel %vm623, %v3707, 0
      %3725 = vmatprep.subr.bf16.mxu0 %v3723
      %3726 = vmatpush1.bf16.msra.mxu0 %v3720
      %3727 = vmatprep.subr.bf16.mxu0 0
      %3728 = vmatpush1.bf16.msra.mxu0 0
      %3729 = vmatprep.subr.bf16.mxu0 0
      %3730 = vmatpush1.bf16.msra.mxu0 0
      %3731 = vmatprep.subr.bf16.mxu0 0
      %3732 = vmatpush1.bf16.msra.mxu0 0
      %3733 = vmatprep.subr.bf16.mxu0 0
      %3734 = vmatpush1.bf16.msra.mxu0 0
      %3735 = vmatprep.subr.bf16.mxu0 0
      %3736 = vmatpush1.bf16.msra.mxu0 0
      %3737 = vmatprep.subr.bf16.mxu0 0
      %3738 = vmatpush1.bf16.msra.mxu0 0
      %3739 = vmatprep.subr.bf16.mxu0 0
      %3740 = vmatpush1.bf16.msra.mxu0 0
      %3741 = vmatprep.subr.bf16.mxu0 0
      %3742 = vmatpush1.bf16.msra.mxu0 0
      %3743 = vmatprep.subr.bf16.mxu0 0
      %3744 = vmatpush1.bf16.msra.mxu0 0
      %3745 = vmatprep.subr.bf16.mxu0 0
      %3746 = vmatpush1.bf16.msra.mxu0 0
      %3747 = vmatprep.subr.bf16.mxu0 0
      %3748 = vmatpush1.bf16.msra.mxu0 0
      %3749 = vmatprep.subr.bf16.mxu0 0
      %3750 = vmatpush1.bf16.msra.mxu0 0
      %3751 = vmatprep.subr.bf16.mxu0 0
      %3752 = vmatpush1.bf16.msra.mxu0 0
      %3753 = vmatprep.subr.bf16.mxu0 0
      %3754 = vmatpush1.bf16.msra.mxu0 0
      %3755 = vmatprep.subr.bf16.mxu0 0
      %3756 = vmatpush1.bf16.msra.mxu0 0
      %3757 = vmatprep.mubr.bf16.mxu0 0
      %3758 = vmatmul.mubr.bf16.gmra.mrb[0].mxu0 %v3717
      %v3759 = vpop.f32.mrb[0].mxu0
      %v3760 = vadd.f32 0.0, %v3759
      %v3761 = vpop.f32.mrb[0].mxu0
      %v3762 = vadd.f32 0.0, %v3761
      %v3763 = vpop.f32.mrb[0].mxu0
      %v3764 = vadd.f32 0.0, %v3763
      %v3765 = vpop.f32.mrb[0].mxu0
      %v3766 = vadd.f32 0.0, %v3765
      %3767 = vdwg.mxu0
      %v3768 = vadd.f32 %v3693, %v3760
      %v3769 = vadd.f32 %v3694, %v3762
      %v3770 = vadd.f32 %v3695, %v3764
      %v3771 = vadd.f32 %v3696, %v3766
      %3772 = vrot.lane.b32.xlu0 %v2598, 113
      %v3773 = vpop.permute.xlu0 %3772
      %3774 = vrot.lane.b32.xlu0 %v2599, 113
      %v3775 = vpop.permute.xlu0 %3774
      %v3776 = vsel %vm1899, %v3773, %v3775
      %v3779 = vsel %vm1902, %v3775, 0
      %v3781 = vsel %vm687, %v3776, 0
      %v3782 = vsel %vm688, %v3779, 0
      %s3783 = scalar_lea.vmem %s3, 128
      %v3784 = vld [vmem:[%s3783] sm:$0xf]
      %v3785 = vld [vmem:[%s3783 + $0x4] sm:$0x7]
      %v3788 = vunpack.c.l.b16 %v3784
      %v3789 = vunpack.c.l.b16 %v3785
      %v3790 = vpack.c.b16 %v3789, %v3788
      %v3792 = vsel %vm699, %v3790, 0
      %v3795 = vsel %vm623, %v3781, 0
      %v3798 = vsel %vm623, %v3782, 0
      %3800 = vmatprep.subr.bf16.mxu0 %v3798
      %3801 = vmatpush1.bf16.msra.mxu0 %v3795
      %3802 = vmatprep.subr.bf16.mxu0 0
      %3803 = vmatpush1.bf16.msra.mxu0 0
      %3804 = vmatprep.subr.bf16.mxu0 0
      %3805 = vmatpush1.bf16.msra.mxu0 0
      %3806 = vmatprep.subr.bf16.mxu0 0
      %3807 = vmatpush1.bf16.msra.mxu0 0
      %3808 = vmatprep.subr.bf16.mxu0 0
      %3809 = vmatpush1.bf16.msra.mxu0 0
      %3810 = vmatprep.subr.bf16.mxu0 0
      %3811 = vmatpush1.bf16.msra.mxu0 0
      %3812 = vmatprep.subr.bf16.mxu0 0
      %3813 = vmatpush1.bf16.msra.mxu0 0
      %3814 = vmatprep.subr.bf16.mxu0 0
      %3815 = vmatpush1.bf16.msra.mxu0 0
      %3816 = vmatprep.subr.bf16.mxu0 0
      %3817 = vmatpush1.bf16.msra.mxu0 0
      %3818 = vmatprep.subr.bf16.mxu0 0
      %3819 = vmatpush1.bf16.msra.mxu0 0
      %3820 = vmatprep.subr.bf16.mxu0 0
      %3821 = vmatpush1.bf16.msra.mxu0 0
      %3822 = vmatprep.subr.bf16.mxu0 0
      %3823 = vmatpush1.bf16.msra.mxu0 0
      %3824 = vmatprep.subr.bf16.mxu0 0
      %3825 = vmatpush1.bf16.msra.mxu0 0
      %3826 = vmatprep.subr.bf16.mxu0 0
      %3827 = vmatpush1.bf16.msra.mxu0 0
      %3828 = vmatprep.subr.bf16.mxu0 0
      %3829 = vmatpush1.bf16.msra.mxu0 0
      %3830 = vmatprep.subr.bf16.mxu0 0
      %3831 = vmatpush1.bf16.msra.mxu0 0
      %3832 = vmatprep.mubr.bf16.mxu0 0
      %3833 = vmatmul.mubr.bf16.gmra.mrb[0].mxu0 %v3792
      %v3834 = vpop.f32.mrb[0].mxu0
      %v3835 = vadd.f32 0.0, %v3834
      %v3836 = vpop.f32.mrb[0].mxu0
      %v3837 = vadd.f32 0.0, %v3836
      %v3838 = vpop.f32.mrb[0].mxu0
      %v3839 = vadd.f32 0.0, %v3838
      %v3840 = vpop.f32.mrb[0].mxu0
      %v3841 = vadd.f32 0.0, %v3840
      %3842 = vdwg.mxu0
      %v3843 = vadd.f32 %v3768, %v3835
      %v3844 = vadd.f32 %v3769, %v3837
      %v3845 = vadd.f32 %v3770, %v3839
      %v3846 = vadd.f32 %v3771, %v3841
      %3847 = vrot.lane.b32.xlu0 %v2598, 112
      %v3848 = vpop.permute.xlu0 %3847
      %3849 = vrot.lane.b32.xlu0 %v2599, 112
      %v3850 = vpop.permute.xlu0 %3849
      %v3851 = vsel %vm1976, %v3848, %v3850
      %v3853 = vsel %vm1978, %v3850, 0
      %s3854 = scalar_lea.vmem %s3, 136
      %v3855 = vld [vmem:[%s3854] sm:$0xf]
      %v3856 = vld [vmem:[%s3854 + $0x4] sm:$0x7]
      %v3859 = vunpack.c.l.b16 %v3855
      %v3860 = vunpack.c.l.b16 %v3856
      %v3861 = vpack.c.b16 %v3860, %v3859
      %v3863 = vsel %vm699, %v3861, 0
      %v3866 = vsel %vm623, %v3851, 0
      %v3868 = vsel %vm623, %v3853, 0
      %3870 = vmatprep.subr.bf16.mxu0 %v3868
      %3871 = vmatpush1.bf16.msra.mxu0 %v3866
      %3872 = vmatprep.subr.bf16.mxu0 0
      %3873 = vmatpush1.bf16.msra.mxu0 0
      %3874 = vmatprep.subr.bf16.mxu0 0
      %3875 = vmatpush1.bf16.msra.mxu0 0
      %3876 = vmatprep.subr.bf16.mxu0 0
      %3877 = vmatpush1.bf16.msra.mxu0 0
      %3878 = vmatprep.subr.bf16.mxu0 0
      %3879 = vmatpush1.bf16.msra.mxu0 0
      %3880 = vmatprep.subr.bf16.mxu0 0
      %3881 = vmatpush1.bf16.msra.mxu0 0
      %3882 = vmatprep.subr.bf16.mxu0 0
      %3883 = vmatpush1.bf16.msra.mxu0 0
      %3884 = vmatprep.subr.bf16.mxu0 0
      %3885 = vmatpush1.bf16.msra.mxu0 0
      %3886 = vmatprep.subr.bf16.mxu0 0
      %3887 = vmatpush1.bf16.msra.mxu0 0
      %3888 = vmatprep.subr.bf16.mxu0 0
      %3889 = vmatpush1.bf16.msra.mxu0 0
      %3890 = vmatprep.subr.bf16.mxu0 0
      %3891 = vmatpush1.bf16.msra.mxu0 0
      %3892 = vmatprep.subr.bf16.mxu0 0
      %3893 = vmatpush1.bf16.msra.mxu0 0
      %3894 = vmatprep.subr.bf16.mxu0 0
      %3895 = vmatpush1.bf16.msra.mxu0 0
      %3896 = vmatprep.subr.bf16.mxu0 0
      %3897 = vmatpush1.bf16.msra.mxu0 0
      %3898 = vmatprep.subr.bf16.mxu0 0
      %3899 = vmatpush1.bf16.msra.mxu0 0
      %3900 = vmatprep.subr.bf16.mxu0 0
      %3901 = vmatpush1.bf16.msra.mxu0 0
      %3902 = vmatprep.mubr.bf16.mxu0 0
      %3903 = vmatmul.mubr.bf16.gmra.mrb[0].mxu0 %v3863
      %v3904 = vpop.f32.mrb[0].mxu0
      %v3905 = vadd.f32 0.0, %v3904
      %v3906 = vpop.f32.mrb[0].mxu0
      %v3907 = vadd.f32 0.0, %v3906
      %v3908 = vpop.f32.mrb[0].mxu0
      %v3909 = vadd.f32 0.0, %v3908
      %v3910 = vpop.f32.mrb[0].mxu0
      %v3911 = vadd.f32 0.0, %v3910
      %3912 = vdwg.mxu0
      %v3913 = vadd.f32 %v3843, %v3905
      %v3914 = vadd.f32 %v3844, %v3907
      %v3915 = vadd.f32 %v3845, %v3909
      %v3916 = vadd.f32 %v3846, %v3911
      %3917 = vrot.lane.b32.xlu0 %v2598, 111
      %v3918 = vpop.permute.xlu0 %3917
      %3919 = vrot.lane.b32.xlu0 %v2599, 111
      %v3920 = vpop.permute.xlu0 %3919
      %v3921 = vsel %vm2048, %v3918, %v3920
      %v3924 = vsel %vm2051, %v3920, 0
      %v3926 = vsel %vm906, %v3921, 0
      %v3927 = vsel %vm907, %v3924, 0
      %s3928 = scalar_lea.vmem %s3, 144
      %v3929 = vld [vmem:[%s3928] sm:$0xf]
      %v3930 = vld [vmem:[%s3928 + $0x4] sm:$0x7]
      %v3933 = vunpack.c.l.b16 %v3929
      %v3934 = vunpack.c.l.b16 %v3930
      %v3935 = vpack.c.b16 %v3934, %v3933
      %v3937 = vsel %vm699, %v3935, 0
      %v3940 = vsel %vm623, %v3926, 0
      %v3943 = vsel %vm623, %v3927, 0
      %3945 = vmatprep.subr.bf16.mxu0 %v3943
      %3946 = vmatpush1.bf16.msra.mxu0 %v3940
      %3947 = vmatprep.subr.bf16.mxu0 0
      %3948 = vmatpush1.bf16.msra.mxu0 0
      %3949 = vmatprep.subr.bf16.mxu0 0
      %3950 = vmatpush1.bf16.msra.mxu0 0
      %3951 = vmatprep.subr.bf16.mxu0 0
      %3952 = vmatpush1.bf16.msra.mxu0 0
      %3953 = vmatprep.subr.bf16.mxu0 0
      %3954 = vmatpush1.bf16.msra.mxu0 0
      %3955 = vmatprep.subr.bf16.mxu0 0
      %3956 = vmatpush1.bf16.msra.mxu0 0
      %3957 = vmatprep.subr.bf16.mxu0 0
      %3958 = vmatpush1.bf16.msra.mxu0 0
      %3959 = vmatprep.subr.bf16.mxu0 0
      %3960 = vmatpush1.bf16.msra.mxu0 0
      %3961 = vmatprep.subr.bf16.mxu0 0
      %3962 = vmatpush1.bf16.msra.mxu0 0
      %3963 = vmatprep.subr.bf16.mxu0 0
      %3964 = vmatpush1.bf16.msra.mxu0 0
      %3965 = vmatprep.subr.bf16.mxu0 0
      %3966 = vmatpush1.bf16.msra.mxu0 0
      %3967 = vmatprep.subr.bf16.mxu0 0
      %3968 = vmatpush1.bf16.msra.mxu0 0
      %3969 = vmatprep.subr.bf16.mxu0 0
      %3970 = vmatpush1.bf16.msra.mxu0 0
      %3971 = vmatprep.subr.bf16.mxu0 0
      %3972 = vmatpush1.bf16.msra.mxu0 0
      %3973 = vmatprep.subr.bf16.mxu0 0
      %3974 = vmatpush1.bf16.msra.mxu0 0
      %3975 = vmatprep.subr.bf16.mxu0 0
      %3976 = vmatpush1.bf16.msra.mxu0 0
      %3977 = vmatprep.mubr.bf16.mxu0 0
      %3978 = vmatmul.mubr.bf16.gmra.mrb[0].mxu0 %v3937
      %v3979 = vpop.f32.mrb[0].mxu0
      %v3980 = vadd.f32 0.0, %v3979
      %v3981 = vpop.f32.mrb[0].mxu0
      %v3982 = vadd.f32 0.0, %v3981
      %v3983 = vpop.f32.mrb[0].mxu0
      %v3984 = vadd.f32 0.0, %v3983
      %v3985 = vpop.f32.mrb[0].mxu0
      %v3986 = vadd.f32 0.0, %v3985
      %3987 = vdwg.mxu0
      %v3988 = vadd.f32 %v3913, %v3980
      %v3989 = vadd.f32 %v3914, %v3982
      %v3990 = vadd.f32 %v3915, %v3984
      %v3991 = vadd.f32 %v3916, %v3986
      %3992 = vrot.lane.b32.xlu0 %v2598, 110
      %v3993 = vpop.permute.xlu0 %3992
      %3994 = vrot.lane.b32.xlu0 %v2599, 110
      %v3995 = vpop.permute.xlu0 %3994
      %v3996 = vsel %vm2125, %v3993, %v3995
      %v3999 = vsel %vm2128, %v3995, 0
      %v4001 = vsel %vm999, %v3996, 0
      %v4002 = vsel %vm1000, %v3999, 0
      %s4003 = scalar_lea.vmem %s3, 152
      %v4004 = vld [vmem:[%s4003] sm:$0xf]
      %v4005 = vld [vmem:[%s4003 + $0x4] sm:$0x7]
      %v4008 = vunpack.c.l.b16 %v4004
      %v4009 = vunpack.c.l.b16 %v4005
      %v4010 = vpack.c.b16 %v4009, %v4008
      %v4012 = vsel %vm699, %v4010, 0
      %v4015 = vsel %vm623, %v4001, 0
      %v4018 = vsel %vm623, %v4002, 0
      %4020 = vmatprep.subr.bf16.mxu0 %v4018
      %4021 = vmatpush1.bf16.msra.mxu0 %v4015
      %4022 = vmatprep.subr.bf16.mxu0 0
      %4023 = vmatpush1.bf16.msra.mxu0 0
      %4024 = vmatprep.subr.bf16.mxu0 0
      %4025 = vmatpush1.bf16.msra.mxu0 0
      %4026 = vmatprep.subr.bf16.mxu0 0
      %4027 = vmatpush1.bf16.msra.mxu0 0
      %4028 = vmatprep.subr.bf16.mxu0 0
      %4029 = vmatpush1.bf16.msra.mxu0 0
      %4030 = vmatprep.subr.bf16.mxu0 0
      %4031 = vmatpush1.bf16.msra.mxu0 0
      %4032 = vmatprep.subr.bf16.mxu0 0
      %4033 = vmatpush1.bf16.msra.mxu0 0
      %4034 = vmatprep.subr.bf16.mxu0 0
      %4035 = vmatpush1.bf16.msra.mxu0 0
      %4036 = vmatprep.subr.bf16.mxu0 0
      %4037 = vmatpush1.bf16.msra.mxu0 0
      %4038 = vmatprep.subr.bf16.mxu0 0
      %4039 = vmatpush1.bf16.msra.mxu0 0
      %4040 = vmatprep.subr.bf16.mxu0 0
      %4041 = vmatpush1.bf16.msra.mxu0 0
      %4042 = vmatprep.subr.bf16.mxu0 0
      %4043 = vmatpush1.bf16.msra.mxu0 0
      %4044 = vmatprep.subr.bf16.mxu0 0
      %4045 = vmatpush1.bf16.msra.mxu0 0
      %4046 = vmatprep.subr.bf16.mxu0 0
      %4047 = vmatpush1.bf16.msra.mxu0 0
      %4048 = vmatprep.subr.bf16.mxu0 0
      %4049 = vmatpush1.bf16.msra.mxu0 0
      %4050 = vmatprep.subr.bf16.mxu0 0
      %4051 = vmatpush1.bf16.msra.mxu0 0
      %4052 = vmatprep.mubr.bf16.mxu0 0
      %4053 = vmatmul.mubr.bf16.gmra.mrb[0].mxu0 %v4012
      %v4054 = vpop.f32.mrb[0].mxu0
      %v4055 = vadd.f32 0.0, %v4054
      %v4056 = vpop.f32.mrb[0].mxu0
      %v4057 = vadd.f32 0.0, %v4056
      %v4058 = vpop.f32.mrb[0].mxu0
      %v4059 = vadd.f32 0.0, %v4058
      %v4060 = vpop.f32.mrb[0].mxu0
      %v4061 = vadd.f32 0.0, %v4060
      %4062 = vdwg.mxu0
      %v4063 = vadd.f32 %v3988, %v4055
      %v4064 = vadd.f32 %v3989, %v4057
      %v4065 = vadd.f32 %v3990, %v4059
      %v4066 = vadd.f32 %v3991, %v4061
      %4067 = vrot.lane.b32.xlu0 %v2598, 98
      %v4068 = vpop.permute.xlu0 %4067
      %4069 = vrot.lane.b32.xlu0 %v2599, 98
      %v4070 = vpop.permute.xlu0 %4069
      %v4071 = vsel %vm2202, %v4068, %v4070
      %v4074 = vsel %vm2205, %v4070, 0
      %v4076 = vsel %vm656, %v4071, 0
      %v4077 = vsel %vm657, %v4074, 0
      %s4078 = scalar_lea.vmem %s3, 160
      %v4079 = vld [vmem:[%s4078] sm:$0xf]
      %v4080 = vld [vmem:[%s4078 + $0x4] sm:$0x7]
      %v4083 = vunpack.c.l.b16 %v4079
      %v4084 = vunpack.c.l.b16 %v4080
      %v4085 = vpack.c.b16 %v4084, %v4083
      %v4087 = vsel %vm699, %v4085, 0
      %v4090 = vsel %vm623, %v4076, 0
      %v4093 = vsel %vm623, %v4077, 0
      %4095 = vmatprep.subr.bf16.mxu0 %v4093
      %4096 = vmatpush1.bf16.msra.mxu0 %v4090
      %4097 = vmatprep.subr.bf16.mxu0 0
      %4098 = vmatpush1.bf16.msra.mxu0 0
      %4099 = vmatprep.subr.bf16.mxu0 0
      %4100 = vmatpush1.bf16.msra.mxu0 0
      %4101 = vmatprep.subr.bf16.mxu0 0
      %4102 = vmatpush1.bf16.msra.mxu0 0
      %4103 = vmatprep.subr.bf16.mxu0 0
      %4104 = vmatpush1.bf16.msra.mxu0 0
      %4105 = vmatprep.subr.bf16.mxu0 0
      %4106 = vmatpush1.bf16.msra.mxu0 0
      %4107 = vmatprep.subr.bf16.mxu0 0
      %4108 = vmatpush1.bf16.msra.mxu0 0
      %4109 = vmatprep.subr.bf16.mxu0 0
      %4110 = vmatpush1.bf16.msra.mxu0 0
      %4111 = vmatprep.subr.bf16.mxu0 0
      %4112 = vmatpush1.bf16.msra.mxu0 0
      %4113 = vmatprep.subr.bf16.mxu0 0
      %4114 = vmatpush1.bf16.msra.mxu0 0
      %4115 = vmatprep.subr.bf16.mxu0 0
      %4116 = vmatpush1.bf16.msra.mxu0 0
      %4117 = vmatprep.subr.bf16.mxu0 0
      %4118 = vmatpush1.bf16.msra.mxu0 0
      %4119 = vmatprep.subr.bf16.mxu0 0
      %4120 = vmatpush1.bf16.msra.mxu0 0
      %4121 = vmatprep.subr.bf16.mxu0 0
      %4122 = vmatpush1.bf16.msra.mxu0 0
      %4123 = vmatprep.subr.bf16.mxu0 0
      %4124 = vmatpush1.bf16.msra.mxu0 0
      %4125 = vmatprep.subr.bf16.mxu0 0
      %4126 = vmatpush1.bf16.msra.mxu0 0
      %4127 = vmatprep.mubr.bf16.mxu0 0
      %4128 = vmatmul.mubr.bf16.gmra.mrb[0].mxu0 %v4087
      %v4129 = vpop.f32.mrb[0].mxu0
      %v4130 = vadd.f32 0.0, %v4129
      %v4131 = vpop.f32.mrb[0].mxu0
      %v4132 = vadd.f32 0.0, %v4131
      %v4133 = vpop.f32.mrb[0].mxu0
      %v4134 = vadd.f32 0.0, %v4133
      %v4135 = vpop.f32.mrb[0].mxu0
      %v4136 = vadd.f32 0.0, %v4135
      %4137 = vdwg.mxu0
      %v4138 = vadd.f32 %v4063, %v4130
      %v4139 = vadd.f32 %v4064, %v4132
      %v4140 = vadd.f32 %v4065, %v4134
      %v4141 = vadd.f32 %v4066, %v4136
      %4142 = vrot.lane.b32.xlu0 %v2598, 97
      %v4143 = vpop.permute.xlu0 %4142
      %4144 = vrot.lane.b32.xlu0 %v2599, 97
      %v4145 = vpop.permute.xlu0 %4144
      %v4146 = vsel %vm2279, %v4143, %v4145
      %v4149 = vsel %vm2282, %v4145, 0
      %v4151 = vsel %vm687, %v4146, 0
      %v4152 = vsel %vm688, %v4149, 0
      %s4153 = scalar_lea.vmem %s3, 168
      %v4154 = vld [vmem:[%s4153] sm:$0xf]
      %v4155 = vld [vmem:[%s4153 + $0x4] sm:$0x7]
      %v4158 = vunpack.c.l.b16 %v4154
      %v4159 = vunpack.c.l.b16 %v4155
      %v4160 = vpack.c.b16 %v4159, %v4158
      %v4162 = vsel %vm699, %v4160, 0
      %v4165 = vsel %vm623, %v4151, 0
      %v4168 = vsel %vm623, %v4152, 0
      %4170 = vmatprep.subr.bf16.mxu0 %v4168
      %4171 = vmatpush1.bf16.msra.mxu0 %v4165
      %4172 = vmatprep.subr.bf16.mxu0 0
      %4173 = vmatpush1.bf16.msra.mxu0 0
      %4174 = vmatprep.subr.bf16.mxu0 0
      %4175 = vmatpush1.bf16.msra.mxu0 0
      %4176 = vmatprep.subr.bf16.mxu0 0
      %4177 = vmatpush1.bf16.msra.mxu0 0
      %4178 = vmatprep.subr.bf16.mxu0 0
      %4179 = vmatpush1.bf16.msra.mxu0 0
      %4180 = vmatprep.subr.bf16.mxu0 0
      %4181 = vmatpush1.bf16.msra.mxu0 0
      %4182 = vmatprep.subr.bf16.mxu0 0
      %4183 = vmatpush1.bf16.msra.mxu0 0
      %4184 = vmatprep.subr.bf16.mxu0 0
      %4185 = vmatpush1.bf16.msra.mxu0 0
      %4186 = vmatprep.subr.bf16.mxu0 0
      %4187 = vmatpush1.bf16.msra.mxu0 0
      %4188 = vmatprep.subr.bf16.mxu0 0
      %4189 = vmatpush1.bf16.msra.mxu0 0
      %4190 = vmatprep.subr.bf16.mxu0 0
      %4191 = vmatpush1.bf16.msra.mxu0 0
      %4192 = vmatprep.subr.bf16.mxu0 0
      %4193 = vmatpush1.bf16.msra.mxu0 0
      %4194 = vmatprep.subr.bf16.mxu0 0
      %4195 = vmatpush1.bf16.msra.mxu0 0
      %4196 = vmatprep.subr.bf16.mxu0 0
      %4197 = vmatpush1.bf16.msra.mxu0 0
      %4198 = vmatprep.subr.bf16.mxu0 0
      %4199 = vmatpush1.bf16.msra.mxu0 0
      %4200 = vmatprep.subr.bf16.mxu0 0
      %4201 = vmatpush1.bf16.msra.mxu0 0
      %4202 = vmatprep.mubr.bf16.mxu0 0
      %4203 = vmatmul.mubr.bf16.gmra.mrb[0].mxu0 %v4162
      %v4204 = vpop.f32.mrb[0].mxu0
      %v4205 = vadd.f32 0.0, %v4204
      %v4206 = vpop.f32.mrb[0].mxu0
      %v4207 = vadd.f32 0.0, %v4206
      %v4208 = vpop.f32.mrb[0].mxu0
      %v4209 = vadd.f32 0.0, %v4208
      %v4210 = vpop.f32.mrb[0].mxu0
      %v4211 = vadd.f32 0.0, %v4210
      %4212 = vdwg.mxu0
      %v4213 = vadd.f32 %v4138, %v4205
      %v4214 = vadd.f32 %v4139, %v4207
      %v4215 = vadd.f32 %v4140, %v4209
      %v4216 = vadd.f32 %v4141, %v4211
      %4217 = vrot.lane.b32.xlu0 %v2598, 96
      %v4218 = vpop.permute.xlu0 %4217
      %4219 = vrot.lane.b32.xlu0 %v2599, 96
      %v4220 = vpop.permute.xlu0 %4219
      %v4221 = vsel %vm2356, %v4218, %v4220
      %v4223 = vsel %vm2358, %v4220, 0
      %s4224 = scalar_lea.vmem %s3, 176
      %v4225 = vld [vmem:[%s4224] sm:$0xf]
      %v4226 = vld [vmem:[%s4224 + $0x4] sm:$0x7]
      %v4229 = vunpack.c.l.b16 %v4225
      %v4230 = vunpack.c.l.b16 %v4226
      %v4231 = vpack.c.b16 %v4230, %v4229
      %v4233 = vsel %vm699, %v4231, 0
      %v4236 = vsel %vm623, %v4221, 0
      %v4238 = vsel %vm623, %v4223, 0
      %4240 = vmatprep.subr.bf16.mxu0 %v4238
      %4241 = vmatpush1.bf16.msra.mxu0 %v4236
      %4242 = vmatprep.subr.bf16.mxu0 0
      %4243 = vmatpush1.bf16.msra.mxu0 0
      %4244 = vmatprep.subr.bf16.mxu0 0
      %4245 = vmatpush1.bf16.msra.mxu0 0
      %4246 = vmatprep.subr.bf16.mxu0 0
      %4247 = vmatpush1.bf16.msra.mxu0 0
      %4248 = vmatprep.subr.bf16.mxu0 0
      %4249 = vmatpush1.bf16.msra.mxu0 0
      %4250 = vmatprep.subr.bf16.mxu0 0
      %4251 = vmatpush1.bf16.msra.mxu0 0
      %4252 = vmatprep.subr.bf16.mxu0 0
      %4253 = vmatpush1.bf16.msra.mxu0 0
      %4254 = vmatprep.subr.bf16.mxu0 0
      %4255 = vmatpush1.bf16.msra.mxu0 0
      %4256 = vmatprep.subr.bf16.mxu0 0
      %4257 = vmatpush1.bf16.msra.mxu0 0
      %4258 = vmatprep.subr.bf16.mxu0 0
      %4259 = vmatpush1.bf16.msra.mxu0 0
      %4260 = vmatprep.subr.bf16.mxu0 0
      %4261 = vmatpush1.bf16.msra.mxu0 0
      %4262 = vmatprep.subr.bf16.mxu0 0
      %4263 = vmatpush1.bf16.msra.mxu0 0
      %4264 = vmatprep.subr.bf16.mxu0 0
      %4265 = vmatpush1.bf16.msra.mxu0 0
      %4266 = vmatprep.subr.bf16.mxu0 0
      %4267 = vmatpush1.bf16.msra.mxu0 0
      %4268 = vmatprep.subr.bf16.mxu0 0
      %4269 = vmatpush1.bf16.msra.mxu0 0
      %4270 = vmatprep.subr.bf16.mxu0 0
      %4271 = vmatpush1.bf16.msra.mxu0 0
      %4272 = vmatprep.mubr.bf16.mxu0 0
      %4273 = vmatmul.mubr.bf16.gmra.mrb[0].mxu0 %v4233
      %v4274 = vpop.f32.mrb[0].mxu0
      %v4275 = vadd.f32 0.0, %v4274
      %v4276 = vpop.f32.mrb[0].mxu0
      %v4277 = vadd.f32 0.0, %v4276
      %v4278 = vpop.f32.mrb[0].mxu0
      %v4279 = vadd.f32 0.0, %v4278
      %v4280 = vpop.f32.mrb[0].mxu0
      %v4281 = vadd.f32 0.0, %v4280
      %4282 = vdwg.mxu0
      %v4283 = vadd.f32 %v4213, %v4275
      %v4284 = vadd.f32 %v4214, %v4277
      %v4285 = vadd.f32 %v4215, %v4279
      %v4286 = vadd.f32 %v4216, %v4281
      %4287 = vrot.lane.b32.xlu0 %v2598, 95
      %v4288 = vpop.permute.xlu0 %4287
      %4289 = vrot.lane.b32.xlu0 %v2599, 95
      %v4290 = vpop.permute.xlu0 %4289
      %v4291 = vsel %vm2428, %v4288, %v4290
      %v4294 = vsel %vm2431, %v4290, 0
      %v4296 = vsel %vm906, %v4291, 0
      %v4297 = vsel %vm907, %v4294, 0
      %s4298 = scalar_lea.vmem %s3, 184
      %v4299 = vld [vmem:[%s4298] sm:$0xf]
      %v4300 = vld [vmem:[%s4298 + $0x4] sm:$0x7]
      %v4303 = vunpack.c.l.b16 %v4299
      %v4304 = vunpack.c.l.b16 %v4300
      %v4305 = vpack.c.b16 %v4304, %v4303
      %v4307 = vsel %vm699, %v4305, 0
      %v4310 = vsel %vm623, %v4296, 0
      %v4313 = vsel %vm623, %v4297, 0
      %4315 = vmatprep.subr.bf16.mxu0 %v4313
      %4316 = vmatpush1.bf16.msra.mxu0 %v4310
      %4317 = vmatprep.subr.bf16.mxu0 0
      %4318 = vmatpush1.bf16.msra.mxu0 0
      %4319 = vmatprep.subr.bf16.mxu0 0
      %4320 = vmatpush1.bf16.msra.mxu0 0
      %4321 = vmatprep.subr.bf16.mxu0 0
      %4322 = vmatpush1.bf16.msra.mxu0 0
      %4323 = vmatprep.subr.bf16.mxu0 0
      %4324 = vmatpush1.bf16.msra.mxu0 0
      %4325 = vmatprep.subr.bf16.mxu0 0
      %4326 = vmatpush1.bf16.msra.mxu0 0
      %4327 = vmatprep.subr.bf16.mxu0 0
      %4328 = vmatpush1.bf16.msra.mxu0 0
      %4329 = vmatprep.subr.bf16.mxu0 0
      %4330 = vmatpush1.bf16.msra.mxu0 0
      %4331 = vmatprep.subr.bf16.mxu0 0
      %4332 = vmatpush1.bf16.msra.mxu0 0
      %4333 = vmatprep.subr.bf16.mxu0 0
      %4334 = vmatpush1.bf16.msra.mxu0 0
      %4335 = vmatprep.subr.bf16.mxu0 0
      %4336 = vmatpush1.bf16.msra.mxu0 0
      %4337 = vmatprep.subr.bf16.mxu0 0
      %4338 = vmatpush1.bf16.msra.mxu0 0
      %4339 = vmatprep.subr.bf16.mxu0 0
      %4340 = vmatpush1.bf16.msra.mxu0 0
      %4341 = vmatprep.subr.bf16.mxu0 0
      %4342 = vmatpush1.bf16.msra.mxu0 0
      %4343 = vmatprep.subr.bf16.mxu0 0
      %4344 = vmatpush1.bf16.msra.mxu0 0
      %4345 = vmatprep.subr.bf16.mxu0 0
      %4346 = vmatpush1.bf16.msra.mxu0 0
      %4347 = vmatprep.mubr.bf16.mxu0 0
      %4348 = vmatmul.mubr.bf16.gmra.mrb[0].mxu0 %v4307
      %v4349 = vpop.f32.mrb[0].mxu0
      %v4350 = vadd.f32 0.0, %v4349
      %v4351 = vpop.f32.mrb[0].mxu0
      %v4352 = vadd.f32 0.0, %v4351
      %v4353 = vpop.f32.mrb[0].mxu0
      %v4354 = vadd.f32 0.0, %v4353
      %v4355 = vpop.f32.mrb[0].mxu0
      %v4356 = vadd.f32 0.0, %v4355
      %4357 = vdwg.mxu0
      %v4358 = vadd.f32 %v4283, %v4350
      %v4359 = vadd.f32 %v4284, %v4352
      %v4360 = vadd.f32 %v4285, %v4354
      %v4361 = vadd.f32 %v4286, %v4356
      %4362 = vrot.lane.b32.xlu0 %v2598, 94
      %v4363 = vpop.permute.xlu0 %4362
      %4364 = vrot.lane.b32.xlu0 %v2599, 94
      %v4365 = vpop.permute.xlu0 %4364
      %v4366 = vsel %vm2505, %v4363, %v4365
      %v4369 = vsel %vm2508, %v4365, 0
      %v4371 = vsel %vm999, %v4366, 0
      %v4372 = vsel %vm1000, %v4369, 0
      %s4373 = scalar_lea.vmem %s3, 192
      %v4374 = vld [vmem:[%s4373] sm:$0xf]
      %v4375 = vld [vmem:[%s4373 + $0x4] sm:$0x7]
      %v4378 = vunpack.c.l.b16 %v4374
      %v4379 = vunpack.c.l.b16 %v4375
      %v4380 = vpack.c.b16 %v4379, %v4378
      %v4382 = vsel %vm699, %v4380, 0
      %v4385 = vsel %vm623, %v4371, 0
      %v4388 = vsel %vm623, %v4372, 0
      %4390 = vmatprep.subr.bf16.mxu0 %v4388
      %4391 = vmatpush1.bf16.msra.mxu0 %v4385
      %4392 = vmatprep.subr.bf16.mxu0 0
      %4393 = vmatpush1.bf16.msra.mxu0 0
      %4394 = vmatprep.subr.bf16.mxu0 0
      %4395 = vmatpush1.bf16.msra.mxu0 0
      %4396 = vmatprep.subr.bf16.mxu0 0
      %4397 = vmatpush1.bf16.msra.mxu0 0
      %4398 = vmatprep.subr.bf16.mxu0 0
      %4399 = vmatpush1.bf16.msra.mxu0 0
      %4400 = vmatprep.subr.bf16.mxu0 0
      %4401 = vmatpush1.bf16.msra.mxu0 0
      %4402 = vmatprep.subr.bf16.mxu0 0
      %4403 = vmatpush1.bf16.msra.mxu0 0
      %4404 = vmatprep.subr.bf16.mxu0 0
      %4405 = vmatpush1.bf16.msra.mxu0 0
      %4406 = vmatprep.subr.bf16.mxu0 0
      %4407 = vmatpush1.bf16.msra.mxu0 0
      %4408 = vmatprep.subr.bf16.mxu0 0
      %4409 = vmatpush1.bf16.msra.mxu0 0
      %4410 = vmatprep.subr.bf16.mxu0 0
      %4411 = vmatpush1.bf16.msra.mxu0 0
      %4412 = vmatprep.subr.bf16.mxu0 0
      %4413 = vmatpush1.bf16.msra.mxu0 0
      %4414 = vmatprep.subr.bf16.mxu0 0
      %4415 = vmatpush1.bf16.msra.mxu0 0
      %4416 = vmatprep.subr.bf16.mxu0 0
      %4417 = vmatpush1.bf16.msra.mxu0 0
      %4418 = vmatprep.subr.bf16.mxu0 0
      %4419 = vmatpush1.bf16.msra.mxu0 0
      %4420 = vmatprep.subr.bf16.mxu0 0
      %4421 = vmatpush1.bf16.msra.mxu0 0
      %4422 = vmatprep.mubr.bf16.mxu0 0
      %4423 = vmatmul.mubr.bf16.gmra.mrb[0].mxu0 %v4382
      %v4424 = vpop.f32.mrb[0].mxu0
      %v4425 = vadd.f32 0.0, %v4424
      %v4426 = vpop.f32.mrb[0].mxu0
      %v4427 = vadd.f32 0.0, %v4426
      %v4428 = vpop.f32.mrb[0].mxu0
      %v4429 = vadd.f32 0.0, %v4428
      %v4430 = vpop.f32.mrb[0].mxu0
      %v4431 = vadd.f32 0.0, %v4430
      %4432 = vdwg.mxu0
      %v4433 = vadd.f32 %v4358, %v4425
      %v4434 = vadd.f32 %v4359, %v4427
      %v4435 = vadd.f32 %v4360, %v4429
      %v4436 = vadd.f32 %v4361, %v4431
      %v4437 = vld [vmem:[%s4] sm:$0xff]
      %v4438 = vld [vmem:[%s4 + $0x8] sm:$0x3f]
      %4440 = vset.pattern.permute.xlu0 0
      %4441 = vperm.xlu0 %4440, %v4437
      %v4442 = vpop.permute.xlu0 %4441
      %4445 = vset.pattern.permute.xlu0 0
      %4446 = vperm.xlu0 %4445, %v4438
      %v4447 = vpop.permute.xlu0 %4446
      %v4449 = vadd.f32 %v4433, %v4442
      %v4450 = vadd.f32 %v4434, %v4442
      %v4451 = vadd.f32 %v4435, %v4447
      %v4452 = vadd.f32 %v4436, %v4447
      %v4453 = vmax.f32 %v4449, 0.0
      %v4454 = vmax.f32 %v4450, 0.0
      %v4455 = vmax.f32 %v4451, 0.0
      %v4456 = vmax.f32 %v4452, 0.0
      %v4457 = vpack.c.bf16 %v4455, %v4453
      %v4458 = vpack.c.bf16 %v4456, %v4454
      %4461 = vrot.lane.b32.xlu0 %v4457, 34
      %v4462 = vpop.permute.xlu0 %4461
      %4463 = vrot.lane.b32.xlu0 %v4458, 34
      %v4464 = vpop.permute.xlu0 %4463
      %v4465 = vsel %vm634, %v4462, %v4464
      %v4468 = vsel %vm637, 0, %v4462
      %v4470 = vsel %vm656, %v4468, 0
      %v4471 = vsel %vm657, %v4465, 0
      %v4472 = vld [vmem:[%s5] sm:$0x7]
      %4473 = vrot.lane.b32.xlu0 %v4457, 33
      %v4474 = vpop.permute.xlu0 %4473
      %4475 = vrot.lane.b32.xlu0 %v4458, 33
      %v4476 = vpop.permute.xlu0 %4475
      %v4477 = vsel %vm666, %v4474, %v4476
      %v4480 = vsel %vm669, 0, %v4474
      %v4482 = vsel %vm687, %v4480, 0
      %v4483 = vsel %vm688, %v4477, 0
      %s4484 = scalar_lea.vmem %s5, 4
      %v4485 = vld [vmem:[%s4484] sm:$0x7]
      %v4487 = vsel %vm699, %v4485, 0
      %v4490 = vsel %vm623, %v4482, 0
      %v4493 = vsel %vm623, %v4483, 0
      %4495 = vmatprep.subr.bf16.mxu0 %v4493
      %4496 = vmatpush1.bf16.msra.mxu0 %v4490
      %4497 = vmatprep.subr.bf16.mxu0 0
      %4498 = vmatpush1.bf16.msra.mxu0 0
      %4499 = vmatprep.subr.bf16.mxu0 0
      %4500 = vmatpush1.bf16.msra.mxu0 0
      %4501 = vmatprep.subr.bf16.mxu0 0
      %4502 = vmatpush1.bf16.msra.mxu0 0
      %4503 = vmatprep.subr.bf16.mxu0 0
      %4504 = vmatpush1.bf16.msra.mxu0 0
      %4505 = vmatprep.subr.bf16.mxu0 0
      %4506 = vmatpush1.bf16.msra.mxu0 0
      %4507 = vmatprep.subr.bf16.mxu0 0
      %4508 = vmatpush1.bf16.msra.mxu0 0
      %4509 = vmatprep.subr.bf16.mxu0 0
      %4510 = vmatpush1.bf16.msra.mxu0 0
      %4511 = vmatprep.subr.bf16.mxu0 0
      %4512 = vmatpush1.bf16.msra.mxu0 0
      %4513 = vmatprep.subr.bf16.mxu0 0
      %4514 = vmatpush1.bf16.msra.mxu0 0
      %4515 = vmatprep.subr.bf16.mxu0 0
      %4516 = vmatpush1.bf16.msra.mxu0 0
      %4517 = vmatprep.subr.bf16.mxu0 0
      %4518 = vmatpush1.bf16.msra.mxu0 0
      %4519 = vmatprep.subr.bf16.mxu0 0
      %4520 = vmatpush1.bf16.msra.mxu0 0
      %4521 = vmatprep.subr.bf16.mxu0 0
      %4522 = vmatpush1.bf16.msra.mxu0 0
      %4523 = vmatprep.subr.bf16.mxu0 0
      %4524 = vmatpush1.bf16.msra.mxu0 0
      %4525 = vmatprep.subr.bf16.mxu0 0
      %4526 = vmatpush1.bf16.msra.mxu0 0
      %4527 = vmatprep.mubr.bf16.mxu0 0
      %4528 = vmatmul.mubr.bf16.gmra.mrb[0].mxu0 %v4487
      %v4529 = vpop.f32.mrb[0].mxu0
      %v4530 = vadd.f32 0.0, %v4529
      %v4531 = vpop.f32.mrb[0].mxu0
      %v4532 = vadd.f32 0.0, %v4531
      %v4533 = vpop.f32.mrb[0].mxu0
      %v4534 = vpop.f32.mrb[0].mxu0
      %4535 = vdwg.mxu0
      %v4537 = vsel %vm699, %v4472, 0
      %v4540 = vsel %vm623, %v4470, 0
      %v4543 = vsel %vm623, %v4471, 0
      %4545 = vmatprep.subr.bf16.mxu0 %v4543
      %4546 = vmatpush1.bf16.msra.mxu0 %v4540
      %4547 = vmatprep.subr.bf16.mxu0 0
      %4548 = vmatpush1.bf16.msra.mxu0 0
      %4549 = vmatprep.subr.bf16.mxu0 0
      %4550 = vmatpush1.bf16.msra.mxu0 0
      %4551 = vmatprep.subr.bf16.mxu0 0
      %4552 = vmatpush1.bf16.msra.mxu0 0
      %4553 = vmatprep.subr.bf16.mxu0 0
      %4554 = vmatpush1.bf16.msra.mxu0 0
      %4555 = vmatprep.subr.bf16.mxu0 0
      %4556 = vmatpush1.bf16.msra.mxu0 0
      %4557 = vmatprep.subr.bf16.mxu0 0
      %4558 = vmatpush1.bf16.msra.mxu0 0
      %4559 = vmatprep.subr.bf16.mxu0 0
      %4560 = vmatpush1.bf16.msra.mxu0 0
      %4561 = vmatprep.subr.bf16.mxu0 0
      %4562 = vmatpush1.bf16.msra.mxu0 0
      %4563 = vmatprep.subr.bf16.mxu0 0
      %4564 = vmatpush1.bf16.msra.mxu0 0
      %4565 = vmatprep.subr.bf16.mxu0 0
      %4566 = vmatpush1.bf16.msra.mxu0 0
      %4567 = vmatprep.subr.bf16.mxu0 0
      %4568 = vmatpush1.bf16.msra.mxu0 0
      %4569 = vmatprep.subr.bf16.mxu0 0
      %4570 = vmatpush1.bf16.msra.mxu0 0
      %4571 = vmatprep.subr.bf16.mxu0 0
      %4572 = vmatpush1.bf16.msra.mxu0 0
      %4573 = vmatprep.subr.bf16.mxu0 0
      %4574 = vmatpush1.bf16.msra.mxu0 0
      %4575 = vmatprep.subr.bf16.mxu0 0
      %4576 = vmatpush1.bf16.msra.mxu0 0
      %4577 = vmatprep.mubr.bf16.mxu0 0
      %4578 = vmatmul.mubr.bf16.gmra.mrb[0].mxu0 %v4537
      %v4579 = vpop.f32.mrb[0].mxu0
      %v4580 = vadd.f32 %v4530, %v4579
      %v4581 = vpop.f32.mrb[0].mxu0
      %v4582 = vadd.f32 %v4532, %v4581
      %v4583 = vpop.f32.mrb[0].mxu0
      %v4584 = vpop.f32.mrb[0].mxu0
      %4585 = vdwg.mxu0
      %4586 = vrot.lane.b32.xlu0 %v4457, 32
      %v4587 = vpop.permute.xlu0 %4586
      %4588 = vrot.lane.b32.xlu0 %v4458, 32
      %v4589 = vpop.permute.xlu0 %4588
      %v4590 = vsel %vm813, %v4587, %v4589
      %v4592 = vsel %vm815, 0, %v4587
      %s4593 = scalar_lea.vmem %s5, 8
      %v4594 = vld [vmem:[%s4593] sm:$0x7]
      %v4596 = vsel %vm699, %v4594, 0
      %v4598 = vsel %vm623, %v4592, 0
      %v4601 = vsel %vm623, %v4590, 0
      %4603 = vmatprep.subr.bf16.mxu0 %v4601
      %4604 = vmatpush1.bf16.msra.mxu0 %v4598
      %4605 = vmatprep.subr.bf16.mxu0 0
      %4606 = vmatpush1.bf16.msra.mxu0 0
      %4607 = vmatprep.subr.bf16.mxu0 0
      %4608 = vmatpush1.bf16.msra.mxu0 0
      %4609 = vmatprep.subr.bf16.mxu0 0
      %4610 = vmatpush1.bf16.msra.mxu0 0
      %4611 = vmatprep.subr.bf16.mxu0 0
      %4612 = vmatpush1.bf16.msra.mxu0 0
      %4613 = vmatprep.subr.bf16.mxu0 0
      %4614 = vmatpush1.bf16.msra.mxu0 0
      %4615 = vmatprep.subr.bf16.mxu0 0
      %4616 = vmatpush1.bf16.msra.mxu0 0
      %4617 = vmatprep.subr.bf16.mxu0 0
      %4618 = vmatpush1.bf16.msra.mxu0 0
      %4619 = vmatprep.subr.bf16.mxu0 0
      %4620 = vmatpush1.bf16.msra.mxu0 0
      %4621 = vmatprep.subr.bf16.mxu0 0
      %4622 = vmatpush1.bf16.msra.mxu0 0
      %4623 = vmatprep.subr.bf16.mxu0 0
      %4624 = vmatpush1.bf16.msra.mxu0 0
      %4625 = vmatprep.subr.bf16.mxu0 0
      %4626 = vmatpush1.bf16.msra.mxu0 0
      %4627 = vmatprep.subr.bf16.mxu0 0
      %4628 = vmatpush1.bf16.msra.mxu0 0
      %4629 = vmatprep.subr.bf16.mxu0 0
      %4630 = vmatpush1.bf16.msra.mxu0 0
      %4631 = vmatprep.subr.bf16.mxu0 0
      %4632 = vmatpush1.bf16.msra.mxu0 0
      %4633 = vmatprep.subr.bf16.mxu0 0
      %4634 = vmatpush1.bf16.msra.mxu0 0
      %4635 = vmatprep.mubr.bf16.mxu0 0
      %4636 = vmatmul.mubr.bf16.gmra.mrb[0].mxu0 %v4596
      %v4637 = vpop.f32.mrb[0].mxu0
      %v4638 = vadd.f32 0.0, %v4637
      %v4639 = vpop.f32.mrb[0].mxu0
      %v4640 = vadd.f32 0.0, %v4639
      %v4641 = vpop.f32.mrb[0].mxu0
      %v4642 = vpop.f32.mrb[0].mxu0
      %4643 = vdwg.mxu0
      %v4644 = vadd.f32 %v4580, %v4638
      %v4645 = vadd.f32 %v4582, %v4640
      %4646 = vrot.lane.b32.xlu0 %v4457, 31
      %v4647 = vpop.permute.xlu0 %4646
      %4648 = vrot.lane.b32.xlu0 %v4458, 31
      %v4649 = vpop.permute.xlu0 %4648
      %v4650 = vsel %vm885, %v4647, %v4649
      %v4653 = vsel %vm888, 0, %v4647
      %v4655 = vsel %vm906, %v4653, 0
      %v4656 = vsel %vm907, %v4650, 0
      %s4657 = scalar_lea.vmem %s5, 12
      %v4658 = vld [vmem:[%s4657] sm:$0x7]
      %v4660 = vsel %vm699, %v4658, 0
      %v4663 = vsel %vm623, %v4655, 0
      %v4666 = vsel %vm623, %v4656, 0
      %4668 = vmatprep.subr.bf16.mxu0 %v4666
      %4669 = vmatpush1.bf16.msra.mxu0 %v4663
      %4670 = vmatprep.subr.bf16.mxu0 0
      %4671 = vmatpush1.bf16.msra.mxu0 0
      %4672 = vmatprep.subr.bf16.mxu0 0
      %4673 = vmatpush1.bf16.msra.mxu0 0
      %4674 = vmatprep.subr.bf16.mxu0 0
      %4675 = vmatpush1.bf16.msra.mxu0 0
      %4676 = vmatprep.subr.bf16.mxu0 0
      %4677 = vmatpush1.bf16.msra.mxu0 0
      %4678 = vmatprep.subr.bf16.mxu0 0
      %4679 = vmatpush1.bf16.msra.mxu0 0
      %4680 = vmatprep.subr.bf16.mxu0 0
      %4681 = vmatpush1.bf16.msra.mxu0 0
      %4682 = vmatprep.subr.bf16.mxu0 0
      %4683 = vmatpush1.bf16.msra.mxu0 0
      %4684 = vmatprep.subr.bf16.mxu0 0
      %4685 = vmatpush1.bf16.msra.mxu0 0
      %4686 = vmatprep.subr.bf16.mxu0 0
      %4687 = vmatpush1.bf16.msra.mxu0 0
      %4688 = vmatprep.subr.bf16.mxu0 0
      %4689 = vmatpush1.bf16.msra.mxu0 0
      %4690 = vmatprep.subr.bf16.mxu0 0
      %4691 = vmatpush1.bf16.msra.mxu0 0
      %4692 = vmatprep.subr.bf16.mxu0 0
      %4693 = vmatpush1.bf16.msra.mxu0 0
      %4694 = vmatprep.subr.bf16.mxu0 0
      %4695 = vmatpush1.bf16.msra.mxu0 0
      %4696 = vmatprep.subr.bf16.mxu0 0
      %4697 = vmatpush1.bf16.msra.mxu0 0
      %4698 = vmatprep.subr.bf16.mxu0 0
      %4699 = vmatpush1.bf16.msra.mxu0 0
      %4700 = vmatprep.mubr.bf16.mxu0 0
      %4701 = vmatmul.mubr.bf16.gmra.mrb[0].mxu0 %v4660
      %v4702 = vpop.f32.mrb[0].mxu0
      %v4703 = vadd.f32 0.0, %v4702
      %v4704 = vpop.f32.mrb[0].mxu0
      %v4705 = vadd.f32 0.0, %v4704
      %v4706 = vpop.f32.mrb[0].mxu0
      %v4707 = vpop.f32.mrb[0].mxu0
      %4708 = vdwg.mxu0
      %v4709 = vadd.f32 %v4644, %v4703
      %v4710 = vadd.f32 %v4645, %v4705
      %4711 = vrot.lane.b32.xlu0 %v4457, 30
      %v4712 = vpop.permute.xlu0 %4711
      %4713 = vrot.lane.b32.xlu0 %v4458, 30
      %v4714 = vpop.permute.xlu0 %4713
      %v4715 = vsel %vm978, %v4712, %v4714
      %v4718 = vsel %vm981, 0, %v4712
      %v4720 = vsel %vm999, %v4718, 0
      %v4721 = vsel %vm1000, %v4715, 0
      %s4722 = scalar_lea.vmem %s5, 16
      %v4723 = vld [vmem:[%s4722] sm:$0x7]
      %v4725 = vsel %vm699, %v4723, 0
      %v4728 = vsel %vm623, %v4720, 0
      %v4731 = vsel %vm623, %v4721, 0
      %4733 = vmatprep.subr.bf16.mxu0 %v4731
      %4734 = vmatpush1.bf16.msra.mxu0 %v4728
      %4735 = vmatprep.subr.bf16.mxu0 0
      %4736 = vmatpush1.bf16.msra.mxu0 0
      %4737 = vmatprep.subr.bf16.mxu0 0
      %4738 = vmatpush1.bf16.msra.mxu0 0
      %4739 = vmatprep.subr.bf16.mxu0 0
      %4740 = vmatpush1.bf16.msra.mxu0 0
      %4741 = vmatprep.subr.bf16.mxu0 0
      %4742 = vmatpush1.bf16.msra.mxu0 0
      %4743 = vmatprep.subr.bf16.mxu0 0
      %4744 = vmatpush1.bf16.msra.mxu0 0
      %4745 = vmatprep.subr.bf16.mxu0 0
      %4746 = vmatpush1.bf16.msra.mxu0 0
      %4747 = vmatprep.subr.bf16.mxu0 0
      %4748 = vmatpush1.bf16.msra.mxu0 0
      %4749 = vmatprep.subr.bf16.mxu0 0
      %4750 = vmatpush1.bf16.msra.mxu0 0
      %4751 = vmatprep.subr.bf16.mxu0 0
      %4752 = vmatpush1.bf16.msra.mxu0 0
      %4753 = vmatprep.subr.bf16.mxu0 0
      %4754 = vmatpush1.bf16.msra.mxu0 0
      %4755 = vmatprep.subr.bf16.mxu0 0
      %4756 = vmatpush1.bf16.msra.mxu0 0
      %4757 = vmatprep.subr.bf16.mxu0 0
      %4758 = vmatpush1.bf16.msra.mxu0 0
      %4759 = vmatprep.subr.bf16.mxu0 0
      %4760 = vmatpush1.bf16.msra.mxu0 0
      %4761 = vmatprep.subr.bf16.mxu0 0
      %4762 = vmatpush1.bf16.msra.mxu0 0
      %4763 = vmatprep.subr.bf16.mxu0 0
      %4764 = vmatpush1.bf16.msra.mxu0 0
      %4765 = vmatprep.mubr.bf16.mxu0 0
      %4766 = vmatmul.mubr.bf16.gmra.mrb[0].mxu0 %v4725
      %v4767 = vpop.f32.mrb[0].mxu0
      %v4768 = vadd.f32 0.0, %v4767
      %v4769 = vpop.f32.mrb[0].mxu0
      %v4770 = vadd.f32 0.0, %v4769
      %v4771 = vpop.f32.mrb[0].mxu0
      %v4772 = vpop.f32.mrb[0].mxu0
      %4773 = vdwg.mxu0
      %v4774 = vadd.f32 %v4709, %v4768
      %v4775 = vadd.f32 %v4710, %v4770
      %4776 = vrot.lane.b32.xlu0 %v4457, 18
      %v4777 = vpop.permute.xlu0 %4776
      %4778 = vrot.lane.b32.xlu0 %v4458, 18
      %v4779 = vpop.permute.xlu0 %4778
      %v4780 = vsel %vm1071, %v4777, %v4779
      %v4783 = vsel %vm1074, 0, %v4777
      %v4785 = vsel %vm656, %v4783, 0
      %v4786 = vsel %vm657, %v4780, 0
      %s4787 = scalar_lea.vmem %s5, 20
      %v4788 = vld [vmem:[%s4787] sm:$0x7]
      %v4790 = vsel %vm699, %v4788, 0
      %v4793 = vsel %vm623, %v4785, 0
      %v4796 = vsel %vm623, %v4786, 0
      %4798 = vmatprep.subr.bf16.mxu0 %v4796
      %4799 = vmatpush1.bf16.msra.mxu0 %v4793
      %4800 = vmatprep.subr.bf16.mxu0 0
      %4801 = vmatpush1.bf16.msra.mxu0 0
      %4802 = vmatprep.subr.bf16.mxu0 0
      %4803 = vmatpush1.bf16.msra.mxu0 0
      %4804 = vmatprep.subr.bf16.mxu0 0
      %4805 = vmatpush1.bf16.msra.mxu0 0
      %4806 = vmatprep.subr.bf16.mxu0 0
      %4807 = vmatpush1.bf16.msra.mxu0 0
      %4808 = vmatprep.subr.bf16.mxu0 0
      %4809 = vmatpush1.bf16.msra.mxu0 0
      %4810 = vmatprep.subr.bf16.mxu0 0
      %4811 = vmatpush1.bf16.msra.mxu0 0
      %4812 = vmatprep.subr.bf16.mxu0 0
      %4813 = vmatpush1.bf16.msra.mxu0 0
      %4814 = vmatprep.subr.bf16.mxu0 0
      %4815 = vmatpush1.bf16.msra.mxu0 0
      %4816 = vmatprep.subr.bf16.mxu0 0
      %4817 = vmatpush1.bf16.msra.mxu0 0
      %4818 = vmatprep.subr.bf16.mxu0 0
      %4819 = vmatpush1.bf16.msra.mxu0 0
      %4820 = vmatprep.subr.bf16.mxu0 0
      %4821 = vmatpush1.bf16.msra.mxu0 0
      %4822 = vmatprep.subr.bf16.mxu0 0
      %4823 = vmatpush1.bf16.msra.mxu0 0
      %4824 = vmatprep.subr.bf16.mxu0 0
      %4825 = vmatpush1.bf16.msra.mxu0 0
      %4826 = vmatprep.subr.bf16.mxu0 0
      %4827 = vmatpush1.bf16.msra.mxu0 0
      %4828 = vmatprep.subr.bf16.mxu0 0
      %4829 = vmatpush1.bf16.msra.mxu0 0
      %4830 = vmatprep.mubr.bf16.mxu0 0
      %4831 = vmatmul.mubr.bf16.gmra.mrb[0].mxu0 %v4790
      %v4832 = vpop.f32.mrb[0].mxu0
      %v4833 = vadd.f32 0.0, %v4832
      %v4834 = vpop.f32.mrb[0].mxu0
      %v4835 = vadd.f32 0.0, %v4834
      %v4836 = vpop.f32.mrb[0].mxu0
      %v4837 = vpop.f32.mrb[0].mxu0
      %4838 = vdwg.mxu0
      %v4839 = vadd.f32 %v4774, %v4833
      %v4840 = vadd.f32 %v4775, %v4835
      %4841 = vrot.lane.b32.xlu0 %v4457, 17
      %v4842 = vpop.permute.xlu0 %4841
      %4843 = vrot.lane.b32.xlu0 %v4458, 17
      %v4844 = vpop.permute.xlu0 %4843
      %v4845 = vsel %vm1148, %v4842, %v4844
      %v4848 = vsel %vm1151, 0, %v4842
      %v4850 = vsel %vm687, %v4848, 0
      %v4851 = vsel %vm688, %v4845, 0
      %s4852 = scalar_lea.vmem %s5, 24
      %v4853 = vld [vmem:[%s4852] sm:$0x7]
      %v4855 = vsel %vm699, %v4853, 0
      %v4858 = vsel %vm623, %v4850, 0
      %v4861 = vsel %vm623, %v4851, 0
      %4863 = vmatprep.subr.bf16.mxu0 %v4861
      %4864 = vmatpush1.bf16.msra.mxu0 %v4858
      %4865 = vmatprep.subr.bf16.mxu0 0
      %4866 = vmatpush1.bf16.msra.mxu0 0
      %4867 = vmatprep.subr.bf16.mxu0 0
      %4868 = vmatpush1.bf16.msra.mxu0 0
      %4869 = vmatprep.subr.bf16.mxu0 0
      %4870 = vmatpush1.bf16.msra.mxu0 0
      %4871 = vmatprep.subr.bf16.mxu0 0
      %4872 = vmatpush1.bf16.msra.mxu0 0
      %4873 = vmatprep.subr.bf16.mxu0 0
      %4874 = vmatpush1.bf16.msra.mxu0 0
      %4875 = vmatprep.subr.bf16.mxu0 0
      %4876 = vmatpush1.bf16.msra.mxu0 0
      %4877 = vmatprep.subr.bf16.mxu0 0
      %4878 = vmatpush1.bf16.msra.mxu0 0
      %4879 = vmatprep.subr.bf16.mxu0 0
      %4880 = vmatpush1.bf16.msra.mxu0 0
      %4881 = vmatprep.subr.bf16.mxu0 0
      %4882 = vmatpush1.bf16.msra.mxu0 0
      %4883 = vmatprep.subr.bf16.mxu0 0
      %4884 = vmatpush1.bf16.msra.mxu0 0
      %4885 = vmatprep.subr.bf16.mxu0 0
      %4886 = vmatpush1.bf16.msra.mxu0 0
      %4887 = vmatprep.subr.bf16.mxu0 0
      %4888 = vmatpush1.bf16.msra.mxu0 0
      %4889 = vmatprep.subr.bf16.mxu0 0
      %4890 = vmatpush1.bf16.msra.mxu0 0
      %4891 = vmatprep.subr.bf16.mxu0 0
      %4892 = vmatpush1.bf16.msra.mxu0 0
      %4893 = vmatprep.subr.bf16.mxu0 0
      %4894 = vmatpush1.bf16.msra.mxu0 0
      %4895 = vmatprep.mubr.bf16.mxu0 0
      %4896 = vmatmul.mubr.bf16.gmra.mrb[0].mxu0 %v4855
      %v4897 = vpop.f32.mrb[0].mxu0
      %v4898 = vadd.f32 0.0, %v4897
      %v4899 = vpop.f32.mrb[0].mxu0
      %v4900 = vadd.f32 0.0, %v4899
      %v4901 = vpop.f32.mrb[0].mxu0
      %v4902 = vpop.f32.mrb[0].mxu0
      %4903 = vdwg.mxu0
      %v4904 = vadd.f32 %v4839, %v4898
      %v4905 = vadd.f32 %v4840, %v4900
      %4906 = vrot.lane.b32.xlu0 %v4457, 16
      %v4907 = vpop.permute.xlu0 %4906
      %4908 = vrot.lane.b32.xlu0 %v4458, 16
      %v4909 = vpop.permute.xlu0 %4908
      %v4910 = vsel %vm1225, %v4907, %v4909
      %v4912 = vsel %vm1227, 0, %v4907
      %s4913 = scalar_lea.vmem %s5, 28
      %v4914 = vld [vmem:[%s4913] sm:$0x7]
      %v4916 = vsel %vm699, %v4914, 0
      %v4918 = vsel %vm623, %v4912, 0
      %v4921 = vsel %vm623, %v4910, 0
      %4923 = vmatprep.subr.bf16.mxu0 %v4921
      %4924 = vmatpush1.bf16.msra.mxu0 %v4918
      %4925 = vmatprep.subr.bf16.mxu0 0
      %4926 = vmatpush1.bf16.msra.mxu0 0
      %4927 = vmatprep.subr.bf16.mxu0 0
      %4928 = vmatpush1.bf16.msra.mxu0 0
      %4929 = vmatprep.subr.bf16.mxu0 0
      %4930 = vmatpush1.bf16.msra.mxu0 0
      %4931 = vmatprep.subr.bf16.mxu0 0
      %4932 = vmatpush1.bf16.msra.mxu0 0
      %4933 = vmatprep.subr.bf16.mxu0 0
      %4934 = vmatpush1.bf16.msra.mxu0 0
      %4935 = vmatprep.subr.bf16.mxu0 0
      %4936 = vmatpush1.bf16.msra.mxu0 0
      %4937 = vmatprep.subr.bf16.mxu0 0
      %4938 = vmatpush1.bf16.msra.mxu0 0
      %4939 = vmatprep.subr.bf16.mxu0 0
      %4940 = vmatpush1.bf16.msra.mxu0 0
      %4941 = vmatprep.subr.bf16.mxu0 0
      %4942 = vmatpush1.bf16.msra.mxu0 0
      %4943 = vmatprep.subr.bf16.mxu0 0
      %4944 = vmatpush1.bf16.msra.mxu0 0
      %4945 = vmatprep.subr.bf16.mxu0 0
      %4946 = vmatpush1.bf16.msra.mxu0 0
      %4947 = vmatprep.subr.bf16.mxu0 0
      %4948 = vmatpush1.bf16.msra.mxu0 0
      %4949 = vmatprep.subr.bf16.mxu0 0
      %4950 = vmatpush1.bf16.msra.mxu0 0
      %4951 = vmatprep.subr.bf16.mxu0 0
      %4952 = vmatpush1.bf16.msra.mxu0 0
      %4953 = vmatprep.subr.bf16.mxu0 0
      %4954 = vmatpush1.bf16.msra.mxu0 0
      %4955 = vmatprep.mubr.bf16.mxu0 0
      %4956 = vmatmul.mubr.bf16.gmra.mrb[0].mxu0 %v4916
      %v4957 = vpop.f32.mrb[0].mxu0
      %v4958 = vadd.f32 0.0, %v4957
      %v4959 = vpop.f32.mrb[0].mxu0
      %v4960 = vadd.f32 0.0, %v4959
      %v4961 = vpop.f32.mrb[0].mxu0
      %v4962 = vpop.f32.mrb[0].mxu0
      %4963 = vdwg.mxu0
      %v4964 = vadd.f32 %v4904, %v4958
      %v4965 = vadd.f32 %v4905, %v4960
      %4966 = vrot.lane.b32.xlu0 %v4457, 15
      %v4967 = vpop.permute.xlu0 %4966
      %4968 = vrot.lane.b32.xlu0 %v4458, 15
      %v4969 = vpop.permute.xlu0 %4968
      %v4970 = vsel %vm1297, %v4967, %v4969
      %v4973 = vsel %vm1300, 0, %v4967
      %v4975 = vsel %vm906, %v4973, 0
      %v4976 = vsel %vm907, %v4970, 0
      %s4977 = scalar_lea.vmem %s5, 32
      %v4978 = vld [vmem:[%s4977] sm:$0x7]
      %v4980 = vsel %vm699, %v4978, 0
      %v4983 = vsel %vm623, %v4975, 0
      %v4986 = vsel %vm623, %v4976, 0
      %4988 = vmatprep.subr.bf16.mxu0 %v4986
      %4989 = vmatpush1.bf16.msra.mxu0 %v4983
      %4990 = vmatprep.subr.bf16.mxu0 0
      %4991 = vmatpush1.bf16.msra.mxu0 0
      %4992 = vmatprep.subr.bf16.mxu0 0
      %4993 = vmatpush1.bf16.msra.mxu0 0
      %4994 = vmatprep.subr.bf16.mxu0 0
      %4995 = vmatpush1.bf16.msra.mxu0 0
      %4996 = vmatprep.subr.bf16.mxu0 0
      %4997 = vmatpush1.bf16.msra.mxu0 0
      %4998 = vmatprep.subr.bf16.mxu0 0
      %4999 = vmatpush1.bf16.msra.mxu0 0
      %5000 = vmatprep.subr.bf16.mxu0 0
      %5001 = vmatpush1.bf16.msra.mxu0 0
      %5002 = vmatprep.subr.bf16.mxu0 0
      %5003 = vmatpush1.bf16.msra.mxu0 0
      %5004 = vmatprep.subr.bf16.mxu0 0
      %5005 = vmatpush1.bf16.msra.mxu0 0
      %5006 = vmatprep.subr.bf16.mxu0 0
      %5007 = vmatpush1.bf16.msra.mxu0 0
      %5008 = vmatprep.subr.bf16.mxu0 0
      %5009 = vmatpush1.bf16.msra.mxu0 0
      %5010 = vmatprep.subr.bf16.mxu0 0
      %5011 = vmatpush1.bf16.msra.mxu0 0
      %5012 = vmatprep.subr.bf16.mxu0 0
      %5013 = vmatpush1.bf16.msra.mxu0 0
      %5014 = vmatprep.subr.bf16.mxu0 0
      %5015 = vmatpush1.bf16.msra.mxu0 0
      %5016 = vmatprep.subr.bf16.mxu0 0
      %5017 = vmatpush1.bf16.msra.mxu0 0
      %5018 = vmatprep.subr.bf16.mxu0 0
      %5019 = vmatpush1.bf16.msra.mxu0 0
      %5020 = vmatprep.mubr.bf16.mxu0 0
      %5021 = vmatmul.mubr.bf16.gmra.mrb[0].mxu0 %v4980
      %v5022 = vpop.f32.mrb[0].mxu0
      %v5023 = vadd.f32 0.0, %v5022
      %v5024 = vpop.f32.mrb[0].mxu0
      %v5025 = vadd.f32 0.0, %v5024
      %v5026 = vpop.f32.mrb[0].mxu0
      %v5027 = vpop.f32.mrb[0].mxu0
      %5028 = vdwg.mxu0
      %v5029 = vadd.f32 %v4964, %v5023
      %v5030 = vadd.f32 %v4965, %v5025
      %5031 = vrot.lane.b32.xlu0 %v4457, 14
      %v5032 = vpop.permute.xlu0 %5031
      %5033 = vrot.lane.b32.xlu0 %v4458, 14
      %v5034 = vpop.permute.xlu0 %5033
      %v5035 = vsel %vm1374, %v5032, %v5034
      %v5038 = vsel %vm699, 0, %v5032
      %v5040 = vsel %vm999, %v5038, 0
      %v5041 = vsel %vm1000, %v5035, 0
      %s5042 = scalar_lea.vmem %s5, 36
      %v5043 = vld [vmem:[%s5042] sm:$0x7]
      %v5045 = vsel %vm699, %v5043, 0
      %v5048 = vsel %vm623, %v5040, 0
      %v5051 = vsel %vm623, %v5041, 0
      %5053 = vmatprep.subr.bf16.mxu0 %v5051
      %5054 = vmatpush1.bf16.msra.mxu0 %v5048
      %5055 = vmatprep.subr.bf16.mxu0 0
      %5056 = vmatpush1.bf16.msra.mxu0 0
      %5057 = vmatprep.subr.bf16.mxu0 0
      %5058 = vmatpush1.bf16.msra.mxu0 0
      %5059 = vmatprep.subr.bf16.mxu0 0
      %5060 = vmatpush1.bf16.msra.mxu0 0
      %5061 = vmatprep.subr.bf16.mxu0 0
      %5062 = vmatpush1.bf16.msra.mxu0 0
      %5063 = vmatprep.subr.bf16.mxu0 0
      %5064 = vmatpush1.bf16.msra.mxu0 0
      %5065 = vmatprep.subr.bf16.mxu0 0
      %5066 = vmatpush1.bf16.msra.mxu0 0
      %5067 = vmatprep.subr.bf16.mxu0 0
      %5068 = vmatpush1.bf16.msra.mxu0 0
      %5069 = vmatprep.subr.bf16.mxu0 0
      %5070 = vmatpush1.bf16.msra.mxu0 0
      %5071 = vmatprep.subr.bf16.mxu0 0
      %5072 = vmatpush1.bf16.msra.mxu0 0
      %5073 = vmatprep.subr.bf16.mxu0 0
      %5074 = vmatpush1.bf16.msra.mxu0 0
      %5075 = vmatprep.subr.bf16.mxu0 0
      %5076 = vmatpush1.bf16.msra.mxu0 0
      %5077 = vmatprep.subr.bf16.mxu0 0
      %5078 = vmatpush1.bf16.msra.mxu0 0
      %5079 = vmatprep.subr.bf16.mxu0 0
      %5080 = vmatpush1.bf16.msra.mxu0 0
      %5081 = vmatprep.subr.bf16.mxu0 0
      %5082 = vmatpush1.bf16.msra.mxu0 0
      %5083 = vmatprep.subr.bf16.mxu0 0
      %5084 = vmatpush1.bf16.msra.mxu0 0
      %5085 = vmatprep.mubr.bf16.mxu0 0
      %5086 = vmatmul.mubr.bf16.gmra.mrb[0].mxu0 %v5045
      %v5087 = vpop.f32.mrb[0].mxu0
      %v5088 = vadd.f32 0.0, %v5087
      %v5089 = vpop.f32.mrb[0].mxu0
      %v5090 = vadd.f32 0.0, %v5089
      %v5091 = vpop.f32.mrb[0].mxu0
      %v5092 = vpop.f32.mrb[0].mxu0
      %5093 = vdwg.mxu0
      %v5094 = vadd.f32 %v5029, %v5088
      %v5095 = vadd.f32 %v5030, %v5090
      %5096 = vrot.lane.b32.xlu0 %v4457, 2
      %v5097 = vpop.permute.xlu0 %5096
      %5098 = vrot.lane.b32.xlu0 %v4458, 2
      %v5099 = vpop.permute.xlu0 %5098
      %v5100 = vsel %vm1450, %v5097, %v5099
      %v5103 = vsel %vm1453, 0, %v5097
      %v5105 = vsel %vm656, %v5103, 0
      %v5106 = vsel %vm657, %v5100, 0
      %s5107 = scalar_lea.vmem %s5, 40
      %v5108 = vld [vmem:[%s5107] sm:$0x7]
      %v5110 = vsel %vm699, %v5108, 0
      %v5113 = vsel %vm623, %v5105, 0
      %v5116 = vsel %vm623, %v5106, 0
      %5118 = vmatprep.subr.bf16.mxu0 %v5116
      %5119 = vmatpush1.bf16.msra.mxu0 %v5113
      %5120 = vmatprep.subr.bf16.mxu0 0
      %5121 = vmatpush1.bf16.msra.mxu0 0
      %5122 = vmatprep.subr.bf16.mxu0 0
      %5123 = vmatpush1.bf16.msra.mxu0 0
      %5124 = vmatprep.subr.bf16.mxu0 0
      %5125 = vmatpush1.bf16.msra.mxu0 0
      %5126 = vmatprep.subr.bf16.mxu0 0
      %5127 = vmatpush1.bf16.msra.mxu0 0
      %5128 = vmatprep.subr.bf16.mxu0 0
      %5129 = vmatpush1.bf16.msra.mxu0 0
      %5130 = vmatprep.subr.bf16.mxu0 0
      %5131 = vmatpush1.bf16.msra.mxu0 0
      %5132 = vmatprep.subr.bf16.mxu0 0
      %5133 = vmatpush1.bf16.msra.mxu0 0
      %5134 = vmatprep.subr.bf16.mxu0 0
      %5135 = vmatpush1.bf16.msra.mxu0 0
      %5136 = vmatprep.subr.bf16.mxu0 0
      %5137 = vmatpush1.bf16.msra.mxu0 0
      %5138 = vmatprep.subr.bf16.mxu0 0
      %5139 = vmatpush1.bf16.msra.mxu0 0
      %5140 = vmatprep.subr.bf16.mxu0 0
      %5141 = vmatpush1.bf16.msra.mxu0 0
      %5142 = vmatprep.subr.bf16.mxu0 0
      %5143 = vmatpush1.bf16.msra.mxu0 0
      %5144 = vmatprep.subr.bf16.mxu0 0
      %5145 = vmatpush1.bf16.msra.mxu0 0
      %5146 = vmatprep.subr.bf16.mxu0 0
      %5147 = vmatpush1.bf16.msra.mxu0 0
      %5148 = vmatprep.subr.bf16.mxu0 0
      %5149 = vmatpush1.bf16.msra.mxu0 0
      %5150 = vmatprep.mubr.bf16.mxu0 0
      %5151 = vmatmul.mubr.bf16.gmra.mrb[0].mxu0 %v5110
      %v5152 = vpop.f32.mrb[0].mxu0
      %v5153 = vadd.f32 0.0, %v5152
      %v5154 = vpop.f32.mrb[0].mxu0
      %v5155 = vadd.f32 0.0, %v5154
      %v5156 = vpop.f32.mrb[0].mxu0
      %v5157 = vpop.f32.mrb[0].mxu0
      %5158 = vdwg.mxu0
      %v5159 = vadd.f32 %v5094, %v5153
      %v5160 = vadd.f32 %v5095, %v5155
      %5161 = vrot.lane.b32.xlu0 %v4457, 1
      %v5162 = vpop.permute.xlu0 %5161
      %5163 = vrot.lane.b32.xlu0 %v4458, 1
      %v5164 = vpop.permute.xlu0 %5163
      %v5165 = vsel %vm1527, %v5162, %v5164
      %v5168 = vsel %vm1530, 0, %v5162
      %v5170 = vsel %vm687, %v5168, 0
      %v5171 = vsel %vm688, %v5165, 0
      %s5172 = scalar_lea.vmem %s5, 44
      %v5173 = vld [vmem:[%s5172] sm:$0x7]
      %v5175 = vsel %vm699, %v5173, 0
      %v5178 = vsel %vm623, %v5170, 0
      %v5181 = vsel %vm623, %v5171, 0
      %5183 = vmatprep.subr.bf16.mxu0 %v5181
      %5184 = vmatpush1.bf16.msra.mxu0 %v5178
      %5185 = vmatprep.subr.bf16.mxu0 0
      %5186 = vmatpush1.bf16.msra.mxu0 0
      %5187 = vmatprep.subr.bf16.mxu0 0
      %5188 = vmatpush1.bf16.msra.mxu0 0
      %5189 = vmatprep.subr.bf16.mxu0 0
      %5190 = vmatpush1.bf16.msra.mxu0 0
      %5191 = vmatprep.subr.bf16.mxu0 0
      %5192 = vmatpush1.bf16.msra.mxu0 0
      %5193 = vmatprep.subr.bf16.mxu0 0
      %5194 = vmatpush1.bf16.msra.mxu0 0
      %5195 = vmatprep.subr.bf16.mxu0 0
      %5196 = vmatpush1.bf16.msra.mxu0 0
      %5197 = vmatprep.subr.bf16.mxu0 0
      %5198 = vmatpush1.bf16.msra.mxu0 0
      %5199 = vmatprep.subr.bf16.mxu0 0
      %5200 = vmatpush1.bf16.msra.mxu0 0
      %5201 = vmatprep.subr.bf16.mxu0 0
      %5202 = vmatpush1.bf16.msra.mxu0 0
      %5203 = vmatprep.subr.bf16.mxu0 0
      %5204 = vmatpush1.bf16.msra.mxu0 0
      %5205 = vmatprep.subr.bf16.mxu0 0
      %5206 = vmatpush1.bf16.msra.mxu0 0
      %5207 = vmatprep.subr.bf16.mxu0 0
      %5208 = vmatpush1.bf16.msra.mxu0 0
      %5209 = vmatprep.subr.bf16.mxu0 0
      %5210 = vmatpush1.bf16.msra.mxu0 0
      %5211 = vmatprep.subr.bf16.mxu0 0
      %5212 = vmatpush1.bf16.msra.mxu0 0
      %5213 = vmatprep.subr.bf16.mxu0 0
      %5214 = vmatpush1.bf16.msra.mxu0 0
      %5215 = vmatprep.mubr.bf16.mxu0 0
      %5216 = vmatmul.mubr.bf16.gmra.mrb[0].mxu0 %v5175
      %v5217 = vpop.f32.mrb[0].mxu0
      %v5218 = vadd.f32 0.0, %v5217
      %v5219 = vpop.f32.mrb[0].mxu0
      %v5220 = vadd.f32 0.0, %v5219
      %v5221 = vpop.f32.mrb[0].mxu0
      %v5222 = vpop.f32.mrb[0].mxu0
      %5223 = vdwg.mxu0
      %v5224 = vadd.f32 %v5159, %v5218
      %v5225 = vadd.f32 %v5160, %v5220
      %s5226 = scalar_lea.vmem %s5, 48
      %v5227 = vld [vmem:[%s5226] sm:$0x7]
      %v5229 = vsel %vm699, %v5227, 0
      %v5232 = vsel %vm623, %v4457, 0
      %v5235 = vsel %vm623, %v4458, 0
      %5237 = vmatprep.subr.bf16.mxu0 %v5235
      %5238 = vmatpush1.bf16.msra.mxu0 %v5232
      %5239 = vmatprep.subr.bf16.mxu0 0
      %5240 = vmatpush1.bf16.msra.mxu0 0
      %5241 = vmatprep.subr.bf16.mxu0 0
      %5242 = vmatpush1.bf16.msra.mxu0 0
      %5243 = vmatprep.subr.bf16.mxu0 0
      %5244 = vmatpush1.bf16.msra.mxu0 0
      %5245 = vmatprep.subr.bf16.mxu0 0
      %5246 = vmatpush1.bf16.msra.mxu0 0
      %5247 = vmatprep.subr.bf16.mxu0 0
      %5248 = vmatpush1.bf16.msra.mxu0 0
      %5249 = vmatprep.subr.bf16.mxu0 0
      %5250 = vmatpush1.bf16.msra.mxu0 0
      %5251 = vmatprep.subr.bf16.mxu0 0
      %5252 = vmatpush1.bf16.msra.mxu0 0
      %5253 = vmatprep.subr.bf16.mxu0 0
      %5254 = vmatpush1.bf16.msra.mxu0 0
      %5255 = vmatprep.subr.bf16.mxu0 0
      %5256 = vmatpush1.bf16.msra.mxu0 0
      %5257 = vmatprep.subr.bf16.mxu0 0
      %5258 = vmatpush1.bf16.msra.mxu0 0
      %5259 = vmatprep.subr.bf16.mxu0 0
      %5260 = vmatpush1.bf16.msra.mxu0 0
      %5261 = vmatprep.subr.bf16.mxu0 0
      %5262 = vmatpush1.bf16.msra.mxu0 0
      %5263 = vmatprep.subr.bf16.mxu0 0
      %5264 = vmatpush1.bf16.msra.mxu0 0
      %5265 = vmatprep.subr.bf16.mxu0 0
      %5266 = vmatpush1.bf16.msra.mxu0 0
      %5267 = vmatprep.subr.bf16.mxu0 0
      %5268 = vmatpush1.bf16.msra.mxu0 0
      %5269 = vmatprep.mubr.bf16.mxu0 0
      %5270 = vmatmul.mubr.bf16.gmra.mrb[0].mxu0 %v5229
      %v5271 = vpop.f32.mrb[0].mxu0
      %v5272 = vadd.f32 0.0, %v5271
      %v5273 = vpop.f32.mrb[0].mxu0
      %v5274 = vadd.f32 0.0, %v5273
      %v5275 = vpop.f32.mrb[0].mxu0
      %v5276 = vpop.f32.mrb[0].mxu0
      %5277 = vdwg.mxu0
      %v5278 = vadd.f32 %v5224, %v5272
      %v5279 = vadd.f32 %v5225, %v5274
      %5280 = vrot.lane.b32.xlu0 %v4457, 127
      %v5281 = vpop.permute.xlu0 %5280
      %5282 = vrot.lane.b32.xlu0 %v4458, 127
      %v5283 = vpop.permute.xlu0 %5282
      %v5284 = vsel %vm1668, %v5281, %v5283
      %v5287 = vsel %vm1671, %v5283, 0
      %v5289 = vsel %vm906, %v5284, 0
      %v5290 = vsel %vm907, %v5287, 0
      %s5291 = scalar_lea.vmem %s5, 52
      %v5292 = vld [vmem:[%s5291] sm:$0x7]
      %v5294 = vsel %vm699, %v5292, 0
      %v5297 = vsel %vm623, %v5289, 0
      %v5300 = vsel %vm623, %v5290, 0
      %5302 = vmatprep.subr.bf16.mxu0 %v5300
      %5303 = vmatpush1.bf16.msra.mxu0 %v5297
      %5304 = vmatprep.subr.bf16.mxu0 0
      %5305 = vmatpush1.bf16.msra.mxu0 0
      %5306 = vmatprep.subr.bf16.mxu0 0
      %5307 = vmatpush1.bf16.msra.mxu0 0
      %5308 = vmatprep.subr.bf16.mxu0 0
      %5309 = vmatpush1.bf16.msra.mxu0 0
      %5310 = vmatprep.subr.bf16.mxu0 0
      %5311 = vmatpush1.bf16.msra.mxu0 0
      %5312 = vmatprep.subr.bf16.mxu0 0
      %5313 = vmatpush1.bf16.msra.mxu0 0
      %5314 = vmatprep.subr.bf16.mxu0 0
      %5315 = vmatpush1.bf16.msra.mxu0 0
      %5316 = vmatprep.subr.bf16.mxu0 0
      %5317 = vmatpush1.bf16.msra.mxu0 0
      %5318 = vmatprep.subr.bf16.mxu0 0
      %5319 = vmatpush1.bf16.msra.mxu0 0
      %5320 = vmatprep.subr.bf16.mxu0 0
      %5321 = vmatpush1.bf16.msra.mxu0 0
      %5322 = vmatprep.subr.bf16.mxu0 0
      %5323 = vmatpush1.bf16.msra.mxu0 0
      %5324 = vmatprep.subr.bf16.mxu0 0
      %5325 = vmatpush1.bf16.msra.mxu0 0
      %5326 = vmatprep.subr.bf16.mxu0 0
      %5327 = vmatpush1.bf16.msra.mxu0 0
      %5328 = vmatprep.subr.bf16.mxu0 0
      %5329 = vmatpush1.bf16.msra.mxu0 0
      %5330 = vmatprep.subr.bf16.mxu0 0
      %5331 = vmatpush1.bf16.msra.mxu0 0
      %5332 = vmatprep.subr.bf16.mxu0 0
      %5333 = vmatpush1.bf16.msra.mxu0 0
      %5334 = vmatprep.mubr.bf16.mxu0 0
      %5335 = vmatmul.mubr.bf16.gmra.mrb[0].mxu0 %v5294
      %v5336 = vpop.f32.mrb[0].mxu0
      %v5337 = vadd.f32 0.0, %v5336
      %v5338 = vpop.f32.mrb[0].mxu0
      %v5339 = vadd.f32 0.0, %v5338
      %v5340 = vpop.f32.mrb[0].mxu0
      %v5341 = vpop.f32.mrb[0].mxu0
      %5342 = vdwg.mxu0
      %v5343 = vadd.f32 %v5278, %v5337
      %v5344 = vadd.f32 %v5279, %v5339
      %5345 = vrot.lane.b32.xlu0 %v4457, 126
      %v5346 = vpop.permute.xlu0 %5345
      %5347 = vrot.lane.b32.xlu0 %v4458, 126
      %v5348 = vpop.permute.xlu0 %5347
      %v5349 = vsel %vm1745, %v5346, %v5348
      %v5352 = vsel %vm1748, %v5348, 0
      %v5354 = vsel %vm999, %v5349, 0
      %v5355 = vsel %vm1000, %v5352, 0
      %s5356 = scalar_lea.vmem %s5, 56
      %v5357 = vld [vmem:[%s5356] sm:$0x7]
      %v5359 = vsel %vm699, %v5357, 0
      %v5362 = vsel %vm623, %v5354, 0
      %v5365 = vsel %vm623, %v5355, 0
      %5367 = vmatprep.subr.bf16.mxu0 %v5365
      %5368 = vmatpush1.bf16.msra.mxu0 %v5362
      %5369 = vmatprep.subr.bf16.mxu0 0
      %5370 = vmatpush1.bf16.msra.mxu0 0
      %5371 = vmatprep.subr.bf16.mxu0 0
      %5372 = vmatpush1.bf16.msra.mxu0 0
      %5373 = vmatprep.subr.bf16.mxu0 0
      %5374 = vmatpush1.bf16.msra.mxu0 0
      %5375 = vmatprep.subr.bf16.mxu0 0
      %5376 = vmatpush1.bf16.msra.mxu0 0
      %5377 = vmatprep.subr.bf16.mxu0 0
      %5378 = vmatpush1.bf16.msra.mxu0 0
      %5379 = vmatprep.subr.bf16.mxu0 0
      %5380 = vmatpush1.bf16.msra.mxu0 0
      %5381 = vmatprep.subr.bf16.mxu0 0
      %5382 = vmatpush1.bf16.msra.mxu0 0
      %5383 = vmatprep.subr.bf16.mxu0 0
      %5384 = vmatpush1.bf16.msra.mxu0 0
      %5385 = vmatprep.subr.bf16.mxu0 0
      %5386 = vmatpush1.bf16.msra.mxu0 0
      %5387 = vmatprep.subr.bf16.mxu0 0
      %5388 = vmatpush1.bf16.msra.mxu0 0
      %5389 = vmatprep.subr.bf16.mxu0 0
      %5390 = vmatpush1.bf16.msra.mxu0 0
      %5391 = vmatprep.subr.bf16.mxu0 0
      %5392 = vmatpush1.bf16.msra.mxu0 0
      %5393 = vmatprep.subr.bf16.mxu0 0
      %5394 = vmatpush1.bf16.msra.mxu0 0
      %5395 = vmatprep.subr.bf16.mxu0 0
      %5396 = vmatpush1.bf16.msra.mxu0 0
      %5397 = vmatprep.subr.bf16.mxu0 0
      %5398 = vmatpush1.bf16.msra.mxu0 0
      %5399 = vmatprep.mubr.bf16.mxu0 0
      %5400 = vmatmul.mubr.bf16.gmra.mrb[0].mxu0 %v5359
      %v5401 = vpop.f32.mrb[0].mxu0
      %v5402 = vadd.f32 0.0, %v5401
      %v5403 = vpop.f32.mrb[0].mxu0
      %v5404 = vadd.f32 0.0, %v5403
      %v5405 = vpop.f32.mrb[0].mxu0
      %v5406 = vpop.f32.mrb[0].mxu0
      %5407 = vdwg.mxu0
      %v5408 = vadd.f32 %v5343, %v5402
      %v5409 = vadd.f32 %v5344, %v5404
      %5410 = vrot.lane.b32.xlu0 %v4457, 114
      %v5411 = vpop.permute.xlu0 %5410
      %5412 = vrot.lane.b32.xlu0 %v4458, 114
      %v5413 = vpop.permute.xlu0 %5412
      %v5414 = vsel %vm1822, %v5411, %v5413
      %v5417 = vsel %vm1825, %v5413, 0
      %v5419 = vsel %vm656, %v5414, 0
      %v5420 = vsel %vm657, %v5417, 0
      %s5421 = scalar_lea.vmem %s5, 60
      %v5422 = vld [vmem:[%s5421] sm:$0x7]
      %v5424 = vsel %vm699, %v5422, 0
      %v5427 = vsel %vm623, %v5419, 0
      %v5430 = vsel %vm623, %v5420, 0
      %5432 = vmatprep.subr.bf16.mxu0 %v5430
      %5433 = vmatpush1.bf16.msra.mxu0 %v5427
      %5434 = vmatprep.subr.bf16.mxu0 0
      %5435 = vmatpush1.bf16.msra.mxu0 0
      %5436 = vmatprep.subr.bf16.mxu0 0
      %5437 = vmatpush1.bf16.msra.mxu0 0
      %5438 = vmatprep.subr.bf16.mxu0 0
      %5439 = vmatpush1.bf16.msra.mxu0 0
      %5440 = vmatprep.subr.bf16.mxu0 0
      %5441 = vmatpush1.bf16.msra.mxu0 0
      %5442 = vmatprep.subr.bf16.mxu0 0
      %5443 = vmatpush1.bf16.msra.mxu0 0
      %5444 = vmatprep.subr.bf16.mxu0 0
      %5445 = vmatpush1.bf16.msra.mxu0 0
      %5446 = vmatprep.subr.bf16.mxu0 0
      %5447 = vmatpush1.bf16.msra.mxu0 0
      %5448 = vmatprep.subr.bf16.mxu0 0
      %5449 = vmatpush1.bf16.msra.mxu0 0
      %5450 = vmatprep.subr.bf16.mxu0 0
      %5451 = vmatpush1.bf16.msra.mxu0 0
      %5452 = vmatprep.subr.bf16.mxu0 0
      %5453 = vmatpush1.bf16.msra.mxu0 0
      %5454 = vmatprep.subr.bf16.mxu0 0
      %5455 = vmatpush1.bf16.msra.mxu0 0
      %5456 = vmatprep.subr.bf16.mxu0 0
      %5457 = vmatpush1.bf16.msra.mxu0 0
      %5458 = vmatprep.subr.bf16.mxu0 0
      %5459 = vmatpush1.bf16.msra.mxu0 0
      %5460 = vmatprep.subr.bf16.mxu0 0
      %5461 = vmatpush1.bf16.msra.mxu0 0
      %5462 = vmatprep.subr.bf16.mxu0 0
      %5463 = vmatpush1.bf16.msra.mxu0 0
      %5464 = vmatprep.mubr.bf16.mxu0 0
      %5465 = vmatmul.mubr.bf16.gmra.mrb[0].mxu0 %v5424
      %v5466 = vpop.f32.mrb[0].mxu0
      %v5467 = vadd.f32 0.0, %v5466
      %v5468 = vpop.f32.mrb[0].mxu0
      %v5469 = vadd.f32 0.0, %v5468
      %v5470 = vpop.f32.mrb[0].mxu0
      %v5471 = vpop.f32.mrb[0].mxu0
      %5472 = vdwg.mxu0
      %v5473 = vadd.f32 %v5408, %v5467
      %v5474 = vadd.f32 %v5409, %v5469
      %5475 = vrot.lane.b32.xlu0 %v4457, 113
      %v5476 = vpop.permute.xlu0 %5475
      %5477 = vrot.lane.b32.xlu0 %v4458, 113
      %v5478 = vpop.permute.xlu0 %5477
      %v5479 = vsel %vm1899, %v5476, %v5478
      %v5482 = vsel %vm1902, %v5478, 0
      %v5484 = vsel %vm687, %v5479, 0
      %v5485 = vsel %vm688, %v5482, 0
      %s5486 = scalar_lea.vmem %s5, 64
      %v5487 = vld [vmem:[%s5486] sm:$0x7]
      %v5489 = vsel %vm699, %v5487, 0
      %v5492 = vsel %vm623, %v5484, 0
      %v5495 = vsel %vm623, %v5485, 0
      %5497 = vmatprep.subr.bf16.mxu0 %v5495
      %5498 = vmatpush1.bf16.msra.mxu0 %v5492
      %5499 = vmatprep.subr.bf16.mxu0 0
      %5500 = vmatpush1.bf16.msra.mxu0 0
      %5501 = vmatprep.subr.bf16.mxu0 0
      %5502 = vmatpush1.bf16.msra.mxu0 0
      %5503 = vmatprep.subr.bf16.mxu0 0
      %5504 = vmatpush1.bf16.msra.mxu0 0
      %5505 = vmatprep.subr.bf16.mxu0 0
      %5506 = vmatpush1.bf16.msra.mxu0 0
      %5507 = vmatprep.subr.bf16.mxu0 0
      %5508 = vmatpush1.bf16.msra.mxu0 0
      %5509 = vmatprep.subr.bf16.mxu0 0
      %5510 = vmatpush1.bf16.msra.mxu0 0
      %5511 = vmatprep.subr.bf16.mxu0 0
      %5512 = vmatpush1.bf16.msra.mxu0 0
      %5513 = vmatprep.subr.bf16.mxu0 0
      %5514 = vmatpush1.bf16.msra.mxu0 0
      %5515 = vmatprep.subr.bf16.mxu0 0
      %5516 = vmatpush1.bf16.msra.mxu0 0
      %5517 = vmatprep.subr.bf16.mxu0 0
      %5518 = vmatpush1.bf16.msra.mxu0 0
      %5519 = vmatprep.subr.bf16.mxu0 0
      %5520 = vmatpush1.bf16.msra.mxu0 0
      %5521 = vmatprep.subr.bf16.mxu0 0
      %5522 = vmatpush1.bf16.msra.mxu0 0
      %5523 = vmatprep.subr.bf16.mxu0 0
      %5524 = vmatpush1.bf16.msra.mxu0 0
      %5525 = vmatprep.subr.bf16.mxu0 0
      %5526 = vmatpush1.bf16.msra.mxu0 0
      %5527 = vmatprep.subr.bf16.mxu0 0
      %5528 = vmatpush1.bf16.msra.mxu0 0
      %5529 = vmatprep.mubr.bf16.mxu0 0
      %5530 = vmatmul.mubr.bf16.gmra.mrb[0].mxu0 %v5489
      %v5531 = vpop.f32.mrb[0].mxu0
      %v5532 = vadd.f32 0.0, %v5531
      %v5533 = vpop.f32.mrb[0].mxu0
      %v5534 = vadd.f32 0.0, %v5533
      %v5535 = vpop.f32.mrb[0].mxu0
      %v5536 = vpop.f32.mrb[0].mxu0
      %5537 = vdwg.mxu0
      %v5538 = vadd.f32 %v5473, %v5532
      %v5539 = vadd.f32 %v5474, %v5534
      %5540 = vrot.lane.b32.xlu0 %v4457, 112
      %v5541 = vpop.permute.xlu0 %5540
      %5542 = vrot.lane.b32.xlu0 %v4458, 112
      %v5543 = vpop.permute.xlu0 %5542
      %v5544 = vsel %vm1976, %v5541, %v5543
      %v5546 = vsel %vm1978, %v5543, 0
      %s5547 = scalar_lea.vmem %s5, 68
      %v5548 = vld [vmem:[%s5547] sm:$0x7]
      %v5550 = vsel %vm699, %v5548, 0
      %v5553 = vsel %vm623, %v5544, 0
      %v5555 = vsel %vm623, %v5546, 0
      %5557 = vmatprep.subr.bf16.mxu0 %v5555
      %5558 = vmatpush1.bf16.msra.mxu0 %v5553
      %5559 = vmatprep.subr.bf16.mxu0 0
      %5560 = vmatpush1.bf16.msra.mxu0 0
      %5561 = vmatprep.subr.bf16.mxu0 0
      %5562 = vmatpush1.bf16.msra.mxu0 0
      %5563 = vmatprep.subr.bf16.mxu0 0
      %5564 = vmatpush1.bf16.msra.mxu0 0
      %5565 = vmatprep.subr.bf16.mxu0 0
      %5566 = vmatpush1.bf16.msra.mxu0 0
      %5567 = vmatprep.subr.bf16.mxu0 0
      %5568 = vmatpush1.bf16.msra.mxu0 0
      %5569 = vmatprep.subr.bf16.mxu0 0
      %5570 = vmatpush1.bf16.msra.mxu0 0
      %5571 = vmatprep.subr.bf16.mxu0 0
      %5572 = vmatpush1.bf16.msra.mxu0 0
      %5573 = vmatprep.subr.bf16.mxu0 0
      %5574 = vmatpush1.bf16.msra.mxu0 0
      %5575 = vmatprep.subr.bf16.mxu0 0
      %5576 = vmatpush1.bf16.msra.mxu0 0
      %5577 = vmatprep.subr.bf16.mxu0 0
      %5578 = vmatpush1.bf16.msra.mxu0 0
      %5579 = vmatprep.subr.bf16.mxu0 0
      %5580 = vmatpush1.bf16.msra.mxu0 0
      %5581 = vmatprep.subr.bf16.mxu0 0
      %5582 = vmatpush1.bf16.msra.mxu0 0
      %5583 = vmatprep.subr.bf16.mxu0 0
      %5584 = vmatpush1.bf16.msra.mxu0 0
      %5585 = vmatprep.subr.bf16.mxu0 0
      %5586 = vmatpush1.bf16.msra.mxu0 0
      %5587 = vmatprep.subr.bf16.mxu0 0
      %5588 = vmatpush1.bf16.msra.mxu0 0
      %5589 = vmatprep.mubr.bf16.mxu0 0
      %5590 = vmatmul.mubr.bf16.gmra.mrb[0].mxu0 %v5550
      %v5591 = vpop.f32.mrb[0].mxu0
      %v5592 = vadd.f32 0.0, %v5591
      %v5593 = vpop.f32.mrb[0].mxu0
      %v5594 = vadd.f32 0.0, %v5593
      %v5595 = vpop.f32.mrb[0].mxu0
      %v5596 = vpop.f32.mrb[0].mxu0
      %5597 = vdwg.mxu0
      %v5598 = vadd.f32 %v5538, %v5592
      %v5599 = vadd.f32 %v5539, %v5594
      %5600 = vrot.lane.b32.xlu0 %v4457, 111
      %v5601 = vpop.permute.xlu0 %5600
      %5602 = vrot.lane.b32.xlu0 %v4458, 111
      %v5603 = vpop.permute.xlu0 %5602
      %v5604 = vsel %vm2048, %v5601, %v5603
      %v5607 = vsel %vm2051, %v5603, 0
      %v5609 = vsel %vm906, %v5604, 0
      %v5610 = vsel %vm907, %v5607, 0
      %s5611 = scalar_lea.vmem %s5, 72
      %v5612 = vld [vmem:[%s5611] sm:$0x7]
      %v5614 = vsel %vm699, %v5612, 0
      %v5617 = vsel %vm623, %v5609, 0
      %v5620 = vsel %vm623, %v5610, 0
      %5622 = vmatprep.subr.bf16.mxu0 %v5620
      %5623 = vmatpush1.bf16.msra.mxu0 %v5617
      %5624 = vmatprep.subr.bf16.mxu0 0
      %5625 = vmatpush1.bf16.msra.mxu0 0
      %5626 = vmatprep.subr.bf16.mxu0 0
      %5627 = vmatpush1.bf16.msra.mxu0 0
      %5628 = vmatprep.subr.bf16.mxu0 0
      %5629 = vmatpush1.bf16.msra.mxu0 0
      %5630 = vmatprep.subr.bf16.mxu0 0
      %5631 = vmatpush1.bf16.msra.mxu0 0
      %5632 = vmatprep.subr.bf16.mxu0 0
      %5633 = vmatpush1.bf16.msra.mxu0 0
      %5634 = vmatprep.subr.bf16.mxu0 0
      %5635 = vmatpush1.bf16.msra.mxu0 0
      %5636 = vmatprep.subr.bf16.mxu0 0
      %5637 = vmatpush1.bf16.msra.mxu0 0
      %5638 = vmatprep.subr.bf16.mxu0 0
      %5639 = vmatpush1.bf16.msra.mxu0 0
      %5640 = vmatprep.subr.bf16.mxu0 0
      %5641 = vmatpush1.bf16.msra.mxu0 0
      %5642 = vmatprep.subr.bf16.mxu0 0
      %5643 = vmatpush1.bf16.msra.mxu0 0
      %5644 = vmatprep.subr.bf16.mxu0 0
      %5645 = vmatpush1.bf16.msra.mxu0 0
      %5646 = vmatprep.subr.bf16.mxu0 0
      %5647 = vmatpush1.bf16.msra.mxu0 0
      %5648 = vmatprep.subr.bf16.mxu0 0
      %5649 = vmatpush1.bf16.msra.mxu0 0
      %5650 = vmatprep.subr.bf16.mxu0 0
      %5651 = vmatpush1.bf16.msra.mxu0 0
      %5652 = vmatprep.subr.bf16.mxu0 0
      %5653 = vmatpush1.bf16.msra.mxu0 0
      %5654 = vmatprep.mubr.bf16.mxu0 0
      %5655 = vmatmul.mubr.bf16.gmra.mrb[0].mxu0 %v5614
      %v5656 = vpop.f32.mrb[0].mxu0
      %v5657 = vadd.f32 0.0, %v5656
      %v5658 = vpop.f32.mrb[0].mxu0
      %v5659 = vadd.f32 0.0, %v5658
      %v5660 = vpop.f32.mrb[0].mxu0
      %v5661 = vpop.f32.mrb[0].mxu0
      %5662 = vdwg.mxu0
      %v5663 = vadd.f32 %v5598, %v5657
      %v5664 = vadd.f32 %v5599, %v5659
      %5665 = vrot.lane.b32.xlu0 %v4457, 110
      %v5666 = vpop.permute.xlu0 %5665
      %5667 = vrot.lane.b32.xlu0 %v4458, 110
      %v5668 = vpop.permute.xlu0 %5667
      %v5669 = vsel %vm2125, %v5666, %v5668
      %v5672 = vsel %vm2128, %v5668, 0
      %v5674 = vsel %vm999, %v5669, 0
      %v5675 = vsel %vm1000, %v5672, 0
      %s5676 = scalar_lea.vmem %s5, 76
      %v5677 = vld [vmem:[%s5676] sm:$0x7]
      %v5679 = vsel %vm699, %v5677, 0
      %v5682 = vsel %vm623, %v5674, 0
      %v5685 = vsel %vm623, %v5675, 0
      %5687 = vmatprep.subr.bf16.mxu0 %v5685
      %5688 = vmatpush1.bf16.msra.mxu0 %v5682
      %5689 = vmatprep.subr.bf16.mxu0 0
      %5690 = vmatpush1.bf16.msra.mxu0 0
      %5691 = vmatprep.subr.bf16.mxu0 0
      %5692 = vmatpush1.bf16.msra.mxu0 0
      %5693 = vmatprep.subr.bf16.mxu0 0
      %5694 = vmatpush1.bf16.msra.mxu0 0
      %5695 = vmatprep.subr.bf16.mxu0 0
      %5696 = vmatpush1.bf16.msra.mxu0 0
      %5697 = vmatprep.subr.bf16.mxu0 0
      %5698 = vmatpush1.bf16.msra.mxu0 0
      %5699 = vmatprep.subr.bf16.mxu0 0
      %5700 = vmatpush1.bf16.msra.mxu0 0
      %5701 = vmatprep.subr.bf16.mxu0 0
      %5702 = vmatpush1.bf16.msra.mxu0 0
      %5703 = vmatprep.subr.bf16.mxu0 0
      %5704 = vmatpush1.bf16.msra.mxu0 0
      %5705 = vmatprep.subr.bf16.mxu0 0
      %5706 = vmatpush1.bf16.msra.mxu0 0
      %5707 = vmatprep.subr.bf16.mxu0 0
      %5708 = vmatpush1.bf16.msra.mxu0 0
      %5709 = vmatprep.subr.bf16.mxu0 0
      %5710 = vmatpush1.bf16.msra.mxu0 0
      %5711 = vmatprep.subr.bf16.mxu0 0
      %5712 = vmatpush1.bf16.msra.mxu0 0
      %5713 = vmatprep.subr.bf16.mxu0 0
      %5714 = vmatpush1.bf16.msra.mxu0 0
      %5715 = vmatprep.subr.bf16.mxu0 0
      %5716 = vmatpush1.bf16.msra.mxu0 0
      %5717 = vmatprep.subr.bf16.mxu0 0
      %5718 = vmatpush1.bf16.msra.mxu0 0
      %5719 = vmatprep.mubr.bf16.mxu0 0
      %5720 = vmatmul.mubr.bf16.gmra.mrb[0].mxu0 %v5679
      %v5721 = vpop.f32.mrb[0].mxu0
      %v5722 = vadd.f32 0.0, %v5721
      %v5723 = vpop.f32.mrb[0].mxu0
      %v5724 = vadd.f32 0.0, %v5723
      %v5725 = vpop.f32.mrb[0].mxu0
      %v5726 = vpop.f32.mrb[0].mxu0
      %5727 = vdwg.mxu0
      %v5728 = vadd.f32 %v5663, %v5722
      %v5729 = vadd.f32 %v5664, %v5724
      %5730 = vrot.lane.b32.xlu0 %v4457, 98
      %v5731 = vpop.permute.xlu0 %5730
      %5732 = vrot.lane.b32.xlu0 %v4458, 98
      %v5733 = vpop.permute.xlu0 %5732
      %v5734 = vsel %vm2202, %v5731, %v5733
      %v5737 = vsel %vm2205, %v5733, 0
      %v5739 = vsel %vm656, %v5734, 0
      %v5740 = vsel %vm657, %v5737, 0
      %s5741 = scalar_lea.vmem %s5, 80
      %v5742 = vld [vmem:[%s5741] sm:$0x7]
      %v5744 = vsel %vm699, %v5742, 0
      %v5747 = vsel %vm623, %v5739, 0
      %v5750 = vsel %vm623, %v5740, 0
      %5752 = vmatprep.subr.bf16.mxu0 %v5750
      %5753 = vmatpush1.bf16.msra.mxu0 %v5747
      %5754 = vmatprep.subr.bf16.mxu0 0
      %5755 = vmatpush1.bf16.msra.mxu0 0
      %5756 = vmatprep.subr.bf16.mxu0 0
      %5757 = vmatpush1.bf16.msra.mxu0 0
      %5758 = vmatprep.subr.bf16.mxu0 0
      %5759 = vmatpush1.bf16.msra.mxu0 0
      %5760 = vmatprep.subr.bf16.mxu0 0
      %5761 = vmatpush1.bf16.msra.mxu0 0
      %5762 = vmatprep.subr.bf16.mxu0 0
      %5763 = vmatpush1.bf16.msra.mxu0 0
      %5764 = vmatprep.subr.bf16.mxu0 0
      %5765 = vmatpush1.bf16.msra.mxu0 0
      %5766 = vmatprep.subr.bf16.mxu0 0
      %5767 = vmatpush1.bf16.msra.mxu0 0
      %5768 = vmatprep.subr.bf16.mxu0 0
      %5769 = vmatpush1.bf16.msra.mxu0 0
      %5770 = vmatprep.subr.bf16.mxu0 0
      %5771 = vmatpush1.bf16.msra.mxu0 0
      %5772 = vmatprep.subr.bf16.mxu0 0
      %5773 = vmatpush1.bf16.msra.mxu0 0
      %5774 = vmatprep.subr.bf16.mxu0 0
      %5775 = vmatpush1.bf16.msra.mxu0 0
      %5776 = vmatprep.subr.bf16.mxu0 0
      %5777 = vmatpush1.bf16.msra.mxu0 0
      %5778 = vmatprep.subr.bf16.mxu0 0
      %5779 = vmatpush1.bf16.msra.mxu0 0
      %5780 = vmatprep.subr.bf16.mxu0 0
      %5781 = vmatpush1.bf16.msra.mxu0 0
      %5782 = vmatprep.subr.bf16.mxu0 0
      %5783 = vmatpush1.bf16.msra.mxu0 0
      %5784 = vmatprep.mubr.bf16.mxu0 0
      %5785 = vmatmul.mubr.bf16.gmra.mrb[0].mxu0 %v5744
      %v5786 = vpop.f32.mrb[0].mxu0
      %v5787 = vadd.f32 0.0, %v5786
      %v5788 = vpop.f32.mrb[0].mxu0
      %v5789 = vadd.f32 0.0, %v5788
      %v5790 = vpop.f32.mrb[0].mxu0
      %v5791 = vpop.f32.mrb[0].mxu0
      %5792 = vdwg.mxu0
      %v5793 = vadd.f32 %v5728, %v5787
      %v5794 = vadd.f32 %v5729, %v5789
      %5795 = vrot.lane.b32.xlu0 %v4457, 97
      %v5796 = vpop.permute.xlu0 %5795
      %5797 = vrot.lane.b32.xlu0 %v4458, 97
      %v5798 = vpop.permute.xlu0 %5797
      %v5799 = vsel %vm2279, %v5796, %v5798
      %v5802 = vsel %vm2282, %v5798, 0
      %v5804 = vsel %vm687, %v5799, 0
      %v5805 = vsel %vm688, %v5802, 0
      %s5806 = scalar_lea.vmem %s5, 84
      %v5807 = vld [vmem:[%s5806] sm:$0x7]
      %v5809 = vsel %vm699, %v5807, 0
      %v5812 = vsel %vm623, %v5804, 0
      %v5815 = vsel %vm623, %v5805, 0
      %5817 = vmatprep.subr.bf16.mxu0 %v5815
      %5818 = vmatpush1.bf16.msra.mxu0 %v5812
      %5819 = vmatprep.subr.bf16.mxu0 0
      %5820 = vmatpush1.bf16.msra.mxu0 0
      %5821 = vmatprep.subr.bf16.mxu0 0
      %5822 = vmatpush1.bf16.msra.mxu0 0
      %5823 = vmatprep.subr.bf16.mxu0 0
      %5824 = vmatpush1.bf16.msra.mxu0 0
      %5825 = vmatprep.subr.bf16.mxu0 0
      %5826 = vmatpush1.bf16.msra.mxu0 0
      %5827 = vmatprep.subr.bf16.mxu0 0
      %5828 = vmatpush1.bf16.msra.mxu0 0
      %5829 = vmatprep.subr.bf16.mxu0 0
      %5830 = vmatpush1.bf16.msra.mxu0 0
      %5831 = vmatprep.subr.bf16.mxu0 0
      %5832 = vmatpush1.bf16.msra.mxu0 0
      %5833 = vmatprep.subr.bf16.mxu0 0
      %5834 = vmatpush1.bf16.msra.mxu0 0
      %5835 = vmatprep.subr.bf16.mxu0 0
      %5836 = vmatpush1.bf16.msra.mxu0 0
      %5837 = vmatprep.subr.bf16.mxu0 0
      %5838 = vmatpush1.bf16.msra.mxu0 0
      %5839 = vmatprep.subr.bf16.mxu0 0
      %5840 = vmatpush1.bf16.msra.mxu0 0
      %5841 = vmatprep.subr.bf16.mxu0 0
      %5842 = vmatpush1.bf16.msra.mxu0 0
      %5843 = vmatprep.subr.bf16.mxu0 0
      %5844 = vmatpush1.bf16.msra.mxu0 0
      %5845 = vmatprep.subr.bf16.mxu0 0
      %5846 = vmatpush1.bf16.msra.mxu0 0
      %5847 = vmatprep.subr.bf16.mxu0 0
      %5848 = vmatpush1.bf16.msra.mxu0 0
      %5849 = vmatprep.mubr.bf16.mxu0 0
      %5850 = vmatmul.mubr.bf16.gmra.mrb[0].mxu0 %v5809
      %v5851 = vpop.f32.mrb[0].mxu0
      %v5852 = vadd.f32 0.0, %v5851
      %v5853 = vpop.f32.mrb[0].mxu0
      %v5854 = vadd.f32 0.0, %v5853
      %v5855 = vpop.f32.mrb[0].mxu0
      %v5856 = vpop.f32.mrb[0].mxu0
      %5857 = vdwg.mxu0
      %v5858 = vadd.f32 %v5793, %v5852
      %v5859 = vadd.f32 %v5794, %v5854
      %5860 = vrot.lane.b32.xlu0 %v4457, 96
      %v5861 = vpop.permute.xlu0 %5860
      %5862 = vrot.lane.b32.xlu0 %v4458, 96
      %v5863 = vpop.permute.xlu0 %5862
      %v5864 = vsel %vm2356, %v5861, %v5863
      %v5866 = vsel %vm2358, %v5863, 0
      %s5867 = scalar_lea.vmem %s5, 88
      %v5868 = vld [vmem:[%s5867] sm:$0x7]
      %v5870 = vsel %vm699, %v5868, 0
      %v5873 = vsel %vm623, %v5864, 0
      %v5875 = vsel %vm623, %v5866, 0
      %5877 = vmatprep.subr.bf16.mxu0 %v5875
      %5878 = vmatpush1.bf16.msra.mxu0 %v5873
      %5879 = vmatprep.subr.bf16.mxu0 0
      %5880 = vmatpush1.bf16.msra.mxu0 0
      %5881 = vmatprep.subr.bf16.mxu0 0
      %5882 = vmatpush1.bf16.msra.mxu0 0
      %5883 = vmatprep.subr.bf16.mxu0 0
      %5884 = vmatpush1.bf16.msra.mxu0 0
      %5885 = vmatprep.subr.bf16.mxu0 0
      %5886 = vmatpush1.bf16.msra.mxu0 0
      %5887 = vmatprep.subr.bf16.mxu0 0
      %5888 = vmatpush1.bf16.msra.mxu0 0
      %5889 = vmatprep.subr.bf16.mxu0 0
      %5890 = vmatpush1.bf16.msra.mxu0 0
      %5891 = vmatprep.subr.bf16.mxu0 0
      %5892 = vmatpush1.bf16.msra.mxu0 0
      %5893 = vmatprep.subr.bf16.mxu0 0
      %5894 = vmatpush1.bf16.msra.mxu0 0
      %5895 = vmatprep.subr.bf16.mxu0 0
      %5896 = vmatpush1.bf16.msra.mxu0 0
      %5897 = vmatprep.subr.bf16.mxu0 0
      %5898 = vmatpush1.bf16.msra.mxu0 0
      %5899 = vmatprep.subr.bf16.mxu0 0
      %5900 = vmatpush1.bf16.msra.mxu0 0
      %5901 = vmatprep.subr.bf16.mxu0 0
      %5902 = vmatpush1.bf16.msra.mxu0 0
      %5903 = vmatprep.subr.bf16.mxu0 0
      %5904 = vmatpush1.bf16.msra.mxu0 0
      %5905 = vmatprep.subr.bf16.mxu0 0
      %5906 = vmatpush1.bf16.msra.mxu0 0
      %5907 = vmatprep.subr.bf16.mxu0 0
      %5908 = vmatpush1.bf16.msra.mxu0 0
      %5909 = vmatprep.mubr.bf16.mxu0 0
      %5910 = vmatmul.mubr.bf16.gmra.mrb[0].mxu0 %v5870
      %v5911 = vpop.f32.mrb[0].mxu0
      %v5912 = vadd.f32 0.0, %v5911
      %v5913 = vpop.f32.mrb[0].mxu0
      %v5914 = vadd.f32 0.0, %v5913
      %v5915 = vpop.f32.mrb[0].mxu0
      %v5916 = vpop.f32.mrb[0].mxu0
      %5917 = vdwg.mxu0
      %v5918 = vadd.f32 %v5858, %v5912
      %v5919 = vadd.f32 %v5859, %v5914
      %5920 = vrot.lane.b32.xlu0 %v4457, 95
      %v5921 = vpop.permute.xlu0 %5920
      %5922 = vrot.lane.b32.xlu0 %v4458, 95
      %v5923 = vpop.permute.xlu0 %5922
      %v5924 = vsel %vm2428, %v5921, %v5923
      %v5927 = vsel %vm2431, %v5923, 0
      %v5929 = vsel %vm906, %v5924, 0
      %v5930 = vsel %vm907, %v5927, 0
      %s5931 = scalar_lea.vmem %s5, 92
      %v5932 = vld [vmem:[%s5931] sm:$0x7]
      %v5934 = vsel %vm699, %v5932, 0
      %v5937 = vsel %vm623, %v5929, 0
      %v5940 = vsel %vm623, %v5930, 0
      %5942 = vmatprep.subr.bf16.mxu0 %v5940
      %5943 = vmatpush1.bf16.msra.mxu0 %v5937
      %5944 = vmatprep.subr.bf16.mxu0 0
      %5945 = vmatpush1.bf16.msra.mxu0 0
      %5946 = vmatprep.subr.bf16.mxu0 0
      %5947 = vmatpush1.bf16.msra.mxu0 0
      %5948 = vmatprep.subr.bf16.mxu0 0
      %5949 = vmatpush1.bf16.msra.mxu0 0
      %5950 = vmatprep.subr.bf16.mxu0 0
      %5951 = vmatpush1.bf16.msra.mxu0 0
      %5952 = vmatprep.subr.bf16.mxu0 0
      %5953 = vmatpush1.bf16.msra.mxu0 0
      %5954 = vmatprep.subr.bf16.mxu0 0
      %5955 = vmatpush1.bf16.msra.mxu0 0
      %5956 = vmatprep.subr.bf16.mxu0 0
      %5957 = vmatpush1.bf16.msra.mxu0 0
      %5958 = vmatprep.subr.bf16.mxu0 0
      %5959 = vmatpush1.bf16.msra.mxu0 0
      %5960 = vmatprep.subr.bf16.mxu0 0
      %5961 = vmatpush1.bf16.msra.mxu0 0
      %5962 = vmatprep.subr.bf16.mxu0 0
      %5963 = vmatpush1.bf16.msra.mxu0 0
      %5964 = vmatprep.subr.bf16.mxu0 0
      %5965 = vmatpush1.bf16.msra.mxu0 0
      %5966 = vmatprep.subr.bf16.mxu0 0
      %5967 = vmatpush1.bf16.msra.mxu0 0
      %5968 = vmatprep.subr.bf16.mxu0 0
      %5969 = vmatpush1.bf16.msra.mxu0 0
      %5970 = vmatprep.subr.bf16.mxu0 0
      %5971 = vmatpush1.bf16.msra.mxu0 0
      %5972 = vmatprep.subr.bf16.mxu0 0
      %5973 = vmatpush1.bf16.msra.mxu0 0
      %5974 = vmatprep.mubr.bf16.mxu0 0
      %5975 = vmatmul.mubr.bf16.gmra.mrb[0].mxu0 %v5934
      %v5976 = vpop.f32.mrb[0].mxu0
      %v5977 = vadd.f32 0.0, %v5976
      %v5978 = vpop.f32.mrb[0].mxu0
      %v5979 = vadd.f32 0.0, %v5978
      %v5980 = vpop.f32.mrb[0].mxu0
      %v5981 = vpop.f32.mrb[0].mxu0
      %5982 = vdwg.mxu0
      %v5983 = vadd.f32 %v5918, %v5977
      %v5984 = vadd.f32 %v5919, %v5979
      %5985 = vrot.lane.b32.xlu0 %v4457, 94
      %v5986 = vpop.permute.xlu0 %5985
      %5987 = vrot.lane.b32.xlu0 %v4458, 94
      %v5988 = vpop.permute.xlu0 %5987
      %v5989 = vsel %vm2505, %v5986, %v5988
      %v5992 = vsel %vm2508, %v5988, 0
      %v5994 = vsel %vm999, %v5989, 0
      %v5995 = vsel %vm1000, %v5992, 0
      %s5996 = scalar_lea.vmem %s5, 96
      %v5997 = vld [vmem:[%s5996] sm:$0x7]
      %v5999 = vsel %vm699, %v5997, 0
      %v6002 = vsel %vm623, %v5994, 0
      %v6005 = vsel %vm623, %v5995, 0
      %6007 = vmatprep.subr.bf16.mxu0 %v6005
      %6008 = vmatpush1.bf16.msra.mxu0 %v6002
      %6009 = vmatprep.subr.bf16.mxu0 0
      %6010 = vmatpush1.bf16.msra.mxu0 0
      %6011 = vmatprep.subr.bf16.mxu0 0
      %6012 = vmatpush1.bf16.msra.mxu0 0
      %6013 = vmatprep.subr.bf16.mxu0 0
      %6014 = vmatpush1.bf16.msra.mxu0 0
      %6015 = vmatprep.subr.bf16.mxu0 0
      %6016 = vmatpush1.bf16.msra.mxu0 0
      %6017 = vmatprep.subr.bf16.mxu0 0
      %6018 = vmatpush1.bf16.msra.mxu0 0
      %6019 = vmatprep.subr.bf16.mxu0 0
      %6020 = vmatpush1.bf16.msra.mxu0 0
      %6021 = vmatprep.subr.bf16.mxu0 0
      %6022 = vmatpush1.bf16.msra.mxu0 0
      %6023 = vmatprep.subr.bf16.mxu0 0
      %6024 = vmatpush1.bf16.msra.mxu0 0
      %6025 = vmatprep.subr.bf16.mxu0 0
      %6026 = vmatpush1.bf16.msra.mxu0 0
      %6027 = vmatprep.subr.bf16.mxu0 0
      %6028 = vmatpush1.bf16.msra.mxu0 0
      %6029 = vmatprep.subr.bf16.mxu0 0
      %6030 = vmatpush1.bf16.msra.mxu0 0
      %6031 = vmatprep.subr.bf16.mxu0 0
      %6032 = vmatpush1.bf16.msra.mxu0 0
      %6033 = vmatprep.subr.bf16.mxu0 0
      %6034 = vmatpush1.bf16.msra.mxu0 0
      %6035 = vmatprep.subr.bf16.mxu0 0
      %6036 = vmatpush1.bf16.msra.mxu0 0
      %6037 = vmatprep.subr.bf16.mxu0 0
      %6038 = vmatpush1.bf16.msra.mxu0 0
      %6039 = vmatprep.mubr.bf16.mxu0 0
      %6040 = vmatmul.mubr.bf16.gmra.mrb[0].mxu0 %v5999
      %v6041 = vpop.f32.mrb[0].mxu0
      %v6042 = vadd.f32 0.0, %v6041
      %v6043 = vpop.f32.mrb[0].mxu0
      %v6044 = vadd.f32 0.0, %v6043
      %v6045 = vpop.f32.mrb[0].mxu0
      %v6046 = vpop.f32.mrb[0].mxu0
      %6047 = vdwg.mxu0
      %v6048 = vadd.f32 %v5983, %v6042
      %v6049 = vadd.f32 %v5984, %v6044
      %v6050 = vld [vmem:[%s6] sm:$0x1f]
      %6052 = vset.pattern.permute.xlu0 0
      %6053 = vperm.xlu0 %6052, %v6050
      %v6054 = vpop.permute.xlu0 %6053
      %v6056 = vadd.f32 %v6048, %v6054
      %v6057 = vadd.f32 %v6049, %v6054
      %v6060 = vrot.slane %v6056, 6
      %v6061 = vrot.slane %v6057, 6
      %vm6064 = vcmask 1042432
      %v6065 = vsel %vm6064, %v611, %v6060
      %v6066 = vsel %vm6064, %v612, %v6061
      %v6067 = vsel %vm623, %v6065, %v611
      %v6068 = vsel %vm623, %v6066, %v612
      %v6069 = vpack.c.bf16 %v613, %v6067
      %v6070 = vpack.c.bf16 %v614, %v6068
      %v6071 = vld [vmem:[%s7] sm:$0xf]
      %v6072 = vld [vmem:[%s8] sm:$0xff]
      %6074 = vset.pattern.permute.xlu0 0
      %6075 = vperm.xlu0 %6074, %v6072
      %v6076 = vpop.permute.xlu0 %6075
      %vm6078 = vcmask 89088
      %v6080 = vsel %vm6078, %v6071, 0
      %vm6082 = vcmask 1044480
      %vm6083 = vcmask 1045504
      %v6084 = vsel %vm6082, 4294967295, 65535
      %v6085 = vsel %vm6083, %v6084, 0
      %v6087 = vand.u32 %v6069, %v6085
      %v6090 = vand.u32 %v6070, %v6085
      %6092 = vmatprep.subr.bf16.mxu0 %v6090
      %6093 = vmatpush1.bf16.msra.mxu0 %v6087
      %6094 = vmatprep.subr.bf16.mxu0 0
      %6095 = vmatpush1.bf16.msra.mxu0 0
      %6096 = vmatprep.subr.bf16.mxu0 0
      %6097 = vmatpush1.bf16.msra.mxu0 0
      %6098 = vmatprep.subr.bf16.mxu0 0
      %6099 = vmatpush1.bf16.msra.mxu0 0
      %6100 = vmatprep.subr.bf16.mxu0 0
      %6101 = vmatpush1.bf16.msra.mxu0 0
      %6102 = vmatprep.subr.bf16.mxu0 0
      %6103 = vmatpush1.bf16.msra.mxu0 0
      %6104 = vmatprep.subr.bf16.mxu0 0
      %6105 = vmatpush1.bf16.msra.mxu0 0
      %6106 = vmatprep.subr.bf16.mxu0 0
      %6107 = vmatpush1.bf16.msra.mxu0 0
      %6108 = vmatprep.subr.bf16.mxu0 0
      %6109 = vmatpush1.bf16.msra.mxu0 0
      %6110 = vmatprep.subr.bf16.mxu0 0
      %6111 = vmatpush1.bf16.msra.mxu0 0
      %6112 = vmatprep.subr.bf16.mxu0 0
      %6113 = vmatpush1.bf16.msra.mxu0 0
      %6114 = vmatprep.subr.bf16.mxu0 0
      %6115 = vmatpush1.bf16.msra.mxu0 0
      %6116 = vmatprep.subr.bf16.mxu0 0
      %6117 = vmatpush1.bf16.msra.mxu0 0
      %6118 = vmatprep.subr.bf16.mxu0 0
      %6119 = vmatpush1.bf16.msra.mxu0 0
      %6120 = vmatprep.subr.bf16.mxu0 0
      %6121 = vmatpush1.bf16.msra.mxu0 0
      %6122 = vmatprep.subr.bf16.mxu0 0
      %6123 = vmatpush1.bf16.msra.mxu0 0
      %6124 = vmatprep.mubr.bf16.mxu0 0
      %6125 = vmatmul.mubr.bf16.gmra.mrb[0].mxu0 %v6080
      %v6126 = vpop.f32.mrb[0].mxu0
      %v6127 = vadd.f32 %v6076, %v6126
      %v6128 = vpop.f32.mrb[0].mxu0
      %v6129 = vadd.f32 %v6076, %v6128
      %v6130 = vpop.f32.mrb[0].mxu0
      %v6131 = vpop.f32.mrb[0].mxu0
      %6132 = vdwg.mxu0
      %v6133 = vmax.f32 %v6127, 0.0
      %v6134 = vmax.f32 %v6129, 0.0
      %v6135 = vpack.c.bf16 %v6133, %v6133
      %v6136 = vpack.c.bf16 %v6134, %v6134
      %6139 = vrot.lane.b32.xlu0 %v6135, 17
      %v6140 = vpop.permute.xlu0 %6139
      %6141 = vrot.lane.b32.xlu0 %v6136, 17
      %v6142 = vpop.permute.xlu0 %6141
      %v6143 = vsel %vm1148, %v6140, %v6142
      %v6146 = vsel %vm1151, 0, %v6140
      %v6148 = vsel %vm687, %v6146, 0
      %v6149 = vsel %vm688, %v6143, 0
      %v6150 = vld [vmem:[%s9] sm:$0xf]
      %6151 = vrot.lane.b32.xlu0 %v6135, 16
      %v6152 = vpop.permute.xlu0 %6151
      %6153 = vrot.lane.b32.xlu0 %v6136, 16
      %v6154 = vpop.permute.xlu0 %6153
      %v6155 = vsel %vm1225, %v6152, %v6154
      %v6157 = vsel %vm1227, 0, %v6152
      %s6158 = scalar_lea.vmem %s9, 4
      %v6159 = vld [vmem:[%s6158] sm:$0xf]
      %vm6160 = vcmask 64512
      %v6162 = vsel %vm6160, %v6159, 0
      %vm6164 = vcmask 1043456
      %v6165 = vsel %vm6164, %v6157, 0
      %v6168 = vsel %vm6164, %v6155, 0
      %6170 = vmatprep.subr.bf16.mxu0 %v6168
      %6171 = vmatpush1.bf16.msra.mxu0 %v6165
      %6172 = vmatprep.subr.bf16.mxu0 0
      %6173 = vmatpush1.bf16.msra.mxu0 0
      %6174 = vmatprep.subr.bf16.mxu0 0
      %6175 = vmatpush1.bf16.msra.mxu0 0
      %6176 = vmatprep.subr.bf16.mxu0 0
      %6177 = vmatpush1.bf16.msra.mxu0 0
      %6178 = vmatprep.subr.bf16.mxu0 0
      %6179 = vmatpush1.bf16.msra.mxu0 0
      %6180 = vmatprep.subr.bf16.mxu0 0
      %6181 = vmatpush1.bf16.msra.mxu0 0
      %6182 = vmatprep.subr.bf16.mxu0 0
      %6183 = vmatpush1.bf16.msra.mxu0 0
      %6184 = vmatprep.subr.bf16.mxu0 0
      %6185 = vmatpush1.bf16.msra.mxu0 0
      %6186 = vmatprep.subr.bf16.mxu0 0
      %6187 = vmatpush1.bf16.msra.mxu0 0
      %6188 = vmatprep.subr.bf16.mxu0 0
      %6189 = vmatpush1.bf16.msra.mxu0 0
      %6190 = vmatprep.subr.bf16.mxu0 0
      %6191 = vmatpush1.bf16.msra.mxu0 0
      %6192 = vmatprep.subr.bf16.mxu0 0
      %6193 = vmatpush1.bf16.msra.mxu0 0
      %6194 = vmatprep.subr.bf16.mxu0 0
      %6195 = vmatpush1.bf16.msra.mxu0 0
      %6196 = vmatprep.subr.bf16.mxu0 0
      %6197 = vmatpush1.bf16.msra.mxu0 0
      %6198 = vmatprep.subr.bf16.mxu0 0
      %6199 = vmatpush1.bf16.msra.mxu0 0
      %6200 = vmatprep.subr.bf16.mxu0 0
      %6201 = vmatpush1.bf16.msra.mxu0 0
      %6202 = vmatprep.mubr.bf16.mxu0 0
      %6203 = vmatmul.mubr.bf16.gmra.mrb[0].mxu0 %v6162
      %v6204 = vpop.f32.mrb[0].mxu0
      %v6205 = vadd.f32 0.0, %v6204
      %v6206 = vpop.f32.mrb[0].mxu0
      %v6207 = vadd.f32 0.0, %v6206
      %v6208 = vpop.f32.mrb[0].mxu0
      %v6209 = vpop.f32.mrb[0].mxu0
      %6210 = vdwg.mxu0
      %v6212 = vsel %vm6160, %v6150, 0
      %v6215 = vsel %vm6164, %v6148, 0
      %v6218 = vsel %vm6164, %v6149, 0
      %6220 = vmatprep.subr.bf16.mxu0 %v6218
      %6221 = vmatpush1.bf16.msra.mxu0 %v6215
      %6222 = vmatprep.subr.bf16.mxu0 0
      %6223 = vmatpush1.bf16.msra.mxu0 0
      %6224 = vmatprep.subr.bf16.mxu0 0
      %6225 = vmatpush1.bf16.msra.mxu0 0
      %6226 = vmatprep.subr.bf16.mxu0 0
      %6227 = vmatpush1.bf16.msra.mxu0 0
      %6228 = vmatprep.subr.bf16.mxu0 0
      %6229 = vmatpush1.bf16.msra.mxu0 0
      %6230 = vmatprep.subr.bf16.mxu0 0
      %6231 = vmatpush1.bf16.msra.mxu0 0
      %6232 = vmatprep.subr.bf16.mxu0 0
      %6233 = vmatpush1.bf16.msra.mxu0 0
      %6234 = vmatprep.subr.bf16.mxu0 0
      %6235 = vmatpush1.bf16.msra.mxu0 0
      %6236 = vmatprep.subr.bf16.mxu0 0
      %6237 = vmatpush1.bf16.msra.mxu0 0
      %6238 = vmatprep.subr.bf16.mxu0 0
      %6239 = vmatpush1.bf16.msra.mxu0 0
      %6240 = vmatprep.subr.bf16.mxu0 0
      %6241 = vmatpush1.bf16.msra.mxu0 0
      %6242 = vmatprep.subr.bf16.mxu0 0
      %6243 = vmatpush1.bf16.msra.mxu0 0
      %6244 = vmatprep.subr.bf16.mxu0 0
      %6245 = vmatpush1.bf16.msra.mxu0 0
      %6246 = vmatprep.subr.bf16.mxu0 0
      %6247 = vmatpush1.bf16.msra.mxu0 0
      %6248 = vmatprep.subr.bf16.mxu0 0
      %6249 = vmatpush1.bf16.msra.mxu0 0
      %6250 = vmatprep.subr.bf16.mxu0 0
      %6251 = vmatpush1.bf16.msra.mxu0 0
      %6252 = vmatprep.mubr.bf16.mxu0 0
      %6253 = vmatmul.mubr.bf16.gmra.mrb[0].mxu0 %v6212
      %v6254 = vpop.f32.mrb[0].mxu0
      %v6255 = vadd.f32 %v6205, %v6254
      %v6256 = vpop.f32.mrb[0].mxu0
      %v6257 = vadd.f32 %v6207, %v6256
      %v6258 = vpop.f32.mrb[0].mxu0
      %v6259 = vpop.f32.mrb[0].mxu0
      %6260 = vdwg.mxu0
      %6261 = vrot.lane.b32.xlu0 %v6135, 15
      %v6262 = vpop.permute.xlu0 %6261
      %6263 = vrot.lane.b32.xlu0 %v6136, 15
      %v6264 = vpop.permute.xlu0 %6263
      %v6265 = vsel %vm1297, %v6262, %v6264
      %v6268 = vsel %vm1300, 0, %v6262
      %v6270 = vsel %vm906, %v6268, 0
      %v6271 = vsel %vm907, %v6265, 0
      %s6272 = scalar_lea.vmem %s9, 8
      %v6273 = vld [vmem:[%s6272] sm:$0xf]
      %v6275 = vsel %vm6160, %v6273, 0
      %v6278 = vsel %vm6164, %v6270, 0
      %v6281 = vsel %vm6164, %v6271, 0
      %6283 = vmatprep.subr.bf16.mxu0 %v6281
      %6284 = vmatpush1.bf16.msra.mxu0 %v6278
      %6285 = vmatprep.subr.bf16.mxu0 0
      %6286 = vmatpush1.bf16.msra.mxu0 0
      %6287 = vmatprep.subr.bf16.mxu0 0
      %6288 = vmatpush1.bf16.msra.mxu0 0
      %6289 = vmatprep.subr.bf16.mxu0 0
      %6290 = vmatpush1.bf16.msra.mxu0 0
      %6291 = vmatprep.subr.bf16.mxu0 0
      %6292 = vmatpush1.bf16.msra.mxu0 0
      %6293 = vmatprep.subr.bf16.mxu0 0
      %6294 = vmatpush1.bf16.msra.mxu0 0
      %6295 = vmatprep.subr.bf16.mxu0 0
      %6296 = vmatpush1.bf16.msra.mxu0 0
      %6297 = vmatprep.subr.bf16.mxu0 0
      %6298 = vmatpush1.bf16.msra.mxu0 0
      %6299 = vmatprep.subr.bf16.mxu0 0
      %6300 = vmatpush1.bf16.msra.mxu0 0
      %6301 = vmatprep.subr.bf16.mxu0 0
      %6302 = vmatpush1.bf16.msra.mxu0 0
      %6303 = vmatprep.subr.bf16.mxu0 0
      %6304 = vmatpush1.bf16.msra.mxu0 0
      %6305 = vmatprep.subr.bf16.mxu0 0
      %6306 = vmatpush1.bf16.msra.mxu0 0
      %6307 = vmatprep.subr.bf16.mxu0 0
      %6308 = vmatpush1.bf16.msra.mxu0 0
      %6309 = vmatprep.subr.bf16.mxu0 0
      %6310 = vmatpush1.bf16.msra.mxu0 0
      %6311 = vmatprep.subr.bf16.mxu0 0
      %6312 = vmatpush1.bf16.msra.mxu0 0
      %6313 = vmatprep.subr.bf16.mxu0 0
      %6314 = vmatpush1.bf16.msra.mxu0 0
      %6315 = vmatprep.mubr.bf16.mxu0 0
      %6316 = vmatmul.mubr.bf16.gmra.mrb[0].mxu0 %v6275
      %v6317 = vpop.f32.mrb[0].mxu0
      %v6318 = vadd.f32 0.0, %v6317
      %v6319 = vpop.f32.mrb[0].mxu0
      %v6320 = vadd.f32 0.0, %v6319
      %v6321 = vpop.f32.mrb[0].mxu0
      %v6322 = vpop.f32.mrb[0].mxu0
      %6323 = vdwg.mxu0
      %v6324 = vadd.f32 %v6255, %v6318
      %v6325 = vadd.f32 %v6257, %v6320
      %6326 = vrot.lane.b32.xlu0 %v6135, 1
      %v6327 = vpop.permute.xlu0 %6326
      %6328 = vrot.lane.b32.xlu0 %v6136, 1
      %v6329 = vpop.permute.xlu0 %6328
      %v6330 = vsel %vm1527, %v6327, %v6329
      %v6333 = vsel %vm1530, 0, %v6327
      %v6335 = vsel %vm687, %v6333, 0
      %v6336 = vsel %vm688, %v6330, 0
      %s6337 = scalar_lea.vmem %s9, 12
      %v6338 = vld [vmem:[%s6337] sm:$0xf]
      %v6340 = vsel %vm6160, %v6338, 0
      %v6343 = vsel %vm6164, %v6335, 0
      %v6346 = vsel %vm6164, %v6336, 0
      %6348 = vmatprep.subr.bf16.mxu0 %v6346
      %6349 = vmatpush1.bf16.msra.mxu0 %v6343
      %6350 = vmatprep.subr.bf16.mxu0 0
      %6351 = vmatpush1.bf16.msra.mxu0 0
      %6352 = vmatprep.subr.bf16.mxu0 0
      %6353 = vmatpush1.bf16.msra.mxu0 0
      %6354 = vmatprep.subr.bf16.mxu0 0
      %6355 = vmatpush1.bf16.msra.mxu0 0
      %6356 = vmatprep.subr.bf16.mxu0 0
      %6357 = vmatpush1.bf16.msra.mxu0 0
      %6358 = vmatprep.subr.bf16.mxu0 0
      %6359 = vmatpush1.bf16.msra.mxu0 0
      %6360 = vmatprep.subr.bf16.mxu0 0
      %6361 = vmatpush1.bf16.msra.mxu0 0
      %6362 = vmatprep.subr.bf16.mxu0 0
      %6363 = vmatpush1.bf16.msra.mxu0 0
      %6364 = vmatprep.subr.bf16.mxu0 0
      %6365 = vmatpush1.bf16.msra.mxu0 0
      %6366 = vmatprep.subr.bf16.mxu0 0
      %6367 = vmatpush1.bf16.msra.mxu0 0
      %6368 = vmatprep.subr.bf16.mxu0 0
      %6369 = vmatpush1.bf16.msra.mxu0 0
      %6370 = vmatprep.subr.bf16.mxu0 0
      %6371 = vmatpush1.bf16.msra.mxu0 0
      %6372 = vmatprep.subr.bf16.mxu0 0
      %6373 = vmatpush1.bf16.msra.mxu0 0
      %6374 = vmatprep.subr.bf16.mxu0 0
      %6375 = vmatpush1.bf16.msra.mxu0 0
      %6376 = vmatprep.subr.bf16.mxu0 0
      %6377 = vmatpush1.bf16.msra.mxu0 0
      %6378 = vmatprep.subr.bf16.mxu0 0
      %6379 = vmatpush1.bf16.msra.mxu0 0
      %6380 = vmatprep.mubr.bf16.mxu0 0
      %6381 = vmatmul.mubr.bf16.gmra.mrb[0].mxu0 %v6340
      %v6382 = vpop.f32.mrb[0].mxu0
      %v6383 = vadd.f32 0.0, %v6382
      %v6384 = vpop.f32.mrb[0].mxu0
      %v6385 = vadd.f32 0.0, %v6384
      %v6386 = vpop.f32.mrb[0].mxu0
      %v6387 = vpop.f32.mrb[0].mxu0
      %6388 = vdwg.mxu0
      %v6389 = vadd.f32 %v6324, %v6383
      %v6390 = vadd.f32 %v6325, %v6385
      %s6391 = scalar_lea.vmem %s9, 16
      %v6392 = vld [vmem:[%s6391] sm:$0xf]
      %v6394 = vsel %vm6160, %v6392, 0
      %v6397 = vsel %vm6164, %v6135, 0
      %v6400 = vsel %vm6164, %v6136, 0
      %6402 = vmatprep.subr.bf16.mxu0 %v6400
      %6403 = vmatpush1.bf16.msra.mxu0 %v6397
      %6404 = vmatprep.subr.bf16.mxu0 0
      %6405 = vmatpush1.bf16.msra.mxu0 0
      %6406 = vmatprep.subr.bf16.mxu0 0
      %6407 = vmatpush1.bf16.msra.mxu0 0
      %6408 = vmatprep.subr.bf16.mxu0 0
      %6409 = vmatpush1.bf16.msra.mxu0 0
      %6410 = vmatprep.subr.bf16.mxu0 0
      %6411 = vmatpush1.bf16.msra.mxu0 0
      %6412 = vmatprep.subr.bf16.mxu0 0
      %6413 = vmatpush1.bf16.msra.mxu0 0
      %6414 = vmatprep.subr.bf16.mxu0 0
      %6415 = vmatpush1.bf16.msra.mxu0 0
      %6416 = vmatprep.subr.bf16.mxu0 0
      %6417 = vmatpush1.bf16.msra.mxu0 0
      %6418 = vmatprep.subr.bf16.mxu0 0
      %6419 = vmatpush1.bf16.msra.mxu0 0
      %6420 = vmatprep.subr.bf16.mxu0 0
      %6421 = vmatpush1.bf16.msra.mxu0 0
      %6422 = vmatprep.subr.bf16.mxu0 0
      %6423 = vmatpush1.bf16.msra.mxu0 0
      %6424 = vmatprep.subr.bf16.mxu0 0
      %6425 = vmatpush1.bf16.msra.mxu0 0
      %6426 = vmatprep.subr.bf16.mxu0 0
      %6427 = vmatpush1.bf16.msra.mxu0 0
      %6428 = vmatprep.subr.bf16.mxu0 0
      %6429 = vmatpush1.bf16.msra.mxu0 0
      %6430 = vmatprep.subr.bf16.mxu0 0
      %6431 = vmatpush1.bf16.msra.mxu0 0
      %6432 = vmatprep.subr.bf16.mxu0 0
      %6433 = vmatpush1.bf16.msra.mxu0 0
      %6434 = vmatprep.mubr.bf16.mxu0 0
      %6435 = vmatmul.mubr.bf16.gmra.mrb[0].mxu0 %v6394
      %v6436 = vpop.f32.mrb[0].mxu0
      %v6437 = vadd.f32 0.0, %v6436
      %v6438 = vpop.f32.mrb[0].mxu0
      %v6439 = vadd.f32 0.0, %v6438
      %v6440 = vpop.f32.mrb[0].mxu0
      %v6441 = vpop.f32.mrb[0].mxu0
      %6442 = vdwg.mxu0
      %v6443 = vadd.f32 %v6389, %v6437
      %v6444 = vadd.f32 %v6390, %v6439
      %6445 = vrot.lane.b32.xlu0 %v6135, 127
      %v6446 = vpop.permute.xlu0 %6445
      %6447 = vrot.lane.b32.xlu0 %v6136, 127
      %v6448 = vpop.permute.xlu0 %6447
      %v6449 = vsel %vm1668, %v6446, %v6448
      %v6452 = vsel %vm1671, %v6448, 0
      %v6454 = vsel %vm906, %v6449, 0
      %v6455 = vsel %vm907, %v6452, 0
      %s6456 = scalar_lea.vmem %s9, 20
      %v6457 = vld [vmem:[%s6456] sm:$0xf]
      %v6459 = vsel %vm6160, %v6457, 0
      %v6462 = vsel %vm6164, %v6454, 0
      %v6465 = vsel %vm6164, %v6455, 0
      %6467 = vmatprep.subr.bf16.mxu0 %v6465
      %6468 = vmatpush1.bf16.msra.mxu0 %v6462
      %6469 = vmatprep.subr.bf16.mxu0 0
      %6470 = vmatpush1.bf16.msra.mxu0 0
      %6471 = vmatprep.subr.bf16.mxu0 0
      %6472 = vmatpush1.bf16.msra.mxu0 0
      %6473 = vmatprep.subr.bf16.mxu0 0
      %6474 = vmatpush1.bf16.msra.mxu0 0
      %6475 = vmatprep.subr.bf16.mxu0 0
      %6476 = vmatpush1.bf16.msra.mxu0 0
      %6477 = vmatprep.subr.bf16.mxu0 0
      %6478 = vmatpush1.bf16.msra.mxu0 0
      %6479 = vmatprep.subr.bf16.mxu0 0
      %6480 = vmatpush1.bf16.msra.mxu0 0
      %6481 = vmatprep.subr.bf16.mxu0 0
      %6482 = vmatpush1.bf16.msra.mxu0 0
      %6483 = vmatprep.subr.bf16.mxu0 0
      %6484 = vmatpush1.bf16.msra.mxu0 0
      %6485 = vmatprep.subr.bf16.mxu0 0
      %6486 = vmatpush1.bf16.msra.mxu0 0
      %6487 = vmatprep.subr.bf16.mxu0 0
      %6488 = vmatpush1.bf16.msra.mxu0 0
      %6489 = vmatprep.subr.bf16.mxu0 0
      %6490 = vmatpush1.bf16.msra.mxu0 0
      %6491 = vmatprep.subr.bf16.mxu0 0
      %6492 = vmatpush1.bf16.msra.mxu0 0
      %6493 = vmatprep.subr.bf16.mxu0 0
      %6494 = vmatpush1.bf16.msra.mxu0 0
      %6495 = vmatprep.subr.bf16.mxu0 0
      %6496 = vmatpush1.bf16.msra.mxu0 0
      %6497 = vmatprep.subr.bf16.mxu0 0
      %6498 = vmatpush1.bf16.msra.mxu0 0
      %6499 = vmatprep.mubr.bf16.mxu0 0
      %6500 = vmatmul.mubr.bf16.gmra.mrb[0].mxu0 %v6459
      %v6501 = vpop.f32.mrb[0].mxu0
      %v6502 = vadd.f32 0.0, %v6501
      %v6503 = vpop.f32.mrb[0].mxu0
      %v6504 = vadd.f32 0.0, %v6503
      %v6505 = vpop.f32.mrb[0].mxu0
      %v6506 = vpop.f32.mrb[0].mxu0
      %6507 = vdwg.mxu0
      %v6508 = vadd.f32 %v6443, %v6502
      %v6509 = vadd.f32 %v6444, %v6504
      %6510 = vrot.lane.b32.xlu0 %v6135, 113
      %v6511 = vpop.permute.xlu0 %6510
      %6512 = vrot.lane.b32.xlu0 %v6136, 113
      %v6513 = vpop.permute.xlu0 %6512
      %v6514 = vsel %vm1899, %v6511, %v6513
      %v6517 = vsel %vm1902, %v6513, 0
      %v6519 = vsel %vm687, %v6514, 0
      %v6520 = vsel %vm688, %v6517, 0
      %s6521 = scalar_lea.vmem %s9, 24
      %v6522 = vld [vmem:[%s6521] sm:$0xf]
      %v6524 = vsel %vm6160, %v6522, 0
      %v6527 = vsel %vm6164, %v6519, 0
      %v6530 = vsel %vm6164, %v6520, 0
      %6532 = vmatprep.subr.bf16.mxu0 %v6530
      %6533 = vmatpush1.bf16.msra.mxu0 %v6527
      %6534 = vmatprep.subr.bf16.mxu0 0
      %6535 = vmatpush1.bf16.msra.mxu0 0
      %6536 = vmatprep.subr.bf16.mxu0 0
      %6537 = vmatpush1.bf16.msra.mxu0 0
      %6538 = vmatprep.subr.bf16.mxu0 0
      %6539 = vmatpush1.bf16.msra.mxu0 0
      %6540 = vmatprep.subr.bf16.mxu0 0
      %6541 = vmatpush1.bf16.msra.mxu0 0
      %6542 = vmatprep.subr.bf16.mxu0 0
      %6543 = vmatpush1.bf16.msra.mxu0 0
      %6544 = vmatprep.subr.bf16.mxu0 0
      %6545 = vmatpush1.bf16.msra.mxu0 0
      %6546 = vmatprep.subr.bf16.mxu0 0
      %6547 = vmatpush1.bf16.msra.mxu0 0
      %6548 = vmatprep.subr.bf16.mxu0 0
      %6549 = vmatpush1.bf16.msra.mxu0 0
      %6550 = vmatprep.subr.bf16.mxu0 0
      %6551 = vmatpush1.bf16.msra.mxu0 0
      %6552 = vmatprep.subr.bf16.mxu0 0
      %6553 = vmatpush1.bf16.msra.mxu0 0
      %6554 = vmatprep.subr.bf16.mxu0 0
      %6555 = vmatpush1.bf16.msra.mxu0 0
      %6556 = vmatprep.subr.bf16.mxu0 0
      %6557 = vmatpush1.bf16.msra.mxu0 0
      %6558 = vmatprep.subr.bf16.mxu0 0
      %6559 = vmatpush1.bf16.msra.mxu0 0
      %6560 = vmatprep.subr.bf16.mxu0 0
      %6561 = vmatpush1.bf16.msra.mxu0 0
      %6562 = vmatprep.subr.bf16.mxu0 0
      %6563 = vmatpush1.bf16.msra.mxu0 0
      %6564 = vmatprep.mubr.bf16.mxu0 0
      %6565 = vmatmul.mubr.bf16.gmra.mrb[0].mxu0 %v6524
      %v6566 = vpop.f32.mrb[0].mxu0
      %v6567 = vadd.f32 0.0, %v6566
      %v6568 = vpop.f32.mrb[0].mxu0
      %v6569 = vadd.f32 0.0, %v6568
      %v6570 = vpop.f32.mrb[0].mxu0
      %v6571 = vpop.f32.mrb[0].mxu0
      %6572 = vdwg.mxu0
      %v6573 = vadd.f32 %v6508, %v6567
      %v6574 = vadd.f32 %v6509, %v6569
      %6575 = vrot.lane.b32.xlu0 %v6135, 112
      %v6576 = vpop.permute.xlu0 %6575
      %6577 = vrot.lane.b32.xlu0 %v6136, 112
      %v6578 = vpop.permute.xlu0 %6577
      %v6579 = vsel %vm1976, %v6576, %v6578
      %v6581 = vsel %vm1978, %v6578, 0
      %s6582 = scalar_lea.vmem %s9, 28
      %v6583 = vld [vmem:[%s6582] sm:$0xf]
      %v6585 = vsel %vm6160, %v6583, 0
      %v6588 = vsel %vm6164, %v6579, 0
      %v6590 = vsel %vm6164, %v6581, 0
      %6592 = vmatprep.subr.bf16.mxu0 %v6590
      %6593 = vmatpush1.bf16.msra.mxu0 %v6588
      %6594 = vmatprep.subr.bf16.mxu0 0
      %6595 = vmatpush1.bf16.msra.mxu0 0
      %6596 = vmatprep.subr.bf16.mxu0 0
      %6597 = vmatpush1.bf16.msra.mxu0 0
      %6598 = vmatprep.subr.bf16.mxu0 0
      %6599 = vmatpush1.bf16.msra.mxu0 0
      %6600 = vmatprep.subr.bf16.mxu0 0
      %6601 = vmatpush1.bf16.msra.mxu0 0
      %6602 = vmatprep.subr.bf16.mxu0 0
      %6603 = vmatpush1.bf16.msra.mxu0 0
      %6604 = vmatprep.subr.bf16.mxu0 0
      %6605 = vmatpush1.bf16.msra.mxu0 0
      %6606 = vmatprep.subr.bf16.mxu0 0
      %6607 = vmatpush1.bf16.msra.mxu0 0
      %6608 = vmatprep.subr.bf16.mxu0 0
      %6609 = vmatpush1.bf16.msra.mxu0 0
      %6610 = vmatprep.subr.bf16.mxu0 0
      %6611 = vmatpush1.bf16.msra.mxu0 0
      %6612 = vmatprep.subr.bf16.mxu0 0
      %6613 = vmatpush1.bf16.msra.mxu0 0
      %6614 = vmatprep.subr.bf16.mxu0 0
      %6615 = vmatpush1.bf16.msra.mxu0 0
      %6616 = vmatprep.subr.bf16.mxu0 0
      %6617 = vmatpush1.bf16.msra.mxu0 0
      %6618 = vmatprep.subr.bf16.mxu0 0
      %6619 = vmatpush1.bf16.msra.mxu0 0
      %6620 = vmatprep.subr.bf16.mxu0 0
      %6621 = vmatpush1.bf16.msra.mxu0 0
      %6622 = vmatprep.subr.bf16.mxu0 0
      %6623 = vmatpush1.bf16.msra.mxu0 0
      %6624 = vmatprep.mubr.bf16.mxu0 0
      %6625 = vmatmul.mubr.bf16.gmra.mrb[0].mxu0 %v6585
      %v6626 = vpop.f32.mrb[0].mxu0
      %v6627 = vadd.f32 0.0, %v6626
      %v6628 = vpop.f32.mrb[0].mxu0
      %v6629 = vadd.f32 0.0, %v6628
      %v6630 = vpop.f32.mrb[0].mxu0
      %v6631 = vpop.f32.mrb[0].mxu0
      %6632 = vdwg.mxu0
      %v6633 = vadd.f32 %v6573, %v6627
      %v6634 = vadd.f32 %v6574, %v6629
      %6635 = vrot.lane.b32.xlu0 %v6135, 111
      %v6636 = vpop.permute.xlu0 %6635
      %6637 = vrot.lane.b32.xlu0 %v6136, 111
      %v6638 = vpop.permute.xlu0 %6637
      %v6639 = vsel %vm2048, %v6636, %v6638
      %v6642 = vsel %vm2051, %v6638, 0
      %v6644 = vsel %vm906, %v6639, 0
      %v6645 = vsel %vm907, %v6642, 0
      %s6646 = scalar_lea.vmem %s9, 32
      %v6647 = vld [vmem:[%s6646] sm:$0xf]
      %v6649 = vsel %vm6160, %v6647, 0
      %v6652 = vsel %vm6164, %v6644, 0
      %v6655 = vsel %vm6164, %v6645, 0
      %6657 = vmatprep.subr.bf16.mxu0 %v6655
      %6658 = vmatpush1.bf16.msra.mxu0 %v6652
      %6659 = vmatprep.subr.bf16.mxu0 0
      %6660 = vmatpush1.bf16.msra.mxu0 0
      %6661 = vmatprep.subr.bf16.mxu0 0
      %6662 = vmatpush1.bf16.msra.mxu0 0
      %6663 = vmatprep.subr.bf16.mxu0 0
      %6664 = vmatpush1.bf16.msra.mxu0 0
      %6665 = vmatprep.subr.bf16.mxu0 0
      %6666 = vmatpush1.bf16.msra.mxu0 0
      %6667 = vmatprep.subr.bf16.mxu0 0
      %6668 = vmatpush1.bf16.msra.mxu0 0
      %6669 = vmatprep.subr.bf16.mxu0 0
      %6670 = vmatpush1.bf16.msra.mxu0 0
      %6671 = vmatprep.subr.bf16.mxu0 0
      %6672 = vmatpush1.bf16.msra.mxu0 0
      %6673 = vmatprep.subr.bf16.mxu0 0
      %6674 = vmatpush1.bf16.msra.mxu0 0
      %6675 = vmatprep.subr.bf16.mxu0 0
      %6676 = vmatpush1.bf16.msra.mxu0 0
      %6677 = vmatprep.subr.bf16.mxu0 0
      %6678 = vmatpush1.bf16.msra.mxu0 0
      %6679 = vmatprep.subr.bf16.mxu0 0
      %6680 = vmatpush1.bf16.msra.mxu0 0
      %6681 = vmatprep.subr.bf16.mxu0 0
      %6682 = vmatpush1.bf16.msra.mxu0 0
      %6683 = vmatprep.subr.bf16.mxu0 0
      %6684 = vmatpush1.bf16.msra.mxu0 0
      %6685 = vmatprep.subr.bf16.mxu0 0
      %6686 = vmatpush1.bf16.msra.mxu0 0
      %6687 = vmatprep.subr.bf16.mxu0 0
      %6688 = vmatpush1.bf16.msra.mxu0 0
      %6689 = vmatprep.mubr.bf16.mxu0 0
      %6690 = vmatmul.mubr.bf16.gmra.mrb[0].mxu0 %v6649
      %v6691 = vpop.f32.mrb[0].mxu0
      %v6692 = vadd.f32 0.0, %v6691
      %v6693 = vpop.f32.mrb[0].mxu0
      %v6694 = vadd.f32 0.0, %v6693
      %v6695 = vpop.f32.mrb[0].mxu0
      %v6696 = vpop.f32.mrb[0].mxu0
      %6697 = vdwg.mxu0
      %v6698 = vadd.f32 %v6633, %v6692
      %v6699 = vadd.f32 %v6634, %v6694
      %v6700 = vld [vmem:[%s10] sm:$0xff]
      %6702 = vset.pattern.permute.xlu0 0
      %6703 = vperm.xlu0 %6702, %v6700
      %v6704 = vpop.permute.xlu0 %6703
      %v6706 = vadd.f32 %v6698, %v6704
      %v6707 = vadd.f32 %v6699, %v6704
      %v6708 = vmax.f32 %v6706, 0.0
      %v6709 = vmax.f32 %v6707, 0.0
      %v6710 = vpack.c.bf16 %v6708, %v6708
      %v6711 = vpack.c.bf16 %v6709, %v6709
      %6714 = vrot.lane.b32.xlu0 %v6710, 17
      %v6715 = vpop.permute.xlu0 %6714
      %6716 = vrot.lane.b32.xlu0 %v6711, 17
      %v6717 = vpop.permute.xlu0 %6716
      %v6718 = vsel %vm1148, %v6715, %v6717
      %v6721 = vsel %vm1151, 0, %v6715
      %v6723 = vsel %vm687, %v6721, 0
      %v6724 = vsel %vm688, %v6718, 0
      %v6725 = vld [vmem:[%s11] sm:$0xf]
      %6726 = vrot.lane.b32.xlu0 %v6710, 16
      %v6727 = vpop.permute.xlu0 %6726
      %6728 = vrot.lane.b32.xlu0 %v6711, 16
      %v6729 = vpop.permute.xlu0 %6728
      %v6730 = vsel %vm1225, %v6727, %v6729
      %v6732 = vsel %vm1227, 0, %v6727
      %s6733 = scalar_lea.vmem %s11, 4
      %v6734 = vld [vmem:[%s6733] sm:$0xf]
      %v6736 = vsel %vm6160, %v6734, 0
      %v6738 = vsel %vm6164, %v6732, 0
      %v6741 = vsel %vm6164, %v6730, 0
      %6743 = vmatprep.subr.bf16.mxu0 %v6741
      %6744 = vmatpush1.bf16.msra.mxu0 %v6738
      %6745 = vmatprep.subr.bf16.mxu0 0
      %6746 = vmatpush1.bf16.msra.mxu0 0
      %6747 = vmatprep.subr.bf16.mxu0 0
      %6748 = vmatpush1.bf16.msra.mxu0 0
      %6749 = vmatprep.subr.bf16.mxu0 0
      %6750 = vmatpush1.bf16.msra.mxu0 0
      %6751 = vmatprep.subr.bf16.mxu0 0
      %6752 = vmatpush1.bf16.msra.mxu0 0
      %6753 = vmatprep.subr.bf16.mxu0 0
      %6754 = vmatpush1.bf16.msra.mxu0 0
      %6755 = vmatprep.subr.bf16.mxu0 0
      %6756 = vmatpush1.bf16.msra.mxu0 0
      %6757 = vmatprep.subr.bf16.mxu0 0
      %6758 = vmatpush1.bf16.msra.mxu0 0
      %6759 = vmatprep.subr.bf16.mxu0 0
      %6760 = vmatpush1.bf16.msra.mxu0 0
      %6761 = vmatprep.subr.bf16.mxu0 0
      %6762 = vmatpush1.bf16.msra.mxu0 0
      %6763 = vmatprep.subr.bf16.mxu0 0
      %6764 = vmatpush1.bf16.msra.mxu0 0
      %6765 = vmatprep.subr.bf16.mxu0 0
      %6766 = vmatpush1.bf16.msra.mxu0 0
      %6767 = vmatprep.subr.bf16.mxu0 0
      %6768 = vmatpush1.bf16.msra.mxu0 0
      %6769 = vmatprep.subr.bf16.mxu0 0
      %6770 = vmatpush1.bf16.msra.mxu0 0
      %6771 = vmatprep.subr.bf16.mxu0 0
      %6772 = vmatpush1.bf16.msra.mxu0 0
      %6773 = vmatprep.subr.bf16.mxu0 0
      %6774 = vmatpush1.bf16.msra.mxu0 0
      %6775 = vmatprep.mubr.bf16.mxu0 0
      %6776 = vmatmul.mubr.bf16.gmra.mrb[0].mxu0 %v6736
      %v6777 = vpop.f32.mrb[0].mxu0
      %v6778 = vadd.f32 0.0, %v6777
      %v6779 = vpop.f32.mrb[0].mxu0
      %v6780 = vadd.f32 0.0, %v6779
      %v6781 = vpop.f32.mrb[0].mxu0
      %v6782 = vpop.f32.mrb[0].mxu0
      %6783 = vdwg.mxu0
      %v6785 = vsel %vm6160, %v6725, 0
      %v6788 = vsel %vm6164, %v6723, 0
      %v6791 = vsel %vm6164, %v6724, 0
      %6793 = vmatprep.subr.bf16.mxu0 %v6791
      %6794 = vmatpush1.bf16.msra.mxu0 %v6788
      %6795 = vmatprep.subr.bf16.mxu0 0
      %6796 = vmatpush1.bf16.msra.mxu0 0
      %6797 = vmatprep.subr.bf16.mxu0 0
      %6798 = vmatpush1.bf16.msra.mxu0 0
      %6799 = vmatprep.subr.bf16.mxu0 0
      %6800 = vmatpush1.bf16.msra.mxu0 0
      %6801 = vmatprep.subr.bf16.mxu0 0
      %6802 = vmatpush1.bf16.msra.mxu0 0
      %6803 = vmatprep.subr.bf16.mxu0 0
      %6804 = vmatpush1.bf16.msra.mxu0 0
      %6805 = vmatprep.subr.bf16.mxu0 0
      %6806 = vmatpush1.bf16.msra.mxu0 0
      %6807 = vmatprep.subr.bf16.mxu0 0
      %6808 = vmatpush1.bf16.msra.mxu0 0
      %6809 = vmatprep.subr.bf16.mxu0 0
      %6810 = vmatpush1.bf16.msra.mxu0 0
      %6811 = vmatprep.subr.bf16.mxu0 0
      %6812 = vmatpush1.bf16.msra.mxu0 0
      %6813 = vmatprep.subr.bf16.mxu0 0
      %6814 = vmatpush1.bf16.msra.mxu0 0
      %6815 = vmatprep.subr.bf16.mxu0 0
      %6816 = vmatpush1.bf16.msra.mxu0 0
      %6817 = vmatprep.subr.bf16.mxu0 0
      %6818 = vmatpush1.bf16.msra.mxu0 0
      %6819 = vmatprep.subr.bf16.mxu0 0
      %6820 = vmatpush1.bf16.msra.mxu0 0
      %6821 = vmatprep.subr.bf16.mxu0 0
      %6822 = vmatpush1.bf16.msra.mxu0 0
      %6823 = vmatprep.subr.bf16.mxu0 0
      %6824 = vmatpush1.bf16.msra.mxu0 0
      %6825 = vmatprep.mubr.bf16.mxu0 0
      %6826 = vmatmul.mubr.bf16.gmra.mrb[0].mxu0 %v6785
      %v6827 = vpop.f32.mrb[0].mxu0
      %v6828 = vadd.f32 %v6778, %v6827
      %v6829 = vpop.f32.mrb[0].mxu0
      %v6830 = vadd.f32 %v6780, %v6829
      %v6831 = vpop.f32.mrb[0].mxu0
      %v6832 = vpop.f32.mrb[0].mxu0
      %6833 = vdwg.mxu0
      %6834 = vrot.lane.b32.xlu0 %v6710, 15
      %v6835 = vpop.permute.xlu0 %6834
      %6836 = vrot.lane.b32.xlu0 %v6711, 15
      %v6837 = vpop.permute.xlu0 %6836
      %v6838 = vsel %vm1297, %v6835, %v6837
      %v6841 = vsel %vm1300, 0, %v6835
      %v6843 = vsel %vm906, %v6841, 0
      %v6844 = vsel %vm907, %v6838, 0
      %s6845 = scalar_lea.vmem %s11, 8
      %v6846 = vld [vmem:[%s6845] sm:$0xf]
      %v6848 = vsel %vm6160, %v6846, 0
      %v6851 = vsel %vm6164, %v6843, 0
      %v6854 = vsel %vm6164, %v6844, 0
      %6856 = vmatprep.subr.bf16.mxu0 %v6854
      %6857 = vmatpush1.bf16.msra.mxu0 %v6851
      %6858 = vmatprep.subr.bf16.mxu0 0
      %6859 = vmatpush1.bf16.msra.mxu0 0
      %6860 = vmatprep.subr.bf16.mxu0 0
      %6861 = vmatpush1.bf16.msra.mxu0 0
      %6862 = vmatprep.subr.bf16.mxu0 0
      %6863 = vmatpush1.bf16.msra.mxu0 0
      %6864 = vmatprep.subr.bf16.mxu0 0
      %6865 = vmatpush1.bf16.msra.mxu0 0
      %6866 = vmatprep.subr.bf16.mxu0 0
      %6867 = vmatpush1.bf16.msra.mxu0 0
      %6868 = vmatprep.subr.bf16.mxu0 0
      %6869 = vmatpush1.bf16.msra.mxu0 0
      %6870 = vmatprep.subr.bf16.mxu0 0
      %6871 = vmatpush1.bf16.msra.mxu0 0
      %6872 = vmatprep.subr.bf16.mxu0 0
      %6873 = vmatpush1.bf16.msra.mxu0 0
      %6874 = vmatprep.subr.bf16.mxu0 0
      %6875 = vmatpush1.bf16.msra.mxu0 0
      %6876 = vmatprep.subr.bf16.mxu0 0
      %6877 = vmatpush1.bf16.msra.mxu0 0
      %6878 = vmatprep.subr.bf16.mxu0 0
      %6879 = vmatpush1.bf16.msra.mxu0 0
      %6880 = vmatprep.subr.bf16.mxu0 0
      %6881 = vmatpush1.bf16.msra.mxu0 0
      %6882 = vmatprep.subr.bf16.mxu0 0
      %6883 = vmatpush1.bf16.msra.mxu0 0
      %6884 = vmatprep.subr.bf16.mxu0 0
      %6885 = vmatpush1.bf16.msra.mxu0 0
      %6886 = vmatprep.subr.bf16.mxu0 0
      %6887 = vmatpush1.bf16.msra.mxu0 0
      %6888 = vmatprep.mubr.bf16.mxu0 0
      %6889 = vmatmul.mubr.bf16.gmra.mrb[0].mxu0 %v6848
      %v6890 = vpop.f32.mrb[0].mxu0
      %v6891 = vadd.f32 0.0, %v6890
      %v6892 = vpop.f32.mrb[0].mxu0
      %v6893 = vadd.f32 0.0, %v6892
      %v6894 = vpop.f32.mrb[0].mxu0
      %v6895 = vpop.f32.mrb[0].mxu0
      %6896 = vdwg.mxu0
      %v6897 = vadd.f32 %v6828, %v6891
      %v6898 = vadd.f32 %v6830, %v6893
      %6899 = vrot.lane.b32.xlu0 %v6710, 1
      %v6900 = vpop.permute.xlu0 %6899
      %6901 = vrot.lane.b32.xlu0 %v6711, 1
      %v6902 = vpop.permute.xlu0 %6901
      %v6903 = vsel %vm1527, %v6900, %v6902
      %v6906 = vsel %vm1530, 0, %v6900
      %v6908 = vsel %vm687, %v6906, 0
      %v6909 = vsel %vm688, %v6903, 0
      %s6910 = scalar_lea.vmem %s11, 12
      %v6911 = vld [vmem:[%s6910] sm:$0xf]
      %v6913 = vsel %vm6160, %v6911, 0
      %v6916 = vsel %vm6164, %v6908, 0
      %v6919 = vsel %vm6164, %v6909, 0
      %6921 = vmatprep.subr.bf16.mxu0 %v6919
      %6922 = vmatpush1.bf16.msra.mxu0 %v6916
      %6923 = vmatprep.subr.bf16.mxu0 0
      %6924 = vmatpush1.bf16.msra.mxu0 0
      %6925 = vmatprep.subr.bf16.mxu0 0
      %6926 = vmatpush1.bf16.msra.mxu0 0
      %6927 = vmatprep.subr.bf16.mxu0 0
      %6928 = vmatpush1.bf16.msra.mxu0 0
      %6929 = vmatprep.subr.bf16.mxu0 0
      %6930 = vmatpush1.bf16.msra.mxu0 0
      %6931 = vmatprep.subr.bf16.mxu0 0
      %6932 = vmatpush1.bf16.msra.mxu0 0
      %6933 = vmatprep.subr.bf16.mxu0 0
      %6934 = vmatpush1.bf16.msra.mxu0 0
      %6935 = vmatprep.subr.bf16.mxu0 0
      %6936 = vmatpush1.bf16.msra.mxu0 0
      %6937 = vmatprep.subr.bf16.mxu0 0
      %6938 = vmatpush1.bf16.msra.mxu0 0
      %6939 = vmatprep.subr.bf16.mxu0 0
      %6940 = vmatpush1.bf16.msra.mxu0 0
      %6941 = vmatprep.subr.bf16.mxu0 0
      %6942 = vmatpush1.bf16.msra.mxu0 0
      %6943 = vmatprep.subr.bf16.mxu0 0
      %6944 = vmatpush1.bf16.msra.mxu0 0
      %6945 = vmatprep.subr.bf16.mxu0 0
      %6946 = vmatpush1.bf16.msra.mxu0 0
      %6947 = vmatprep.subr.bf16.mxu0 0
      %6948 = vmatpush1.bf16.msra.mxu0 0
      %6949 = vmatprep.subr.bf16.mxu0 0
      %6950 = vmatpush1.bf16.msra.mxu0 0
      %6951 = vmatprep.subr.bf16.mxu0 0
      %6952 = vmatpush1.bf16.msra.mxu0 0
      %6953 = vmatprep.mubr.bf16.mxu0 0
      %6954 = vmatmul.mubr.bf16.gmra.mrb[0].mxu0 %v6913
      %v6955 = vpop.f32.mrb[0].mxu0
      %v6956 = vadd.f32 0.0, %v6955
      %v6957 = vpop.f32.mrb[0].mxu0
      %v6958 = vadd.f32 0.0, %v6957
      %v6959 = vpop.f32.mrb[0].mxu0
      %v6960 = vpop.f32.mrb[0].mxu0
      %6961 = vdwg.mxu0
      %v6962 = vadd.f32 %v6897, %v6956
      %v6963 = vadd.f32 %v6898, %v6958
      %s6964 = scalar_lea.vmem %s11, 16
      %v6965 = vld [vmem:[%s6964] sm:$0xf]
      %v6967 = vsel %vm6160, %v6965, 0
      %v6970 = vsel %vm6164, %v6710, 0
      %v6973 = vsel %vm6164, %v6711, 0
      %6975 = vmatprep.subr.bf16.mxu0 %v6973
      %6976 = vmatpush1.bf16.msra.mxu0 %v6970
      %6977 = vmatprep.subr.bf16.mxu0 0
      %6978 = vmatpush1.bf16.msra.mxu0 0
      %6979 = vmatprep.subr.bf16.mxu0 0
      %6980 = vmatpush1.bf16.msra.mxu0 0
      %6981 = vmatprep.subr.bf16.mxu0 0
      %6982 = vmatpush1.bf16.msra.mxu0 0
      %6983 = vmatprep.subr.bf16.mxu0 0
      %6984 = vmatpush1.bf16.msra.mxu0 0
      %6985 = vmatprep.subr.bf16.mxu0 0
      %6986 = vmatpush1.bf16.msra.mxu0 0
      %6987 = vmatprep.subr.bf16.mxu0 0
      %6988 = vmatpush1.bf16.msra.mxu0 0
      %6989 = vmatprep.subr.bf16.mxu0 0
      %6990 = vmatpush1.bf16.msra.mxu0 0
      %6991 = vmatprep.subr.bf16.mxu0 0
      %6992 = vmatpush1.bf16.msra.mxu0 0
      %6993 = vmatprep.subr.bf16.mxu0 0
      %6994 = vmatpush1.bf16.msra.mxu0 0
      %6995 = vmatprep.subr.bf16.mxu0 0
      %6996 = vmatpush1.bf16.msra.mxu0 0
      %6997 = vmatprep.subr.bf16.mxu0 0
      %6998 = vmatpush1.bf16.msra.mxu0 0
      %6999 = vmatprep.subr.bf16.mxu0 0
      %7000 = vmatpush1.bf16.msra.mxu0 0
      %7001 = vmatprep.subr.bf16.mxu0 0
      %7002 = vmatpush1.bf16.msra.mxu0 0
      %7003 = vmatprep.subr.bf16.mxu0 0
      %7004 = vmatpush1.bf16.msra.mxu0 0
      %7005 = vmatprep.subr.bf16.mxu0 0
      %7006 = vmatpush1.bf16.msra.mxu0 0
      %7007 = vmatprep.mubr.bf16.mxu0 0
      %7008 = vmatmul.mubr.bf16.gmra.mrb[0].mxu0 %v6967
      %v7009 = vpop.f32.mrb[0].mxu0
      %v7010 = vadd.f32 0.0, %v7009
      %v7011 = vpop.f32.mrb[0].mxu0
      %v7012 = vadd.f32 0.0, %v7011
      %v7013 = vpop.f32.mrb[0].mxu0
      %v7014 = vpop.f32.mrb[0].mxu0
      %7015 = vdwg.mxu0
      %v7016 = vadd.f32 %v6962, %v7010
      %v7017 = vadd.f32 %v6963, %v7012
      %7018 = vrot.lane.b32.xlu0 %v6710, 127
      %v7019 = vpop.permute.xlu0 %7018
      %7020 = vrot.lane.b32.xlu0 %v6711, 127
      %v7021 = vpop.permute.xlu0 %7020
      %v7022 = vsel %vm1668, %v7019, %v7021
      %v7025 = vsel %vm1671, %v7021, 0
      %v7027 = vsel %vm906, %v7022, 0
      %v7028 = vsel %vm907, %v7025, 0
      %s7029 = scalar_lea.vmem %s11, 20
      %v7030 = vld [vmem:[%s7029] sm:$0xf]
      %v7032 = vsel %vm6160, %v7030, 0
      %v7035 = vsel %vm6164, %v7027, 0
      %v7038 = vsel %vm6164, %v7028, 0
      %7040 = vmatprep.subr.bf16.mxu0 %v7038
      %7041 = vmatpush1.bf16.msra.mxu0 %v7035
      %7042 = vmatprep.subr.bf16.mxu0 0
      %7043 = vmatpush1.bf16.msra.mxu0 0
      %7044 = vmatprep.subr.bf16.mxu0 0
      %7045 = vmatpush1.bf16.msra.mxu0 0
      %7046 = vmatprep.subr.bf16.mxu0 0
      %7047 = vmatpush1.bf16.msra.mxu0 0
      %7048 = vmatprep.subr.bf16.mxu0 0
      %7049 = vmatpush1.bf16.msra.mxu0 0
      %7050 = vmatprep.subr.bf16.mxu0 0
      %7051 = vmatpush1.bf16.msra.mxu0 0
      %7052 = vmatprep.subr.bf16.mxu0 0
      %7053 = vmatpush1.bf16.msra.mxu0 0
      %7054 = vmatprep.subr.bf16.mxu0 0
      %7055 = vmatpush1.bf16.msra.mxu0 0
      %7056 = vmatprep.subr.bf16.mxu0 0
      %7057 = vmatpush1.bf16.msra.mxu0 0
      %7058 = vmatprep.subr.bf16.mxu0 0
      %7059 = vmatpush1.bf16.msra.mxu0 0
      %7060 = vmatprep.subr.bf16.mxu0 0
      %7061 = vmatpush1.bf16.msra.mxu0 0
      %7062 = vmatprep.subr.bf16.mxu0 0
      %7063 = vmatpush1.bf16.msra.mxu0 0
      %7064 = vmatprep.subr.bf16.mxu0 0
      %7065 = vmatpush1.bf16.msra.mxu0 0
      %7066 = vmatprep.subr.bf16.mxu0 0
      %7067 = vmatpush1.bf16.msra.mxu0 0
      %7068 = vmatprep.subr.bf16.mxu0 0
      %7069 = vmatpush1.bf16.msra.mxu0 0
      %7070 = vmatprep.subr.bf16.mxu0 0
      %7071 = vmatpush1.bf16.msra.mxu0 0
      %7072 = vmatprep.mubr.bf16.mxu0 0
      %7073 = vmatmul.mubr.bf16.gmra.mrb[0].mxu0 %v7032
      %v7074 = vpop.f32.mrb[0].mxu0
      %v7075 = vadd.f32 0.0, %v7074
      %v7076 = vpop.f32.mrb[0].mxu0
      %v7077 = vadd.f32 0.0, %v7076
      %v7078 = vpop.f32.mrb[0].mxu0
      %v7079 = vpop.f32.mrb[0].mxu0
      %7080 = vdwg.mxu0
      %v7081 = vadd.f32 %v7016, %v7075
      %v7082 = vadd.f32 %v7017, %v7077
      %7083 = vrot.lane.b32.xlu0 %v6710, 113
      %v7084 = vpop.permute.xlu0 %7083
      %7085 = vrot.lane.b32.xlu0 %v6711, 113
      %v7086 = vpop.permute.xlu0 %7085
      %v7087 = vsel %vm1899, %v7084, %v7086
      %v7090 = vsel %vm1902, %v7086, 0
      %v7092 = vsel %vm687, %v7087, 0
      %v7093 = vsel %vm688, %v7090, 0
      %s7094 = scalar_lea.vmem %s11, 24
      %v7095 = vld [vmem:[%s7094] sm:$0xf]
      %v7097 = vsel %vm6160, %v7095, 0
      %v7100 = vsel %vm6164, %v7092, 0
      %v7103 = vsel %vm6164, %v7093, 0
      %7105 = vmatprep.subr.bf16.mxu0 %v7103
      %7106 = vmatpush1.bf16.msra.mxu0 %v7100
      %7107 = vmatprep.subr.bf16.mxu0 0
      %7108 = vmatpush1.bf16.msra.mxu0 0
      %7109 = vmatprep.subr.bf16.mxu0 0
      %7110 = vmatpush1.bf16.msra.mxu0 0
      %7111 = vmatprep.subr.bf16.mxu0 0
      %7112 = vmatpush1.bf16.msra.mxu0 0
      %7113 = vmatprep.subr.bf16.mxu0 0
      %7114 = vmatpush1.bf16.msra.mxu0 0
      %7115 = vmatprep.subr.bf16.mxu0 0
      %7116 = vmatpush1.bf16.msra.mxu0 0
      %7117 = vmatprep.subr.bf16.mxu0 0
      %7118 = vmatpush1.bf16.msra.mxu0 0
      %7119 = vmatprep.subr.bf16.mxu0 0
      %7120 = vmatpush1.bf16.msra.mxu0 0
      %7121 = vmatprep.subr.bf16.mxu0 0
      %7122 = vmatpush1.bf16.msra.mxu0 0
      %7123 = vmatprep.subr.bf16.mxu0 0
      %7124 = vmatpush1.bf16.msra.mxu0 0
      %7125 = vmatprep.subr.bf16.mxu0 0
      %7126 = vmatpush1.bf16.msra.mxu0 0
      %7127 = vmatprep.subr.bf16.mxu0 0
      %7128 = vmatpush1.bf16.msra.mxu0 0
      %7129 = vmatprep.subr.bf16.mxu0 0
      %7130 = vmatpush1.bf16.msra.mxu0 0
      %7131 = vmatprep.subr.bf16.mxu0 0
      %7132 = vmatpush1.bf16.msra.mxu0 0
      %7133 = vmatprep.subr.bf16.mxu0 0
      %7134 = vmatpush1.bf16.msra.mxu0 0
      %7135 = vmatprep.subr.bf16.mxu0 0
      %7136 = vmatpush1.bf16.msra.mxu0 0
      %7137 = vmatprep.mubr.bf16.mxu0 0
      %7138 = vmatmul.mubr.bf16.gmra.mrb[0].mxu0 %v7097
      %v7139 = vpop.f32.mrb[0].mxu0
      %v7140 = vadd.f32 0.0, %v7139
      %v7141 = vpop.f32.mrb[0].mxu0
      %v7142 = vadd.f32 0.0, %v7141
      %v7143 = vpop.f32.mrb[0].mxu0
      %v7144 = vpop.f32.mrb[0].mxu0
      %7145 = vdwg.mxu0
      %v7146 = vadd.f32 %v7081, %v7140
      %v7147 = vadd.f32 %v7082, %v7142
      %7148 = vrot.lane.b32.xlu0 %v6710, 112
      %v7149 = vpop.permute.xlu0 %7148
      %7150 = vrot.lane.b32.xlu0 %v6711, 112
      %v7151 = vpop.permute.xlu0 %7150
      %v7152 = vsel %vm1976, %v7149, %v7151
      %v7154 = vsel %vm1978, %v7151, 0
      %s7155 = scalar_lea.vmem %s11, 28
      %v7156 = vld [vmem:[%s7155] sm:$0xf]
      %v7158 = vsel %vm6160, %v7156, 0
      %v7161 = vsel %vm6164, %v7152, 0
      %v7163 = vsel %vm6164, %v7154, 0
      %7165 = vmatprep.subr.bf16.mxu0 %v7163
      %7166 = vmatpush1.bf16.msra.mxu0 %v7161
      %7167 = vmatprep.subr.bf16.mxu0 0
      %7168 = vmatpush1.bf16.msra.mxu0 0
      %7169 = vmatprep.subr.bf16.mxu0 0
      %7170 = vmatpush1.bf16.msra.mxu0 0
      %7171 = vmatprep.subr.bf16.mxu0 0
      %7172 = vmatpush1.bf16.msra.mxu0 0
      %7173 = vmatprep.subr.bf16.mxu0 0
      %7174 = vmatpush1.bf16.msra.mxu0 0
      %7175 = vmatprep.subr.bf16.mxu0 0
      %7176 = vmatpush1.bf16.msra.mxu0 0
      %7177 = vmatprep.subr.bf16.mxu0 0
      %7178 = vmatpush1.bf16.msra.mxu0 0
      %7179 = vmatprep.subr.bf16.mxu0 0
      %7180 = vmatpush1.bf16.msra.mxu0 0
      %7181 = vmatprep.subr.bf16.mxu0 0
      %7182 = vmatpush1.bf16.msra.mxu0 0
      %7183 = vmatprep.subr.bf16.mxu0 0
      %7184 = vmatpush1.bf16.msra.mxu0 0
      %7185 = vmatprep.subr.bf16.mxu0 0
      %7186 = vmatpush1.bf16.msra.mxu0 0
      %7187 = vmatprep.subr.bf16.mxu0 0
      %7188 = vmatpush1.bf16.msra.mxu0 0
      %7189 = vmatprep.subr.bf16.mxu0 0
      %7190 = vmatpush1.bf16.msra.mxu0 0
      %7191 = vmatprep.subr.bf16.mxu0 0
      %7192 = vmatpush1.bf16.msra.mxu0 0
      %7193 = vmatprep.subr.bf16.mxu0 0
      %7194 = vmatpush1.bf16.msra.mxu0 0
      %7195 = vmatprep.subr.bf16.mxu0 0
      %7196 = vmatpush1.bf16.msra.mxu0 0
      %7197 = vmatprep.mubr.bf16.mxu0 0
      %7198 = vmatmul.mubr.bf16.gmra.mrb[0].mxu0 %v7158
      %v7199 = vpop.f32.mrb[0].mxu0
      %v7200 = vadd.f32 0.0, %v7199
      %v7201 = vpop.f32.mrb[0].mxu0
      %v7202 = vadd.f32 0.0, %v7201
      %v7203 = vpop.f32.mrb[0].mxu0
      %v7204 = vpop.f32.mrb[0].mxu0
      %7205 = vdwg.mxu0
      %v7206 = vadd.f32 %v7146, %v7200
      %v7207 = vadd.f32 %v7147, %v7202
      %7208 = vrot.lane.b32.xlu0 %v6710, 111
      %v7209 = vpop.permute.xlu0 %7208
      %7210 = vrot.lane.b32.xlu0 %v6711, 111
      %v7211 = vpop.permute.xlu0 %7210
      %v7212 = vsel %vm2048, %v7209, %v7211
      %v7215 = vsel %vm2051, %v7211, 0
      %v7217 = vsel %vm906, %v7212, 0
      %v7218 = vsel %vm907, %v7215, 0
      %s7219 = scalar_lea.vmem %s11, 32
      %v7220 = vld [vmem:[%s7219] sm:$0xf]
      %v7222 = vsel %vm6160, %v7220, 0
      %v7225 = vsel %vm6164, %v7217, 0
      %v7228 = vsel %vm6164, %v7218, 0
      %7230 = vmatprep.subr.bf16.mxu0 %v7228
      %7231 = vmatpush1.bf16.msra.mxu0 %v7225
      %7232 = vmatprep.subr.bf16.mxu0 0
      %7233 = vmatpush1.bf16.msra.mxu0 0
      %7234 = vmatprep.subr.bf16.mxu0 0
      %7235 = vmatpush1.bf16.msra.mxu0 0
      %7236 = vmatprep.subr.bf16.mxu0 0
      %7237 = vmatpush1.bf16.msra.mxu0 0
      %7238 = vmatprep.subr.bf16.mxu0 0
      %7239 = vmatpush1.bf16.msra.mxu0 0
      %7240 = vmatprep.subr.bf16.mxu0 0
      %7241 = vmatpush1.bf16.msra.mxu0 0
      %7242 = vmatprep.subr.bf16.mxu0 0
      %7243 = vmatpush1.bf16.msra.mxu0 0
      %7244 = vmatprep.subr.bf16.mxu0 0
      %7245 = vmatpush1.bf16.msra.mxu0 0
      %7246 = vmatprep.subr.bf16.mxu0 0
      %7247 = vmatpush1.bf16.msra.mxu0 0
      %7248 = vmatprep.subr.bf16.mxu0 0
      %7249 = vmatpush1.bf16.msra.mxu0 0
      %7250 = vmatprep.subr.bf16.mxu0 0
      %7251 = vmatpush1.bf16.msra.mxu0 0
      %7252 = vmatprep.subr.bf16.mxu0 0
      %7253 = vmatpush1.bf16.msra.mxu0 0
      %7254 = vmatprep.subr.bf16.mxu0 0
      %7255 = vmatpush1.bf16.msra.mxu0 0
      %7256 = vmatprep.subr.bf16.mxu0 0
      %7257 = vmatpush1.bf16.msra.mxu0 0
      %7258 = vmatprep.subr.bf16.mxu0 0
      %7259 = vmatpush1.bf16.msra.mxu0 0
      %7260 = vmatprep.subr.bf16.mxu0 0
      %7261 = vmatpush1.bf16.msra.mxu0 0
      %7262 = vmatprep.mubr.bf16.mxu0 0
      %7263 = vmatmul.mubr.bf16.gmra.mrb[0].mxu0 %v7222
      %v7264 = vpop.f32.mrb[0].mxu0
      %v7265 = vadd.f32 0.0, %v7264
      %v7266 = vpop.f32.mrb[0].mxu0
      %v7267 = vadd.f32 0.0, %v7266
      %v7268 = vpop.f32.mrb[0].mxu0
      %v7269 = vpop.f32.mrb[0].mxu0
      %7270 = vdwg.mxu0
      %v7271 = vadd.f32 %v7206, %v7265
      %v7272 = vadd.f32 %v7207, %v7267
      %v7273 = vld [vmem:[%s12] sm:$0xff]
      %7275 = vset.pattern.permute.xlu0 0
      %7276 = vperm.xlu0 %7275, %v7273
      %v7277 = vpop.permute.xlu0 %7276
      %v7279 = vadd.f32 %v7271, %v7277
      %v7280 = vadd.f32 %v7272, %v7277
      %v7283 = vrot.slane %v7279, 4
      %v7284 = vrot.slane %v7280, 4
      %v7287 = vsel %vm6164, %v7283, %v7283
      %v7288 = vsel %vm6164, %v7284, %v7284
      %v7291 = vrot.slane %v7287, 4
      %v7292 = vrot.slane %v7288, 4
      %v7295 = vadd.f32 %v7287, %v7291
      %v7296 = vadd.f32 %v7288, %v7292
      %v7299 = vrot.slane %v7295, 4
      %v7300 = vrot.slane %v7296, 4
      %v7303 = vsel %vm6164, %v7287, %v7299
      %v7304 = vsel %vm6164, %v7288, %v7300
      %v7305 = vpack.c.bf16 %v7303, %v7303
      %v7306 = vpack.c.bf16 %v7304, %v7304
      %v7307 = vld [vmem:[%s13] sm:$0xf]
      %v7308 = vld [vmem:[%s14] sm:$0xff]
      %7310 = vset.pattern.permute.xlu0 0
      %7311 = vperm.xlu0 %7310, %v7308
      %v7312 = vpop.permute.xlu0 %7311
      %v7315 = vsel %vm6160, %v7307, 0
      %v7318 = vsel %vm6164, %v7305, 0
      %v7321 = vsel %vm6164, %v7306, 0
      %7323 = vmatprep.subr.bf16.mxu0 %v7321
      %7324 = vmatpush1.bf16.msra.mxu0 %v7318
      %7325 = vmatprep.subr.bf16.mxu0 0
      %7326 = vmatpush1.bf16.msra.mxu0 0
      %7327 = vmatprep.subr.bf16.mxu0 0
      %7328 = vmatpush1.bf16.msra.mxu0 0
      %7329 = vmatprep.subr.bf16.mxu0 0
      %7330 = vmatpush1.bf16.msra.mxu0 0
      %7331 = vmatprep.subr.bf16.mxu0 0
      %7332 = vmatpush1.bf16.msra.mxu0 0
      %7333 = vmatprep.subr.bf16.mxu0 0
      %7334 = vmatpush1.bf16.msra.mxu0 0
      %7335 = vmatprep.subr.bf16.mxu0 0
      %7336 = vmatpush1.bf16.msra.mxu0 0
      %7337 = vmatprep.subr.bf16.mxu0 0
      %7338 = vmatpush1.bf16.msra.mxu0 0
      %7339 = vmatprep.subr.bf16.mxu0 0
      %7340 = vmatpush1.bf16.msra.mxu0 0
      %7341 = vmatprep.subr.bf16.mxu0 0
      %7342 = vmatpush1.bf16.msra.mxu0 0
      %7343 = vmatprep.subr.bf16.mxu0 0
      %7344 = vmatpush1.bf16.msra.mxu0 0
      %7345 = vmatprep.subr.bf16.mxu0 0
      %7346 = vmatpush1.bf16.msra.mxu0 0
      %7347 = vmatprep.subr.bf16.mxu0 0
      %7348 = vmatpush1.bf16.msra.mxu0 0
      %7349 = vmatprep.subr.bf16.mxu0 0
      %7350 = vmatpush1.bf16.msra.mxu0 0
      %7351 = vmatprep.subr.bf16.mxu0 0
      %7352 = vmatpush1.bf16.msra.mxu0 0
      %7353 = vmatprep.subr.bf16.mxu0 0
      %7354 = vmatpush1.bf16.msra.mxu0 0
      %7355 = vmatprep.mubr.bf16.mxu0 0
      %7356 = vmatmul.mubr.bf16.gmra.mrb[0].mxu0 %v7315
      %v7357 = vpop.f32.mrb[0].mxu0
      %v7358 = vadd.f32 %v7312, %v7357
      %v7359 = vpop.f32.mrb[0].mxu0
      %v7360 = vadd.f32 %v7312, %v7359
      %v7361 = vpop.f32.mrb[0].mxu0
      %v7362 = vpop.f32.mrb[0].mxu0
      %7363 = vdwg.mxu0
      %v7364 = vmax.f32 %v7358, 0.0
      %v7365 = vmax.f32 %v7360, 0.0
      %v7366 = vpack.c.bf16 %v7364, %v7364
      %v7367 = vpack.c.bf16 %v7365, %v7365
      %v7368 = vld [vmem:[%s15] sm:$0xf]
      %v7369 = vld [vmem:[%s16] sm:$0xff]
      %7371 = vset.pattern.permute.xlu0 0
      %7372 = vperm.xlu0 %7371, %v7369
      %v7373 = vpop.permute.xlu0 %7372
      %v7376 = vsel %vm6160, %v7368, 0
      %v7379 = vsel %vm6164, %v7366, 0
      %v7382 = vsel %vm6164, %v7367, 0
      %7384 = vmatprep.subr.bf16.mxu0 %v7382
      %7385 = vmatpush1.bf16.msra.mxu0 %v7379
      %7386 = vmatprep.subr.bf16.mxu0 0
      %7387 = vmatpush1.bf16.msra.mxu0 0
      %7388 = vmatprep.subr.bf16.mxu0 0
      %7389 = vmatpush1.bf16.msra.mxu0 0
      %7390 = vmatprep.subr.bf16.mxu0 0
      %7391 = vmatpush1.bf16.msra.mxu0 0
      %7392 = vmatprep.subr.bf16.mxu0 0
      %7393 = vmatpush1.bf16.msra.mxu0 0
      %7394 = vmatprep.subr.bf16.mxu0 0
      %7395 = vmatpush1.bf16.msra.mxu0 0
      %7396 = vmatprep.subr.bf16.mxu0 0
      %7397 = vmatpush1.bf16.msra.mxu0 0
      %7398 = vmatprep.subr.bf16.mxu0 0
      %7399 = vmatpush1.bf16.msra.mxu0 0
      %7400 = vmatprep.subr.bf16.mxu0 0
      %7401 = vmatpush1.bf16.msra.mxu0 0
      %7402 = vmatprep.subr.bf16.mxu0 0
      %7403 = vmatpush1.bf16.msra.mxu0 0
      %7404 = vmatprep.subr.bf16.mxu0 0
      %7405 = vmatpush1.bf16.msra.mxu0 0
      %7406 = vmatprep.subr.bf16.mxu0 0
      %7407 = vmatpush1.bf16.msra.mxu0 0
      %7408 = vmatprep.subr.bf16.mxu0 0
      %7409 = vmatpush1.bf16.msra.mxu0 0
      %7410 = vmatprep.subr.bf16.mxu0 0
      %7411 = vmatpush1.bf16.msra.mxu0 0
      %7412 = vmatprep.subr.bf16.mxu0 0
      %7413 = vmatpush1.bf16.msra.mxu0 0
      %7414 = vmatprep.subr.bf16.mxu0 0
      %7415 = vmatpush1.bf16.msra.mxu0 0
      %7416 = vmatprep.mubr.bf16.mxu0 0
      %7417 = vmatmul.mubr.bf16.gmra.mrb[0].mxu0 %v7376
      %v7418 = vpop.f32.mrb[0].mxu0
      %v7419 = vadd.f32 %v7373, %v7418
      %v7420 = vpop.f32.mrb[0].mxu0
      %v7421 = vadd.f32 %v7373, %v7420
      %v7422 = vpop.f32.mrb[0].mxu0
      %v7423 = vpop.f32.mrb[0].mxu0
      %7424 = vdwg.mxu0
      %v7425 = vadd.f32 %v7419, %v6133
      %v7426 = vadd.f32 %v7421, %v6134
      %7427 = vst [vmem:[%s548] sm:$0xff] %v7425
      %7428 = vst [vmem:[%s548 + $0x8] sm:$0xff] %v7426
      %p7429 = scmp.lt.s32.totalorder %s28, 1
      %s7430 = scalar_select %p7429, %s28, 1
      %s7431 = smul.addr %s7430, 2
      %s7432 = smul.addr %s7431, 8
      %s7433 = scalar_lea.vmem %s17, %s7432
      // Predicated region
      $region89: #{eesp_encoder_forward.1} parent=87 // pred_check
        %p7434 = pneg %p408
      $region90: #{eesp_encoder_forward.1} parent=87 // pred_check_branch
        %7436 = sbr.rel (%p7434) target = $region92
      $region91: #{eesp_encoder_forward.1} parent=87 // pred_region
        _
      $region92: #{eesp_encoder_forward.1} parent=87 // pred_fallthru
        _
    $region88: #{eesp_encoder_forward.1} parent=5 // pred_fallthru
      _
    %p7437 = scmp.le.s32.totalorder 2, %s23
    // Predicated region
    $region93: #{eesp_encoder_forward.1} parent=5 // pred_check
      %p7438 = pneg %p7437
    $region94: #{eesp_encoder_forward.1} parent=5 // pred_check_branch
      %7440 = sbr.rel (%p7438) target = $region96
    $region95: #{eesp_encoder_forward.1} parent=5 // pred_region
      %s7441 = ssub.s32 %s23, 2
      // Predicated region
      $region97: #{eesp_encoder_forward.1} parent=95 // pred_check
        %p7442 = pneg %p414
      $region98: #{eesp_encoder_forward.1} parent=95 // pred_check_branch
        %7444 = sbr.rel (%p7442) target = $region100
      $region99: #{eesp_encoder_forward.1} parent=95 // pred_region
        %p7445 = scmp.lt.s32.totalorder %s29, 1
        %s7446 = scalar_select %p7445, %s29, 1
        %s7447 = smul.addr %s7446, 2
        %s7448 = smul.addr %s7447, 8
        %s7449 = scalar_lea.vmem %s17, %s7448
      $region100: #{eesp_encoder_forward.1} parent=95 // pred_fallthru
        _
    $region96: #{eesp_encoder_forward.1} parent=5 // pred_fallthru
      _
  $region6: #{eesp_encoder_forward.1} parent=0 // loop_footer
    %s27 = sadd.s32 1, %s23
  $region7: #{eesp_encoder_forward.1} parent=0 // loop_footer_branch
    %22 = sbr.rel target = $region3
  $region8: #{eesp_encoder_forward.1} parent=0 // loop_exit
    _

</llo_original>
